<compile_context>
chip_gen: v7x
topology: tpu7x:2x2x1
jax: 0.10.0
libtpu: 0.0.40
codegen_flags: <defaults>
</compile_context>

<pallas_src>
import jax
import jax.numpy as jnp
import numpy as np
from jax.experimental import pallas as pl
from jax.experimental.pallas import tpu as pltpu

BB = 8  # images per grid step (= sublane tile); batch is padded to a multiple.


# ------------------------------ Pallas kernel -------------------------------

def _cnn_fused_kernel(x_ref, t1_ref, b1_ref, t2_ref, b2_ref,
                      w1_ref, bf1_ref, w2_ref, bf2_ref, o_ref):
    """Whole CNNMnist forward for one tile of BB images.

    x_ref  : (28, BB, 32)  f32   rows = input h, sublane = image, lane = w (28->32 pad)
    t1_ref : (5, 32, 480)  bf16  conv1 banded weights, out lane = dw*240 + wp*20 + c
    b1_ref : (1, 480)      f32
    t2_ref : (5, 240, 400) bf16  conv2 banded weights, out lane = dw*200 + wp*50 + c
    b2_ref : (1, 400)      f32
    w1_ref : (4, 200, 512) bf16  fc1 weights per pooled row hp (torch flatten folded in)
    bf1_ref: (1, 512)      f32
    w2_ref : (512, 128)    bf16  fc2 weights, classes padded 10 -> 128
    bf2_ref: (1, 128)      f32   padded classes carry -1e9 bias (-> exp == 0)
    o_ref  : (BB, 128)     f32   log-probs (cols >= 10 are junk, sliced outside)
    """
    x = x_ref[...]

    # ---- conv1 (+bias+ReLU): 5 banded GEMMs over the kernel-row index ----
    y1 = jnp.zeros((24 * BB, 480), jnp.float32)
    for i in range(5):
        lhs = x[i:i + 24].reshape(24 * BB, 32).astype(jnp.bfloat16)
        y1 = y1 + jnp.dot(lhs, t1_ref[i], preferred_element_type=jnp.float32)
    y1 = jnp.maximum(y1 + b1_ref[...], 0.0)

    # ---- 2x2 max-pool #1: H via leading row pairs, W via the two lane halves ----
    y1 = y1.reshape(12, 2, BB, 480)
    y1 = jnp.maximum(y1[:, 0], y1[:, 1])                       # (12, BB, 480)
    p1 = jnp.maximum(y1[:, :, :240], y1[:, :, 240:])           # (12, BB, 240)

    # ---- conv2 (+bias+ReLU): 5 banded GEMMs, contraction over (w, cin) jointly ----
    y2 = jnp.zeros((8 * BB, 400), jnp.float32)
    for i in range(5):
        lhs = p1[i:i + 8].reshape(8 * BB, 240).astype(jnp.bfloat16)
        y2 = y2 + jnp.dot(lhs, t2_ref[i], preferred_element_type=jnp.float32)
    y2 = jnp.maximum(y2 + b2_ref[...], 0.0)

    # ---- 2x2 max-pool #2 ----
    y2 = y2.reshape(4, 2, BB, 400)
    y2 = jnp.maximum(y2[:, 0], y2[:, 1])                       # (4, BB, 400)
    p2 = jnp.maximum(y2[:, :, :200], y2[:, :, 200:])           # (4, BB, 200)

    # ---- fc1 (+ReLU): torch .view(-1, 800) order folded into w1_ref ----
    h = jnp.zeros((BB, 512), jnp.float32)
    for r in range(4):
        h = h + jnp.dot(p2[r].astype(jnp.bfloat16), w1_ref[r],
                        preferred_element_type=jnp.float32)
    h = jnp.maximum(h + bf1_ref[...], 0.0)

    # ---- fc2 + log_softmax over 128 padded class lanes ----
    logits = jnp.dot(h.astype(jnp.bfloat16), w2_ref[...],
                     preferred_element_type=jnp.float32) + bf2_ref[...]
    m = jnp.max(logits, axis=-1, keepdims=True)
    s = logits - m
    lse = jnp.log(jnp.sum(jnp.exp(s), axis=-1, keepdims=True))
    o_ref[...] = s - lse


# ----------------------------- params / prepare -----------------------------

def init_params(key):
    """PyTorch-style uniform(-1/sqrt(fan_in), 1/sqrt(fan_in)) init."""
    def uniform(k, shape, fan_in):
        bound = 1.0 / jnp.sqrt(jnp.float32(fan_in))
        return jax.random.uniform(k, shape, jnp.float32, -bound, bound)
    ks = jax.random.split(key, 8)
    return {
        "conv1_w": uniform(ks[0], (20, 1, 5, 5), 1 * 25),
        "conv1_b": uniform(ks[1], (20,), 1 * 25),
        "conv2_w": uniform(ks[2], (50, 20, 5, 5), 20 * 25),
        "conv2_b": uniform(ks[3], (50,), 20 * 25),
        "fc1_w": uniform(ks[4], (500, 800), 800),
        "fc1_b": uniform(ks[5], (500,), 800),
        "fc2_w": uniform(ks[6], (10, 500), 500),
        "fc2_b": uniform(ks[7], (10,), 500),
    }


def prepare_params(p):
    """One-time host-side prep: fold convs into banded (Toeplitz) GEMM weights,
    fold the torch flatten order into fc1, pad + bf16-cast all MXU operands."""
    w1 = np.asarray(p["conv1_w"], np.float32)   # (20, 1, 5, 5)
    b1 = np.asarray(p["conv1_b"], np.float32)
    w2 = np.asarray(p["conv2_w"], np.float32)   # (50, 20, 5, 5)
    b2 = np.asarray(p["conv2_b"], np.float32)
    fw1 = np.asarray(p["fc1_w"], np.float32)    # (500, 800)
    fb1 = np.asarray(p["fc1_b"], np.float32)
    fw2 = np.asarray(p["fc2_w"], np.float32)    # (10, 500)
    fb2 = np.asarray(p["fc2_b"], np.float32)

    # conv1: t1[i, w_in, dw*240 + wp*20 + c] = w1[c, 0, i, w_in - (2*wp+dw)]
    t1 = np.zeros((5, 32, 480), np.float32)     # input-W padded 28 -> 32 (zeros)
    for i in range(5):
        for j in range(5):
            for wp in range(12):
                for dw in range(2):
                    ow = 2 * wp + dw
                    c0 = dw * 240 + wp * 20
                    t1[i, ow + j, c0:c0 + 20] = w1[:, 0, i, j]
    bias1 = np.tile(b1, 24).reshape(1, 480)     # lane = (dw, wp, c) -> b1[c]

    # conv2: t2[i, 20*(wo+j)+cin, dw*200 + wp*50 + cout] = w2[cout, cin, i, j]
    t2 = np.zeros((5, 240, 400), np.float32)
    for i in range(5):
        for j in range(5):
            for wp in range(4):
                for dw in range(2):
                    wo = 2 * wp + dw
                    r0 = 20 * (wo + j)
                    c0 = dw * 200 + wp * 50
                    t2[i, r0:r0 + 20, c0:c0 + 50] = w2[:, :, i, j].T
    bias2 = np.tile(b2, 8).reshape(1, 400)      # lane = (dw, wp, cout) -> b2[cout]

    # fc1: torch feature index f = c*16 + h*4 + w; our lane = 50*w + c per row h.
    fw1r = fw1.reshape(500, 50, 4, 4)           # [n, c, h, w]
    w1h = np.zeros((4, 200, 512), np.float32)   # hidden padded 500 -> 512
    for hp in range(4):
        for wp in range(4):
            w1h[hp, 50 * wp:50 * wp + 50, :500] = fw1r[:, :, hp, wp].T
    bf1 = np.zeros((1, 512), np.float32)
    bf1[0, :500] = fb1

    # fc2: rows padded 500 -> 512 (zeros), classes padded 10 -> 128.
    w2p = np.zeros((512, 128), np.float32)
    w2p[:500, :10] = fw2.T
    bf2 = np.full((1, 128), -1e9, np.float32)   # padded classes never win softmax
    bf2[0, :10] = fb2

    return {
        "t1": jnp.asarray(t1, jnp.bfloat16), "b1": jnp.asarray(bias1),
        "t2": jnp.asarray(t2, jnp.bfloat16), "b2": jnp.asarray(bias2),
        "w1h": jnp.asarray(w1h, jnp.bfloat16), "bf1": jnp.asarray(bf1),
        "w2p": jnp.asarray(w2p, jnp.bfloat16), "bf2": jnp.asarray(bf2),
    }


# --------------------------------- forward ----------------------------------

def cnn_mnist_forward(prep, x):
    """x: (B, 1, 28, 28) NCHW f32 -> (B, 10) log-probs."""
    b = x.shape[0]
    bpad = ((b + BB - 1) // BB) * BB
    nblk = bpad // BB

    # (B,1,28,28) -> rows=h, sublane=image, lane=w; pad batch and W (28->32).
    xk = jnp.transpose(x[:, 0, :, :], (1, 0, 2))               # (28, B, 28)
    xk = jnp.pad(xk, ((0, 0), (0, bpad - b), (0, 4)))          # (28, bpad, 32)

    weight_bytes = sum(int(a.size) * a.dtype.itemsize for a in prep.values())
    cost = pl.CostEstimate(
        flops=4_586_000 * bpad,
        bytes_accessed=int(xk.size) * 4 + weight_bytes + bpad * 128 * 4,
        transcendentals=129 * bpad,
    )

    out = pl.pallas_call(
        _cnn_fused_kernel,
        out_shape=jax.ShapeDtypeStruct((bpad, 128), jnp.float32),
        grid=(nblk,),
        in_specs=[
            pl.BlockSpec((28, BB, 32), lambda i: (0, i, 0)),
            pl.BlockSpec((5, 32, 480), lambda i: (0, 0, 0)),
            pl.BlockSpec((1, 480), lambda i: (0, 0)),
            pl.BlockSpec((5, 240, 400), lambda i: (0, 0, 0)),
            pl.BlockSpec((1, 400), lambda i: (0, 0)),
            pl.BlockSpec((4, 200, 512), lambda i: (0, 0, 0)),
            pl.BlockSpec((1, 512), lambda i: (0, 0)),
            pl.BlockSpec((512, 128), lambda i: (0, 0)),
            pl.BlockSpec((1, 128), lambda i: (0, 0)),
        ],
        out_specs=pl.BlockSpec((BB, 128), lambda i: (i, 0)),
        compiler_params=pltpu.CompilerParams(
            dimension_semantics=("parallel",)),
        cost_estimate=cost,
    )(xk, prep["t1"], prep["b1"], prep["t2"], prep["b2"],
      prep["w1h"], prep["bf1"], prep["w2p"], prep["bf2"])

    return out[:b, :10]


# ------------------------------ f32 reference --------------------------------

def reference_forward(p, x):
    def conv(x, w, b):
        y = jax.lax.conv_general_dilated(
            x, w, (1, 1), "VALID",
            dimension_numbers=("NCHW", "OIHW", "NCHW"))
        return y + b[None, :, None, None]

    def pool(x):
        return jax.lax.reduce_window(
            x, -jnp.inf, jax.lax.max, (1, 1, 2, 2), (1, 1, 2, 2), "VALID")

    h = pool(jax.nn.relu(conv(x, p["conv1_w"], p["conv1_b"])))
    h = pool(jax.nn.relu(conv(h, p["conv2_w"], p["conv2_b"])))
    h = h.reshape(h.shape[0], -1)
    h = jax.nn.relu(h @ p["fc1_w"].T + p["fc1_b"])
    logits = h @ p["fc2_w"].T + p["fc2_b"]
    return jax.nn.log_softmax(logits, axis=-1)


if __name__ == "__main__":
    key = jax.random.PRNGKey(0)
    pkey, xkey = jax.random.split(key)
    params = init_params(pkey)
    prep = prepare_params(params)
    # MNIST-shaped input: fc1 (800 = 50*4*4) forces 28x28 spatial.
    x = jax.random.normal(xkey, (2, 1, 28, 28), jnp.float32)

    out = jax.jit(cnn_mnist_forward)(prep, x)
    out = jax.block_until_ready(out)

    assert out.shape == (2, 10)
    assert bool(jnp.all(jnp.isfinite(out)))
    ref = reference_forward(params, x)
    err = float(jnp.max(jnp.abs(out - ref)))
    assert err < 1e-1, f"max abs err vs f32 reference: {err}"
    print("KERNEL_OK")
</pallas_src>

<mosaic_0001>
module attributes {stable_mosaic.version = 11 : i64} {
  func.func @_cnn_fused_kernel(%arg0: i32, %arg1: memref<28x8x32xf32, #tpu.memory_space<vmem>>, %arg2: memref<5x32x480xbf16, #tpu.memory_space<vmem>>, %arg3: memref<1x480xf32, #tpu.memory_space<vmem>>, %arg4: memref<5x240x400xbf16, #tpu.memory_space<vmem>>, %arg5: memref<1x400xf32, #tpu.memory_space<vmem>>, %arg6: memref<4x200x512xbf16, #tpu.memory_space<vmem>>, %arg7: memref<1x512xf32, #tpu.memory_space<vmem>>, %arg8: memref<512x128xbf16, #tpu.memory_space<vmem>>, %arg9: memref<1x128xf32, #tpu.memory_space<vmem>>, %arg10: memref<8x128xf32, #tpu.memory_space<vmem>>) attributes {dimension_semantics = [#tpu.dimension_semantics<parallel>], iteration_bounds = array<i64: 1>, scalar_prefetch = 0 : i64, scratch_operands = 0 : i64, tpu.core_type = #tpu.core_type<tc>, window_params = [{transform_indices = @transform_0, window_bounds = array<i64: 28, 8, 32>}, {pipeline_mode = #tpu.pipeline_mode<synchronous>, transform_indices = @transform_1, window_bounds = array<i64: 5, 32, 480>}, {pipeline_mode = #tpu.pipeline_mode<synchronous>, transform_indices = @transform_2, window_bounds = array<i64: 1, 480>}, {pipeline_mode = #tpu.pipeline_mode<synchronous>, transform_indices = @transform_3, window_bounds = array<i64: 5, 240, 400>}, {pipeline_mode = #tpu.pipeline_mode<synchronous>, transform_indices = @transform_4, window_bounds = array<i64: 1, 400>}, {pipeline_mode = #tpu.pipeline_mode<synchronous>, transform_indices = @transform_5, window_bounds = array<i64: 4, 200, 512>}, {pipeline_mode = #tpu.pipeline_mode<synchronous>, transform_indices = @transform_6, window_bounds = array<i64: 1, 512>}, {pipeline_mode = #tpu.pipeline_mode<synchronous>, transform_indices = @transform_7, window_bounds = array<i64: 512, 128>}, {pipeline_mode = #tpu.pipeline_mode<synchronous>, transform_indices = @transform_8, window_bounds = array<i64: 1, 128>}, {transform_indices = @transform_9, window_bounds = array<i64: 8, 128>}]} {
    %c0 = arith.constant 0 : index
    %c0_0 = arith.constant 0 : index
    %c0_1 = arith.constant 0 : index
    %0 = vector.load %arg1[%c0, %c0_0, %c0_1] : memref<28x8x32xf32, #tpu.memory_space<vmem>>, vector<28x8x32xf32>
    %cst = arith.constant 0.000000e+00 : f32
    %1 = vector.broadcast %cst : f32 to vector<192x480xf32>
    %2 = vector.extract_strided_slice %0 {offsets = [0, 0, 0], sizes = [24, 8, 32], strides = [1, 1, 1]} : vector<28x8x32xf32> to vector<24x8x32xf32>
    %3 = vector.shape_cast %2 : vector<24x8x32xf32> to vector<192x32xf32>
    %4 = arith.truncf %3 : vector<192x32xf32> to vector<192x32xbf16>
    %c0_2 = arith.constant 0 : index
    %c0_3 = arith.constant 0 : index
    %c0_4 = arith.constant 0 : index
    %5 = vector.load %arg2[%c0_2, %c0_3, %c0_4] : memref<5x32x480xbf16, #tpu.memory_space<vmem>>, vector<1x32x480xbf16>
    %6 = vector.shape_cast %5 : vector<1x32x480xbf16> to vector<32x480xbf16>
    %cst_5 = arith.constant dense<0.000000e+00> : vector<192x480xf32>
    %7 = tpu.matmul %4, %6, %cst_5 {dimension_numbers = #tpu.dot_dimension_numbers<[1], [0], [0], [1], [0, 0, 1, 1], [], []>} : vector<192x32xbf16>, vector<32x480xbf16>, vector<192x480xf32> -> vector<192x480xf32>
    %8 = arith.addf %1, %7 : vector<192x480xf32>
    %9 = vector.extract_strided_slice %0 {offsets = [1, 0, 0], sizes = [24, 8, 32], strides = [1, 1, 1]} : vector<28x8x32xf32> to vector<24x8x32xf32>
    %10 = vector.shape_cast %9 : vector<24x8x32xf32> to vector<192x32xf32>
    %11 = arith.truncf %10 : vector<192x32xf32> to vector<192x32xbf16>
    %c1 = arith.constant 1 : index
    %c0_6 = arith.constant 0 : index
    %c0_7 = arith.constant 0 : index
    %12 = vector.load %arg2[%c1, %c0_6, %c0_7] : memref<5x32x480xbf16, #tpu.memory_space<vmem>>, vector<1x32x480xbf16>
    %13 = vector.shape_cast %12 : vector<1x32x480xbf16> to vector<32x480xbf16>
    %cst_8 = arith.constant dense<0.000000e+00> : vector<192x480xf32>
    %14 = tpu.matmul %11, %13, %cst_8 {dimension_numbers = #tpu.dot_dimension_numbers<[1], [0], [0], [1], [0, 0, 1, 1], [], []>} : vector<192x32xbf16>, vector<32x480xbf16>, vector<192x480xf32> -> vector<192x480xf32>
    %15 = arith.addf %8, %14 : vector<192x480xf32>
    %16 = vector.extract_strided_slice %0 {offsets = [2, 0, 0], sizes = [24, 8, 32], strides = [1, 1, 1]} : vector<28x8x32xf32> to vector<24x8x32xf32>
    %17 = vector.shape_cast %16 : vector<24x8x32xf32> to vector<192x32xf32>
    %18 = arith.truncf %17 : vector<192x32xf32> to vector<192x32xbf16>
    %c2 = arith.constant 2 : index
    %c0_9 = arith.constant 0 : index
    %c0_10 = arith.constant 0 : index
    %19 = vector.load %arg2[%c2, %c0_9, %c0_10] : memref<5x32x480xbf16, #tpu.memory_space<vmem>>, vector<1x32x480xbf16>
    %20 = vector.shape_cast %19 : vector<1x32x480xbf16> to vector<32x480xbf16>
    %cst_11 = arith.constant dense<0.000000e+00> : vector<192x480xf32>
    %21 = tpu.matmul %18, %20, %cst_11 {dimension_numbers = #tpu.dot_dimension_numbers<[1], [0], [0], [1], [0, 0, 1, 1], [], []>} : vector<192x32xbf16>, vector<32x480xbf16>, vector<192x480xf32> -> vector<192x480xf32>
    %22 = arith.addf %15, %21 : vector<192x480xf32>
    %23 = vector.extract_strided_slice %0 {offsets = [3, 0, 0], sizes = [24, 8, 32], strides = [1, 1, 1]} : vector<28x8x32xf32> to vector<24x8x32xf32>
    %24 = vector.shape_cast %23 : vector<24x8x32xf32> to vector<192x32xf32>
    %25 = arith.truncf %24 : vector<192x32xf32> to vector<192x32xbf16>
    %c3 = arith.constant 3 : index
    %c0_12 = arith.constant 0 : index
    %c0_13 = arith.constant 0 : index
    %26 = vector.load %arg2[%c3, %c0_12, %c0_13] : memref<5x32x480xbf16, #tpu.memory_space<vmem>>, vector<1x32x480xbf16>
    %27 = vector.shape_cast %26 : vector<1x32x480xbf16> to vector<32x480xbf16>
    %cst_14 = arith.constant dense<0.000000e+00> : vector<192x480xf32>
    %28 = tpu.matmul %25, %27, %cst_14 {dimension_numbers = #tpu.dot_dimension_numbers<[1], [0], [0], [1], [0, 0, 1, 1], [], []>} : vector<192x32xbf16>, vector<32x480xbf16>, vector<192x480xf32> -> vector<192x480xf32>
    %29 = arith.addf %22, %28 : vector<192x480xf32>
    %30 = vector.extract_strided_slice %0 {offsets = [4, 0, 0], sizes = [24, 8, 32], strides = [1, 1, 1]} : vector<28x8x32xf32> to vector<24x8x32xf32>
    %31 = vector.shape_cast %30 : vector<24x8x32xf32> to vector<192x32xf32>
    %32 = arith.truncf %31 : vector<192x32xf32> to vector<192x32xbf16>
    %c4 = arith.constant 4 : index
    %c0_15 = arith.constant 0 : index
    %c0_16 = arith.constant 0 : index
    %33 = vector.load %arg2[%c4, %c0_15, %c0_16] : memref<5x32x480xbf16, #tpu.memory_space<vmem>>, vector<1x32x480xbf16>
    %34 = vector.shape_cast %33 : vector<1x32x480xbf16> to vector<32x480xbf16>
    %cst_17 = arith.constant dense<0.000000e+00> : vector<192x480xf32>
    %35 = tpu.matmul %32, %34, %cst_17 {dimension_numbers = #tpu.dot_dimension_numbers<[1], [0], [0], [1], [0, 0, 1, 1], [], []>} : vector<192x32xbf16>, vector<32x480xbf16>, vector<192x480xf32> -> vector<192x480xf32>
    %36 = arith.addf %29, %35 : vector<192x480xf32>
    %c0_18 = arith.constant 0 : index
    %c0_19 = arith.constant 0 : index
    %37 = vector.load %arg3[%c0_18, %c0_19] : memref<1x480xf32, #tpu.memory_space<vmem>>, vector<1x480xf32>
    %38 = vector.broadcast %37 : vector<1x480xf32> to vector<192x480xf32>
    %39 = arith.addf %36, %38 : vector<192x480xf32>
    %cst_20 = arith.constant 0.000000e+00 : f32
    %40 = vector.broadcast %cst_20 : f32 to vector<192x480xf32>
    %41 = arith.maximumf %39, %40 : vector<192x480xf32>
    %42 = vector.shape_cast %41 : vector<192x480xf32> to vector<12x2x8x480xf32>
    %43 = vector.extract_strided_slice %42 {offsets = [0, 0, 0, 0], sizes = [12, 1, 8, 480], strides = [1, 1, 1, 1]} : vector<12x2x8x480xf32> to vector<12x1x8x480xf32>
    %44 = vector.shape_cast %43 : vector<12x1x8x480xf32> to vector<12x8x480xf32>
    %45 = vector.extract_strided_slice %42 {offsets = [0, 1, 0, 0], sizes = [12, 1, 8, 480], strides = [1, 1, 1, 1]} : vector<12x2x8x480xf32> to vector<12x1x8x480xf32>
    %46 = vector.shape_cast %45 : vector<12x1x8x480xf32> to vector<12x8x480xf32>
    %47 = arith.maximumf %44, %46 : vector<12x8x480xf32>
    %48 = vector.extract_strided_slice %47 {offsets = [0, 0, 0], sizes = [12, 8, 240], strides = [1, 1, 1]} : vector<12x8x480xf32> to vector<12x8x240xf32>
    %49 = vector.extract_strided_slice %47 {offsets = [0, 0, 240], sizes = [12, 8, 240], strides = [1, 1, 1]} : vector<12x8x480xf32> to vector<12x8x240xf32>
    %50 = arith.maximumf %48, %49 : vector<12x8x240xf32>
    %cst_21 = arith.constant 0.000000e+00 : f32
    %51 = vector.broadcast %cst_21 : f32 to vector<64x400xf32>
    %52 = vector.extract_strided_slice %50 {offsets = [0, 0, 0], sizes = [8, 8, 240], strides = [1, 1, 1]} : vector<12x8x240xf32> to vector<8x8x240xf32>
    %53 = vector.shape_cast %52 : vector<8x8x240xf32> to vector<64x240xf32>
    %54 = arith.truncf %53 : vector<64x240xf32> to vector<64x240xbf16>
    %c0_22 = arith.constant 0 : index
    %c0_23 = arith.constant 0 : index
    %c0_24 = arith.constant 0 : index
    %55 = vector.load %arg4[%c0_22, %c0_23, %c0_24] : memref<5x240x400xbf16, #tpu.memory_space<vmem>>, vector<1x240x400xbf16>
    %56 = vector.shape_cast %55 : vector<1x240x400xbf16> to vector<240x400xbf16>
    %cst_25 = arith.constant dense<0.000000e+00> : vector<64x400xf32>
    %57 = tpu.matmul %54, %56, %cst_25 {dimension_numbers = #tpu.dot_dimension_numbers<[1], [0], [0], [1], [0, 0, 1, 1], [], []>} : vector<64x240xbf16>, vector<240x400xbf16>, vector<64x400xf32> -> vector<64x400xf32>
    %58 = arith.addf %51, %57 : vector<64x400xf32>
    %59 = vector.extract_strided_slice %50 {offsets = [1, 0, 0], sizes = [8, 8, 240], strides = [1, 1, 1]} : vector<12x8x240xf32> to vector<8x8x240xf32>
    %60 = vector.shape_cast %59 : vector<8x8x240xf32> to vector<64x240xf32>
    %61 = arith.truncf %60 : vector<64x240xf32> to vector<64x240xbf16>
    %c1_26 = arith.constant 1 : index
    %c0_27 = arith.constant 0 : index
    %c0_28 = arith.constant 0 : index
    %62 = vector.load %arg4[%c1_26, %c0_27, %c0_28] : memref<5x240x400xbf16, #tpu.memory_space<vmem>>, vector<1x240x400xbf16>
    %63 = vector.shape_cast %62 : vector<1x240x400xbf16> to vector<240x400xbf16>
    %cst_29 = arith.constant dense<0.000000e+00> : vector<64x400xf32>
    %64 = tpu.matmul %61, %63, %cst_29 {dimension_numbers = #tpu.dot_dimension_numbers<[1], [0], [0], [1], [0, 0, 1, 1], [], []>} : vector<64x240xbf16>, vector<240x400xbf16>, vector<64x400xf32> -> vector<64x400xf32>
    %65 = arith.addf %58, %64 : vector<64x400xf32>
    %66 = vector.extract_strided_slice %50 {offsets = [2, 0, 0], sizes = [8, 8, 240], strides = [1, 1, 1]} : vector<12x8x240xf32> to vector<8x8x240xf32>
    %67 = vector.shape_cast %66 : vector<8x8x240xf32> to vector<64x240xf32>
    %68 = arith.truncf %67 : vector<64x240xf32> to vector<64x240xbf16>
    %c2_30 = arith.constant 2 : index
    %c0_31 = arith.constant 0 : index
    %c0_32 = arith.constant 0 : index
    %69 = vector.load %arg4[%c2_30, %c0_31, %c0_32] : memref<5x240x400xbf16, #tpu.memory_space<vmem>>, vector<1x240x400xbf16>
    %70 = vector.shape_cast %69 : vector<1x240x400xbf16> to vector<240x400xbf16>
    %cst_33 = arith.constant dense<0.000000e+00> : vector<64x400xf32>
    %71 = tpu.matmul %68, %70, %cst_33 {dimension_numbers = #tpu.dot_dimension_numbers<[1], [0], [0], [1], [0, 0, 1, 1], [], []>} : vector<64x240xbf16>, vector<240x400xbf16>, vector<64x400xf32> -> vector<64x400xf32>
    %72 = arith.addf %65, %71 : vector<64x400xf32>
    %73 = vector.extract_strided_slice %50 {offsets = [3, 0, 0], sizes = [8, 8, 240], strides = [1, 1, 1]} : vector<12x8x240xf32> to vector<8x8x240xf32>
    %74 = vector.shape_cast %73 : vector<8x8x240xf32> to vector<64x240xf32>
    %75 = arith.truncf %74 : vector<64x240xf32> to vector<64x240xbf16>
    %c3_34 = arith.constant 3 : index
    %c0_35 = arith.constant 0 : index
    %c0_36 = arith.constant 0 : index
    %76 = vector.load %arg4[%c3_34, %c0_35, %c0_36] : memref<5x240x400xbf16, #tpu.memory_space<vmem>>, vector<1x240x400xbf16>
    %77 = vector.shape_cast %76 : vector<1x240x400xbf16> to vector<240x400xbf16>
    %cst_37 = arith.constant dense<0.000000e+00> : vector<64x400xf32>
    %78 = tpu.matmul %75, %77, %cst_37 {dimension_numbers = #tpu.dot_dimension_numbers<[1], [0], [0], [1], [0, 0, 1, 1], [], []>} : vector<64x240xbf16>, vector<240x400xbf16>, vector<64x400xf32> -> vector<64x400xf32>
    %79 = arith.addf %72, %78 : vector<64x400xf32>
    %80 = vector.extract_strided_slice %50 {offsets = [4, 0, 0], sizes = [8, 8, 240], strides = [1, 1, 1]} : vector<12x8x240xf32> to vector<8x8x240xf32>
    %81 = vector.shape_cast %80 : vector<8x8x240xf32> to vector<64x240xf32>
    %82 = arith.truncf %81 : vector<64x240xf32> to vector<64x240xbf16>
    %c4_38 = arith.constant 4 : index
    %c0_39 = arith.constant 0 : index
    %c0_40 = arith.constant 0 : index
    %83 = vector.load %arg4[%c4_38, %c0_39, %c0_40] : memref<5x240x400xbf16, #tpu.memory_space<vmem>>, vector<1x240x400xbf16>
    %84 = vector.shape_cast %83 : vector<1x240x400xbf16> to vector<240x400xbf16>
    %cst_41 = arith.constant dense<0.000000e+00> : vector<64x400xf32>
    %85 = tpu.matmul %82, %84, %cst_41 {dimension_numbers = #tpu.dot_dimension_numbers<[1], [0], [0], [1], [0, 0, 1, 1], [], []>} : vector<64x240xbf16>, vector<240x400xbf16>, vector<64x400xf32> -> vector<64x400xf32>
    %86 = arith.addf %79, %85 : vector<64x400xf32>
    %c0_42 = arith.constant 0 : index
    %c0_43 = arith.constant 0 : index
    %87 = vector.load %arg5[%c0_42, %c0_43] : memref<1x400xf32, #tpu.memory_space<vmem>>, vector<1x400xf32>
    %88 = vector.broadcast %87 : vector<1x400xf32> to vector<64x400xf32>
    %89 = arith.addf %86, %88 : vector<64x400xf32>
    %cst_44 = arith.constant 0.000000e+00 : f32
    %90 = vector.broadcast %cst_44 : f32 to vector<64x400xf32>
    %91 = arith.maximumf %89, %90 : vector<64x400xf32>
    %92 = vector.shape_cast %91 : vector<64x400xf32> to vector<4x2x8x400xf32>
    %93 = vector.extract_strided_slice %92 {offsets = [0, 0, 0, 0], sizes = [4, 1, 8, 400], strides = [1, 1, 1, 1]} : vector<4x2x8x400xf32> to vector<4x1x8x400xf32>
    %94 = vector.shape_cast %93 : vector<4x1x8x400xf32> to vector<4x8x400xf32>
    %95 = vector.extract_strided_slice %92 {offsets = [0, 1, 0, 0], sizes = [4, 1, 8, 400], strides = [1, 1, 1, 1]} : vector<4x2x8x400xf32> to vector<4x1x8x400xf32>
    %96 = vector.shape_cast %95 : vector<4x1x8x400xf32> to vector<4x8x400xf32>
    %97 = arith.maximumf %94, %96 : vector<4x8x400xf32>
    %98 = vector.extract_strided_slice %97 {offsets = [0, 0, 0], sizes = [4, 8, 200], strides = [1, 1, 1]} : vector<4x8x400xf32> to vector<4x8x200xf32>
    %99 = vector.extract_strided_slice %97 {offsets = [0, 0, 200], sizes = [4, 8, 200], strides = [1, 1, 1]} : vector<4x8x400xf32> to vector<4x8x200xf32>
    %100 = arith.maximumf %98, %99 : vector<4x8x200xf32>
    %cst_45 = arith.constant 0.000000e+00 : f32
    %101 = vector.broadcast %cst_45 : f32 to vector<8x512xf32>
    %102 = vector.extract_strided_slice %100 {offsets = [0, 0, 0], sizes = [1, 8, 200], strides = [1, 1, 1]} : vector<4x8x200xf32> to vector<1x8x200xf32>
    %103 = vector.shape_cast %102 : vector<1x8x200xf32> to vector<8x200xf32>
    %104 = arith.truncf %103 : vector<8x200xf32> to vector<8x200xbf16>
    %c0_46 = arith.constant 0 : index
    %c0_47 = arith.constant 0 : index
    %c0_48 = arith.constant 0 : index
    %105 = vector.load %arg6[%c0_46, %c0_47, %c0_48] : memref<4x200x512xbf16, #tpu.memory_space<vmem>>, vector<1x200x512xbf16>
    %106 = vector.shape_cast %105 : vector<1x200x512xbf16> to vector<200x512xbf16>
    %cst_49 = arith.constant dense<0.000000e+00> : vector<8x512xf32>
    %107 = tpu.matmul %104, %106, %cst_49 {dimension_numbers = #tpu.dot_dimension_numbers<[1], [0], [0], [1], [0, 0, 1, 1], [], []>} : vector<8x200xbf16>, vector<200x512xbf16>, vector<8x512xf32> -> vector<8x512xf32>
    %108 = arith.addf %101, %107 : vector<8x512xf32>
    %109 = vector.extract_strided_slice %100 {offsets = [1, 0, 0], sizes = [1, 8, 200], strides = [1, 1, 1]} : vector<4x8x200xf32> to vector<1x8x200xf32>
    %110 = vector.shape_cast %109 : vector<1x8x200xf32> to vector<8x200xf32>
    %111 = arith.truncf %110 : vector<8x200xf32> to vector<8x200xbf16>
    %c1_50 = arith.constant 1 : index
    %c0_51 = arith.constant 0 : index
    %c0_52 = arith.constant 0 : index
    %112 = vector.load %arg6[%c1_50, %c0_51, %c0_52] : memref<4x200x512xbf16, #tpu.memory_space<vmem>>, vector<1x200x512xbf16>
    %113 = vector.shape_cast %112 : vector<1x200x512xbf16> to vector<200x512xbf16>
    %cst_53 = arith.constant dense<0.000000e+00> : vector<8x512xf32>
    %114 = tpu.matmul %111, %113, %cst_53 {dimension_numbers = #tpu.dot_dimension_numbers<[1], [0], [0], [1], [0, 0, 1, 1], [], []>} : vector<8x200xbf16>, vector<200x512xbf16>, vector<8x512xf32> -> vector<8x512xf32>
    %115 = arith.addf %108, %114 : vector<8x512xf32>
    %116 = vector.extract_strided_slice %100 {offsets = [2, 0, 0], sizes = [1, 8, 200], strides = [1, 1, 1]} : vector<4x8x200xf32> to vector<1x8x200xf32>
    %117 = vector.shape_cast %116 : vector<1x8x200xf32> to vector<8x200xf32>
    %118 = arith.truncf %117 : vector<8x200xf32> to vector<8x200xbf16>
    %c2_54 = arith.constant 2 : index
    %c0_55 = arith.constant 0 : index
    %c0_56 = arith.constant 0 : index
    %119 = vector.load %arg6[%c2_54, %c0_55, %c0_56] : memref<4x200x512xbf16, #tpu.memory_space<vmem>>, vector<1x200x512xbf16>
    %120 = vector.shape_cast %119 : vector<1x200x512xbf16> to vector<200x512xbf16>
    %cst_57 = arith.constant dense<0.000000e+00> : vector<8x512xf32>
    %121 = tpu.matmul %118, %120, %cst_57 {dimension_numbers = #tpu.dot_dimension_numbers<[1], [0], [0], [1], [0, 0, 1, 1], [], []>} : vector<8x200xbf16>, vector<200x512xbf16>, vector<8x512xf32> -> vector<8x512xf32>
    %122 = arith.addf %115, %121 : vector<8x512xf32>
    %123 = vector.extract_strided_slice %100 {offsets = [3, 0, 0], sizes = [1, 8, 200], strides = [1, 1, 1]} : vector<4x8x200xf32> to vector<1x8x200xf32>
    %124 = vector.shape_cast %123 : vector<1x8x200xf32> to vector<8x200xf32>
    %125 = arith.truncf %124 : vector<8x200xf32> to vector<8x200xbf16>
    %c3_58 = arith.constant 3 : index
    %c0_59 = arith.constant 0 : index
    %c0_60 = arith.constant 0 : index
    %126 = vector.load %arg6[%c3_58, %c0_59, %c0_60] : memref<4x200x512xbf16, #tpu.memory_space<vmem>>, vector<1x200x512xbf16>
    %127 = vector.shape_cast %126 : vector<1x200x512xbf16> to vector<200x512xbf16>
    %cst_61 = arith.constant dense<0.000000e+00> : vector<8x512xf32>
    %128 = tpu.matmul %125, %127, %cst_61 {dimension_numbers = #tpu.dot_dimension_numbers<[1], [0], [0], [1], [0, 0, 1, 1], [], []>} : vector<8x200xbf16>, vector<200x512xbf16>, vector<8x512xf32> -> vector<8x512xf32>
    %129 = arith.addf %122, %128 : vector<8x512xf32>
    %c0_62 = arith.constant 0 : index
    %c0_63 = arith.constant 0 : index
    %130 = vector.load %arg7[%c0_62, %c0_63] : memref<1x512xf32, #tpu.memory_space<vmem>>, vector<1x512xf32>
    %131 = vector.broadcast %130 : vector<1x512xf32> to vector<8x512xf32>
    %132 = arith.addf %129, %131 : vector<8x512xf32>
    %cst_64 = arith.constant 0.000000e+00 : f32
    %133 = vector.broadcast %cst_64 : f32 to vector<8x512xf32>
    %134 = arith.maximumf %132, %133 : vector<8x512xf32>
    %135 = arith.truncf %134 : vector<8x512xf32> to vector<8x512xbf16>
    %c0_65 = arith.constant 0 : index
    %c0_66 = arith.constant 0 : index
    %136 = vector.load %arg8[%c0_65, %c0_66] : memref<512x128xbf16, #tpu.memory_space<vmem>>, vector<512x128xbf16>
    %cst_67 = arith.constant dense<0.000000e+00> : vector<8x128xf32>
    %137 = tpu.matmul %135, %136, %cst_67 {dimension_numbers = #tpu.dot_dimension_numbers<[1], [0], [0], [1], [0, 0, 1, 1], [], []>} : vector<8x512xbf16>, vector<512x128xbf16>, vector<8x128xf32> -> vector<8x128xf32>
    %c0_68 = arith.constant 0 : index
    %c0_69 = arith.constant 0 : index
    %138 = vector.load %arg9[%c0_68, %c0_69] : memref<1x128xf32, #tpu.memory_space<vmem>>, vector<1x128xf32>
    %139 = vector.broadcast %138 : vector<1x128xf32> to vector<8x128xf32>
    %140 = arith.addf %137, %139 : vector<8x128xf32>
    %cst_70 = arith.constant dense<0xFF800000> : vector<8xf32>
    %141 = vector.multi_reduction <maximumf>, %140, %cst_70 [1] : vector<8x128xf32> to vector<8xf32>
    %142 = vector.shape_cast %141 : vector<8xf32> to vector<8x1xf32>
    %143 = vector.broadcast %142 : vector<8x1xf32> to vector<8x128xf32>
    %144 = arith.subf %140, %143 : vector<8x128xf32>
    %145 = math.exp %144 : vector<8x128xf32>
    %cst_71 = arith.constant dense<0.000000e+00> : vector<8xf32>
    %146 = vector.multi_reduction <add>, %145, %cst_71 [1] : vector<8x128xf32> to vector<8xf32>
    %147 = vector.shape_cast %146 : vector<8xf32> to vector<8x1xf32>
    %148 = math.log %147 : vector<8x1xf32>
    %149 = vector.broadcast %148 : vector<8x1xf32> to vector<8x128xf32>
    %150 = arith.subf %144, %149 : vector<8x128xf32>
    %c0_72 = arith.constant 0 : index
    %c0_73 = arith.constant 0 : index
    %151 = vector.load %arg10[%c0_72, %c0_73] : memref<8x128xf32, #tpu.memory_space<vmem>>, vector<8x128xf32>
    tpu.vector_store %arg10[%c0_72, %c0_73], %150 {strides = array<i32>} : memref<8x128xf32, #tpu.memory_space<vmem>>, vector<8x128xf32>,
    return
  }
  func.func @transform_0(%arg0: i32) -> (i32, i32, i32) {
    %c0_i32 = arith.constant 0 : i32
    %c0_i32_0 = arith.constant 0 : i32
    %c0_i32_1 = arith.constant 0 : i32
    return %c0_i32, %arg0, %c0_i32_0 : i32, i32, i32
  }
  func.func @transform_1(%arg0: i32) -> (i32, i32, i32) {
    %c0_i32 = arith.constant 0 : i32
    %c0_i32_0 = arith.constant 0 : i32
    %c0_i32_1 = arith.constant 0 : i32
    %c0_i32_2 = arith.constant 0 : i32
    return %c0_i32, %c0_i32_0, %c0_i32_1 : i32, i32, i32
  }
  func.func @transform_2(%arg0: i32) -> (i32, i32) {
    %c0_i32 = arith.constant 0 : i32
    %c0_i32_0 = arith.constant 0 : i32
    %c0_i32_1 = arith.constant 0 : i32
    return %c0_i32, %c0_i32_0 : i32, i32
  }
  func.func @transform_3(%arg0: i32) -> (i32, i32, i32) {
    %c0_i32 = arith.constant 0 : i32
    %c0_i32_0 = arith.constant 0 : i32
    %c0_i32_1 = arith.constant 0 : i32
    %c0_i32_2 = arith.constant 0 : i32
    return %c0_i32, %c0_i32_0, %c0_i32_1 : i32, i32, i32
  }
  func.func @transform_4(%arg0: i32) -> (i32, i32) {
    %c0_i32 = arith.constant 0 : i32
    %c0_i32_0 = arith.constant 0 : i32
    %c0_i32_1 = arith.constant 0 : i32
    return %c0_i32, %c0_i32_0 : i32, i32
  }
  func.func @transform_5(%arg0: i32) -> (i32, i32, i32) {
    %c0_i32 = arith.constant 0 : i32
    %c0_i32_0 = arith.constant 0 : i32
    %c0_i32_1 = arith.constant 0 : i32
    %c0_i32_2 = arith.constant 0 : i32
    return %c0_i32, %c0_i32_0, %c0_i32_1 : i32, i32, i32
  }
  func.func @transform_6(%arg0: i32) -> (i32, i32) {
    %c0_i32 = arith.constant 0 : i32
    %c0_i32_0 = arith.constant 0 : i32
    %c0_i32_1 = arith.constant 0 : i32
    return %c0_i32, %c0_i32_0 : i32, i32
  }
  func.func @transform_7(%arg0: i32) -> (i32, i32) {
    %c0_i32 = arith.constant 0 : i32
    %c0_i32_0 = arith.constant 0 : i32
    %c0_i32_1 = arith.constant 0 : i32
    return %c0_i32, %c0_i32_0 : i32, i32
  }
  func.func @transform_8(%arg0: i32) -> (i32, i32) {
    %c0_i32 = arith.constant 0 : i32
    %c0_i32_0 = arith.constant 0 : i32
    %c0_i32_1 = arith.constant 0 : i32
    return %c0_i32, %c0_i32_0 : i32, i32
  }
  func.func @transform_9(%arg0: i32) -> (i32, i32) {
    %c0_i32 = arith.constant 0 : i32
    %c0_i32_0 = arith.constant 0 : i32
    return %arg0, %c0_i32 : i32, i32
  }
}

</mosaic_0001>

<llo_original>
// kernel: cnn_mnist_forward.1
$region0: #{cnn_mnist_forward.1}
  #allocation0 [shape = 'u32[]', space=smem, size = 0x4, offset = 0x4, fixed_abs, tag = 'smem constant byte address 0x4 - core index']
  #allocation1 [shape = 'u32[144,128]{1,0:T(1,128)}', space=vmem, size = 0x12000, scoped, tag = 'internal scratch']
  %s0 = inlined_call_operand.vmem [shape: f32[28,8,32], index: 0, kind: input, shape index: {}]
  %s1 = inlined_call_operand.vmem [shape: bf16[5,32,480], index: 1, kind: input, shape index: {}]
  %s2 = inlined_call_operand.vmem [shape: f32[1,480], index: 2, kind: input, shape index: {}]
  %s3 = inlined_call_operand.vmem [shape: bf16[5,240,400], index: 3, kind: input, shape index: {}]
  %s4 = inlined_call_operand.vmem [shape: f32[1,400], index: 4, kind: input, shape index: {}]
  %s5 = inlined_call_operand.vmem [shape: bf16[4,200,512], index: 5, kind: input, shape index: {}]
  %s6 = inlined_call_operand.vmem [shape: f32[1,512], index: 6, kind: input, shape index: {}]
  %s7 = inlined_call_operand.vmem [shape: bf16[512,128], index: 7, kind: input, shape index: {}]
  %s8 = inlined_call_operand.vmem [shape: f32[1,128], index: 8, kind: input, shape index: {}]
  %s9 = inlined_call_operand.vmem [shape: f32[8,128], index: 9, kind: output, shape index: {}]
  %s10 = sld [smem:[#allocation0]]
  $region46: #{cnn_mnist_forward.1} parent=0
    _
  %s12 = ssub.s32 1, %s10
  %s13 = scalar_select 0, %s12, %s10
  // Predicated region
  $region2: #{cnn_mnist_forward.1} parent=0 // pred_check
    _
  $region3: #{cnn_mnist_forward.1} parent=0 // pred_check_branch
    %15 = sbr.rel (0) target = $region5
  $region4: #{cnn_mnist_forward.1} parent=0 // pred_region
    _
  $region5: #{cnn_mnist_forward.1} parent=0 // pred_fallthru
    _
  // Predicated region
  $region6: #{cnn_mnist_forward.1} parent=0 // pred_check
    _
  $region7: #{cnn_mnist_forward.1} parent=0 // pred_check_branch
    %17 = sbr.rel (0) target = $region9
  $region8: #{cnn_mnist_forward.1} parent=0 // pred_region
    _
  $region9: #{cnn_mnist_forward.1} parent=0 // pred_fallthru
    _
  // Predicated region
  $region10: #{cnn_mnist_forward.1} parent=0 // pred_check
    _
  $region11: #{cnn_mnist_forward.1} parent=0 // pred_check_branch
    %19 = sbr.rel (0) target = $region13
  $region12: #{cnn_mnist_forward.1} parent=0 // pred_region
    _
  $region13: #{cnn_mnist_forward.1} parent=0 // pred_fallthru
    _
  // Predicated region
  $region14: #{cnn_mnist_forward.1} parent=0 // pred_check
    _
  $region15: #{cnn_mnist_forward.1} parent=0 // pred_check_branch
    %21 = sbr.rel (0) target = $region17
  $region16: #{cnn_mnist_forward.1} parent=0 // pred_region
    _
  $region17: #{cnn_mnist_forward.1} parent=0 // pred_fallthru
    _
  // Predicated region
  $region18: #{cnn_mnist_forward.1} parent=0 // pred_check
    _
  $region19: #{cnn_mnist_forward.1} parent=0 // pred_check_branch
    %23 = sbr.rel (0) target = $region21
  $region20: #{cnn_mnist_forward.1} parent=0 // pred_region
    _
  $region21: #{cnn_mnist_forward.1} parent=0 // pred_fallthru
    _
  // Predicated region
  $region22: #{cnn_mnist_forward.1} parent=0 // pred_check
    _
  $region23: #{cnn_mnist_forward.1} parent=0 // pred_check_branch
    %25 = sbr.rel (0) target = $region25
  $region24: #{cnn_mnist_forward.1} parent=0 // pred_region
    _
  $region25: #{cnn_mnist_forward.1} parent=0 // pred_fallthru
    _
  // Predicated region
  $region26: #{cnn_mnist_forward.1} parent=0 // pred_check
    _
  $region27: #{cnn_mnist_forward.1} parent=0 // pred_check_branch
    %27 = sbr.rel (0) target = $region29
  $region28: #{cnn_mnist_forward.1} parent=0 // pred_region
    _
  $region29: #{cnn_mnist_forward.1} parent=0 // pred_fallthru
    _
  // Predicated region
  $region30: #{cnn_mnist_forward.1} parent=0 // pred_check
    _
  $region31: #{cnn_mnist_forward.1} parent=0 // pred_check_branch
    %29 = sbr.rel (0) target = $region33
  $region32: #{cnn_mnist_forward.1} parent=0 // pred_region
    _
  $region33: #{cnn_mnist_forward.1} parent=0 // pred_fallthru
    _
  // Predicated region
  $region34: #{cnn_mnist_forward.1} parent=0 // pred_check
    _
  $region35: #{cnn_mnist_forward.1} parent=0 // pred_check_branch
    %31 = sbr.rel (0) target = $region37
  $region36: #{cnn_mnist_forward.1} parent=0 // pred_region
    _
  $region37: #{cnn_mnist_forward.1} parent=0 // pred_fallthru
    _
  %v33 = vld [vmem:[%s0] sm:$0xff]
  %v34 = vld [vmem:[%s0 + $0x8] sm:$0xff]
  %v35 = vld [vmem:[%s0 + $0x10] sm:$0xff]
  %v36 = vld [vmem:[%s0 + $0x18] sm:$0xff]
  %v37 = vld [vmem:[%s0 + $0x20] sm:$0xff]
  %v38 = vld [vmem:[%s0 + $0x28] sm:$0xff]
  %v39 = vld [vmem:[%s0 + $0x30] sm:$0xff]
  %v40 = vld [vmem:[%s0 + $0x38] sm:$0xff]
  %v41 = vld [vmem:[%s0 + $0x40] sm:$0xff]
  %v42 = vld [vmem:[%s0 + $0x48] sm:$0xff]
  %v43 = vld [vmem:[%s0 + $0x50] sm:$0xff]
  %v44 = vld [vmem:[%s0 + $0x58] sm:$0xff]
  %v45 = vld [vmem:[%s0 + $0x60] sm:$0xff]
  %v46 = vld [vmem:[%s0 + $0x68] sm:$0xff]
  %v47 = vld [vmem:[%s0 + $0x70] sm:$0xff]
  %v48 = vld [vmem:[%s0 + $0x78] sm:$0xff]
  %v49 = vld [vmem:[%s0 + $0x80] sm:$0xff]
  %v50 = vld [vmem:[%s0 + $0x88] sm:$0xff]
  %v51 = vld [vmem:[%s0 + $0x90] sm:$0xff]
  %v52 = vld [vmem:[%s0 + $0x98] sm:$0xff]
  %v53 = vld [vmem:[%s0 + $0xa0] sm:$0xff]
  %v54 = vld [vmem:[%s0 + $0xa8] sm:$0xff]
  %v55 = vld [vmem:[%s0 + $0xb0] sm:$0xff]
  %v56 = vld [vmem:[%s0 + $0xb8] sm:$0xff]
  %v57 = vld [vmem:[%s0 + $0xc0] sm:$0xff]
  %v58 = vld [vmem:[%s0 + $0xc8] sm:$0xff]
  %v59 = vld [vmem:[%s0 + $0xd0] sm:$0xff]
  %v60 = vld [vmem:[%s0 + $0xd8] sm:$0xff]
  %v61 = vpack.c.bf16 %v34, %v33
  %v62 = vpack.c.bf16 %v36, %v35
  %v63 = vpack.c.bf16 %v38, %v37
  %v64 = vpack.c.bf16 %v40, %v39
  %v65 = vpack.c.bf16 %v42, %v41
  %v66 = vpack.c.bf16 %v44, %v43
  %v67 = vpack.c.bf16 %v46, %v45
  %v68 = vpack.c.bf16 %v48, %v47
  %v69 = vpack.c.bf16 %v50, %v49
  %v70 = vpack.c.bf16 %v52, %v51
  %v71 = vpack.c.bf16 %v54, %v53
  %v72 = vpack.c.bf16 %v56, %v55
  %v73 = vld [vmem:[%s1] sm:$0xff]
  %v74 = vld [vmem:[%s1 + $0x8] sm:$0xff]
  %v75 = vld [vmem:[%s1 + $0x10] sm:$0xff]
  %v76 = vld [vmem:[%s1 + $0x18] sm:$0xff]
  %v77 = vld [vmem:[%s1 + $0x20] sm:$0xff]
  %v78 = vld [vmem:[%s1 + $0x28] sm:$0xff]
  %v79 = vld [vmem:[%s1 + $0x30] sm:$0xff]
  %v80 = vld [vmem:[%s1 + $0x38] sm:$0xff]
  %v81 = vpack.c.bf16 %v35, %v34
  %v82 = vpack.c.bf16 %v37, %v36
  %v83 = vpack.c.bf16 %v39, %v38
  %v84 = vpack.c.bf16 %v41, %v40
  %v85 = vpack.c.bf16 %v43, %v42
  %v86 = vpack.c.bf16 %v45, %v44
  %v87 = vpack.c.bf16 %v47, %v46
  %v88 = vpack.c.bf16 %v49, %v48
  %v89 = vpack.c.bf16 %v51, %v50
  %v90 = vpack.c.bf16 %v53, %v52
  %v91 = vpack.c.bf16 %v55, %v54
  %v92 = vpack.c.bf16 %v57, %v56
  %s93 = scalar_lea.vmem %s1, 64
  %v94 = vld [vmem:[%s93] sm:$0xff]
  %v95 = vld [vmem:[%s93 + $0x8] sm:$0xff]
  %v96 = vld [vmem:[%s93 + $0x10] sm:$0xff]
  %v97 = vld [vmem:[%s93 + $0x18] sm:$0xff]
  %v98 = vld [vmem:[%s93 + $0x20] sm:$0xff]
  %v99 = vld [vmem:[%s93 + $0x28] sm:$0xff]
  %v100 = vld [vmem:[%s93 + $0x30] sm:$0xff]
  %v101 = vld [vmem:[%s93 + $0x38] sm:$0xff]
  %v110 = vunpack.c.l.b16 %v94
  %v111 = vunpack.c.h.b16 %v94
  %v112 = vunpack.c.l.b16 %v95
  %v113 = vunpack.c.h.b16 %v95
  %v114 = vunpack.c.l.b16 %v96
  %v115 = vunpack.c.h.b16 %v96
  %v116 = vunpack.c.l.b16 %v97
  %v117 = vunpack.c.h.b16 %v97
  %v118 = vunpack.c.l.b16 %v98
  %v119 = vunpack.c.h.b16 %v98
  %v120 = vunpack.c.l.b16 %v99
  %v121 = vunpack.c.h.b16 %v99
  %v122 = vunpack.c.l.b16 %v100
  %v123 = vunpack.c.h.b16 %v100
  %v124 = vunpack.c.l.b16 %v101
  %v125 = vunpack.c.h.b16 %v101
  %v126 = vpack.c.b16 %v114, %v110
  %v127 = vpack.c.b16 %v115, %v111
  %v128 = vpack.c.b16 %v116, %v112
  %v129 = vpack.c.b16 %v117, %v113
  %v130 = vpack.c.b16 %v122, %v118
  %v131 = vpack.c.b16 %v123, %v119
  %v132 = vpack.c.b16 %v124, %v120
  %v133 = vpack.c.b16 %v125, %v121
  %vm142 = vcmask 261120
  %v144 = vsel %vm142, %v81, 0
  %v147 = vsel %vm142, %v82, 0
  %v150 = vsel %vm142, %v83, 0
  %v153 = vsel %vm142, %v84, 0
  %v156 = vsel %vm142, %v85, 0
  %v159 = vsel %vm142, %v86, 0
  %v162 = vsel %vm142, %v87, 0
  %v165 = vsel %vm142, %v88, 0
  %v168 = vsel %vm142, %v89, 0
  %v171 = vsel %vm142, %v90, 0
  %v174 = vsel %vm142, %v91, 0
  %v177 = vsel %vm142, %v92, 0
  %179 = vmatprep.subr.bf16.mxu0 %v127
  %180 = vmatpush1.bf16.msra.mxu0 %v126
  %181 = vmatprep.subr.bf16.mxu0 %v131
  %182 = vmatpush1.bf16.msra.mxu0 %v130
  %183 = vmatprep.subr.bf16.mxu0 0
  %184 = vmatpush1.bf16.msra.mxu0 0
  %185 = vmatprep.subr.bf16.mxu0 0
  %186 = vmatpush1.bf16.msra.mxu0 0
  %187 = vmatprep.subr.bf16.mxu0 0
  %188 = vmatpush1.bf16.msra.mxu0 0
  %189 = vmatprep.subr.bf16.mxu0 0
  %190 = vmatpush1.bf16.msra.mxu0 0
  %191 = vmatprep.subr.bf16.mxu0 0
  %192 = vmatpush1.bf16.msra.mxu0 0
  %193 = vmatprep.subr.bf16.mxu0 0
  %194 = vmatpush1.bf16.msra.mxu0 0
  %195 = vmatprep.subr.bf16.mxu0 0
  %196 = vmatpush1.bf16.msra.mxu0 0
  %197 = vmatprep.subr.bf16.mxu0 0
  %198 = vmatpush1.bf16.msra.mxu0 0
  %199 = vmatprep.subr.bf16.mxu0 0
  %200 = vmatpush1.bf16.msra.mxu0 0
  %201 = vmatprep.subr.bf16.mxu0 0
  %202 = vmatpush1.bf16.msra.mxu0 0
  %203 = vmatprep.subr.bf16.mxu0 0
  %204 = vmatpush1.bf16.msra.mxu0 0
  %205 = vmatprep.subr.bf16.mxu0 0
  %206 = vmatpush1.bf16.msra.mxu0 0
  %207 = vmatprep.subr.bf16.mxu0 0
  %208 = vmatpush1.bf16.msra.mxu0 0
  %209 = vmatprep.subr.bf16.mxu0 0
  %210 = vmatpush1.bf16.msra.mxu0 0
  %211 = vmatprep.mubr.bf16.mxu0 0
  %212 = vmatmul.mubr.bf16.gmra.mrb[0].mxu0 %v144
  %v213 = vpop.f32.mrb[0].mxu0
  %v214 = vadd.f32 0.0, %v213
  %v215 = vpop.f32.mrb[0].mxu0
  %v216 = vadd.f32 0.0, %v215
  %v217 = vpop.f32.mrb[0].mxu0
  %v218 = vadd.f32 0.0, %v217
  %v219 = vpop.f32.mrb[0].mxu0
  %v220 = vadd.f32 0.0, %v219
  %221 = vmatprep.mubr.bf16.mxu0 0
  %222 = vmatmul.mubr.bf16.gmra.mrb[0].mxu0 %v147
  %v223 = vpop.f32.mrb[0].mxu0
  %v224 = vadd.f32 0.0, %v223
  %v225 = vpop.f32.mrb[0].mxu0
  %v226 = vadd.f32 0.0, %v225
  %v227 = vpop.f32.mrb[0].mxu0
  %v228 = vadd.f32 0.0, %v227
  %v229 = vpop.f32.mrb[0].mxu0
  %v230 = vadd.f32 0.0, %v229
  %231 = vmatprep.mubr.bf16.mxu0 0
  %232 = vmatmul.mubr.bf16.gmra.mrb[0].mxu0 %v150
  %v233 = vpop.f32.mrb[0].mxu0
  %v234 = vadd.f32 0.0, %v233
  %v235 = vpop.f32.mrb[0].mxu0
  %v236 = vadd.f32 0.0, %v235
  %v237 = vpop.f32.mrb[0].mxu0
  %v238 = vadd.f32 0.0, %v237
  %v239 = vpop.f32.mrb[0].mxu0
  %v240 = vadd.f32 0.0, %v239
  %241 = vmatprep.mubr.bf16.mxu0 0
  %242 = vmatmul.mubr.bf16.gmra.mrb[0].mxu0 %v153
  %v243 = vpop.f32.mrb[0].mxu0
  %v244 = vadd.f32 0.0, %v243
  %v245 = vpop.f32.mrb[0].mxu0
  %v246 = vadd.f32 0.0, %v245
  %v247 = vpop.f32.mrb[0].mxu0
  %v248 = vadd.f32 0.0, %v247
  %v249 = vpop.f32.mrb[0].mxu0
  %v250 = vadd.f32 0.0, %v249
  %251 = vmatprep.mubr.bf16.mxu0 0
  %252 = vmatmul.mubr.bf16.gmra.mrb[0].mxu0 %v156
  %v253 = vpop.f32.mrb[0].mxu0
  %v254 = vadd.f32 0.0, %v253
  %v255 = vpop.f32.mrb[0].mxu0
  %v256 = vadd.f32 0.0, %v255
  %v257 = vpop.f32.mrb[0].mxu0
  %v258 = vadd.f32 0.0, %v257
  %v259 = vpop.f32.mrb[0].mxu0
  %v260 = vadd.f32 0.0, %v259
  %261 = vmatprep.mubr.bf16.mxu0 0
  %262 = vmatmul.mubr.bf16.gmra.mrb[0].mxu0 %v159
  %v263 = vpop.f32.mrb[0].mxu0
  %v264 = vadd.f32 0.0, %v263
  %v265 = vpop.f32.mrb[0].mxu0
  %v266 = vadd.f32 0.0, %v265
  %v267 = vpop.f32.mrb[0].mxu0
  %v268 = vadd.f32 0.0, %v267
  %v269 = vpop.f32.mrb[0].mxu0
  %v270 = vadd.f32 0.0, %v269
  %271 = vmatprep.mubr.bf16.mxu0 0
  %272 = vmatmul.mubr.bf16.gmra.mrb[0].mxu0 %v162
  %v273 = vpop.f32.mrb[0].mxu0
  %v274 = vadd.f32 0.0, %v273
  %v275 = vpop.f32.mrb[0].mxu0
  %v276 = vadd.f32 0.0, %v275
  %v277 = vpop.f32.mrb[0].mxu0
  %v278 = vadd.f32 0.0, %v277
  %v279 = vpop.f32.mrb[0].mxu0
  %v280 = vadd.f32 0.0, %v279
  %281 = vmatprep.mubr.bf16.mxu0 0
  %282 = vmatmul.mubr.bf16.gmra.mrb[0].mxu0 %v165
  %v283 = vpop.f32.mrb[0].mxu0
  %v284 = vadd.f32 0.0, %v283
  %v285 = vpop.f32.mrb[0].mxu0
  %v286 = vadd.f32 0.0, %v285
  %v287 = vpop.f32.mrb[0].mxu0
  %v288 = vadd.f32 0.0, %v287
  %v289 = vpop.f32.mrb[0].mxu0
  %v290 = vadd.f32 0.0, %v289
  %291 = vmatprep.mubr.bf16.mxu0 0
  %292 = vmatmul.mubr.bf16.gmra.mrb[0].mxu0 %v168
  %v293 = vpop.f32.mrb[0].mxu0
  %v294 = vadd.f32 0.0, %v293
  %v295 = vpop.f32.mrb[0].mxu0
  %v296 = vadd.f32 0.0, %v295
  %v297 = vpop.f32.mrb[0].mxu0
  %v298 = vadd.f32 0.0, %v297
  %v299 = vpop.f32.mrb[0].mxu0
  %v300 = vadd.f32 0.0, %v299
  %301 = vmatprep.mubr.bf16.mxu0 0
  %302 = vmatmul.mubr.bf16.gmra.mrb[0].mxu0 %v171
  %v303 = vpop.f32.mrb[0].mxu0
  %v304 = vadd.f32 0.0, %v303
  %v305 = vpop.f32.mrb[0].mxu0
  %v306 = vadd.f32 0.0, %v305
  %v307 = vpop.f32.mrb[0].mxu0
  %v308 = vadd.f32 0.0, %v307
  %v309 = vpop.f32.mrb[0].mxu0
  %v310 = vadd.f32 0.0, %v309
  %311 = vmatprep.mubr.bf16.mxu0 0
  %312 = vmatmul.mubr.bf16.gmra.mrb[0].mxu0 %v174
  %v313 = vpop.f32.mrb[0].mxu0
  %v314 = vadd.f32 0.0, %v313
  %v315 = vpop.f32.mrb[0].mxu0
  %v316 = vadd.f32 0.0, %v315
  %v317 = vpop.f32.mrb[0].mxu0
  %v318 = vadd.f32 0.0, %v317
  %v319 = vpop.f32.mrb[0].mxu0
  %v320 = vadd.f32 0.0, %v319
  %321 = vmatprep.mubr.bf16.mxu0 0
  %322 = vmatmul.mubr.bf16.gmra.mrb[0].mxu0 %v177
  %v323 = vpop.f32.mrb[0].mxu0
  %v324 = vadd.f32 0.0, %v323
  %v325 = vpop.f32.mrb[0].mxu0
  %v326 = vadd.f32 0.0, %v325
  %v327 = vpop.f32.mrb[0].mxu0
  %v328 = vadd.f32 0.0, %v327
  %v329 = vpop.f32.mrb[0].mxu0
  %v330 = vadd.f32 0.0, %v329
  %331 = vdwg.mxu0
  %332 = vmatprep.subr.bf16.mxu0 %v129
  %333 = vmatpush1.bf16.msra.mxu0 %v128
  %334 = vmatprep.subr.bf16.mxu0 %v133
  %335 = vmatpush1.bf16.msra.mxu0 %v132
  %336 = vmatprep.subr.bf16.mxu0 0
  %337 = vmatpush1.bf16.msra.mxu0 0
  %338 = vmatprep.subr.bf16.mxu0 0
  %339 = vmatpush1.bf16.msra.mxu0 0
  %340 = vmatprep.subr.bf16.mxu0 0
  %341 = vmatpush1.bf16.msra.mxu0 0
  %342 = vmatprep.subr.bf16.mxu0 0
  %343 = vmatpush1.bf16.msra.mxu0 0
  %344 = vmatprep.subr.bf16.mxu0 0
  %345 = vmatpush1.bf16.msra.mxu0 0
  %346 = vmatprep.subr.bf16.mxu0 0
  %347 = vmatpush1.bf16.msra.mxu0 0
  %348 = vmatprep.subr.bf16.mxu0 0
  %349 = vmatpush1.bf16.msra.mxu0 0
  %350 = vmatprep.subr.bf16.mxu0 0
  %351 = vmatpush1.bf16.msra.mxu0 0
  %352 = vmatprep.subr.bf16.mxu0 0
  %353 = vmatpush1.bf16.msra.mxu0 0
  %354 = vmatprep.subr.bf16.mxu0 0
  %355 = vmatpush1.bf16.msra.mxu0 0
  %356 = vmatprep.subr.bf16.mxu0 0
  %357 = vmatpush1.bf16.msra.mxu0 0
  %358 = vmatprep.subr.bf16.mxu0 0
  %359 = vmatpush1.bf16.msra.mxu0 0
  %360 = vmatprep.subr.bf16.mxu0 0
  %361 = vmatpush1.bf16.msra.mxu0 0
  %362 = vmatprep.subr.bf16.mxu0 0
  %363 = vmatpush1.bf16.msra.mxu0 0
  %364 = vmatprep.mubr.bf16.mxu0 0
  %365 = vmatmul.mubr.bf16.gmra.mrb[0].mxu0 %v144
  %v366 = vpop.f32.mrb[0].mxu0
  %v367 = vadd.f32 0.0, %v366
  %v368 = vpop.f32.mrb[0].mxu0
  %v369 = vadd.f32 0.0, %v368
  %v370 = vpop.f32.mrb[0].mxu0
  %v371 = vadd.f32 0.0, %v370
  %v372 = vpop.f32.mrb[0].mxu0
  %v373 = vadd.f32 0.0, %v372
  %374 = vmatprep.mubr.bf16.mxu0 0
  %375 = vmatmul.mubr.bf16.gmra.mrb[0].mxu0 %v147
  %v376 = vpop.f32.mrb[0].mxu0
  %v377 = vadd.f32 0.0, %v376
  %v378 = vpop.f32.mrb[0].mxu0
  %v379 = vadd.f32 0.0, %v378
  %v380 = vpop.f32.mrb[0].mxu0
  %v381 = vadd.f32 0.0, %v380
  %v382 = vpop.f32.mrb[0].mxu0
  %v383 = vadd.f32 0.0, %v382
  %384 = vmatprep.mubr.bf16.mxu0 0
  %385 = vmatmul.mubr.bf16.gmra.mrb[0].mxu0 %v150
  %v386 = vpop.f32.mrb[0].mxu0
  %v387 = vadd.f32 0.0, %v386
  %v388 = vpop.f32.mrb[0].mxu0
  %v389 = vadd.f32 0.0, %v388
  %v390 = vpop.f32.mrb[0].mxu0
  %v391 = vadd.f32 0.0, %v390
  %v392 = vpop.f32.mrb[0].mxu0
  %v393 = vadd.f32 0.0, %v392
  %394 = vmatprep.mubr.bf16.mxu0 0
  %395 = vmatmul.mubr.bf16.gmra.mrb[0].mxu0 %v153
  %v396 = vpop.f32.mrb[0].mxu0
  %v397 = vadd.f32 0.0, %v396
  %v398 = vpop.f32.mrb[0].mxu0
  %v399 = vadd.f32 0.0, %v398
  %v400 = vpop.f32.mrb[0].mxu0
  %v401 = vadd.f32 0.0, %v400
  %v402 = vpop.f32.mrb[0].mxu0
  %v403 = vadd.f32 0.0, %v402
  %404 = vmatprep.mubr.bf16.mxu0 0
  %405 = vmatmul.mubr.bf16.gmra.mrb[0].mxu0 %v156
  %v406 = vpop.f32.mrb[0].mxu0
  %v407 = vadd.f32 0.0, %v406
  %v408 = vpop.f32.mrb[0].mxu0
  %v409 = vadd.f32 0.0, %v408
  %v410 = vpop.f32.mrb[0].mxu0
  %v411 = vadd.f32 0.0, %v410
  %v412 = vpop.f32.mrb[0].mxu0
  %v413 = vadd.f32 0.0, %v412
  %414 = vmatprep.mubr.bf16.mxu0 0
  %415 = vmatmul.mubr.bf16.gmra.mrb[0].mxu0 %v159
  %v416 = vpop.f32.mrb[0].mxu0
  %v417 = vadd.f32 0.0, %v416
  %v418 = vpop.f32.mrb[0].mxu0
  %v419 = vadd.f32 0.0, %v418
  %v420 = vpop.f32.mrb[0].mxu0
  %v421 = vadd.f32 0.0, %v420
  %v422 = vpop.f32.mrb[0].mxu0
  %v423 = vadd.f32 0.0, %v422
  %424 = vmatprep.mubr.bf16.mxu0 0
  %425 = vmatmul.mubr.bf16.gmra.mrb[0].mxu0 %v162
  %v426 = vpop.f32.mrb[0].mxu0
  %v427 = vadd.f32 0.0, %v426
  %v428 = vpop.f32.mrb[0].mxu0
  %v429 = vadd.f32 0.0, %v428
  %v430 = vpop.f32.mrb[0].mxu0
  %v431 = vadd.f32 0.0, %v430
  %v432 = vpop.f32.mrb[0].mxu0
  %v433 = vadd.f32 0.0, %v432
  %434 = vmatprep.mubr.bf16.mxu0 0
  %435 = vmatmul.mubr.bf16.gmra.mrb[0].mxu0 %v165
  %v436 = vpop.f32.mrb[0].mxu0
  %v437 = vadd.f32 0.0, %v436
  %v438 = vpop.f32.mrb[0].mxu0
  %v439 = vadd.f32 0.0, %v438
  %v440 = vpop.f32.mrb[0].mxu0
  %v441 = vadd.f32 0.0, %v440
  %v442 = vpop.f32.mrb[0].mxu0
  %v443 = vadd.f32 0.0, %v442
  %444 = vmatprep.mubr.bf16.mxu0 0
  %445 = vmatmul.mubr.bf16.gmra.mrb[0].mxu0 %v168
  %v446 = vpop.f32.mrb[0].mxu0
  %v447 = vadd.f32 0.0, %v446
  %v448 = vpop.f32.mrb[0].mxu0
  %v449 = vadd.f32 0.0, %v448
  %v450 = vpop.f32.mrb[0].mxu0
  %v451 = vadd.f32 0.0, %v450
  %v452 = vpop.f32.mrb[0].mxu0
  %v453 = vadd.f32 0.0, %v452
  %454 = vmatprep.mubr.bf16.mxu0 0
  %455 = vmatmul.mubr.bf16.gmra.mrb[0].mxu0 %v171
  %v456 = vpop.f32.mrb[0].mxu0
  %v457 = vadd.f32 0.0, %v456
  %v458 = vpop.f32.mrb[0].mxu0
  %v459 = vadd.f32 0.0, %v458
  %v460 = vpop.f32.mrb[0].mxu0
  %v461 = vadd.f32 0.0, %v460
  %v462 = vpop.f32.mrb[0].mxu0
  %v463 = vadd.f32 0.0, %v462
  %464 = vmatprep.mubr.bf16.mxu0 0
  %465 = vmatmul.mubr.bf16.gmra.mrb[0].mxu0 %v174
  %v466 = vpop.f32.mrb[0].mxu0
  %v467 = vadd.f32 0.0, %v466
  %v468 = vpop.f32.mrb[0].mxu0
  %v469 = vadd.f32 0.0, %v468
  %v470 = vpop.f32.mrb[0].mxu0
  %v471 = vadd.f32 0.0, %v470
  %v472 = vpop.f32.mrb[0].mxu0
  %v473 = vadd.f32 0.0, %v472
  %474 = vmatprep.mubr.bf16.mxu0 0
  %475 = vmatmul.mubr.bf16.gmra.mrb[0].mxu0 %v177
  %v476 = vpop.f32.mrb[0].mxu0
  %v477 = vadd.f32 0.0, %v476
  %v478 = vpop.f32.mrb[0].mxu0
  %v479 = vadd.f32 0.0, %v478
  %v480 = vpop.f32.mrb[0].mxu0
  %v481 = vadd.f32 0.0, %v480
  %v482 = vpop.f32.mrb[0].mxu0
  %v483 = vadd.f32 0.0, %v482
  %484 = vdwg.mxu0
  %v493 = vunpack.c.l.b16 %v73
  %v494 = vunpack.c.h.b16 %v73
  %v495 = vunpack.c.l.b16 %v74
  %v496 = vunpack.c.h.b16 %v74
  %v497 = vunpack.c.l.b16 %v75
  %v498 = vunpack.c.h.b16 %v75
  %v499 = vunpack.c.l.b16 %v76
  %v500 = vunpack.c.h.b16 %v76
  %v501 = vunpack.c.l.b16 %v77
  %v502 = vunpack.c.h.b16 %v77
  %v503 = vunpack.c.l.b16 %v78
  %v504 = vunpack.c.h.b16 %v78
  %v505 = vunpack.c.l.b16 %v79
  %v506 = vunpack.c.h.b16 %v79
  %v507 = vunpack.c.l.b16 %v80
  %v508 = vunpack.c.h.b16 %v80
  %v509 = vpack.c.b16 %v497, %v493
  %v510 = vpack.c.b16 %v498, %v494
  %v511 = vpack.c.b16 %v499, %v495
  %v512 = vpack.c.b16 %v500, %v496
  %v513 = vpack.c.b16 %v505, %v501
  %v514 = vpack.c.b16 %v506, %v502
  %v515 = vpack.c.b16 %v507, %v503
  %v516 = vpack.c.b16 %v508, %v504
  %v526 = vsel %vm142, %v61, 0
  %v529 = vsel %vm142, %v62, 0
  %v532 = vsel %vm142, %v63, 0
  %v535 = vsel %vm142, %v64, 0
  %v538 = vsel %vm142, %v65, 0
  %v541 = vsel %vm142, %v66, 0
  %v544 = vsel %vm142, %v67, 0
  %v547 = vsel %vm142, %v68, 0
  %v550 = vsel %vm142, %v69, 0
  %v553 = vsel %vm142, %v70, 0
  %v556 = vsel %vm142, %v71, 0
  %v559 = vsel %vm142, %v72, 0
  %561 = vmatprep.subr.bf16.mxu0 %v510
  %562 = vmatpush1.bf16.msra.mxu0 %v509
  %563 = vmatprep.subr.bf16.mxu0 %v514
  %564 = vmatpush1.bf16.msra.mxu0 %v513
  %565 = vmatprep.subr.bf16.mxu0 0
  %566 = vmatpush1.bf16.msra.mxu0 0
  %567 = vmatprep.subr.bf16.mxu0 0
  %568 = vmatpush1.bf16.msra.mxu0 0
  %569 = vmatprep.subr.bf16.mxu0 0
  %570 = vmatpush1.bf16.msra.mxu0 0
  %571 = vmatprep.subr.bf16.mxu0 0
  %572 = vmatpush1.bf16.msra.mxu0 0
  %573 = vmatprep.subr.bf16.mxu0 0
  %574 = vmatpush1.bf16.msra.mxu0 0
  %575 = vmatprep.subr.bf16.mxu0 0
  %576 = vmatpush1.bf16.msra.mxu0 0
  %577 = vmatprep.subr.bf16.mxu0 0
  %578 = vmatpush1.bf16.msra.mxu0 0
  %579 = vmatprep.subr.bf16.mxu0 0
  %580 = vmatpush1.bf16.msra.mxu0 0
  %581 = vmatprep.subr.bf16.mxu0 0
  %582 = vmatpush1.bf16.msra.mxu0 0
  %583 = vmatprep.subr.bf16.mxu0 0
  %584 = vmatpush1.bf16.msra.mxu0 0
  %585 = vmatprep.subr.bf16.mxu0 0
  %586 = vmatpush1.bf16.msra.mxu0 0
  %587 = vmatprep.subr.bf16.mxu0 0
  %588 = vmatpush1.bf16.msra.mxu0 0
  %589 = vmatprep.subr.bf16.mxu0 0
  %590 = vmatpush1.bf16.msra.mxu0 0
  %591 = vmatprep.subr.bf16.mxu0 0
  %592 = vmatpush1.bf16.msra.mxu0 0
  %593 = vmatprep.mubr.bf16.mxu0 0
  %594 = vmatmul.mubr.bf16.gmra.mrb[0].mxu0 %v526
  %v595 = vpop.f32.mrb[0].mxu0
  %v596 = vadd.f32 %v214, %v595
  %v597 = vpop.f32.mrb[0].mxu0
  %v598 = vadd.f32 %v216, %v597
  %v599 = vpop.f32.mrb[0].mxu0
  %v600 = vadd.f32 %v218, %v599
  %v601 = vpop.f32.mrb[0].mxu0
  %v602 = vadd.f32 %v220, %v601
  %603 = vmatprep.mubr.bf16.mxu0 0
  %604 = vmatmul.mubr.bf16.gmra.mrb[0].mxu0 %v529
  %v605 = vpop.f32.mrb[0].mxu0
  %v606 = vadd.f32 %v224, %v605
  %v607 = vpop.f32.mrb[0].mxu0
  %v608 = vadd.f32 %v226, %v607
  %v609 = vpop.f32.mrb[0].mxu0
  %v610 = vadd.f32 %v228, %v609
  %v611 = vpop.f32.mrb[0].mxu0
  %v612 = vadd.f32 %v230, %v611
  %613 = vmatprep.mubr.bf16.mxu0 0
  %614 = vmatmul.mubr.bf16.gmra.mrb[0].mxu0 %v532
  %v615 = vpop.f32.mrb[0].mxu0
  %v616 = vadd.f32 %v234, %v615
  %v617 = vpop.f32.mrb[0].mxu0
  %v618 = vadd.f32 %v236, %v617
  %v619 = vpop.f32.mrb[0].mxu0
  %v620 = vadd.f32 %v238, %v619
  %v621 = vpop.f32.mrb[0].mxu0
  %v622 = vadd.f32 %v240, %v621
  %623 = vmatprep.mubr.bf16.mxu0 0
  %624 = vmatmul.mubr.bf16.gmra.mrb[0].mxu0 %v535
  %v625 = vpop.f32.mrb[0].mxu0
  %v626 = vadd.f32 %v244, %v625
  %v627 = vpop.f32.mrb[0].mxu0
  %v628 = vadd.f32 %v246, %v627
  %v629 = vpop.f32.mrb[0].mxu0
  %v630 = vadd.f32 %v248, %v629
  %v631 = vpop.f32.mrb[0].mxu0
  %v632 = vadd.f32 %v250, %v631
  %633 = vmatprep.mubr.bf16.mxu0 0
  %634 = vmatmul.mubr.bf16.gmra.mrb[0].mxu0 %v538
  %v635 = vpop.f32.mrb[0].mxu0
  %v636 = vadd.f32 %v254, %v635
  %v637 = vpop.f32.mrb[0].mxu0
  %v638 = vadd.f32 %v256, %v637
  %v639 = vpop.f32.mrb[0].mxu0
  %v640 = vadd.f32 %v258, %v639
  %v641 = vpop.f32.mrb[0].mxu0
  %v642 = vadd.f32 %v260, %v641
  %643 = vmatprep.mubr.bf16.mxu0 0
  %644 = vmatmul.mubr.bf16.gmra.mrb[0].mxu0 %v541
  %v645 = vpop.f32.mrb[0].mxu0
  %v646 = vadd.f32 %v264, %v645
  %v647 = vpop.f32.mrb[0].mxu0
  %v648 = vadd.f32 %v266, %v647
  %v649 = vpop.f32.mrb[0].mxu0
  %v650 = vadd.f32 %v268, %v649
  %v651 = vpop.f32.mrb[0].mxu0
  %v652 = vadd.f32 %v270, %v651
  %653 = vmatprep.mubr.bf16.mxu0 0
  %654 = vmatmul.mubr.bf16.gmra.mrb[0].mxu0 %v544
  %v655 = vpop.f32.mrb[0].mxu0
  %v656 = vadd.f32 %v274, %v655
  %v657 = vpop.f32.mrb[0].mxu0
  %v658 = vadd.f32 %v276, %v657
  %v659 = vpop.f32.mrb[0].mxu0
  %v660 = vadd.f32 %v278, %v659
  %v661 = vpop.f32.mrb[0].mxu0
  %v662 = vadd.f32 %v280, %v661
  %663 = vmatprep.mubr.bf16.mxu0 0
  %664 = vmatmul.mubr.bf16.gmra.mrb[0].mxu0 %v547
  %v665 = vpop.f32.mrb[0].mxu0
  %v666 = vadd.f32 %v284, %v665
  %v667 = vpop.f32.mrb[0].mxu0
  %v668 = vadd.f32 %v286, %v667
  %v669 = vpop.f32.mrb[0].mxu0
  %v670 = vadd.f32 %v288, %v669
  %v671 = vpop.f32.mrb[0].mxu0
  %v672 = vadd.f32 %v290, %v671
  %673 = vmatprep.mubr.bf16.mxu0 0
  %674 = vmatmul.mubr.bf16.gmra.mrb[0].mxu0 %v550
  %v675 = vpop.f32.mrb[0].mxu0
  %v676 = vadd.f32 %v294, %v675
  %v677 = vpop.f32.mrb[0].mxu0
  %v678 = vadd.f32 %v296, %v677
  %v679 = vpop.f32.mrb[0].mxu0
  %v680 = vadd.f32 %v298, %v679
  %v681 = vpop.f32.mrb[0].mxu0
  %v682 = vadd.f32 %v300, %v681
  %683 = vmatprep.mubr.bf16.mxu0 0
  %684 = vmatmul.mubr.bf16.gmra.mrb[0].mxu0 %v553
  %v685 = vpop.f32.mrb[0].mxu0
  %v686 = vadd.f32 %v304, %v685
  %v687 = vpop.f32.mrb[0].mxu0
  %v688 = vadd.f32 %v306, %v687
  %v689 = vpop.f32.mrb[0].mxu0
  %v690 = vadd.f32 %v308, %v689
  %v691 = vpop.f32.mrb[0].mxu0
  %v692 = vadd.f32 %v310, %v691
  %693 = vmatprep.mubr.bf16.mxu0 0
  %694 = vmatmul.mubr.bf16.gmra.mrb[0].mxu0 %v556
  %v695 = vpop.f32.mrb[0].mxu0
  %v696 = vadd.f32 %v314, %v695
  %v697 = vpop.f32.mrb[0].mxu0
  %v698 = vadd.f32 %v316, %v697
  %v699 = vpop.f32.mrb[0].mxu0
  %v700 = vadd.f32 %v318, %v699
  %v701 = vpop.f32.mrb[0].mxu0
  %v702 = vadd.f32 %v320, %v701
  %703 = vmatprep.mubr.bf16.mxu0 0
  %704 = vmatmul.mubr.bf16.gmra.mrb[0].mxu0 %v559
  %v705 = vpop.f32.mrb[0].mxu0
  %v706 = vadd.f32 %v324, %v705
  %v707 = vpop.f32.mrb[0].mxu0
  %v708 = vadd.f32 %v326, %v707
  %v709 = vpop.f32.mrb[0].mxu0
  %v710 = vadd.f32 %v328, %v709
  %v711 = vpop.f32.mrb[0].mxu0
  %v712 = vadd.f32 %v330, %v711
  %713 = vdwg.mxu0
  %714 = vmatprep.subr.bf16.mxu0 %v512
  %715 = vmatpush1.bf16.msra.mxu0 %v511
  %716 = vmatprep.subr.bf16.mxu0 %v516
  %717 = vmatpush1.bf16.msra.mxu0 %v515
  %718 = vmatprep.subr.bf16.mxu0 0
  %719 = vmatpush1.bf16.msra.mxu0 0
  %720 = vmatprep.subr.bf16.mxu0 0
  %721 = vmatpush1.bf16.msra.mxu0 0
  %722 = vmatprep.subr.bf16.mxu0 0
  %723 = vmatpush1.bf16.msra.mxu0 0
  %724 = vmatprep.subr.bf16.mxu0 0
  %725 = vmatpush1.bf16.msra.mxu0 0
  %726 = vmatprep.subr.bf16.mxu0 0
  %727 = vmatpush1.bf16.msra.mxu0 0
  %728 = vmatprep.subr.bf16.mxu0 0
  %729 = vmatpush1.bf16.msra.mxu0 0
  %730 = vmatprep.subr.bf16.mxu0 0
  %731 = vmatpush1.bf16.msra.mxu0 0
  %732 = vmatprep.subr.bf16.mxu0 0
  %733 = vmatpush1.bf16.msra.mxu0 0
  %734 = vmatprep.subr.bf16.mxu0 0
  %735 = vmatpush1.bf16.msra.mxu0 0
  %736 = vmatprep.subr.bf16.mxu0 0
  %737 = vmatpush1.bf16.msra.mxu0 0
  %738 = vmatprep.subr.bf16.mxu0 0
  %739 = vmatpush1.bf16.msra.mxu0 0
  %740 = vmatprep.subr.bf16.mxu0 0
  %741 = vmatpush1.bf16.msra.mxu0 0
  %742 = vmatprep.subr.bf16.mxu0 0
  %743 = vmatpush1.bf16.msra.mxu0 0
  %744 = vmatprep.subr.bf16.mxu0 0
  %745 = vmatpush1.bf16.msra.mxu0 0
  %746 = vmatprep.mubr.bf16.mxu0 0
  %747 = vmatmul.mubr.bf16.gmra.mrb[0].mxu0 %v526
  %v748 = vpop.f32.mrb[0].mxu0
  %v749 = vadd.f32 %v367, %v748
  %v750 = vpop.f32.mrb[0].mxu0
  %v751 = vadd.f32 %v369, %v750
  %v752 = vpop.f32.mrb[0].mxu0
  %v753 = vadd.f32 %v371, %v752
  %v754 = vpop.f32.mrb[0].mxu0
  %v755 = vadd.f32 %v373, %v754
  %756 = vmatprep.mubr.bf16.mxu0 0
  %757 = vmatmul.mubr.bf16.gmra.mrb[0].mxu0 %v529
  %v758 = vpop.f32.mrb[0].mxu0
  %v759 = vadd.f32 %v377, %v758
  %v760 = vpop.f32.mrb[0].mxu0
  %v761 = vadd.f32 %v379, %v760
  %v762 = vpop.f32.mrb[0].mxu0
  %v763 = vadd.f32 %v381, %v762
  %v764 = vpop.f32.mrb[0].mxu0
  %v765 = vadd.f32 %v383, %v764
  %766 = vmatprep.mubr.bf16.mxu0 0
  %767 = vmatmul.mubr.bf16.gmra.mrb[0].mxu0 %v532
  %v768 = vpop.f32.mrb[0].mxu0
  %v769 = vadd.f32 %v387, %v768
  %v770 = vpop.f32.mrb[0].mxu0
  %v771 = vadd.f32 %v389, %v770
  %v772 = vpop.f32.mrb[0].mxu0
  %v773 = vadd.f32 %v391, %v772
  %v774 = vpop.f32.mrb[0].mxu0
  %v775 = vadd.f32 %v393, %v774
  %776 = vmatprep.mubr.bf16.mxu0 0
  %777 = vmatmul.mubr.bf16.gmra.mrb[0].mxu0 %v535
  %v778 = vpop.f32.mrb[0].mxu0
  %v779 = vadd.f32 %v397, %v778
  %v780 = vpop.f32.mrb[0].mxu0
  %v781 = vadd.f32 %v399, %v780
  %v782 = vpop.f32.mrb[0].mxu0
  %v783 = vadd.f32 %v401, %v782
  %v784 = vpop.f32.mrb[0].mxu0
  %v785 = vadd.f32 %v403, %v784
  %786 = vmatprep.mubr.bf16.mxu0 0
  %787 = vmatmul.mubr.bf16.gmra.mrb[0].mxu0 %v538
  %v788 = vpop.f32.mrb[0].mxu0
  %v789 = vadd.f32 %v407, %v788
  %v790 = vpop.f32.mrb[0].mxu0
  %v791 = vadd.f32 %v409, %v790
  %v792 = vpop.f32.mrb[0].mxu0
  %v793 = vadd.f32 %v411, %v792
  %v794 = vpop.f32.mrb[0].mxu0
  %v795 = vadd.f32 %v413, %v794
  %796 = vmatprep.mubr.bf16.mxu0 0
  %797 = vmatmul.mubr.bf16.gmra.mrb[0].mxu0 %v541
  %v798 = vpop.f32.mrb[0].mxu0
  %v799 = vadd.f32 %v417, %v798
  %v800 = vpop.f32.mrb[0].mxu0
  %v801 = vadd.f32 %v419, %v800
  %v802 = vpop.f32.mrb[0].mxu0
  %v803 = vadd.f32 %v421, %v802
  %v804 = vpop.f32.mrb[0].mxu0
  %v805 = vadd.f32 %v423, %v804
  %806 = vmatprep.mubr.bf16.mxu0 0
  %807 = vmatmul.mubr.bf16.gmra.mrb[0].mxu0 %v544
  %v808 = vpop.f32.mrb[0].mxu0
  %v809 = vadd.f32 %v427, %v808
  %v810 = vpop.f32.mrb[0].mxu0
  %v811 = vadd.f32 %v429, %v810
  %v812 = vpop.f32.mrb[0].mxu0
  %v813 = vadd.f32 %v431, %v812
  %v814 = vpop.f32.mrb[0].mxu0
  %v815 = vadd.f32 %v433, %v814
  %816 = vmatprep.mubr.bf16.mxu0 0
  %817 = vmatmul.mubr.bf16.gmra.mrb[0].mxu0 %v547
  %v818 = vpop.f32.mrb[0].mxu0
  %v819 = vadd.f32 %v437, %v818
  %v820 = vpop.f32.mrb[0].mxu0
  %v821 = vadd.f32 %v439, %v820
  %v822 = vpop.f32.mrb[0].mxu0
  %v823 = vadd.f32 %v441, %v822
  %v824 = vpop.f32.mrb[0].mxu0
  %v825 = vadd.f32 %v443, %v824
  %826 = vmatprep.mubr.bf16.mxu0 0
  %827 = vmatmul.mubr.bf16.gmra.mrb[0].mxu0 %v550
  %v828 = vpop.f32.mrb[0].mxu0
  %v829 = vadd.f32 %v447, %v828
  %v830 = vpop.f32.mrb[0].mxu0
  %v831 = vadd.f32 %v449, %v830
  %v832 = vpop.f32.mrb[0].mxu0
  %v833 = vadd.f32 %v451, %v832
  %v834 = vpop.f32.mrb[0].mxu0
  %v835 = vadd.f32 %v453, %v834
  %836 = vmatprep.mubr.bf16.mxu0 0
  %837 = vmatmul.mubr.bf16.gmra.mrb[0].mxu0 %v553
  %v838 = vpop.f32.mrb[0].mxu0
  %v839 = vadd.f32 %v457, %v838
  %v840 = vpop.f32.mrb[0].mxu0
  %v841 = vadd.f32 %v459, %v840
  %v842 = vpop.f32.mrb[0].mxu0
  %v843 = vadd.f32 %v461, %v842
  %v844 = vpop.f32.mrb[0].mxu0
  %v845 = vadd.f32 %v463, %v844
  %846 = vmatprep.mubr.bf16.mxu0 0
  %847 = vmatmul.mubr.bf16.gmra.mrb[0].mxu0 %v556
  %v848 = vpop.f32.mrb[0].mxu0
  %v849 = vadd.f32 %v467, %v848
  %v850 = vpop.f32.mrb[0].mxu0
  %v851 = vadd.f32 %v469, %v850
  %v852 = vpop.f32.mrb[0].mxu0
  %v853 = vadd.f32 %v471, %v852
  %v854 = vpop.f32.mrb[0].mxu0
  %v855 = vadd.f32 %v473, %v854
  %856 = vmatprep.mubr.bf16.mxu0 0
  %857 = vmatmul.mubr.bf16.gmra.mrb[0].mxu0 %v559
  %v858 = vpop.f32.mrb[0].mxu0
  %v859 = vadd.f32 %v477, %v858
  %v860 = vpop.f32.mrb[0].mxu0
  %v861 = vadd.f32 %v479, %v860
  %v862 = vpop.f32.mrb[0].mxu0
  %v863 = vadd.f32 %v481, %v862
  %v864 = vpop.f32.mrb[0].mxu0
  %v865 = vadd.f32 %v483, %v864
  %866 = vdwg.mxu0
  %v867 = vpack.c.bf16 %v58, %v57
  %s868 = scalar_lea.vmem %s1, 128
  %v869 = vld [vmem:[%s868] sm:$0xff]
  %v870 = vld [vmem:[%s868 + $0x8] sm:$0xff]
  %v871 = vld [vmem:[%s868 + $0x10] sm:$0xff]
  %v872 = vld [vmem:[%s868 + $0x18] sm:$0xff]
  %v873 = vld [vmem:[%s868 + $0x20] sm:$0xff]
  %v874 = vld [vmem:[%s868 + $0x28] sm:$0xff]
  %v875 = vld [vmem:[%s868 + $0x30] sm:$0xff]
  %v876 = vld [vmem:[%s868 + $0x38] sm:$0xff]
  %v885 = vunpack.c.l.b16 %v869
  %v886 = vunpack.c.h.b16 %v869
  %v887 = vunpack.c.l.b16 %v870
  %v888 = vunpack.c.h.b16 %v870
  %v889 = vunpack.c.l.b16 %v871
  %v890 = vunpack.c.h.b16 %v871
  %v891 = vunpack.c.l.b16 %v872
  %v892 = vunpack.c.h.b16 %v872
  %v893 = vunpack.c.l.b16 %v873
  %v894 = vunpack.c.h.b16 %v873
  %v895 = vunpack.c.l.b16 %v874
  %v896 = vunpack.c.h.b16 %v874
  %v897 = vunpack.c.l.b16 %v875
  %v898 = vunpack.c.h.b16 %v875
  %v899 = vunpack.c.l.b16 %v876
  %v900 = vunpack.c.h.b16 %v876
  %v901 = vpack.c.b16 %v889, %v885
  %v902 = vpack.c.b16 %v890, %v886
  %v903 = vpack.c.b16 %v891, %v887
  %v904 = vpack.c.b16 %v892, %v888
  %v905 = vpack.c.b16 %v897, %v893
  %v906 = vpack.c.b16 %v898, %v894
  %v907 = vpack.c.b16 %v899, %v895
  %v908 = vpack.c.b16 %v900, %v896
  %v918 = vsel %vm142, %v867, 0
  %920 = vmatprep.subr.bf16.mxu0 %v902
  %921 = vmatpush1.bf16.msra.mxu0 %v901
  %922 = vmatprep.subr.bf16.mxu0 %v906
  %923 = vmatpush1.bf16.msra.mxu0 %v905
  %924 = vmatprep.subr.bf16.mxu0 0
  %925 = vmatpush1.bf16.msra.mxu0 0
  %926 = vmatprep.subr.bf16.mxu0 0
  %927 = vmatpush1.bf16.msra.mxu0 0
  %928 = vmatprep.subr.bf16.mxu0 0
  %929 = vmatpush1.bf16.msra.mxu0 0
  %930 = vmatprep.subr.bf16.mxu0 0
  %931 = vmatpush1.bf16.msra.mxu0 0
  %932 = vmatprep.subr.bf16.mxu0 0
  %933 = vmatpush1.bf16.msra.mxu0 0
  %934 = vmatprep.subr.bf16.mxu0 0
  %935 = vmatpush1.bf16.msra.mxu0 0
  %936 = vmatprep.subr.bf16.mxu0 0
  %937 = vmatpush1.bf16.msra.mxu0 0
  %938 = vmatprep.subr.bf16.mxu0 0
  %939 = vmatpush1.bf16.msra.mxu0 0
  %940 = vmatprep.subr.bf16.mxu0 0
  %941 = vmatpush1.bf16.msra.mxu0 0
  %942 = vmatprep.subr.bf16.mxu0 0
  %943 = vmatpush1.bf16.msra.mxu0 0
  %944 = vmatprep.subr.bf16.mxu0 0
  %945 = vmatpush1.bf16.msra.mxu0 0
  %946 = vmatprep.subr.bf16.mxu0 0
  %947 = vmatpush1.bf16.msra.mxu0 0
  %948 = vmatprep.subr.bf16.mxu0 0
  %949 = vmatpush1.bf16.msra.mxu0 0
  %950 = vmatprep.subr.bf16.mxu0 0
  %951 = vmatpush1.bf16.msra.mxu0 0
  %952 = vmatprep.mubr.bf16.mxu0 0
  %953 = vmatmul.mubr.bf16.gmra.mrb[0].mxu0 %v529
  %v954 = vpop.f32.mrb[0].mxu0
  %v955 = vadd.f32 0.0, %v954
  %v956 = vpop.f32.mrb[0].mxu0
  %v957 = vadd.f32 0.0, %v956
  %v958 = vpop.f32.mrb[0].mxu0
  %v959 = vadd.f32 0.0, %v958
  %v960 = vpop.f32.mrb[0].mxu0
  %v961 = vadd.f32 0.0, %v960
  %962 = vmatprep.mubr.bf16.mxu0 0
  %963 = vmatmul.mubr.bf16.gmra.mrb[0].mxu0 %v532
  %v964 = vpop.f32.mrb[0].mxu0
  %v965 = vadd.f32 0.0, %v964
  %v966 = vpop.f32.mrb[0].mxu0
  %v967 = vadd.f32 0.0, %v966
  %v968 = vpop.f32.mrb[0].mxu0
  %v969 = vadd.f32 0.0, %v968
  %v970 = vpop.f32.mrb[0].mxu0
  %v971 = vadd.f32 0.0, %v970
  %972 = vmatprep.mubr.bf16.mxu0 0
  %973 = vmatmul.mubr.bf16.gmra.mrb[0].mxu0 %v535
  %v974 = vpop.f32.mrb[0].mxu0
  %v975 = vadd.f32 0.0, %v974
  %v976 = vpop.f32.mrb[0].mxu0
  %v977 = vadd.f32 0.0, %v976
  %v978 = vpop.f32.mrb[0].mxu0
  %v979 = vadd.f32 0.0, %v978
  %v980 = vpop.f32.mrb[0].mxu0
  %v981 = vadd.f32 0.0, %v980
  %982 = vmatprep.mubr.bf16.mxu0 0
  %983 = vmatmul.mubr.bf16.gmra.mrb[0].mxu0 %v538
  %v984 = vpop.f32.mrb[0].mxu0
  %v985 = vadd.f32 0.0, %v984
  %v986 = vpop.f32.mrb[0].mxu0
  %v987 = vadd.f32 0.0, %v986
  %v988 = vpop.f32.mrb[0].mxu0
  %v989 = vadd.f32 0.0, %v988
  %v990 = vpop.f32.mrb[0].mxu0
  %v991 = vadd.f32 0.0, %v990
  %992 = vmatprep.mubr.bf16.mxu0 0
  %993 = vmatmul.mubr.bf16.gmra.mrb[0].mxu0 %v541
  %v994 = vpop.f32.mrb[0].mxu0
  %v995 = vadd.f32 0.0, %v994
  %v996 = vpop.f32.mrb[0].mxu0
  %v997 = vadd.f32 0.0, %v996
  %v998 = vpop.f32.mrb[0].mxu0
  %v999 = vadd.f32 0.0, %v998
  %v1000 = vpop.f32.mrb[0].mxu0
  %v1001 = vadd.f32 0.0, %v1000
  %1002 = vmatprep.mubr.bf16.mxu0 0
  %1003 = vmatmul.mubr.bf16.gmra.mrb[0].mxu0 %v544
  %v1004 = vpop.f32.mrb[0].mxu0
  %v1005 = vadd.f32 0.0, %v1004
  %v1006 = vpop.f32.mrb[0].mxu0
  %v1007 = vadd.f32 0.0, %v1006
  %v1008 = vpop.f32.mrb[0].mxu0
  %v1009 = vadd.f32 0.0, %v1008
  %v1010 = vpop.f32.mrb[0].mxu0
  %v1011 = vadd.f32 0.0, %v1010
  %1012 = vmatprep.mubr.bf16.mxu0 0
  %1013 = vmatmul.mubr.bf16.gmra.mrb[0].mxu0 %v547
  %v1014 = vpop.f32.mrb[0].mxu0
  %v1015 = vadd.f32 0.0, %v1014
  %v1016 = vpop.f32.mrb[0].mxu0
  %v1017 = vadd.f32 0.0, %v1016
  %v1018 = vpop.f32.mrb[0].mxu0
  %v1019 = vadd.f32 0.0, %v1018
  %v1020 = vpop.f32.mrb[0].mxu0
  %v1021 = vadd.f32 0.0, %v1020
  %1022 = vmatprep.mubr.bf16.mxu0 0
  %1023 = vmatmul.mubr.bf16.gmra.mrb[0].mxu0 %v550
  %v1024 = vpop.f32.mrb[0].mxu0
  %v1025 = vadd.f32 0.0, %v1024
  %v1026 = vpop.f32.mrb[0].mxu0
  %v1027 = vadd.f32 0.0, %v1026
  %v1028 = vpop.f32.mrb[0].mxu0
  %v1029 = vadd.f32 0.0, %v1028
  %v1030 = vpop.f32.mrb[0].mxu0
  %v1031 = vadd.f32 0.0, %v1030
  %1032 = vmatprep.mubr.bf16.mxu0 0
  %1033 = vmatmul.mubr.bf16.gmra.mrb[0].mxu0 %v553
  %v1034 = vpop.f32.mrb[0].mxu0
  %v1035 = vadd.f32 0.0, %v1034
  %v1036 = vpop.f32.mrb[0].mxu0
  %v1037 = vadd.f32 0.0, %v1036
  %v1038 = vpop.f32.mrb[0].mxu0
  %v1039 = vadd.f32 0.0, %v1038
  %v1040 = vpop.f32.mrb[0].mxu0
  %v1041 = vadd.f32 0.0, %v1040
  %1042 = vmatprep.mubr.bf16.mxu0 0
  %1043 = vmatmul.mubr.bf16.gmra.mrb[0].mxu0 %v556
  %v1044 = vpop.f32.mrb[0].mxu0
  %v1045 = vadd.f32 0.0, %v1044
  %v1046 = vpop.f32.mrb[0].mxu0
  %v1047 = vadd.f32 0.0, %v1046
  %v1048 = vpop.f32.mrb[0].mxu0
  %v1049 = vadd.f32 0.0, %v1048
  %v1050 = vpop.f32.mrb[0].mxu0
  %v1051 = vadd.f32 0.0, %v1050
  %1052 = vmatprep.mubr.bf16.mxu0 0
  %1053 = vmatmul.mubr.bf16.gmra.mrb[0].mxu0 %v559
  %v1054 = vpop.f32.mrb[0].mxu0
  %v1055 = vadd.f32 0.0, %v1054
  %v1056 = vpop.f32.mrb[0].mxu0
  %v1057 = vadd.f32 0.0, %v1056
  %v1058 = vpop.f32.mrb[0].mxu0
  %v1059 = vadd.f32 0.0, %v1058
  %v1060 = vpop.f32.mrb[0].mxu0
  %v1061 = vadd.f32 0.0, %v1060
  %1062 = vmatprep.mubr.bf16.mxu0 0
  %1063 = vmatmul.mubr.bf16.gmra.mrb[0].mxu0 %v918
  %v1064 = vpop.f32.mrb[0].mxu0
  %v1065 = vadd.f32 0.0, %v1064
  %v1066 = vpop.f32.mrb[0].mxu0
  %v1067 = vadd.f32 0.0, %v1066
  %v1068 = vpop.f32.mrb[0].mxu0
  %v1069 = vadd.f32 0.0, %v1068
  %v1070 = vpop.f32.mrb[0].mxu0
  %v1071 = vadd.f32 0.0, %v1070
  %1072 = vdwg.mxu0
  %1073 = vmatprep.subr.bf16.mxu0 %v904
  %1074 = vmatpush1.bf16.msra.mxu0 %v903
  %1075 = vmatprep.subr.bf16.mxu0 %v908
  %1076 = vmatpush1.bf16.msra.mxu0 %v907
  %1077 = vmatprep.subr.bf16.mxu0 0
  %1078 = vmatpush1.bf16.msra.mxu0 0
  %1079 = vmatprep.subr.bf16.mxu0 0
  %1080 = vmatpush1.bf16.msra.mxu0 0
  %1081 = vmatprep.subr.bf16.mxu0 0
  %1082 = vmatpush1.bf16.msra.mxu0 0
  %1083 = vmatprep.subr.bf16.mxu0 0
  %1084 = vmatpush1.bf16.msra.mxu0 0
  %1085 = vmatprep.subr.bf16.mxu0 0
  %1086 = vmatpush1.bf16.msra.mxu0 0
  %1087 = vmatprep.subr.bf16.mxu0 0
  %1088 = vmatpush1.bf16.msra.mxu0 0
  %1089 = vmatprep.subr.bf16.mxu0 0
  %1090 = vmatpush1.bf16.msra.mxu0 0
  %1091 = vmatprep.subr.bf16.mxu0 0
  %1092 = vmatpush1.bf16.msra.mxu0 0
  %1093 = vmatprep.subr.bf16.mxu0 0
  %1094 = vmatpush1.bf16.msra.mxu0 0
  %1095 = vmatprep.subr.bf16.mxu0 0
  %1096 = vmatpush1.bf16.msra.mxu0 0
  %1097 = vmatprep.subr.bf16.mxu0 0
  %1098 = vmatpush1.bf16.msra.mxu0 0
  %1099 = vmatprep.subr.bf16.mxu0 0
  %1100 = vmatpush1.bf16.msra.mxu0 0
  %1101 = vmatprep.subr.bf16.mxu0 0
  %1102 = vmatpush1.bf16.msra.mxu0 0
  %1103 = vmatprep.subr.bf16.mxu0 0
  %1104 = vmatpush1.bf16.msra.mxu0 0
  %1105 = vmatprep.mubr.bf16.mxu0 0
  %1106 = vmatmul.mubr.bf16.gmra.mrb[0].mxu0 %v529
  %v1107 = vpop.f32.mrb[0].mxu0
  %v1108 = vadd.f32 0.0, %v1107
  %v1109 = vpop.f32.mrb[0].mxu0
  %v1110 = vadd.f32 0.0, %v1109
  %v1111 = vpop.f32.mrb[0].mxu0
  %v1112 = vadd.f32 0.0, %v1111
  %v1113 = vpop.f32.mrb[0].mxu0
  %v1114 = vadd.f32 0.0, %v1113
  %1115 = vmatprep.mubr.bf16.mxu0 0
  %1116 = vmatmul.mubr.bf16.gmra.mrb[0].mxu0 %v532
  %v1117 = vpop.f32.mrb[0].mxu0
  %v1118 = vadd.f32 0.0, %v1117
  %v1119 = vpop.f32.mrb[0].mxu0
  %v1120 = vadd.f32 0.0, %v1119
  %v1121 = vpop.f32.mrb[0].mxu0
  %v1122 = vadd.f32 0.0, %v1121
  %v1123 = vpop.f32.mrb[0].mxu0
  %v1124 = vadd.f32 0.0, %v1123
  %1125 = vmatprep.mubr.bf16.mxu0 0
  %1126 = vmatmul.mubr.bf16.gmra.mrb[0].mxu0 %v535
  %v1127 = vpop.f32.mrb[0].mxu0
  %v1128 = vadd.f32 0.0, %v1127
  %v1129 = vpop.f32.mrb[0].mxu0
  %v1130 = vadd.f32 0.0, %v1129
  %v1131 = vpop.f32.mrb[0].mxu0
  %v1132 = vadd.f32 0.0, %v1131
  %v1133 = vpop.f32.mrb[0].mxu0
  %v1134 = vadd.f32 0.0, %v1133
  %1135 = vmatprep.mubr.bf16.mxu0 0
  %1136 = vmatmul.mubr.bf16.gmra.mrb[0].mxu0 %v538
  %v1137 = vpop.f32.mrb[0].mxu0
  %v1138 = vadd.f32 0.0, %v1137
  %v1139 = vpop.f32.mrb[0].mxu0
  %v1140 = vadd.f32 0.0, %v1139
  %v1141 = vpop.f32.mrb[0].mxu0
  %v1142 = vadd.f32 0.0, %v1141
  %v1143 = vpop.f32.mrb[0].mxu0
  %v1144 = vadd.f32 0.0, %v1143
  %1145 = vmatprep.mubr.bf16.mxu0 0
  %1146 = vmatmul.mubr.bf16.gmra.mrb[0].mxu0 %v541
  %v1147 = vpop.f32.mrb[0].mxu0
  %v1148 = vadd.f32 0.0, %v1147
  %v1149 = vpop.f32.mrb[0].mxu0
  %v1150 = vadd.f32 0.0, %v1149
  %v1151 = vpop.f32.mrb[0].mxu0
  %v1152 = vadd.f32 0.0, %v1151
  %v1153 = vpop.f32.mrb[0].mxu0
  %v1154 = vadd.f32 0.0, %v1153
  %1155 = vmatprep.mubr.bf16.mxu0 0
  %1156 = vmatmul.mubr.bf16.gmra.mrb[0].mxu0 %v544
  %v1157 = vpop.f32.mrb[0].mxu0
  %v1158 = vadd.f32 0.0, %v1157
  %v1159 = vpop.f32.mrb[0].mxu0
  %v1160 = vadd.f32 0.0, %v1159
  %v1161 = vpop.f32.mrb[0].mxu0
  %v1162 = vadd.f32 0.0, %v1161
  %v1163 = vpop.f32.mrb[0].mxu0
  %v1164 = vadd.f32 0.0, %v1163
  %1165 = vmatprep.mubr.bf16.mxu0 0
  %1166 = vmatmul.mubr.bf16.gmra.mrb[0].mxu0 %v547
  %v1167 = vpop.f32.mrb[0].mxu0
  %v1168 = vadd.f32 0.0, %v1167
  %v1169 = vpop.f32.mrb[0].mxu0
  %v1170 = vadd.f32 0.0, %v1169
  %v1171 = vpop.f32.mrb[0].mxu0
  %v1172 = vadd.f32 0.0, %v1171
  %v1173 = vpop.f32.mrb[0].mxu0
  %v1174 = vadd.f32 0.0, %v1173
  %1175 = vmatprep.mubr.bf16.mxu0 0
  %1176 = vmatmul.mubr.bf16.gmra.mrb[0].mxu0 %v550
  %v1177 = vpop.f32.mrb[0].mxu0
  %v1178 = vadd.f32 0.0, %v1177
  %v1179 = vpop.f32.mrb[0].mxu0
  %v1180 = vadd.f32 0.0, %v1179
  %v1181 = vpop.f32.mrb[0].mxu0
  %v1182 = vadd.f32 0.0, %v1181
  %v1183 = vpop.f32.mrb[0].mxu0
  %v1184 = vadd.f32 0.0, %v1183
  %1185 = vmatprep.mubr.bf16.mxu0 0
  %1186 = vmatmul.mubr.bf16.gmra.mrb[0].mxu0 %v553
  %v1187 = vpop.f32.mrb[0].mxu0
  %v1188 = vadd.f32 0.0, %v1187
  %v1189 = vpop.f32.mrb[0].mxu0
  %v1190 = vadd.f32 0.0, %v1189
  %v1191 = vpop.f32.mrb[0].mxu0
  %v1192 = vadd.f32 0.0, %v1191
  %v1193 = vpop.f32.mrb[0].mxu0
  %v1194 = vadd.f32 0.0, %v1193
  %1195 = vmatprep.mubr.bf16.mxu0 0
  %1196 = vmatmul.mubr.bf16.gmra.mrb[0].mxu0 %v556
  %v1197 = vpop.f32.mrb[0].mxu0
  %v1198 = vadd.f32 0.0, %v1197
  %v1199 = vpop.f32.mrb[0].mxu0
  %v1200 = vadd.f32 0.0, %v1199
  %v1201 = vpop.f32.mrb[0].mxu0
  %v1202 = vadd.f32 0.0, %v1201
  %v1203 = vpop.f32.mrb[0].mxu0
  %v1204 = vadd.f32 0.0, %v1203
  %1205 = vmatprep.mubr.bf16.mxu0 0
  %1206 = vmatmul.mubr.bf16.gmra.mrb[0].mxu0 %v559
  %v1207 = vpop.f32.mrb[0].mxu0
  %v1208 = vadd.f32 0.0, %v1207
  %v1209 = vpop.f32.mrb[0].mxu0
  %v1210 = vadd.f32 0.0, %v1209
  %v1211 = vpop.f32.mrb[0].mxu0
  %v1212 = vadd.f32 0.0, %v1211
  %v1213 = vpop.f32.mrb[0].mxu0
  %v1214 = vadd.f32 0.0, %v1213
  %1215 = vmatprep.mubr.bf16.mxu0 0
  %1216 = vmatmul.mubr.bf16.gmra.mrb[0].mxu0 %v918
  %v1217 = vpop.f32.mrb[0].mxu0
  %v1218 = vadd.f32 0.0, %v1217
  %v1219 = vpop.f32.mrb[0].mxu0
  %v1220 = vadd.f32 0.0, %v1219
  %v1221 = vpop.f32.mrb[0].mxu0
  %v1222 = vadd.f32 0.0, %v1221
  %v1223 = vpop.f32.mrb[0].mxu0
  %v1224 = vadd.f32 0.0, %v1223
  %1225 = vdwg.mxu0
  %v1226 = vadd.f32 %v596, %v955
  %v1227 = vadd.f32 %v598, %v957
  %v1228 = vadd.f32 %v749, %v1108
  %v1229 = vadd.f32 %v751, %v1110
  %v1230 = vadd.f32 %v600, %v959
  %v1231 = vadd.f32 %v602, %v961
  %v1232 = vadd.f32 %v753, %v1112
  %v1233 = vadd.f32 %v755, %v1114
  %v1234 = vadd.f32 %v606, %v965
  %v1235 = vadd.f32 %v608, %v967
  %v1236 = vadd.f32 %v759, %v1118
  %v1237 = vadd.f32 %v761, %v1120
  %v1238 = vadd.f32 %v610, %v969
  %v1239 = vadd.f32 %v612, %v971
  %v1240 = vadd.f32 %v763, %v1122
  %v1241 = vadd.f32 %v765, %v1124
  %v1242 = vadd.f32 %v616, %v975
  %v1243 = vadd.f32 %v618, %v977
  %v1244 = vadd.f32 %v769, %v1128
  %v1245 = vadd.f32 %v771, %v1130
  %v1246 = vadd.f32 %v620, %v979
  %v1247 = vadd.f32 %v622, %v981
  %v1248 = vadd.f32 %v773, %v1132
  %v1249 = vadd.f32 %v775, %v1134
  %v1250 = vadd.f32 %v626, %v985
  %v1251 = vadd.f32 %v628, %v987
  %v1252 = vadd.f32 %v779, %v1138
  %v1253 = vadd.f32 %v781, %v1140
  %v1254 = vadd.f32 %v630, %v989
  %v1255 = vadd.f32 %v632, %v991
  %v1256 = vadd.f32 %v783, %v1142
  %v1257 = vadd.f32 %v785, %v1144
  %v1258 = vadd.f32 %v636, %v995
  %v1259 = vadd.f32 %v638, %v997
  %v1260 = vadd.f32 %v789, %v1148
  %v1261 = vadd.f32 %v791, %v1150
  %v1262 = vadd.f32 %v640, %v999
  %v1263 = vadd.f32 %v642, %v1001
  %v1264 = vadd.f32 %v793, %v1152
  %v1265 = vadd.f32 %v795, %v1154
  %v1266 = vadd.f32 %v646, %v1005
  %v1267 = vadd.f32 %v648, %v1007
  %v1268 = vadd.f32 %v799, %v1158
  %v1269 = vadd.f32 %v801, %v1160
  %v1270 = vadd.f32 %v650, %v1009
  %v1271 = vadd.f32 %v652, %v1011
  %v1272 = vadd.f32 %v803, %v1162
  %v1273 = vadd.f32 %v805, %v1164
  %v1274 = vadd.f32 %v656, %v1015
  %v1275 = vadd.f32 %v658, %v1017
  %v1276 = vadd.f32 %v809, %v1168
  %v1277 = vadd.f32 %v811, %v1170
  %v1278 = vadd.f32 %v660, %v1019
  %v1279 = vadd.f32 %v662, %v1021
  %v1280 = vadd.f32 %v813, %v1172
  %v1281 = vadd.f32 %v815, %v1174
  %v1282 = vadd.f32 %v666, %v1025
  %v1283 = vadd.f32 %v668, %v1027
  %v1284 = vadd.f32 %v819, %v1178
  %v1285 = vadd.f32 %v821, %v1180
  %v1286 = vadd.f32 %v670, %v1029
  %v1287 = vadd.f32 %v672, %v1031
  %v1288 = vadd.f32 %v823, %v1182
  %v1289 = vadd.f32 %v825, %v1184
  %v1290 = vadd.f32 %v676, %v1035
  %v1291 = vadd.f32 %v678, %v1037
  %v1292 = vadd.f32 %v829, %v1188
  %v1293 = vadd.f32 %v831, %v1190
  %v1294 = vadd.f32 %v680, %v1039
  %v1295 = vadd.f32 %v682, %v1041
  %v1296 = vadd.f32 %v833, %v1192
  %v1297 = vadd.f32 %v835, %v1194
  %v1298 = vadd.f32 %v686, %v1045
  %v1299 = vadd.f32 %v688, %v1047
  %v1300 = vadd.f32 %v839, %v1198
  %v1301 = vadd.f32 %v841, %v1200
  %v1302 = vadd.f32 %v690, %v1049
  %v1303 = vadd.f32 %v692, %v1051
  %v1304 = vadd.f32 %v843, %v1202
  %v1305 = vadd.f32 %v845, %v1204
  %v1306 = vadd.f32 %v696, %v1055
  %v1307 = vadd.f32 %v698, %v1057
  %v1308 = vadd.f32 %v849, %v1208
  %v1309 = vadd.f32 %v851, %v1210
  %v1310 = vadd.f32 %v700, %v1059
  %v1311 = vadd.f32 %v702, %v1061
  %v1312 = vadd.f32 %v853, %v1212
  %v1313 = vadd.f32 %v855, %v1214
  %v1314 = vadd.f32 %v706, %v1065
  %v1315 = vadd.f32 %v708, %v1067
  %v1316 = vadd.f32 %v859, %v1218
  %v1317 = vadd.f32 %v861, %v1220
  %v1318 = vadd.f32 %v710, %v1069
  %v1319 = vadd.f32 %v712, %v1071
  %v1320 = vadd.f32 %v863, %v1222
  %v1321 = vadd.f32 %v865, %v1224
  %v1322 = vpack.c.bf16 %v59, %v58
  %s1323 = scalar_lea.vmem %s1, 192
  %v1324 = vld [vmem:[%s1323] sm:$0xff]
  %v1325 = vld [vmem:[%s1323 + $0x8] sm:$0xff]
  %v1326 = vld [vmem:[%s1323 + $0x10] sm:$0xff]
  %v1327 = vld [vmem:[%s1323 + $0x18] sm:$0xff]
  %v1328 = vld [vmem:[%s1323 + $0x20] sm:$0xff]
  %v1329 = vld [vmem:[%s1323 + $0x28] sm:$0xff]
  %v1330 = vld [vmem:[%s1323 + $0x30] sm:$0xff]
  %v1331 = vld [vmem:[%s1323 + $0x38] sm:$0xff]
  %v1340 = vunpack.c.l.b16 %v1324
  %v1341 = vunpack.c.h.b16 %v1324
  %v1342 = vunpack.c.l.b16 %v1325
  %v1343 = vunpack.c.h.b16 %v1325
  %v1344 = vunpack.c.l.b16 %v1326
  %v1345 = vunpack.c.h.b16 %v1326
  %v1346 = vunpack.c.l.b16 %v1327
  %v1347 = vunpack.c.h.b16 %v1327
  %v1348 = vunpack.c.l.b16 %v1328
  %v1349 = vunpack.c.h.b16 %v1328
  %v1350 = vunpack.c.l.b16 %v1329
  %v1351 = vunpack.c.h.b16 %v1329
  %v1352 = vunpack.c.l.b16 %v1330
  %v1353 = vunpack.c.h.b16 %v1330
  %v1354 = vunpack.c.l.b16 %v1331
  %v1355 = vunpack.c.h.b16 %v1331
  %v1356 = vpack.c.b16 %v1344, %v1340
  %v1357 = vpack.c.b16 %v1345, %v1341
  %v1358 = vpack.c.b16 %v1346, %v1342
  %v1359 = vpack.c.b16 %v1347, %v1343
  %v1360 = vpack.c.b16 %v1352, %v1348
  %v1361 = vpack.c.b16 %v1353, %v1349
  %v1362 = vpack.c.b16 %v1354, %v1350
  %v1363 = vpack.c.b16 %v1355, %v1351
  %v1373 = vsel %vm142, %v1322, 0
  %1375 = vmatprep.subr.bf16.mxu0 %v1357
  %1376 = vmatpush1.bf16.msra.mxu0 %v1356
  %1377 = vmatprep.subr.bf16.mxu0 %v1361
  %1378 = vmatpush1.bf16.msra.mxu0 %v1360
  %1379 = vmatprep.subr.bf16.mxu0 0
  %1380 = vmatpush1.bf16.msra.mxu0 0
  %1381 = vmatprep.subr.bf16.mxu0 0
  %1382 = vmatpush1.bf16.msra.mxu0 0
  %1383 = vmatprep.subr.bf16.mxu0 0
  %1384 = vmatpush1.bf16.msra.mxu0 0
  %1385 = vmatprep.subr.bf16.mxu0 0
  %1386 = vmatpush1.bf16.msra.mxu0 0
  %1387 = vmatprep.subr.bf16.mxu0 0
  %1388 = vmatpush1.bf16.msra.mxu0 0
  %1389 = vmatprep.subr.bf16.mxu0 0
  %1390 = vmatpush1.bf16.msra.mxu0 0
  %1391 = vmatprep.subr.bf16.mxu0 0
  %1392 = vmatpush1.bf16.msra.mxu0 0
  %1393 = vmatprep.subr.bf16.mxu0 0
  %1394 = vmatpush1.bf16.msra.mxu0 0
  %1395 = vmatprep.subr.bf16.mxu0 0
  %1396 = vmatpush1.bf16.msra.mxu0 0
  %1397 = vmatprep.subr.bf16.mxu0 0
  %1398 = vmatpush1.bf16.msra.mxu0 0
  %1399 = vmatprep.subr.bf16.mxu0 0
  %1400 = vmatpush1.bf16.msra.mxu0 0
  %1401 = vmatprep.subr.bf16.mxu0 0
  %1402 = vmatpush1.bf16.msra.mxu0 0
  %1403 = vmatprep.subr.bf16.mxu0 0
  %1404 = vmatpush1.bf16.msra.mxu0 0
  %1405 = vmatprep.subr.bf16.mxu0 0
  %1406 = vmatpush1.bf16.msra.mxu0 0
  %1407 = vmatprep.mubr.bf16.mxu0 0
  %1408 = vmatmul.mubr.bf16.gmra.mrb[0].mxu0 %v147
  %v1409 = vpop.f32.mrb[0].mxu0
  %v1410 = vadd.f32 0.0, %v1409
  %v1411 = vpop.f32.mrb[0].mxu0
  %v1412 = vadd.f32 0.0, %v1411
  %v1413 = vpop.f32.mrb[0].mxu0
  %v1414 = vadd.f32 0.0, %v1413
  %v1415 = vpop.f32.mrb[0].mxu0
  %v1416 = vadd.f32 0.0, %v1415
  %1417 = vmatprep.mubr.bf16.mxu0 0
  %1418 = vmatmul.mubr.bf16.gmra.mrb[0].mxu0 %v150
  %v1419 = vpop.f32.mrb[0].mxu0
  %v1420 = vadd.f32 0.0, %v1419
  %v1421 = vpop.f32.mrb[0].mxu0
  %v1422 = vadd.f32 0.0, %v1421
  %v1423 = vpop.f32.mrb[0].mxu0
  %v1424 = vadd.f32 0.0, %v1423
  %v1425 = vpop.f32.mrb[0].mxu0
  %v1426 = vadd.f32 0.0, %v1425
  %1427 = vmatprep.mubr.bf16.mxu0 0
  %1428 = vmatmul.mubr.bf16.gmra.mrb[0].mxu0 %v153
  %v1429 = vpop.f32.mrb[0].mxu0
  %v1430 = vadd.f32 0.0, %v1429
  %v1431 = vpop.f32.mrb[0].mxu0
  %v1432 = vadd.f32 0.0, %v1431
  %v1433 = vpop.f32.mrb[0].mxu0
  %v1434 = vadd.f32 0.0, %v1433
  %v1435 = vpop.f32.mrb[0].mxu0
  %v1436 = vadd.f32 0.0, %v1435
  %1437 = vmatprep.mubr.bf16.mxu0 0
  %1438 = vmatmul.mubr.bf16.gmra.mrb[0].mxu0 %v156
  %v1439 = vpop.f32.mrb[0].mxu0
  %v1440 = vadd.f32 0.0, %v1439
  %v1441 = vpop.f32.mrb[0].mxu0
  %v1442 = vadd.f32 0.0, %v1441
  %v1443 = vpop.f32.mrb[0].mxu0
  %v1444 = vadd.f32 0.0, %v1443
  %v1445 = vpop.f32.mrb[0].mxu0
  %v1446 = vadd.f32 0.0, %v1445
  %1447 = vmatprep.mubr.bf16.mxu0 0
  %1448 = vmatmul.mubr.bf16.gmra.mrb[0].mxu0 %v159
  %v1449 = vpop.f32.mrb[0].mxu0
  %v1450 = vadd.f32 0.0, %v1449
  %v1451 = vpop.f32.mrb[0].mxu0
  %v1452 = vadd.f32 0.0, %v1451
  %v1453 = vpop.f32.mrb[0].mxu0
  %v1454 = vadd.f32 0.0, %v1453
  %v1455 = vpop.f32.mrb[0].mxu0
  %v1456 = vadd.f32 0.0, %v1455
  %1457 = vmatprep.mubr.bf16.mxu0 0
  %1458 = vmatmul.mubr.bf16.gmra.mrb[0].mxu0 %v162
  %v1459 = vpop.f32.mrb[0].mxu0
  %v1460 = vadd.f32 0.0, %v1459
  %v1461 = vpop.f32.mrb[0].mxu0
  %v1462 = vadd.f32 0.0, %v1461
  %v1463 = vpop.f32.mrb[0].mxu0
  %v1464 = vadd.f32 0.0, %v1463
  %v1465 = vpop.f32.mrb[0].mxu0
  %v1466 = vadd.f32 0.0, %v1465
  %1467 = vmatprep.mubr.bf16.mxu0 0
  %1468 = vmatmul.mubr.bf16.gmra.mrb[0].mxu0 %v165
  %v1469 = vpop.f32.mrb[0].mxu0
  %v1470 = vadd.f32 0.0, %v1469
  %v1471 = vpop.f32.mrb[0].mxu0
  %v1472 = vadd.f32 0.0, %v1471
  %v1473 = vpop.f32.mrb[0].mxu0
  %v1474 = vadd.f32 0.0, %v1473
  %v1475 = vpop.f32.mrb[0].mxu0
  %v1476 = vadd.f32 0.0, %v1475
  %1477 = vmatprep.mubr.bf16.mxu0 0
  %1478 = vmatmul.mubr.bf16.gmra.mrb[0].mxu0 %v168
  %v1479 = vpop.f32.mrb[0].mxu0
  %v1480 = vadd.f32 0.0, %v1479
  %v1481 = vpop.f32.mrb[0].mxu0
  %v1482 = vadd.f32 0.0, %v1481
  %v1483 = vpop.f32.mrb[0].mxu0
  %v1484 = vadd.f32 0.0, %v1483
  %v1485 = vpop.f32.mrb[0].mxu0
  %v1486 = vadd.f32 0.0, %v1485
  %1487 = vmatprep.mubr.bf16.mxu0 0
  %1488 = vmatmul.mubr.bf16.gmra.mrb[0].mxu0 %v171
  %v1489 = vpop.f32.mrb[0].mxu0
  %v1490 = vadd.f32 0.0, %v1489
  %v1491 = vpop.f32.mrb[0].mxu0
  %v1492 = vadd.f32 0.0, %v1491
  %v1493 = vpop.f32.mrb[0].mxu0
  %v1494 = vadd.f32 0.0, %v1493
  %v1495 = vpop.f32.mrb[0].mxu0
  %v1496 = vadd.f32 0.0, %v1495
  %1497 = vmatprep.mubr.bf16.mxu0 0
  %1498 = vmatmul.mubr.bf16.gmra.mrb[0].mxu0 %v174
  %v1499 = vpop.f32.mrb[0].mxu0
  %v1500 = vadd.f32 0.0, %v1499
  %v1501 = vpop.f32.mrb[0].mxu0
  %v1502 = vadd.f32 0.0, %v1501
  %v1503 = vpop.f32.mrb[0].mxu0
  %v1504 = vadd.f32 0.0, %v1503
  %v1505 = vpop.f32.mrb[0].mxu0
  %v1506 = vadd.f32 0.0, %v1505
  %1507 = vmatprep.mubr.bf16.mxu0 0
  %1508 = vmatmul.mubr.bf16.gmra.mrb[0].mxu0 %v177
  %v1509 = vpop.f32.mrb[0].mxu0
  %v1510 = vadd.f32 0.0, %v1509
  %v1511 = vpop.f32.mrb[0].mxu0
  %v1512 = vadd.f32 0.0, %v1511
  %v1513 = vpop.f32.mrb[0].mxu0
  %v1514 = vadd.f32 0.0, %v1513
  %v1515 = vpop.f32.mrb[0].mxu0
  %v1516 = vadd.f32 0.0, %v1515
  %1517 = vmatprep.mubr.bf16.mxu0 0
  %1518 = vmatmul.mubr.bf16.gmra.mrb[0].mxu0 %v1373
  %v1519 = vpop.f32.mrb[0].mxu0
  %v1520 = vadd.f32 0.0, %v1519
  %v1521 = vpop.f32.mrb[0].mxu0
  %v1522 = vadd.f32 0.0, %v1521
  %v1523 = vpop.f32.mrb[0].mxu0
  %v1524 = vadd.f32 0.0, %v1523
  %v1525 = vpop.f32.mrb[0].mxu0
  %v1526 = vadd.f32 0.0, %v1525
  %1527 = vdwg.mxu0
  %1528 = vmatprep.subr.bf16.mxu0 %v1359
  %1529 = vmatpush1.bf16.msra.mxu0 %v1358
  %1530 = vmatprep.subr.bf16.mxu0 %v1363
  %1531 = vmatpush1.bf16.msra.mxu0 %v1362
  %1532 = vmatprep.subr.bf16.mxu0 0
  %1533 = vmatpush1.bf16.msra.mxu0 0
  %1534 = vmatprep.subr.bf16.mxu0 0
  %1535 = vmatpush1.bf16.msra.mxu0 0
  %1536 = vmatprep.subr.bf16.mxu0 0
  %1537 = vmatpush1.bf16.msra.mxu0 0
  %1538 = vmatprep.subr.bf16.mxu0 0
  %1539 = vmatpush1.bf16.msra.mxu0 0
  %1540 = vmatprep.subr.bf16.mxu0 0
  %1541 = vmatpush1.bf16.msra.mxu0 0
  %1542 = vmatprep.subr.bf16.mxu0 0
  %1543 = vmatpush1.bf16.msra.mxu0 0
  %1544 = vmatprep.subr.bf16.mxu0 0
  %1545 = vmatpush1.bf16.msra.mxu0 0
  %1546 = vmatprep.subr.bf16.mxu0 0
  %1547 = vmatpush1.bf16.msra.mxu0 0
  %1548 = vmatprep.subr.bf16.mxu0 0
  %1549 = vmatpush1.bf16.msra.mxu0 0
  %1550 = vmatprep.subr.bf16.mxu0 0
  %1551 = vmatpush1.bf16.msra.mxu0 0
  %1552 = vmatprep.subr.bf16.mxu0 0
  %1553 = vmatpush1.bf16.msra.mxu0 0
  %1554 = vmatprep.subr.bf16.mxu0 0
  %1555 = vmatpush1.bf16.msra.mxu0 0
  %1556 = vmatprep.subr.bf16.mxu0 0
  %1557 = vmatpush1.bf16.msra.mxu0 0
  %1558 = vmatprep.subr.bf16.mxu0 0
  %1559 = vmatpush1.bf16.msra.mxu0 0
  %1560 = vmatprep.mubr.bf16.mxu0 0
  %1561 = vmatmul.mubr.bf16.gmra.mrb[0].mxu0 %v147
  %v1562 = vpop.f32.mrb[0].mxu0
  %v1563 = vadd.f32 0.0, %v1562
  %v1564 = vpop.f32.mrb[0].mxu0
  %v1565 = vadd.f32 0.0, %v1564
  %v1566 = vpop.f32.mrb[0].mxu0
  %v1567 = vadd.f32 0.0, %v1566
  %v1568 = vpop.f32.mrb[0].mxu0
  %v1569 = vadd.f32 0.0, %v1568
  %1570 = vmatprep.mubr.bf16.mxu0 0
  %1571 = vmatmul.mubr.bf16.gmra.mrb[0].mxu0 %v150
  %v1572 = vpop.f32.mrb[0].mxu0
  %v1573 = vadd.f32 0.0, %v1572
  %v1574 = vpop.f32.mrb[0].mxu0
  %v1575 = vadd.f32 0.0, %v1574
  %v1576 = vpop.f32.mrb[0].mxu0
  %v1577 = vadd.f32 0.0, %v1576
  %v1578 = vpop.f32.mrb[0].mxu0
  %v1579 = vadd.f32 0.0, %v1578
  %1580 = vmatprep.mubr.bf16.mxu0 0
  %1581 = vmatmul.mubr.bf16.gmra.mrb[0].mxu0 %v153
  %v1582 = vpop.f32.mrb[0].mxu0
  %v1583 = vadd.f32 0.0, %v1582
  %v1584 = vpop.f32.mrb[0].mxu0
  %v1585 = vadd.f32 0.0, %v1584
  %v1586 = vpop.f32.mrb[0].mxu0
  %v1587 = vadd.f32 0.0, %v1586
  %v1588 = vpop.f32.mrb[0].mxu0
  %v1589 = vadd.f32 0.0, %v1588
  %1590 = vmatprep.mubr.bf16.mxu0 0
  %1591 = vmatmul.mubr.bf16.gmra.mrb[0].mxu0 %v156
  %v1592 = vpop.f32.mrb[0].mxu0
  %v1593 = vadd.f32 0.0, %v1592
  %v1594 = vpop.f32.mrb[0].mxu0
  %v1595 = vadd.f32 0.0, %v1594
  %v1596 = vpop.f32.mrb[0].mxu0
  %v1597 = vadd.f32 0.0, %v1596
  %v1598 = vpop.f32.mrb[0].mxu0
  %v1599 = vadd.f32 0.0, %v1598
  %1600 = vmatprep.mubr.bf16.mxu0 0
  %1601 = vmatmul.mubr.bf16.gmra.mrb[0].mxu0 %v159
  %v1602 = vpop.f32.mrb[0].mxu0
  %v1603 = vadd.f32 0.0, %v1602
  %v1604 = vpop.f32.mrb[0].mxu0
  %v1605 = vadd.f32 0.0, %v1604
  %v1606 = vpop.f32.mrb[0].mxu0
  %v1607 = vadd.f32 0.0, %v1606
  %v1608 = vpop.f32.mrb[0].mxu0
  %v1609 = vadd.f32 0.0, %v1608
  %1610 = vmatprep.mubr.bf16.mxu0 0
  %1611 = vmatmul.mubr.bf16.gmra.mrb[0].mxu0 %v162
  %v1612 = vpop.f32.mrb[0].mxu0
  %v1613 = vadd.f32 0.0, %v1612
  %v1614 = vpop.f32.mrb[0].mxu0
  %v1615 = vadd.f32 0.0, %v1614
  %v1616 = vpop.f32.mrb[0].mxu0
  %v1617 = vadd.f32 0.0, %v1616
  %v1618 = vpop.f32.mrb[0].mxu0
  %v1619 = vadd.f32 0.0, %v1618
  %1620 = vmatprep.mubr.bf16.mxu0 0
  %1621 = vmatmul.mubr.bf16.gmra.mrb[0].mxu0 %v165
  %v1622 = vpop.f32.mrb[0].mxu0
  %v1623 = vadd.f32 0.0, %v1622
  %v1624 = vpop.f32.mrb[0].mxu0
  %v1625 = vadd.f32 0.0, %v1624
  %v1626 = vpop.f32.mrb[0].mxu0
  %v1627 = vadd.f32 0.0, %v1626
  %v1628 = vpop.f32.mrb[0].mxu0
  %v1629 = vadd.f32 0.0, %v1628
  %1630 = vmatprep.mubr.bf16.mxu0 0
  %1631 = vmatmul.mubr.bf16.gmra.mrb[0].mxu0 %v168
  %v1632 = vpop.f32.mrb[0].mxu0
  %v1633 = vadd.f32 0.0, %v1632
  %v1634 = vpop.f32.mrb[0].mxu0
  %v1635 = vadd.f32 0.0, %v1634
  %v1636 = vpop.f32.mrb[0].mxu0
  %v1637 = vadd.f32 0.0, %v1636
  %v1638 = vpop.f32.mrb[0].mxu0
  %v1639 = vadd.f32 0.0, %v1638
  %1640 = vmatprep.mubr.bf16.mxu0 0
  %1641 = vmatmul.mubr.bf16.gmra.mrb[0].mxu0 %v171
  %v1642 = vpop.f32.mrb[0].mxu0
  %v1643 = vadd.f32 0.0, %v1642
  %v1644 = vpop.f32.mrb[0].mxu0
  %v1645 = vadd.f32 0.0, %v1644
  %v1646 = vpop.f32.mrb[0].mxu0
  %v1647 = vadd.f32 0.0, %v1646
  %v1648 = vpop.f32.mrb[0].mxu0
  %v1649 = vadd.f32 0.0, %v1648
  %1650 = vmatprep.mubr.bf16.mxu0 0
  %1651 = vmatmul.mubr.bf16.gmra.mrb[0].mxu0 %v174
  %v1652 = vpop.f32.mrb[0].mxu0
  %v1653 = vadd.f32 0.0, %v1652
  %v1654 = vpop.f32.mrb[0].mxu0
  %v1655 = vadd.f32 0.0, %v1654
  %v1656 = vpop.f32.mrb[0].mxu0
  %v1657 = vadd.f32 0.0, %v1656
  %v1658 = vpop.f32.mrb[0].mxu0
  %v1659 = vadd.f32 0.0, %v1658
  %1660 = vmatprep.mubr.bf16.mxu0 0
  %1661 = vmatmul.mubr.bf16.gmra.mrb[0].mxu0 %v177
  %v1662 = vpop.f32.mrb[0].mxu0
  %v1663 = vadd.f32 0.0, %v1662
  %v1664 = vpop.f32.mrb[0].mxu0
  %v1665 = vadd.f32 0.0, %v1664
  %v1666 = vpop.f32.mrb[0].mxu0
  %v1667 = vadd.f32 0.0, %v1666
  %v1668 = vpop.f32.mrb[0].mxu0
  %v1669 = vadd.f32 0.0, %v1668
  %1670 = vmatprep.mubr.bf16.mxu0 0
  %1671 = vmatmul.mubr.bf16.gmra.mrb[0].mxu0 %v1373
  %v1672 = vpop.f32.mrb[0].mxu0
  %v1673 = vadd.f32 0.0, %v1672
  %v1674 = vpop.f32.mrb[0].mxu0
  %v1675 = vadd.f32 0.0, %v1674
  %v1676 = vpop.f32.mrb[0].mxu0
  %v1677 = vadd.f32 0.0, %v1676
  %v1678 = vpop.f32.mrb[0].mxu0
  %v1679 = vadd.f32 0.0, %v1678
  %1680 = vdwg.mxu0
  %v1681 = vadd.f32 %v1226, %v1410
  %v1682 = vadd.f32 %v1227, %v1412
  %v1683 = vadd.f32 %v1228, %v1563
  %v1684 = vadd.f32 %v1229, %v1565
  %v1685 = vadd.f32 %v1230, %v1414
  %v1686 = vadd.f32 %v1231, %v1416
  %v1687 = vadd.f32 %v1232, %v1567
  %v1688 = vadd.f32 %v1233, %v1569
  %v1689 = vadd.f32 %v1234, %v1420
  %v1690 = vadd.f32 %v1235, %v1422
  %v1691 = vadd.f32 %v1236, %v1573
  %v1692 = vadd.f32 %v1237, %v1575
  %v1693 = vadd.f32 %v1238, %v1424
  %v1694 = vadd.f32 %v1239, %v1426
  %v1695 = vadd.f32 %v1240, %v1577
  %v1696 = vadd.f32 %v1241, %v1579
  %v1697 = vadd.f32 %v1242, %v1430
  %v1698 = vadd.f32 %v1243, %v1432
  %v1699 = vadd.f32 %v1244, %v1583
  %v1700 = vadd.f32 %v1245, %v1585
  %v1701 = vadd.f32 %v1246, %v1434
  %v1702 = vadd.f32 %v1247, %v1436
  %v1703 = vadd.f32 %v1248, %v1587
  %v1704 = vadd.f32 %v1249, %v1589
  %v1705 = vadd.f32 %v1250, %v1440
  %v1706 = vadd.f32 %v1251, %v1442
  %v1707 = vadd.f32 %v1252, %v1593
  %v1708 = vadd.f32 %v1253, %v1595
  %v1709 = vadd.f32 %v1254, %v1444
  %v1710 = vadd.f32 %v1255, %v1446
  %v1711 = vadd.f32 %v1256, %v1597
  %v1712 = vadd.f32 %v1257, %v1599
  %v1713 = vadd.f32 %v1258, %v1450
  %v1714 = vadd.f32 %v1259, %v1452
  %v1715 = vadd.f32 %v1260, %v1603
  %v1716 = vadd.f32 %v1261, %v1605
  %v1717 = vadd.f32 %v1262, %v1454
  %v1718 = vadd.f32 %v1263, %v1456
  %v1719 = vadd.f32 %v1264, %v1607
  %v1720 = vadd.f32 %v1265, %v1609
  %v1721 = vadd.f32 %v1266, %v1460
  %v1722 = vadd.f32 %v1267, %v1462
  %v1723 = vadd.f32 %v1268, %v1613
  %v1724 = vadd.f32 %v1269, %v1615
  %v1725 = vadd.f32 %v1270, %v1464
  %v1726 = vadd.f32 %v1271, %v1466
  %v1727 = vadd.f32 %v1272, %v1617
  %v1728 = vadd.f32 %v1273, %v1619
  %v1729 = vadd.f32 %v1274, %v1470
  %v1730 = vadd.f32 %v1275, %v1472
  %v1731 = vadd.f32 %v1276, %v1623
  %v1732 = vadd.f32 %v1277, %v1625
  %v1733 = vadd.f32 %v1278, %v1474
  %v1734 = vadd.f32 %v1279, %v1476
  %v1735 = vadd.f32 %v1280, %v1627
  %v1736 = vadd.f32 %v1281, %v1629
  %v1737 = vadd.f32 %v1282, %v1480
  %v1738 = vadd.f32 %v1283, %v1482
  %v1739 = vadd.f32 %v1284, %v1633
  %v1740 = vadd.f32 %v1285, %v1635
  %v1741 = vadd.f32 %v1286, %v1484
  %v1742 = vadd.f32 %v1287, %v1486
  %v1743 = vadd.f32 %v1288, %v1637
  %v1744 = vadd.f32 %v1289, %v1639
  %v1745 = vadd.f32 %v1290, %v1490
  %v1746 = vadd.f32 %v1291, %v1492
  %v1747 = vadd.f32 %v1292, %v1643
  %v1748 = vadd.f32 %v1293, %v1645
  %v1749 = vadd.f32 %v1294, %v1494
  %v1750 = vadd.f32 %v1295, %v1496
  %v1751 = vadd.f32 %v1296, %v1647
  %v1752 = vadd.f32 %v1297, %v1649
  %v1753 = vadd.f32 %v1298, %v1500
  %v1754 = vadd.f32 %v1299, %v1502
  %v1755 = vadd.f32 %v1300, %v1653
  %v1756 = vadd.f32 %v1301, %v1655
  %v1757 = vadd.f32 %v1302, %v1504
  %v1758 = vadd.f32 %v1303, %v1506
  %v1759 = vadd.f32 %v1304, %v1657
  %v1760 = vadd.f32 %v1305, %v1659
  %v1761 = vadd.f32 %v1306, %v1510
  %v1762 = vadd.f32 %v1307, %v1512
  %v1763 = vadd.f32 %v1308, %v1663
  %v1764 = vadd.f32 %v1309, %v1665
  %v1765 = vadd.f32 %v1310, %v1514
  %v1766 = vadd.f32 %v1311, %v1516
  %v1767 = vadd.f32 %v1312, %v1667
  %v1768 = vadd.f32 %v1313, %v1669
  %v1769 = vadd.f32 %v1314, %v1520
  %v1770 = vadd.f32 %v1315, %v1522
  %v1771 = vadd.f32 %v1316, %v1673
  %v1772 = vadd.f32 %v1317, %v1675
  %v1773 = vadd.f32 %v1318, %v1524
  %v1774 = vadd.f32 %v1319, %v1526
  %v1775 = vadd.f32 %v1320, %v1677
  %v1776 = vadd.f32 %v1321, %v1679
  %v1777 = vpack.c.bf16 %v60, %v59
  %s1778 = scalar_lea.vmem %s1, 256
  %v1779 = vld [vmem:[%s1778] sm:$0xff]
  %v1780 = vld [vmem:[%s1778 + $0x8] sm:$0xff]
  %v1781 = vld [vmem:[%s1778 + $0x10] sm:$0xff]
  %v1782 = vld [vmem:[%s1778 + $0x18] sm:$0xff]
  %v1783 = vld [vmem:[%s1778 + $0x20] sm:$0xff]
  %v1784 = vld [vmem:[%s1778 + $0x28] sm:$0xff]
  %v1785 = vld [vmem:[%s1778 + $0x30] sm:$0xff]
  %v1786 = vld [vmem:[%s1778 + $0x38] sm:$0xff]
  %v1795 = vunpack.c.l.b16 %v1779
  %v1796 = vunpack.c.h.b16 %v1779
  %v1797 = vunpack.c.l.b16 %v1780
  %v1798 = vunpack.c.h.b16 %v1780
  %v1799 = vunpack.c.l.b16 %v1781
  %v1800 = vunpack.c.h.b16 %v1781
  %v1801 = vunpack.c.l.b16 %v1782
  %v1802 = vunpack.c.h.b16 %v1782
  %v1803 = vunpack.c.l.b16 %v1783
  %v1804 = vunpack.c.h.b16 %v1783
  %v1805 = vunpack.c.l.b16 %v1784
  %v1806 = vunpack.c.h.b16 %v1784
  %v1807 = vunpack.c.l.b16 %v1785
  %v1808 = vunpack.c.h.b16 %v1785
  %v1809 = vunpack.c.l.b16 %v1786
  %v1810 = vunpack.c.h.b16 %v1786
  %v1811 = vpack.c.b16 %v1799, %v1795
  %v1812 = vpack.c.b16 %v1800, %v1796
  %v1813 = vpack.c.b16 %v1801, %v1797
  %v1814 = vpack.c.b16 %v1802, %v1798
  %v1815 = vpack.c.b16 %v1807, %v1803
  %v1816 = vpack.c.b16 %v1808, %v1804
  %v1817 = vpack.c.b16 %v1809, %v1805
  %v1818 = vpack.c.b16 %v1810, %v1806
  %v1828 = vsel %vm142, %v1777, 0
  %1830 = vmatprep.subr.bf16.mxu0 %v1812
  %1831 = vmatpush1.bf16.msra.mxu0 %v1811
  %1832 = vmatprep.subr.bf16.mxu0 %v1816
  %1833 = vmatpush1.bf16.msra.mxu0 %v1815
  %1834 = vmatprep.subr.bf16.mxu0 0
  %1835 = vmatpush1.bf16.msra.mxu0 0
  %1836 = vmatprep.subr.bf16.mxu0 0
  %1837 = vmatpush1.bf16.msra.mxu0 0
  %1838 = vmatprep.subr.bf16.mxu0 0
  %1839 = vmatpush1.bf16.msra.mxu0 0
  %1840 = vmatprep.subr.bf16.mxu0 0
  %1841 = vmatpush1.bf16.msra.mxu0 0
  %1842 = vmatprep.subr.bf16.mxu0 0
  %1843 = vmatpush1.bf16.msra.mxu0 0
  %1844 = vmatprep.subr.bf16.mxu0 0
  %1845 = vmatpush1.bf16.msra.mxu0 0
  %1846 = vmatprep.subr.bf16.mxu0 0
  %1847 = vmatpush1.bf16.msra.mxu0 0
  %1848 = vmatprep.subr.bf16.mxu0 0
  %1849 = vmatpush1.bf16.msra.mxu0 0
  %1850 = vmatprep.subr.bf16.mxu0 0
  %1851 = vmatpush1.bf16.msra.mxu0 0
  %1852 = vmatprep.subr.bf16.mxu0 0
  %1853 = vmatpush1.bf16.msra.mxu0 0
  %1854 = vmatprep.subr.bf16.mxu0 0
  %1855 = vmatpush1.bf16.msra.mxu0 0
  %1856 = vmatprep.subr.bf16.mxu0 0
  %1857 = vmatpush1.bf16.msra.mxu0 0
  %1858 = vmatprep.subr.bf16.mxu0 0
  %1859 = vmatpush1.bf16.msra.mxu0 0
  %1860 = vmatprep.subr.bf16.mxu0 0
  %1861 = vmatpush1.bf16.msra.mxu0 0
  %1862 = vmatprep.mubr.bf16.mxu0 0
  %1863 = vmatmul.mubr.bf16.gmra.mrb[0].mxu0 %v532
  %v1864 = vpop.f32.mrb[0].mxu0
  %v1865 = vadd.f32 0.0, %v1864
  %v1866 = vpop.f32.mrb[0].mxu0
  %v1867 = vadd.f32 0.0, %v1866
  %v1868 = vpop.f32.mrb[0].mxu0
  %v1869 = vadd.f32 0.0, %v1868
  %v1870 = vpop.f32.mrb[0].mxu0
  %v1871 = vadd.f32 0.0, %v1870
  %1872 = vmatprep.mubr.bf16.mxu0 0
  %1873 = vmatmul.mubr.bf16.gmra.mrb[0].mxu0 %v535
  %v1874 = vpop.f32.mrb[0].mxu0
  %v1875 = vadd.f32 0.0, %v1874
  %v1876 = vpop.f32.mrb[0].mxu0
  %v1877 = vadd.f32 0.0, %v1876
  %v1878 = vpop.f32.mrb[0].mxu0
  %v1879 = vadd.f32 0.0, %v1878
  %v1880 = vpop.f32.mrb[0].mxu0
  %v1881 = vadd.f32 0.0, %v1880
  %1882 = vmatprep.mubr.bf16.mxu0 0
  %1883 = vmatmul.mubr.bf16.gmra.mrb[0].mxu0 %v538
  %v1884 = vpop.f32.mrb[0].mxu0
  %v1885 = vadd.f32 0.0, %v1884
  %v1886 = vpop.f32.mrb[0].mxu0
  %v1887 = vadd.f32 0.0, %v1886
  %v1888 = vpop.f32.mrb[0].mxu0
  %v1889 = vadd.f32 0.0, %v1888
  %v1890 = vpop.f32.mrb[0].mxu0
  %v1891 = vadd.f32 0.0, %v1890
  %1892 = vmatprep.mubr.bf16.mxu0 0
  %1893 = vmatmul.mubr.bf16.gmra.mrb[0].mxu0 %v541
  %v1894 = vpop.f32.mrb[0].mxu0
  %v1895 = vadd.f32 0.0, %v1894
  %v1896 = vpop.f32.mrb[0].mxu0
  %v1897 = vadd.f32 0.0, %v1896
  %v1898 = vpop.f32.mrb[0].mxu0
  %v1899 = vadd.f32 0.0, %v1898
  %v1900 = vpop.f32.mrb[0].mxu0
  %v1901 = vadd.f32 0.0, %v1900
  %1902 = vmatprep.mubr.bf16.mxu0 0
  %1903 = vmatmul.mubr.bf16.gmra.mrb[0].mxu0 %v544
  %v1904 = vpop.f32.mrb[0].mxu0
  %v1905 = vadd.f32 0.0, %v1904
  %v1906 = vpop.f32.mrb[0].mxu0
  %v1907 = vadd.f32 0.0, %v1906
  %v1908 = vpop.f32.mrb[0].mxu0
  %v1909 = vadd.f32 0.0, %v1908
  %v1910 = vpop.f32.mrb[0].mxu0
  %v1911 = vadd.f32 0.0, %v1910
  %1912 = vmatprep.mubr.bf16.mxu0 0
  %1913 = vmatmul.mubr.bf16.gmra.mrb[0].mxu0 %v547
  %v1914 = vpop.f32.mrb[0].mxu0
  %v1915 = vadd.f32 0.0, %v1914
  %v1916 = vpop.f32.mrb[0].mxu0
  %v1917 = vadd.f32 0.0, %v1916
  %v1918 = vpop.f32.mrb[0].mxu0
  %v1919 = vadd.f32 0.0, %v1918
  %v1920 = vpop.f32.mrb[0].mxu0
  %v1921 = vadd.f32 0.0, %v1920
  %1922 = vmatprep.mubr.bf16.mxu0 0
  %1923 = vmatmul.mubr.bf16.gmra.mrb[0].mxu0 %v550
  %v1924 = vpop.f32.mrb[0].mxu0
  %v1925 = vadd.f32 0.0, %v1924
  %v1926 = vpop.f32.mrb[0].mxu0
  %v1927 = vadd.f32 0.0, %v1926
  %v1928 = vpop.f32.mrb[0].mxu0
  %v1929 = vadd.f32 0.0, %v1928
  %v1930 = vpop.f32.mrb[0].mxu0
  %v1931 = vadd.f32 0.0, %v1930
  %1932 = vmatprep.mubr.bf16.mxu0 0
  %1933 = vmatmul.mubr.bf16.gmra.mrb[0].mxu0 %v553
  %v1934 = vpop.f32.mrb[0].mxu0
  %v1935 = vadd.f32 0.0, %v1934
  %v1936 = vpop.f32.mrb[0].mxu0
  %v1937 = vadd.f32 0.0, %v1936
  %v1938 = vpop.f32.mrb[0].mxu0
  %v1939 = vadd.f32 0.0, %v1938
  %v1940 = vpop.f32.mrb[0].mxu0
  %v1941 = vadd.f32 0.0, %v1940
  %1942 = vmatprep.mubr.bf16.mxu0 0
  %1943 = vmatmul.mubr.bf16.gmra.mrb[0].mxu0 %v556
  %v1944 = vpop.f32.mrb[0].mxu0
  %v1945 = vadd.f32 0.0, %v1944
  %v1946 = vpop.f32.mrb[0].mxu0
  %v1947 = vadd.f32 0.0, %v1946
  %v1948 = vpop.f32.mrb[0].mxu0
  %v1949 = vadd.f32 0.0, %v1948
  %v1950 = vpop.f32.mrb[0].mxu0
  %v1951 = vadd.f32 0.0, %v1950
  %1952 = vmatprep.mubr.bf16.mxu0 0
  %1953 = vmatmul.mubr.bf16.gmra.mrb[0].mxu0 %v559
  %v1954 = vpop.f32.mrb[0].mxu0
  %v1955 = vadd.f32 0.0, %v1954
  %v1956 = vpop.f32.mrb[0].mxu0
  %v1957 = vadd.f32 0.0, %v1956
  %v1958 = vpop.f32.mrb[0].mxu0
  %v1959 = vadd.f32 0.0, %v1958
  %v1960 = vpop.f32.mrb[0].mxu0
  %v1961 = vadd.f32 0.0, %v1960
  %1962 = vmatprep.mubr.bf16.mxu0 0
  %1963 = vmatmul.mubr.bf16.gmra.mrb[0].mxu0 %v918
  %v1964 = vpop.f32.mrb[0].mxu0
  %v1965 = vadd.f32 0.0, %v1964
  %v1966 = vpop.f32.mrb[0].mxu0
  %v1967 = vadd.f32 0.0, %v1966
  %v1968 = vpop.f32.mrb[0].mxu0
  %v1969 = vadd.f32 0.0, %v1968
  %v1970 = vpop.f32.mrb[0].mxu0
  %v1971 = vadd.f32 0.0, %v1970
  %1972 = vmatprep.mubr.bf16.mxu0 0
  %1973 = vmatmul.mubr.bf16.gmra.mrb[0].mxu0 %v1828
  %v1974 = vpop.f32.mrb[0].mxu0
  %v1975 = vadd.f32 0.0, %v1974
  %v1976 = vpop.f32.mrb[0].mxu0
  %v1977 = vadd.f32 0.0, %v1976
  %v1978 = vpop.f32.mrb[0].mxu0
  %v1979 = vadd.f32 0.0, %v1978
  %v1980 = vpop.f32.mrb[0].mxu0
  %v1981 = vadd.f32 0.0, %v1980
  %1982 = vdwg.mxu0
  %1983 = vmatprep.subr.bf16.mxu0 %v1814
  %1984 = vmatpush1.bf16.msra.mxu0 %v1813
  %1985 = vmatprep.subr.bf16.mxu0 %v1818
  %1986 = vmatpush1.bf16.msra.mxu0 %v1817
  %1987 = vmatprep.subr.bf16.mxu0 0
  %1988 = vmatpush1.bf16.msra.mxu0 0
  %1989 = vmatprep.subr.bf16.mxu0 0
  %1990 = vmatpush1.bf16.msra.mxu0 0
  %1991 = vmatprep.subr.bf16.mxu0 0
  %1992 = vmatpush1.bf16.msra.mxu0 0
  %1993 = vmatprep.subr.bf16.mxu0 0
  %1994 = vmatpush1.bf16.msra.mxu0 0
  %1995 = vmatprep.subr.bf16.mxu0 0
  %1996 = vmatpush1.bf16.msra.mxu0 0
  %1997 = vmatprep.subr.bf16.mxu0 0
  %1998 = vmatpush1.bf16.msra.mxu0 0
  %1999 = vmatprep.subr.bf16.mxu0 0
  %2000 = vmatpush1.bf16.msra.mxu0 0
  %2001 = vmatprep.subr.bf16.mxu0 0
  %2002 = vmatpush1.bf16.msra.mxu0 0
  %2003 = vmatprep.subr.bf16.mxu0 0
  %2004 = vmatpush1.bf16.msra.mxu0 0
  %2005 = vmatprep.subr.bf16.mxu0 0
  %2006 = vmatpush1.bf16.msra.mxu0 0
  %2007 = vmatprep.subr.bf16.mxu0 0
  %2008 = vmatpush1.bf16.msra.mxu0 0
  %2009 = vmatprep.subr.bf16.mxu0 0
  %2010 = vmatpush1.bf16.msra.mxu0 0
  %2011 = vmatprep.subr.bf16.mxu0 0
  %2012 = vmatpush1.bf16.msra.mxu0 0
  %2013 = vmatprep.subr.bf16.mxu0 0
  %2014 = vmatpush1.bf16.msra.mxu0 0
  %2015 = vmatprep.mubr.bf16.mxu0 0
  %2016 = vmatmul.mubr.bf16.gmra.mrb[0].mxu0 %v532
  %v2017 = vpop.f32.mrb[0].mxu0
  %v2018 = vadd.f32 0.0, %v2017
  %v2019 = vpop.f32.mrb[0].mxu0
  %v2020 = vadd.f32 0.0, %v2019
  %v2021 = vpop.f32.mrb[0].mxu0
  %v2022 = vadd.f32 0.0, %v2021
  %v2023 = vpop.f32.mrb[0].mxu0
  %v2024 = vadd.f32 0.0, %v2023
  %2025 = vmatprep.mubr.bf16.mxu0 0
  %2026 = vmatmul.mubr.bf16.gmra.mrb[0].mxu0 %v535
  %v2027 = vpop.f32.mrb[0].mxu0
  %v2028 = vadd.f32 0.0, %v2027
  %v2029 = vpop.f32.mrb[0].mxu0
  %v2030 = vadd.f32 0.0, %v2029
  %v2031 = vpop.f32.mrb[0].mxu0
  %v2032 = vadd.f32 0.0, %v2031
  %v2033 = vpop.f32.mrb[0].mxu0
  %v2034 = vadd.f32 0.0, %v2033
  %2035 = vmatprep.mubr.bf16.mxu0 0
  %2036 = vmatmul.mubr.bf16.gmra.mrb[0].mxu0 %v538
  %v2037 = vpop.f32.mrb[0].mxu0
  %v2038 = vadd.f32 0.0, %v2037
  %v2039 = vpop.f32.mrb[0].mxu0
  %v2040 = vadd.f32 0.0, %v2039
  %v2041 = vpop.f32.mrb[0].mxu0
  %v2042 = vadd.f32 0.0, %v2041
  %v2043 = vpop.f32.mrb[0].mxu0
  %v2044 = vadd.f32 0.0, %v2043
  %2045 = vmatprep.mubr.bf16.mxu0 0
  %2046 = vmatmul.mubr.bf16.gmra.mrb[0].mxu0 %v541
  %v2047 = vpop.f32.mrb[0].mxu0
  %v2048 = vadd.f32 0.0, %v2047
  %v2049 = vpop.f32.mrb[0].mxu0
  %v2050 = vadd.f32 0.0, %v2049
  %v2051 = vpop.f32.mrb[0].mxu0
  %v2052 = vadd.f32 0.0, %v2051
  %v2053 = vpop.f32.mrb[0].mxu0
  %v2054 = vadd.f32 0.0, %v2053
  %2055 = vmatprep.mubr.bf16.mxu0 0
  %2056 = vmatmul.mubr.bf16.gmra.mrb[0].mxu0 %v544
  %v2057 = vpop.f32.mrb[0].mxu0
  %v2058 = vadd.f32 0.0, %v2057
  %v2059 = vpop.f32.mrb[0].mxu0
  %v2060 = vadd.f32 0.0, %v2059
  %v2061 = vpop.f32.mrb[0].mxu0
  %v2062 = vadd.f32 0.0, %v2061
  %v2063 = vpop.f32.mrb[0].mxu0
  %v2064 = vadd.f32 0.0, %v2063
  %2065 = vmatprep.mubr.bf16.mxu0 0
  %2066 = vmatmul.mubr.bf16.gmra.mrb[0].mxu0 %v547
  %v2067 = vpop.f32.mrb[0].mxu0
  %v2068 = vadd.f32 0.0, %v2067
  %v2069 = vpop.f32.mrb[0].mxu0
  %v2070 = vadd.f32 0.0, %v2069
  %v2071 = vpop.f32.mrb[0].mxu0
  %v2072 = vadd.f32 0.0, %v2071
  %v2073 = vpop.f32.mrb[0].mxu0
  %v2074 = vadd.f32 0.0, %v2073
  %2075 = vmatprep.mubr.bf16.mxu0 0
  %2076 = vmatmul.mubr.bf16.gmra.mrb[0].mxu0 %v550
  %v2077 = vpop.f32.mrb[0].mxu0
  %v2078 = vadd.f32 0.0, %v2077
  %v2079 = vpop.f32.mrb[0].mxu0
  %v2080 = vadd.f32 0.0, %v2079
  %v2081 = vpop.f32.mrb[0].mxu0
  %v2082 = vadd.f32 0.0, %v2081
  %v2083 = vpop.f32.mrb[0].mxu0
  %v2084 = vadd.f32 0.0, %v2083
  %2085 = vmatprep.mubr.bf16.mxu0 0
  %2086 = vmatmul.mubr.bf16.gmra.mrb[0].mxu0 %v553
  %v2087 = vpop.f32.mrb[0].mxu0
  %v2088 = vadd.f32 0.0, %v2087
  %v2089 = vpop.f32.mrb[0].mxu0
  %v2090 = vadd.f32 0.0, %v2089
  %v2091 = vpop.f32.mrb[0].mxu0
  %v2092 = vadd.f32 0.0, %v2091
  %v2093 = vpop.f32.mrb[0].mxu0
  %v2094 = vadd.f32 0.0, %v2093
  %2095 = vmatprep.mubr.bf16.mxu0 0
  %2096 = vmatmul.mubr.bf16.gmra.mrb[0].mxu0 %v556
  %v2097 = vpop.f32.mrb[0].mxu0
  %v2098 = vadd.f32 0.0, %v2097
  %v2099 = vpop.f32.mrb[0].mxu0
  %v2100 = vadd.f32 0.0, %v2099
  %v2101 = vpop.f32.mrb[0].mxu0
  %v2102 = vadd.f32 0.0, %v2101
  %v2103 = vpop.f32.mrb[0].mxu0
  %v2104 = vadd.f32 0.0, %v2103
  %2105 = vmatprep.mubr.bf16.mxu0 0
  %2106 = vmatmul.mubr.bf16.gmra.mrb[0].mxu0 %v559
  %v2107 = vpop.f32.mrb[0].mxu0
  %v2108 = vadd.f32 0.0, %v2107
  %v2109 = vpop.f32.mrb[0].mxu0
  %v2110 = vadd.f32 0.0, %v2109
  %v2111 = vpop.f32.mrb[0].mxu0
  %v2112 = vadd.f32 0.0, %v2111
  %v2113 = vpop.f32.mrb[0].mxu0
  %v2114 = vadd.f32 0.0, %v2113
  %2115 = vmatprep.mubr.bf16.mxu0 0
  %2116 = vmatmul.mubr.bf16.gmra.mrb[0].mxu0 %v918
  %v2117 = vpop.f32.mrb[0].mxu0
  %v2118 = vadd.f32 0.0, %v2117
  %v2119 = vpop.f32.mrb[0].mxu0
  %v2120 = vadd.f32 0.0, %v2119
  %v2121 = vpop.f32.mrb[0].mxu0
  %v2122 = vadd.f32 0.0, %v2121
  %v2123 = vpop.f32.mrb[0].mxu0
  %v2124 = vadd.f32 0.0, %v2123
  %2125 = vmatprep.mubr.bf16.mxu0 0
  %2126 = vmatmul.mubr.bf16.gmra.mrb[0].mxu0 %v1828
  %v2127 = vpop.f32.mrb[0].mxu0
  %v2128 = vadd.f32 0.0, %v2127
  %v2129 = vpop.f32.mrb[0].mxu0
  %v2130 = vadd.f32 0.0, %v2129
  %v2131 = vpop.f32.mrb[0].mxu0
  %v2132 = vadd.f32 0.0, %v2131
  %v2133 = vpop.f32.mrb[0].mxu0
  %v2134 = vadd.f32 0.0, %v2133
  %2135 = vdwg.mxu0
  %v2136 = vadd.f32 %v1681, %v1865
  %v2137 = vadd.f32 %v1682, %v1867
  %v2138 = vadd.f32 %v1683, %v2018
  %v2139 = vadd.f32 %v1684, %v2020
  %v2140 = vadd.f32 %v1685, %v1869
  %v2141 = vadd.f32 %v1686, %v1871
  %v2142 = vadd.f32 %v1687, %v2022
  %v2143 = vadd.f32 %v1688, %v2024
  %v2144 = vadd.f32 %v1689, %v1875
  %v2145 = vadd.f32 %v1690, %v1877
  %v2146 = vadd.f32 %v1691, %v2028
  %v2147 = vadd.f32 %v1692, %v2030
  %v2148 = vadd.f32 %v1693, %v1879
  %v2149 = vadd.f32 %v1694, %v1881
  %v2150 = vadd.f32 %v1695, %v2032
  %v2151 = vadd.f32 %v1696, %v2034
  %v2152 = vadd.f32 %v1697, %v1885
  %v2153 = vadd.f32 %v1698, %v1887
  %v2154 = vadd.f32 %v1699, %v2038
  %v2155 = vadd.f32 %v1700, %v2040
  %v2156 = vadd.f32 %v1701, %v1889
  %v2157 = vadd.f32 %v1702, %v1891
  %v2158 = vadd.f32 %v1703, %v2042
  %v2159 = vadd.f32 %v1704, %v2044
  %v2160 = vadd.f32 %v1705, %v1895
  %v2161 = vadd.f32 %v1706, %v1897
  %v2162 = vadd.f32 %v1707, %v2048
  %v2163 = vadd.f32 %v1708, %v2050
  %v2164 = vadd.f32 %v1709, %v1899
  %v2165 = vadd.f32 %v1710, %v1901
  %v2166 = vadd.f32 %v1711, %v2052
  %v2167 = vadd.f32 %v1712, %v2054
  %v2168 = vadd.f32 %v1713, %v1905
  %v2169 = vadd.f32 %v1714, %v1907
  %v2170 = vadd.f32 %v1715, %v2058
  %v2171 = vadd.f32 %v1716, %v2060
  %v2172 = vadd.f32 %v1717, %v1909
  %v2173 = vadd.f32 %v1718, %v1911
  %v2174 = vadd.f32 %v1719, %v2062
  %v2175 = vadd.f32 %v1720, %v2064
  %v2176 = vadd.f32 %v1721, %v1915
  %v2177 = vadd.f32 %v1722, %v1917
  %v2178 = vadd.f32 %v1723, %v2068
  %v2179 = vadd.f32 %v1724, %v2070
  %v2180 = vadd.f32 %v1725, %v1919
  %v2181 = vadd.f32 %v1726, %v1921
  %v2182 = vadd.f32 %v1727, %v2072
  %v2183 = vadd.f32 %v1728, %v2074
  %v2184 = vadd.f32 %v1729, %v1925
  %v2185 = vadd.f32 %v1730, %v1927
  %v2186 = vadd.f32 %v1731, %v2078
  %v2187 = vadd.f32 %v1732, %v2080
  %v2188 = vadd.f32 %v1733, %v1929
  %v2189 = vadd.f32 %v1734, %v1931
  %v2190 = vadd.f32 %v1735, %v2082
  %v2191 = vadd.f32 %v1736, %v2084
  %v2192 = vadd.f32 %v1737, %v1935
  %v2193 = vadd.f32 %v1738, %v1937
  %v2194 = vadd.f32 %v1739, %v2088
  %v2195 = vadd.f32 %v1740, %v2090
  %v2196 = vadd.f32 %v1741, %v1939
  %v2197 = vadd.f32 %v1742, %v1941
  %v2198 = vadd.f32 %v1743, %v2092
  %v2199 = vadd.f32 %v1744, %v2094
  %v2200 = vadd.f32 %v1745, %v1945
  %v2201 = vadd.f32 %v1746, %v1947
  %v2202 = vadd.f32 %v1747, %v2098
  %v2203 = vadd.f32 %v1748, %v2100
  %v2204 = vadd.f32 %v1749, %v1949
  %v2205 = vadd.f32 %v1750, %v1951
  %v2206 = vadd.f32 %v1751, %v2102
  %v2207 = vadd.f32 %v1752, %v2104
  %v2208 = vadd.f32 %v1753, %v1955
  %v2209 = vadd.f32 %v1754, %v1957
  %v2210 = vadd.f32 %v1755, %v2108
  %v2211 = vadd.f32 %v1756, %v2110
  %v2212 = vadd.f32 %v1757, %v1959
  %v2213 = vadd.f32 %v1758, %v1961
  %v2214 = vadd.f32 %v1759, %v2112
  %v2215 = vadd.f32 %v1760, %v2114
  %v2216 = vadd.f32 %v1761, %v1965
  %v2217 = vadd.f32 %v1762, %v1967
  %v2218 = vadd.f32 %v1763, %v2118
  %v2219 = vadd.f32 %v1764, %v2120
  %v2220 = vadd.f32 %v1765, %v1969
  %v2221 = vadd.f32 %v1766, %v1971
  %v2222 = vadd.f32 %v1767, %v2122
  %v2223 = vadd.f32 %v1768, %v2124
  %v2224 = vadd.f32 %v1769, %v1975
  %v2225 = vadd.f32 %v1770, %v1977
  %v2226 = vadd.f32 %v1771, %v2128
  %v2227 = vadd.f32 %v1772, %v2130
  %v2228 = vadd.f32 %v1773, %v1979
  %v2229 = vadd.f32 %v1774, %v1981
  %v2230 = vadd.f32 %v1775, %v2132
  %v2231 = vadd.f32 %v1776, %v2134
  %v2232 = vld [vmem:[%s2] sm:$0xf]
  %v2234 = vlaneseq
  %v2235 = vshrl.u32 %v2234, 7
  %v2236 = vsub.s32 0, %v2235
  %v2237 = vrot.slane %v2232, %v2236
  %v2238 = vlaneseq
  %v2239 = vshrl.u32 %v2238, 7
  %v2240 = vsub.s32 1, %v2239
  %v2241 = vrot.slane %v2232, %v2240
  %v2242 = vlaneseq
  %v2243 = vshrl.u32 %v2242, 7
  %v2244 = vsub.s32 2, %v2243
  %v2245 = vrot.slane %v2232, %v2244
  %v2246 = vlaneseq
  %v2247 = vshrl.u32 %v2246, 7
  %v2248 = vsub.s32 3, %v2247
  %v2249 = vrot.slane %v2232, %v2248
  %v2254 = vadd.f32 %v2136, %v2237
  %v2255 = vadd.f32 %v2137, %v2241
  %v2256 = vadd.f32 %v2138, %v2245
  %v2257 = vadd.f32 %v2139, %v2249
  %v2258 = vadd.f32 %v2140, %v2237
  %v2259 = vadd.f32 %v2141, %v2241
  %v2260 = vadd.f32 %v2142, %v2245
  %v2261 = vadd.f32 %v2143, %v2249
  %v2262 = vadd.f32 %v2144, %v2237
  %v2263 = vadd.f32 %v2145, %v2241
  %v2264 = vadd.f32 %v2146, %v2245
  %v2265 = vadd.f32 %v2147, %v2249
  %v2266 = vadd.f32 %v2148, %v2237
  %v2267 = vadd.f32 %v2149, %v2241
  %v2268 = vadd.f32 %v2150, %v2245
  %v2269 = vadd.f32 %v2151, %v2249
  %v2270 = vadd.f32 %v2152, %v2237
  %v2271 = vadd.f32 %v2153, %v2241
  %v2272 = vadd.f32 %v2154, %v2245
  %v2273 = vadd.f32 %v2155, %v2249
  %v2274 = vadd.f32 %v2156, %v2237
  %v2275 = vadd.f32 %v2157, %v2241
  %v2276 = vadd.f32 %v2158, %v2245
  %v2277 = vadd.f32 %v2159, %v2249
  %v2278 = vadd.f32 %v2160, %v2237
  %v2279 = vadd.f32 %v2161, %v2241
  %v2280 = vadd.f32 %v2162, %v2245
  %v2281 = vadd.f32 %v2163, %v2249
  %v2282 = vadd.f32 %v2164, %v2237
  %v2283 = vadd.f32 %v2165, %v2241
  %v2284 = vadd.f32 %v2166, %v2245
  %v2285 = vadd.f32 %v2167, %v2249
  %v2286 = vadd.f32 %v2168, %v2237
  %v2287 = vadd.f32 %v2169, %v2241
  %v2288 = vadd.f32 %v2170, %v2245
  %v2289 = vadd.f32 %v2171, %v2249
  %v2290 = vadd.f32 %v2172, %v2237
  %v2291 = vadd.f32 %v2173, %v2241
  %v2292 = vadd.f32 %v2174, %v2245
  %v2293 = vadd.f32 %v2175, %v2249
  %v2294 = vadd.f32 %v2176, %v2237
  %v2295 = vadd.f32 %v2177, %v2241
  %v2296 = vadd.f32 %v2178, %v2245
  %v2297 = vadd.f32 %v2179, %v2249
  %v2298 = vadd.f32 %v2180, %v2237
  %v2299 = vadd.f32 %v2181, %v2241
  %v2300 = vadd.f32 %v2182, %v2245
  %v2301 = vadd.f32 %v2183, %v2249
  %v2302 = vadd.f32 %v2184, %v2237
  %v2303 = vadd.f32 %v2185, %v2241
  %v2304 = vadd.f32 %v2186, %v2245
  %v2305 = vadd.f32 %v2187, %v2249
  %v2306 = vadd.f32 %v2188, %v2237
  %v2307 = vadd.f32 %v2189, %v2241
  %v2308 = vadd.f32 %v2190, %v2245
  %v2309 = vadd.f32 %v2191, %v2249
  %v2310 = vadd.f32 %v2192, %v2237
  %v2311 = vadd.f32 %v2193, %v2241
  %v2312 = vadd.f32 %v2194, %v2245
  %v2313 = vadd.f32 %v2195, %v2249
  %v2314 = vadd.f32 %v2196, %v2237
  %v2315 = vadd.f32 %v2197, %v2241
  %v2316 = vadd.f32 %v2198, %v2245
  %v2317 = vadd.f32 %v2199, %v2249
  %v2318 = vadd.f32 %v2200, %v2237
  %v2319 = vadd.f32 %v2201, %v2241
  %v2320 = vadd.f32 %v2202, %v2245
  %v2321 = vadd.f32 %v2203, %v2249
  %v2322 = vadd.f32 %v2204, %v2237
  %v2323 = vadd.f32 %v2205, %v2241
  %v2324 = vadd.f32 %v2206, %v2245
  %v2325 = vadd.f32 %v2207, %v2249
  %v2326 = vadd.f32 %v2208, %v2237
  %v2327 = vadd.f32 %v2209, %v2241
  %v2328 = vadd.f32 %v2210, %v2245
  %v2329 = vadd.f32 %v2211, %v2249
  %v2330 = vadd.f32 %v2212, %v2237
  %v2331 = vadd.f32 %v2213, %v2241
  %v2332 = vadd.f32 %v2214, %v2245
  %v2333 = vadd.f32 %v2215, %v2249
  %v2334 = vadd.f32 %v2216, %v2237
  %v2335 = vadd.f32 %v2217, %v2241
  %v2336 = vadd.f32 %v2218, %v2245
  %v2337 = vadd.f32 %v2219, %v2249
  %v2338 = vadd.f32 %v2220, %v2237
  %v2339 = vadd.f32 %v2221, %v2241
  %v2340 = vadd.f32 %v2222, %v2245
  %v2341 = vadd.f32 %v2223, %v2249
  %v2342 = vadd.f32 %v2224, %v2237
  %v2343 = vadd.f32 %v2225, %v2241
  %v2344 = vadd.f32 %v2226, %v2245
  %v2345 = vadd.f32 %v2227, %v2249
  %v2346 = vadd.f32 %v2228, %v2237
  %v2347 = vadd.f32 %v2229, %v2241
  %v2348 = vadd.f32 %v2230, %v2245
  %v2349 = vadd.f32 %v2231, %v2249
  %v2350 = vmax.f32 %v2254, 0.0
  %v2351 = vmax.f32 %v2255, 0.0
  %v2352 = vmax.f32 %v2256, 0.0
  %v2353 = vmax.f32 %v2257, 0.0
  %v2354 = vmax.f32 %v2258, 0.0
  %v2355 = vmax.f32 %v2259, 0.0
  %v2356 = vmax.f32 %v2260, 0.0
  %v2357 = vmax.f32 %v2261, 0.0
  %v2358 = vmax.f32 %v2262, 0.0
  %v2359 = vmax.f32 %v2263, 0.0
  %v2360 = vmax.f32 %v2264, 0.0
  %v2361 = vmax.f32 %v2265, 0.0
  %v2362 = vmax.f32 %v2266, 0.0
  %v2363 = vmax.f32 %v2267, 0.0
  %v2364 = vmax.f32 %v2268, 0.0
  %v2365 = vmax.f32 %v2269, 0.0
  %v2366 = vmax.f32 %v2270, 0.0
  %v2367 = vmax.f32 %v2271, 0.0
  %v2368 = vmax.f32 %v2272, 0.0
  %v2369 = vmax.f32 %v2273, 0.0
  %v2370 = vmax.f32 %v2274, 0.0
  %v2371 = vmax.f32 %v2275, 0.0
  %v2372 = vmax.f32 %v2276, 0.0
  %v2373 = vmax.f32 %v2277, 0.0
  %v2374 = vmax.f32 %v2278, 0.0
  %v2375 = vmax.f32 %v2279, 0.0
  %v2376 = vmax.f32 %v2280, 0.0
  %v2377 = vmax.f32 %v2281, 0.0
  %v2378 = vmax.f32 %v2282, 0.0
  %v2379 = vmax.f32 %v2283, 0.0
  %v2380 = vmax.f32 %v2284, 0.0
  %v2381 = vmax.f32 %v2285, 0.0
  %v2382 = vmax.f32 %v2286, 0.0
  %v2383 = vmax.f32 %v2287, 0.0
  %v2384 = vmax.f32 %v2288, 0.0
  %v2385 = vmax.f32 %v2289, 0.0
  %v2386 = vmax.f32 %v2290, 0.0
  %v2387 = vmax.f32 %v2291, 0.0
  %v2388 = vmax.f32 %v2292, 0.0
  %v2389 = vmax.f32 %v2293, 0.0
  %v2390 = vmax.f32 %v2294, 0.0
  %v2391 = vmax.f32 %v2295, 0.0
  %v2392 = vmax.f32 %v2296, 0.0
  %v2393 = vmax.f32 %v2297, 0.0
  %v2394 = vmax.f32 %v2298, 0.0
  %v2395 = vmax.f32 %v2299, 0.0
  %v2396 = vmax.f32 %v2300, 0.0
  %v2397 = vmax.f32 %v2301, 0.0
  %v2398 = vmax.f32 %v2302, 0.0
  %v2399 = vmax.f32 %v2303, 0.0
  %v2400 = vmax.f32 %v2304, 0.0
  %v2401 = vmax.f32 %v2305, 0.0
  %v2402 = vmax.f32 %v2306, 0.0
  %v2403 = vmax.f32 %v2307, 0.0
  %v2404 = vmax.f32 %v2308, 0.0
  %v2405 = vmax.f32 %v2309, 0.0
  %v2406 = vmax.f32 %v2310, 0.0
  %v2407 = vmax.f32 %v2311, 0.0
  %v2408 = vmax.f32 %v2312, 0.0
  %v2409 = vmax.f32 %v2313, 0.0
  %v2410 = vmax.f32 %v2314, 0.0
  %v2411 = vmax.f32 %v2315, 0.0
  %v2412 = vmax.f32 %v2316, 0.0
  %v2413 = vmax.f32 %v2317, 0.0
  %v2414 = vmax.f32 %v2318, 0.0
  %v2415 = vmax.f32 %v2319, 0.0
  %v2416 = vmax.f32 %v2320, 0.0
  %v2417 = vmax.f32 %v2321, 0.0
  %v2418 = vmax.f32 %v2322, 0.0
  %v2419 = vmax.f32 %v2323, 0.0
  %v2420 = vmax.f32 %v2324, 0.0
  %v2421 = vmax.f32 %v2325, 0.0
  %v2422 = vmax.f32 %v2326, 0.0
  %v2423 = vmax.f32 %v2327, 0.0
  %v2424 = vmax.f32 %v2328, 0.0
  %v2425 = vmax.f32 %v2329, 0.0
  %v2426 = vmax.f32 %v2330, 0.0
  %v2427 = vmax.f32 %v2331, 0.0
  %v2428 = vmax.f32 %v2332, 0.0
  %v2429 = vmax.f32 %v2333, 0.0
  %v2430 = vmax.f32 %v2334, 0.0
  %v2431 = vmax.f32 %v2335, 0.0
  %v2432 = vmax.f32 %v2336, 0.0
  %v2433 = vmax.f32 %v2337, 0.0
  %v2434 = vmax.f32 %v2338, 0.0
  %v2435 = vmax.f32 %v2339, 0.0
  %v2436 = vmax.f32 %v2340, 0.0
  %v2437 = vmax.f32 %v2341, 0.0
  %v2438 = vmax.f32 %v2342, 0.0
  %v2439 = vmax.f32 %v2343, 0.0
  %v2440 = vmax.f32 %v2344, 0.0
  %v2441 = vmax.f32 %v2345, 0.0
  %v2442 = vmax.f32 %v2346, 0.0
  %v2443 = vmax.f32 %v2347, 0.0
  %v2444 = vmax.f32 %v2348, 0.0
  %v2445 = vmax.f32 %v2349, 0.0
  %v2446 = vmax.f32 %v2350, %v2354
  %v2447 = vmax.f32 %v2351, %v2355
  %v2448 = vmax.f32 %v2352, %v2356
  %v2449 = vmax.f32 %v2353, %v2357
  %v2450 = vmax.f32 %v2358, %v2362
  %v2451 = vmax.f32 %v2359, %v2363
  %v2452 = vmax.f32 %v2360, %v2364
  %v2453 = vmax.f32 %v2361, %v2365
  %v2454 = vmax.f32 %v2366, %v2370
  %v2455 = vmax.f32 %v2367, %v2371
  %v2456 = vmax.f32 %v2368, %v2372
  %v2457 = vmax.f32 %v2369, %v2373
  %v2458 = vmax.f32 %v2374, %v2378
  %v2459 = vmax.f32 %v2375, %v2379
  %v2460 = vmax.f32 %v2376, %v2380
  %v2461 = vmax.f32 %v2377, %v2381
  %v2462 = vmax.f32 %v2382, %v2386
  %v2463 = vmax.f32 %v2383, %v2387
  %v2464 = vmax.f32 %v2384, %v2388
  %v2465 = vmax.f32 %v2385, %v2389
  %v2466 = vmax.f32 %v2390, %v2394
  %v2467 = vmax.f32 %v2391, %v2395
  %v2468 = vmax.f32 %v2392, %v2396
  %v2469 = vmax.f32 %v2393, %v2397
  %v2470 = vmax.f32 %v2398, %v2402
  %v2471 = vmax.f32 %v2399, %v2403
  %v2472 = vmax.f32 %v2400, %v2404
  %v2473 = vmax.f32 %v2401, %v2405
  %v2474 = vmax.f32 %v2406, %v2410
  %v2475 = vmax.f32 %v2407, %v2411
  %v2476 = vmax.f32 %v2408, %v2412
  %v2477 = vmax.f32 %v2409, %v2413
  %v2478 = vmax.f32 %v2414, %v2418
  %v2479 = vmax.f32 %v2415, %v2419
  %v2480 = vmax.f32 %v2416, %v2420
  %v2481 = vmax.f32 %v2417, %v2421
  %v2482 = vmax.f32 %v2422, %v2426
  %v2483 = vmax.f32 %v2423, %v2427
  %v2484 = vmax.f32 %v2424, %v2428
  %v2485 = vmax.f32 %v2425, %v2429
  %v2486 = vmax.f32 %v2430, %v2434
  %v2487 = vmax.f32 %v2431, %v2435
  %v2488 = vmax.f32 %v2432, %v2436
  %v2489 = vmax.f32 %v2433, %v2437
  %v2490 = vmax.f32 %v2438, %v2442
  %v2491 = vmax.f32 %v2439, %v2443
  %v2492 = vmax.f32 %v2440, %v2444
  %v2493 = vmax.f32 %v2441, %v2445
  %2530 = vrot.lane.b32.xlu0 %v2447, 16
  %v2531 = vpop.permute.xlu0 %2530
  %2532 = vrot.lane.b32.xlu0 %v2448, 16
  %v2533 = vpop.permute.xlu0 %2532
  %2534 = vrot.lane.b32.xlu0 %v2449, 16
  %v2535 = vpop.permute.xlu0 %2534
  %2536 = vrot.lane.b32.xlu0 %v2451, 16
  %v2537 = vpop.permute.xlu0 %2536
  %2538 = vrot.lane.b32.xlu0 %v2452, 16
  %v2539 = vpop.permute.xlu0 %2538
  %2540 = vrot.lane.b32.xlu0 %v2453, 16
  %v2541 = vpop.permute.xlu0 %2540
  %2542 = vrot.lane.b32.xlu0 %v2455, 16
  %v2543 = vpop.permute.xlu0 %2542
  %2544 = vrot.lane.b32.xlu0 %v2456, 16
  %v2545 = vpop.permute.xlu0 %2544
  %2546 = vrot.lane.b32.xlu0 %v2457, 16
  %v2547 = vpop.permute.xlu0 %2546
  %2548 = vrot.lane.b32.xlu0 %v2459, 16
  %v2549 = vpop.permute.xlu0 %2548
  %2550 = vrot.lane.b32.xlu0 %v2460, 16
  %v2551 = vpop.permute.xlu0 %2550
  %2552 = vrot.lane.b32.xlu0 %v2461, 16
  %v2553 = vpop.permute.xlu0 %2552
  %2554 = vrot.lane.b32.xlu0 %v2463, 16
  %v2555 = vpop.permute.xlu0 %2554
  %2556 = vrot.lane.b32.xlu0 %v2464, 16
  %v2557 = vpop.permute.xlu0 %2556
  %2558 = vrot.lane.b32.xlu0 %v2465, 16
  %v2559 = vpop.permute.xlu0 %2558
  %2560 = vrot.lane.b32.xlu0 %v2467, 16
  %v2561 = vpop.permute.xlu0 %2560
  %2562 = vrot.lane.b32.xlu0 %v2468, 16
  %v2563 = vpop.permute.xlu0 %2562
  %2564 = vrot.lane.b32.xlu0 %v2469, 16
  %v2565 = vpop.permute.xlu0 %2564
  %2566 = vrot.lane.b32.xlu0 %v2471, 16
  %v2567 = vpop.permute.xlu0 %2566
  %2568 = vrot.lane.b32.xlu0 %v2472, 16
  %v2569 = vpop.permute.xlu0 %2568
  %2570 = vrot.lane.b32.xlu0 %v2473, 16
  %v2571 = vpop.permute.xlu0 %2570
  %2572 = vrot.lane.b32.xlu0 %v2475, 16
  %v2573 = vpop.permute.xlu0 %2572
  %2574 = vrot.lane.b32.xlu0 %v2476, 16
  %v2575 = vpop.permute.xlu0 %2574
  %2576 = vrot.lane.b32.xlu0 %v2477, 16
  %v2577 = vpop.permute.xlu0 %2576
  %2578 = vrot.lane.b32.xlu0 %v2479, 16
  %v2579 = vpop.permute.xlu0 %2578
  %2580 = vrot.lane.b32.xlu0 %v2480, 16
  %v2581 = vpop.permute.xlu0 %2580
  %2582 = vrot.lane.b32.xlu0 %v2481, 16
  %v2583 = vpop.permute.xlu0 %2582
  %2584 = vrot.lane.b32.xlu0 %v2483, 16
  %v2585 = vpop.permute.xlu0 %2584
  %2586 = vrot.lane.b32.xlu0 %v2484, 16
  %v2587 = vpop.permute.xlu0 %2586
  %2588 = vrot.lane.b32.xlu0 %v2485, 16
  %v2589 = vpop.permute.xlu0 %2588
  %2590 = vrot.lane.b32.xlu0 %v2487, 16
  %v2591 = vpop.permute.xlu0 %2590
  %2592 = vrot.lane.b32.xlu0 %v2488, 16
  %v2593 = vpop.permute.xlu0 %2592
  %2594 = vrot.lane.b32.xlu0 %v2489, 16
  %v2595 = vpop.permute.xlu0 %2594
  %2596 = vrot.lane.b32.xlu0 %v2491, 16
  %v2597 = vpop.permute.xlu0 %2596
  %2598 = vrot.lane.b32.xlu0 %v2492, 16
  %v2599 = vpop.permute.xlu0 %2598
  %2600 = vrot.lane.b32.xlu0 %v2493, 16
  %v2601 = vpop.permute.xlu0 %2600
  %vm2602 = vcmask 130048
  %v2603 = vsel %vm2602, %v2531, %v2533
  %v2604 = vsel %vm2602, %v2533, %v2535
  %v2605 = vsel %vm2602, %v2537, %v2539
  %v2606 = vsel %vm2602, %v2539, %v2541
  %v2607 = vsel %vm2602, %v2543, %v2545
  %v2608 = vsel %vm2602, %v2545, %v2547
  %v2609 = vsel %vm2602, %v2549, %v2551
  %v2610 = vsel %vm2602, %v2551, %v2553
  %v2611 = vsel %vm2602, %v2555, %v2557
  %v2612 = vsel %vm2602, %v2557, %v2559
  %v2613 = vsel %vm2602, %v2561, %v2563
  %v2614 = vsel %vm2602, %v2563, %v2565
  %v2615 = vsel %vm2602, %v2567, %v2569
  %v2616 = vsel %vm2602, %v2569, %v2571
  %v2617 = vsel %vm2602, %v2573, %v2575
  %v2618 = vsel %vm2602, %v2575, %v2577
  %v2619 = vsel %vm2602, %v2579, %v2581
  %v2620 = vsel %vm2602, %v2581, %v2583
  %v2621 = vsel %vm2602, %v2585, %v2587
  %v2622 = vsel %vm2602, %v2587, %v2589
  %v2623 = vsel %vm2602, %v2591, %v2593
  %v2624 = vsel %vm2602, %v2593, %v2595
  %v2625 = vsel %vm2602, %v2597, %v2599
  %v2626 = vsel %vm2602, %v2599, %v2601
  %v2651 = vmax.f32 %v2446, %v2603
  %v2652 = vmax.f32 %v2447, %v2604
  %v2653 = vmax.f32 %v2450, %v2605
  %v2654 = vmax.f32 %v2451, %v2606
  %v2655 = vmax.f32 %v2454, %v2607
  %v2656 = vmax.f32 %v2455, %v2608
  %v2657 = vmax.f32 %v2458, %v2609
  %v2658 = vmax.f32 %v2459, %v2610
  %v2659 = vmax.f32 %v2462, %v2611
  %v2660 = vmax.f32 %v2463, %v2612
  %v2661 = vmax.f32 %v2466, %v2613
  %v2662 = vmax.f32 %v2467, %v2614
  %v2663 = vmax.f32 %v2470, %v2615
  %v2664 = vmax.f32 %v2471, %v2616
  %v2665 = vmax.f32 %v2474, %v2617
  %v2666 = vmax.f32 %v2475, %v2618
  %v2667 = vmax.f32 %v2478, %v2619
  %v2668 = vmax.f32 %v2479, %v2620
  %v2669 = vmax.f32 %v2482, %v2621
  %v2670 = vmax.f32 %v2483, %v2622
  %v2671 = vmax.f32 %v2486, %v2623
  %v2672 = vmax.f32 %v2487, %v2624
  %v2673 = vmax.f32 %v2490, %v2625
  %v2674 = vmax.f32 %v2491, %v2626
  %v2675 = vpack.c.bf16 %v2653, %v2651
  %v2676 = vpack.c.bf16 %v2654, %v2652
  %v2677 = vpack.c.bf16 %v2657, %v2655
  %v2678 = vpack.c.bf16 %v2658, %v2656
  %v2679 = vpack.c.bf16 %v2661, %v2659
  %v2680 = vpack.c.bf16 %v2662, %v2660
  %v2681 = vpack.c.bf16 %v2665, %v2663
  %v2682 = vpack.c.bf16 %v2666, %v2664
  %v2683 = vld [vmem:[%s3] sm:$0xff]
  %v2684 = vld [vmem:[%s3 + $0x8] sm:$0xff]
  %v2685 = vld [vmem:[%s3 + $0x10] sm:$0xff]
  %v2686 = vld [vmem:[%s3 + $0x18] sm:$0xff]
  %v2687 = vld [vmem:[%s3 + $0x20] sm:$0xff]
  %v2688 = vld [vmem:[%s3 + $0x28] sm:$0xff]
  %v2689 = vld [vmem:[%s3 + $0x30] sm:$0xff]
  %v2690 = vld [vmem:[%s3 + $0x38] sm:$0xff]
  %v2691 = vld [vmem:[%s3 + $0x40] sm:$0xff]
  %v2692 = vld [vmem:[%s3 + $0x48] sm:$0xff]
  %v2693 = vld [vmem:[%s3 + $0x50] sm:$0xff]
  %v2694 = vld [vmem:[%s3 + $0x58] sm:$0xff]
  %v2695 = vld [vmem:[%s3 + $0x60] sm:$0xff]
  %v2696 = vld [vmem:[%s3 + $0x68] sm:$0xff]
  %v2697 = vld [vmem:[%s3 + $0x70] sm:$0xff]
  %v2698 = vld [vmem:[%s3 + $0x78] sm:$0xff]
  %v2699 = vld [vmem:[%s3 + $0x80] sm:$0xff]
  %v2700 = vld [vmem:[%s3 + $0x88] sm:$0xff]
  %v2701 = vld [vmem:[%s3 + $0x90] sm:$0xff]
  %v2702 = vld [vmem:[%s3 + $0x98] sm:$0xff]
  %v2703 = vld [vmem:[%s3 + $0xa0] sm:$0xff]
  %v2704 = vld [vmem:[%s3 + $0xa8] sm:$0xff]
  %v2705 = vld [vmem:[%s3 + $0xb0] sm:$0xff]
  %v2706 = vld [vmem:[%s3 + $0xb8] sm:$0xff]
  %v2707 = vld [vmem:[%s3 + $0xc0] sm:$0xff]
  %v2708 = vld [vmem:[%s3 + $0xc8] sm:$0xff]
  %v2709 = vld [vmem:[%s3 + $0xd0] sm:$0xff]
  %v2710 = vld [vmem:[%s3 + $0xd8] sm:$0xff]
  %v2711 = vld [vmem:[%s3 + $0xe0] sm:$0xff]
  %v2712 = vld [vmem:[%s3 + $0xe8] sm:$0xff]
  %v2713 = vld [vmem:[%s3 + $0xf0] sm:$0xff]
  %v2714 = vld [vmem:[%s3 + $0xf8] sm:$0xff]
  %v2715 = vld [vmem:[%s3 + $0x100] sm:$0xff]
  %v2716 = vld [vmem:[%s3 + $0x108] sm:$0xff]
  %v2717 = vld [vmem:[%s3 + $0x110] sm:$0xff]
  %v2718 = vld [vmem:[%s3 + $0x118] sm:$0xff]
  %v2719 = vld [vmem:[%s3 + $0x120] sm:$0xff]
  %v2720 = vld [vmem:[%s3 + $0x128] sm:$0xff]
  %v2721 = vld [vmem:[%s3 + $0x130] sm:$0xff]
  %v2722 = vld [vmem:[%s3 + $0x138] sm:$0xff]
  %v2723 = vld [vmem:[%s3 + $0x140] sm:$0xff]
  %v2724 = vld [vmem:[%s3 + $0x148] sm:$0xff]
  %v2725 = vld [vmem:[%s3 + $0x150] sm:$0xff]
  %v2726 = vld [vmem:[%s3 + $0x158] sm:$0xff]
  %v2727 = vld [vmem:[%s3 + $0x160] sm:$0xff]
  %v2728 = vld [vmem:[%s3 + $0x168] sm:$0xff]
  %v2729 = vld [vmem:[%s3 + $0x170] sm:$0xff]
  %v2730 = vld [vmem:[%s3 + $0x178] sm:$0xff]
  %v2731 = vld [vmem:[%s3 + $0x180] sm:$0xff]
  %v2732 = vld [vmem:[%s3 + $0x188] sm:$0xff]
  %v2733 = vld [vmem:[%s3 + $0x190] sm:$0xff]
  %v2734 = vld [vmem:[%s3 + $0x198] sm:$0xff]
  %v2735 = vld [vmem:[%s3 + $0x1a0] sm:$0xff]
  %v2736 = vld [vmem:[%s3 + $0x1a8] sm:$0xff]
  %v2737 = vld [vmem:[%s3 + $0x1b0] sm:$0xff]
  %v2738 = vld [vmem:[%s3 + $0x1b8] sm:$0xff]
  %v2739 = vld [vmem:[%s3 + $0x1c0] sm:$0xff]
  %v2740 = vld [vmem:[%s3 + $0x1c8] sm:$0xff]
  %v2741 = vld [vmem:[%s3 + $0x1d0] sm:$0xff]
  %v2742 = vld [vmem:[%s3 + $0x1d8] sm:$0xff]
  %v2743 = vpack.c.bf16 %v2655, %v2653
  %v2744 = vpack.c.bf16 %v2656, %v2654
  %v2745 = vpack.c.bf16 %v2659, %v2657
  %v2746 = vpack.c.bf16 %v2660, %v2658
  %v2747 = vpack.c.bf16 %v2663, %v2661
  %v2748 = vpack.c.bf16 %v2664, %v2662
  %v2749 = vpack.c.bf16 %v2667, %v2665
  %v2750 = vpack.c.bf16 %v2668, %v2666
  %s2751 = scalar_lea.vmem %s3, 480
  %v2752 = vld [vmem:[%s2751] sm:$0xff]
  %v2753 = vld [vmem:[%s2751 + $0x8] sm:$0xff]
  %v2754 = vld [vmem:[%s2751 + $0x10] sm:$0xff]
  %v2755 = vld [vmem:[%s2751 + $0x18] sm:$0xff]
  %v2756 = vld [vmem:[%s2751 + $0x20] sm:$0xff]
  %v2757 = vld [vmem:[%s2751 + $0x28] sm:$0xff]
  %v2758 = vld [vmem:[%s2751 + $0x30] sm:$0xff]
  %v2759 = vld [vmem:[%s2751 + $0x38] sm:$0xff]
  %v2760 = vld [vmem:[%s2751 + $0x40] sm:$0xff]
  %v2761 = vld [vmem:[%s2751 + $0x48] sm:$0xff]
  %v2762 = vld [vmem:[%s2751 + $0x50] sm:$0xff]
  %v2763 = vld [vmem:[%s2751 + $0x58] sm:$0xff]
  %v2764 = vld [vmem:[%s2751 + $0x60] sm:$0xff]
  %v2765 = vld [vmem:[%s2751 + $0x68] sm:$0xff]
  %v2766 = vld [vmem:[%s2751 + $0x70] sm:$0xff]
  %v2767 = vld [vmem:[%s2751 + $0x78] sm:$0xff]
  %v2768 = vld [vmem:[%s2751 + $0x80] sm:$0xff]
  %v2769 = vld [vmem:[%s2751 + $0x88] sm:$0xff]
  %v2770 = vld [vmem:[%s2751 + $0x90] sm:$0xff]
  %v2771 = vld [vmem:[%s2751 + $0x98] sm:$0xff]
  %v2772 = vld [vmem:[%s2751 + $0xa0] sm:$0xff]
  %v2773 = vld [vmem:[%s2751 + $0xa8] sm:$0xff]
  %v2774 = vld [vmem:[%s2751 + $0xb0] sm:$0xff]
  %v2775 = vld [vmem:[%s2751 + $0xb8] sm:$0xff]
  %v2776 = vld [vmem:[%s2751 + $0xc0] sm:$0xff]
  %v2777 = vld [vmem:[%s2751 + $0xc8] sm:$0xff]
  %v2778 = vld [vmem:[%s2751 + $0xd0] sm:$0xff]
  %v2779 = vld [vmem:[%s2751 + $0xd8] sm:$0xff]
  %v2780 = vld [vmem:[%s2751 + $0xe0] sm:$0xff]
  %v2781 = vld [vmem:[%s2751 + $0xe8] sm:$0xff]
  %v2782 = vld [vmem:[%s2751 + $0xf0] sm:$0xff]
  %v2783 = vld [vmem:[%s2751 + $0xf8] sm:$0xff]
  %v2784 = vld [vmem:[%s2751 + $0x100] sm:$0xff]
  %v2785 = vld [vmem:[%s2751 + $0x108] sm:$0xff]
  %v2786 = vld [vmem:[%s2751 + $0x110] sm:$0xff]
  %v2787 = vld [vmem:[%s2751 + $0x118] sm:$0xff]
  %v2788 = vld [vmem:[%s2751 + $0x120] sm:$0xff]
  %v2789 = vld [vmem:[%s2751 + $0x128] sm:$0xff]
  %v2790 = vld [vmem:[%s2751 + $0x130] sm:$0xff]
  %v2791 = vld [vmem:[%s2751 + $0x138] sm:$0xff]
  %v2792 = vld [vmem:[%s2751 + $0x140] sm:$0xff]
  %v2793 = vld [vmem:[%s2751 + $0x148] sm:$0xff]
  %v2794 = vld [vmem:[%s2751 + $0x150] sm:$0xff]
  %v2795 = vld [vmem:[%s2751 + $0x158] sm:$0xff]
  %v2796 = vld [vmem:[%s2751 + $0x160] sm:$0xff]
  %v2797 = vld [vmem:[%s2751 + $0x168] sm:$0xff]
  %v2798 = vld [vmem:[%s2751 + $0x170] sm:$0xff]
  %v2799 = vld [vmem:[%s2751 + $0x178] sm:$0xff]
  %v2800 = vld [vmem:[%s2751 + $0x180] sm:$0xff]
  %v2801 = vld [vmem:[%s2751 + $0x188] sm:$0xff]
  %v2802 = vld [vmem:[%s2751 + $0x190] sm:$0xff]
  %v2803 = vld [vmem:[%s2751 + $0x198] sm:$0xff]
  %v2804 = vld [vmem:[%s2751 + $0x1a0] sm:$0xff]
  %v2805 = vld [vmem:[%s2751 + $0x1a8] sm:$0xff]
  %v2806 = vld [vmem:[%s2751 + $0x1b0] sm:$0xff]
  %v2807 = vld [vmem:[%s2751 + $0x1b8] sm:$0xff]
  %v2808 = vld [vmem:[%s2751 + $0x1c0] sm:$0xff]
  %v2809 = vld [vmem:[%s2751 + $0x1c8] sm:$0xff]
  %v2810 = vld [vmem:[%s2751 + $0x1d0] sm:$0xff]
  %v2811 = vld [vmem:[%s2751 + $0x1d8] sm:$0xff]
  %v2872 = vunpack.c.l.b16 %v2752
  %v2873 = vunpack.c.h.b16 %v2752
  %v2874 = vunpack.c.l.b16 %v2753
  %v2875 = vunpack.c.h.b16 %v2753
  %v2876 = vunpack.c.l.b16 %v2754
  %v2877 = vunpack.c.h.b16 %v2754
  %v2878 = vunpack.c.l.b16 %v2755
  %v2879 = vunpack.c.h.b16 %v2755
  %v2880 = vunpack.c.l.b16 %v2756
  %v2881 = vunpack.c.h.b16 %v2756
  %v2882 = vunpack.c.l.b16 %v2757
  %v2883 = vunpack.c.h.b16 %v2757
  %v2884 = vunpack.c.l.b16 %v2758
  %v2885 = vunpack.c.h.b16 %v2758
  %v2886 = vunpack.c.l.b16 %v2759
  %v2887 = vunpack.c.h.b16 %v2759
  %v2888 = vunpack.c.l.b16 %v2760
  %v2889 = vunpack.c.h.b16 %v2760
  %v2890 = vunpack.c.l.b16 %v2761
  %v2891 = vunpack.c.h.b16 %v2761
  %v2892 = vunpack.c.l.b16 %v2762
  %v2893 = vunpack.c.h.b16 %v2762
  %v2894 = vunpack.c.l.b16 %v2763
  %v2895 = vunpack.c.h.b16 %v2763
  %v2896 = vunpack.c.l.b16 %v2764
  %v2897 = vunpack.c.h.b16 %v2764
  %v2898 = vunpack.c.l.b16 %v2765
  %v2899 = vunpack.c.h.b16 %v2765
  %v2900 = vunpack.c.l.b16 %v2766
  %v2901 = vunpack.c.h.b16 %v2766
  %v2902 = vunpack.c.l.b16 %v2767
  %v2903 = vunpack.c.h.b16 %v2767
  %v2904 = vunpack.c.l.b16 %v2768
  %v2905 = vunpack.c.h.b16 %v2768
  %v2906 = vunpack.c.l.b16 %v2769
  %v2907 = vunpack.c.h.b16 %v2769
  %v2908 = vunpack.c.l.b16 %v2770
  %v2909 = vunpack.c.h.b16 %v2770
  %v2910 = vunpack.c.l.b16 %v2771
  %v2911 = vunpack.c.h.b16 %v2771
  %v2912 = vunpack.c.l.b16 %v2772
  %v2913 = vunpack.c.h.b16 %v2772
  %v2914 = vunpack.c.l.b16 %v2773
  %v2915 = vunpack.c.h.b16 %v2773
  %v2916 = vunpack.c.l.b16 %v2774
  %v2917 = vunpack.c.h.b16 %v2774
  %v2918 = vunpack.c.l.b16 %v2775
  %v2919 = vunpack.c.h.b16 %v2775
  %v2920 = vunpack.c.l.b16 %v2776
  %v2921 = vunpack.c.h.b16 %v2776
  %v2922 = vunpack.c.l.b16 %v2777
  %v2923 = vunpack.c.h.b16 %v2777
  %v2924 = vunpack.c.l.b16 %v2778
  %v2925 = vunpack.c.h.b16 %v2778
  %v2926 = vunpack.c.l.b16 %v2779
  %v2927 = vunpack.c.h.b16 %v2779
  %v2928 = vunpack.c.l.b16 %v2780
  %v2929 = vunpack.c.h.b16 %v2780
  %v2930 = vunpack.c.l.b16 %v2781
  %v2931 = vunpack.c.h.b16 %v2781
  %v2932 = vunpack.c.l.b16 %v2782
  %v2933 = vunpack.c.h.b16 %v2782
  %v2934 = vunpack.c.l.b16 %v2783
  %v2935 = vunpack.c.h.b16 %v2783
  %v2936 = vunpack.c.l.b16 %v2784
  %v2937 = vunpack.c.h.b16 %v2784
  %v2938 = vunpack.c.l.b16 %v2785
  %v2939 = vunpack.c.h.b16 %v2785
  %v2940 = vunpack.c.l.b16 %v2786
  %v2941 = vunpack.c.h.b16 %v2786
  %v2942 = vunpack.c.l.b16 %v2787
  %v2943 = vunpack.c.h.b16 %v2787
  %v2944 = vunpack.c.l.b16 %v2788
  %v2945 = vunpack.c.h.b16 %v2788
  %v2946 = vunpack.c.l.b16 %v2789
  %v2947 = vunpack.c.h.b16 %v2789
  %v2948 = vunpack.c.l.b16 %v2790
  %v2949 = vunpack.c.h.b16 %v2790
  %v2950 = vunpack.c.l.b16 %v2791
  %v2951 = vunpack.c.h.b16 %v2791
  %v2952 = vunpack.c.l.b16 %v2792
  %v2953 = vunpack.c.h.b16 %v2792
  %v2954 = vunpack.c.l.b16 %v2793
  %v2955 = vunpack.c.h.b16 %v2793
  %v2956 = vunpack.c.l.b16 %v2794
  %v2957 = vunpack.c.h.b16 %v2794
  %v2958 = vunpack.c.l.b16 %v2795
  %v2959 = vunpack.c.h.b16 %v2795
  %v2960 = vunpack.c.l.b16 %v2796
  %v2961 = vunpack.c.h.b16 %v2796
  %v2962 = vunpack.c.l.b16 %v2797
  %v2963 = vunpack.c.h.b16 %v2797
  %v2964 = vunpack.c.l.b16 %v2798
  %v2965 = vunpack.c.h.b16 %v2798
  %v2966 = vunpack.c.l.b16 %v2799
  %v2967 = vunpack.c.h.b16 %v2799
  %v2968 = vunpack.c.l.b16 %v2800
  %v2969 = vunpack.c.h.b16 %v2800
  %v2970 = vunpack.c.l.b16 %v2801
  %v2971 = vunpack.c.h.b16 %v2801
  %v2972 = vunpack.c.l.b16 %v2802
  %v2973 = vunpack.c.h.b16 %v2802
  %v2974 = vunpack.c.l.b16 %v2803
  %v2975 = vunpack.c.h.b16 %v2803
  %v2976 = vunpack.c.l.b16 %v2804
  %v2977 = vunpack.c.h.b16 %v2804
  %v2978 = vunpack.c.l.b16 %v2805
  %v2979 = vunpack.c.h.b16 %v2805
  %v2980 = vunpack.c.l.b16 %v2806
  %v2981 = vunpack.c.h.b16 %v2806
  %v2982 = vunpack.c.l.b16 %v2807
  %v2983 = vunpack.c.h.b16 %v2807
  %v2984 = vunpack.c.l.b16 %v2808
  %v2985 = vunpack.c.h.b16 %v2808
  %v2986 = vunpack.c.l.b16 %v2809
  %v2987 = vunpack.c.h.b16 %v2809
  %v2988 = vunpack.c.l.b16 %v2810
  %v2989 = vunpack.c.h.b16 %v2810
  %v2990 = vunpack.c.l.b16 %v2811
  %v2991 = vunpack.c.h.b16 %v2811
  %v2992 = vpack.c.b16 %v2876, %v2872
  %v2993 = vpack.c.b16 %v2877, %v2873
  %v2994 = vpack.c.b16 %v2878, %v2874
  %v2995 = vpack.c.b16 %v2879, %v2875
  %v2996 = vpack.c.b16 %v2884, %v2880
  %v2997 = vpack.c.b16 %v2885, %v2881
  %v2998 = vpack.c.b16 %v2886, %v2882
  %v2999 = vpack.c.b16 %v2887, %v2883
  %v3000 = vpack.c.b16 %v2892, %v2888
  %v3001 = vpack.c.b16 %v2893, %v2889
  %v3002 = vpack.c.b16 %v2894, %v2890
  %v3003 = vpack.c.b16 %v2895, %v2891
  %v3004 = vpack.c.b16 %v2900, %v2896
  %v3005 = vpack.c.b16 %v2901, %v2897
  %v3006 = vpack.c.b16 %v2902, %v2898
  %v3007 = vpack.c.b16 %v2903, %v2899
  %v3008 = vpack.c.b16 %v2908, %v2904
  %v3009 = vpack.c.b16 %v2909, %v2905
  %v3010 = vpack.c.b16 %v2910, %v2906
  %v3011 = vpack.c.b16 %v2911, %v2907
  %v3012 = vpack.c.b16 %v2916, %v2912
  %v3013 = vpack.c.b16 %v2917, %v2913
  %v3014 = vpack.c.b16 %v2918, %v2914
  %v3015 = vpack.c.b16 %v2919, %v2915
  %v3016 = vpack.c.b16 %v2924, %v2920
  %v3017 = vpack.c.b16 %v2925, %v2921
  %v3018 = vpack.c.b16 %v2926, %v2922
  %v3019 = vpack.c.b16 %v2927, %v2923
  %v3020 = vpack.c.b16 %v2932, %v2928
  %v3021 = vpack.c.b16 %v2933, %v2929
  %v3022 = vpack.c.b16 %v2934, %v2930
  %v3023 = vpack.c.b16 %v2935, %v2931
  %v3024 = vpack.c.b16 %v2940, %v2936
  %v3025 = vpack.c.b16 %v2941, %v2937
  %v3026 = vpack.c.b16 %v2942, %v2938
  %v3027 = vpack.c.b16 %v2943, %v2939
  %v3028 = vpack.c.b16 %v2948, %v2944
  %v3029 = vpack.c.b16 %v2949, %v2945
  %v3030 = vpack.c.b16 %v2950, %v2946
  %v3031 = vpack.c.b16 %v2951, %v2947
  %v3032 = vpack.c.b16 %v2956, %v2952
  %v3033 = vpack.c.b16 %v2957, %v2953
  %v3034 = vpack.c.b16 %v2958, %v2954
  %v3035 = vpack.c.b16 %v2959, %v2955
  %v3036 = vpack.c.b16 %v2964, %v2960
  %v3037 = vpack.c.b16 %v2965, %v2961
  %v3038 = vpack.c.b16 %v2966, %v2962
  %v3039 = vpack.c.b16 %v2967, %v2963
  %v3040 = vpack.c.b16 %v2972, %v2968
  %v3041 = vpack.c.b16 %v2973, %v2969
  %v3042 = vpack.c.b16 %v2974, %v2970
  %v3043 = vpack.c.b16 %v2975, %v2971
  %v3044 = vpack.c.b16 %v2980, %v2976
  %v3045 = vpack.c.b16 %v2981, %v2977
  %v3046 = vpack.c.b16 %v2982, %v2978
  %v3047 = vpack.c.b16 %v2983, %v2979
  %v3048 = vpack.c.b16 %v2988, %v2984
  %v3049 = vpack.c.b16 %v2989, %v2985
  %v3050 = vpack.c.b16 %v2990, %v2986
  %v3051 = vpack.c.b16 %v2991, %v2987
  %vm3112 = vcmask 916480
  %v3114 = vsel %vm3112, %v2744, 0
  %v3117 = vsel %vm3112, %v2746, 0
  %v3120 = vsel %vm3112, %v2748, 0
  %v3123 = vsel %vm3112, %v2750, 0
  %3125 = vmatprep.subr.bf16.mxu0 %v2993
  %3126 = vmatpush1.bf16.msra.mxu0 %v2992
  %3127 = vmatprep.subr.bf16.mxu0 %v2997
  %3128 = vmatpush1.bf16.msra.mxu0 %v2996
  %3129 = vmatprep.subr.bf16.mxu0 %v3001
  %3130 = vmatpush1.bf16.msra.mxu0 %v3000
  %3131 = vmatprep.subr.bf16.mxu0 %v3005
  %3132 = vmatpush1.bf16.msra.mxu0 %v3004
  %3133 = vmatprep.subr.bf16.mxu0 %v3009
  %3134 = vmatpush1.bf16.msra.mxu0 %v3008
  %3135 = vmatprep.subr.bf16.mxu0 %v3013
  %3136 = vmatpush1.bf16.msra.mxu0 %v3012
  %3137 = vmatprep.subr.bf16.mxu0 %v3017
  %3138 = vmatpush1.bf16.msra.mxu0 %v3016
  %3139 = vmatprep.subr.bf16.mxu0 %v3021
  %3140 = vmatpush1.bf16.msra.mxu0 %v3020
  %3141 = vmatprep.subr.bf16.mxu0 %v3025
  %3142 = vmatpush1.bf16.msra.mxu0 %v3024
  %3143 = vmatprep.subr.bf16.mxu0 %v3029
  %3144 = vmatpush1.bf16.msra.mxu0 %v3028
  %3145 = vmatprep.subr.bf16.mxu0 %v3033
  %3146 = vmatpush1.bf16.msra.mxu0 %v3032
  %3147 = vmatprep.subr.bf16.mxu0 %v3037
  %3148 = vmatpush1.bf16.msra.mxu0 %v3036
  %3149 = vmatprep.subr.bf16.mxu0 %v3041
  %3150 = vmatpush1.bf16.msra.mxu0 %v3040
  %3151 = vmatprep.subr.bf16.mxu0 %v3045
  %3152 = vmatpush1.bf16.msra.mxu0 %v3044
  %3153 = vmatprep.subr.bf16.mxu0 %v3049
  %3154 = vmatpush1.bf16.msra.mxu0 %v3048
  %3155 = vmatprep.subr.bf16.mxu0 0
  %3156 = vmatpush1.bf16.msra.mxu0 0
  %3157 = vmatprep.mubr.bf16.mxu0 %v3114
  %3158 = vmatmul.mubr.bf16.gmra.mrb[0].mxu0 %v2743
  %v3159 = vpop.f32.mrb[0].mxu0
  %v3160 = vadd.f32 0.0, %v3159
  %v3161 = vpop.f32.mrb[0].mxu0
  %v3162 = vadd.f32 0.0, %v3161
  %v3163 = vpop.f32.mrb[0].mxu0
  %v3164 = vadd.f32 0.0, %v3163
  %v3165 = vpop.f32.mrb[0].mxu0
  %v3166 = vadd.f32 0.0, %v3165
  %3167 = vmatprep.mubr.bf16.mxu0 %v3117
  %3168 = vmatmul.mubr.bf16.gmra.mrb[0].mxu0 %v2745
  %v3169 = vpop.f32.mrb[0].mxu0
  %v3170 = vadd.f32 0.0, %v3169
  %v3171 = vpop.f32.mrb[0].mxu0
  %v3172 = vadd.f32 0.0, %v3171
  %v3173 = vpop.f32.mrb[0].mxu0
  %v3174 = vadd.f32 0.0, %v3173
  %v3175 = vpop.f32.mrb[0].mxu0
  %v3176 = vadd.f32 0.0, %v3175
  %3177 = vmatprep.mubr.bf16.mxu0 %v3120
  %3178 = vmatmul.mubr.bf16.gmra.mrb[0].mxu0 %v2747
  %v3179 = vpop.f32.mrb[0].mxu0
  %v3180 = vadd.f32 0.0, %v3179
  %v3181 = vpop.f32.mrb[0].mxu0
  %v3182 = vadd.f32 0.0, %v3181
  %v3183 = vpop.f32.mrb[0].mxu0
  %v3184 = vadd.f32 0.0, %v3183
  %v3185 = vpop.f32.mrb[0].mxu0
  %v3186 = vadd.f32 0.0, %v3185
  %3187 = vmatprep.mubr.bf16.mxu0 %v3123
  %3188 = vmatmul.mubr.bf16.gmra.mrb[0].mxu0 %v2749
  %v3189 = vpop.f32.mrb[0].mxu0
  %v3190 = vadd.f32 0.0, %v3189
  %v3191 = vpop.f32.mrb[0].mxu0
  %v3192 = vadd.f32 0.0, %v3191
  %v3193 = vpop.f32.mrb[0].mxu0
  %v3194 = vadd.f32 0.0, %v3193
  %v3195 = vpop.f32.mrb[0].mxu0
  %v3196 = vadd.f32 0.0, %v3195
  %3197 = vdwg.mxu0
  %3198 = vmatprep.subr.bf16.mxu0 %v2995
  %3199 = vmatpush1.bf16.msra.mxu0 %v2994
  %3200 = vmatprep.subr.bf16.mxu0 %v2999
  %3201 = vmatpush1.bf16.msra.mxu0 %v2998
  %3202 = vmatprep.subr.bf16.mxu0 %v3003
  %3203 = vmatpush1.bf16.msra.mxu0 %v3002
  %3204 = vmatprep.subr.bf16.mxu0 %v3007
  %3205 = vmatpush1.bf16.msra.mxu0 %v3006
  %3206 = vmatprep.subr.bf16.mxu0 %v3011
  %3207 = vmatpush1.bf16.msra.mxu0 %v3010
  %3208 = vmatprep.subr.bf16.mxu0 %v3015
  %3209 = vmatpush1.bf16.msra.mxu0 %v3014
  %3210 = vmatprep.subr.bf16.mxu0 %v3019
  %3211 = vmatpush1.bf16.msra.mxu0 %v3018
  %3212 = vmatprep.subr.bf16.mxu0 %v3023
  %3213 = vmatpush1.bf16.msra.mxu0 %v3022
  %3214 = vmatprep.subr.bf16.mxu0 %v3027
  %3215 = vmatpush1.bf16.msra.mxu0 %v3026
  %3216 = vmatprep.subr.bf16.mxu0 %v3031
  %3217 = vmatpush1.bf16.msra.mxu0 %v3030
  %3218 = vmatprep.subr.bf16.mxu0 %v3035
  %3219 = vmatpush1.bf16.msra.mxu0 %v3034
  %3220 = vmatprep.subr.bf16.mxu0 %v3039
  %3221 = vmatpush1.bf16.msra.mxu0 %v3038
  %3222 = vmatprep.subr.bf16.mxu0 %v3043
  %3223 = vmatpush1.bf16.msra.mxu0 %v3042
  %3224 = vmatprep.subr.bf16.mxu0 %v3047
  %3225 = vmatpush1.bf16.msra.mxu0 %v3046
  %3226 = vmatprep.subr.bf16.mxu0 %v3051
  %3227 = vmatpush1.bf16.msra.mxu0 %v3050
  %3228 = vmatprep.subr.bf16.mxu0 0
  %3229 = vmatpush1.bf16.msra.mxu0 0
  %3230 = vmatprep.mubr.bf16.mxu0 %v3114
  %3231 = vmatmul.mubr.bf16.gmra.mrb[0].mxu0 %v2743
  %v3232 = vpop.f32.mrb[0].mxu0
  %v3233 = vadd.f32 0.0, %v3232
  %v3234 = vpop.f32.mrb[0].mxu0
  %v3235 = vadd.f32 0.0, %v3234
  %v3236 = vpop.f32.mrb[0].mxu0
  %v3237 = vadd.f32 0.0, %v3236
  %v3238 = vpop.f32.mrb[0].mxu0
  %v3239 = vadd.f32 0.0, %v3238
  %3240 = vmatprep.mubr.bf16.mxu0 %v3117
  %3241 = vmatmul.mubr.bf16.gmra.mrb[0].mxu0 %v2745
  %v3242 = vpop.f32.mrb[0].mxu0
  %v3243 = vadd.f32 0.0, %v3242
  %v3244 = vpop.f32.mrb[0].mxu0
  %v3245 = vadd.f32 0.0, %v3244
  %v3246 = vpop.f32.mrb[0].mxu0
  %v3247 = vadd.f32 0.0, %v3246
  %v3248 = vpop.f32.mrb[0].mxu0
  %v3249 = vadd.f32 0.0, %v3248
  %3250 = vmatprep.mubr.bf16.mxu0 %v3120
  %3251 = vmatmul.mubr.bf16.gmra.mrb[0].mxu0 %v2747
  %v3252 = vpop.f32.mrb[0].mxu0
  %v3253 = vadd.f32 0.0, %v3252
  %v3254 = vpop.f32.mrb[0].mxu0
  %v3255 = vadd.f32 0.0, %v3254
  %v3256 = vpop.f32.mrb[0].mxu0
  %v3257 = vadd.f32 0.0, %v3256
  %v3258 = vpop.f32.mrb[0].mxu0
  %v3259 = vadd.f32 0.0, %v3258
  %3260 = vmatprep.mubr.bf16.mxu0 %v3123
  %3261 = vmatmul.mubr.bf16.gmra.mrb[0].mxu0 %v2749
  %v3262 = vpop.f32.mrb[0].mxu0
  %v3263 = vadd.f32 0.0, %v3262
  %v3264 = vpop.f32.mrb[0].mxu0
  %v3265 = vadd.f32 0.0, %v3264
  %v3266 = vpop.f32.mrb[0].mxu0
  %v3267 = vadd.f32 0.0, %v3266
  %v3268 = vpop.f32.mrb[0].mxu0
  %v3269 = vadd.f32 0.0, %v3268
  %3270 = vdwg.mxu0
  %v3331 = vunpack.c.l.b16 %v2683
  %v3332 = vunpack.c.h.b16 %v2683
  %v3333 = vunpack.c.l.b16 %v2684
  %v3334 = vunpack.c.h.b16 %v2684
  %v3335 = vunpack.c.l.b16 %v2685
  %v3336 = vunpack.c.h.b16 %v2685
  %v3337 = vunpack.c.l.b16 %v2686
  %v3338 = vunpack.c.h.b16 %v2686
  %v3339 = vunpack.c.l.b16 %v2687
  %v3340 = vunpack.c.h.b16 %v2687
  %v3341 = vunpack.c.l.b16 %v2688
  %v3342 = vunpack.c.h.b16 %v2688
  %v3343 = vunpack.c.l.b16 %v2689
  %v3344 = vunpack.c.h.b16 %v2689
  %v3345 = vunpack.c.l.b16 %v2690
  %v3346 = vunpack.c.h.b16 %v2690
  %v3347 = vunpack.c.l.b16 %v2691
  %v3348 = vunpack.c.h.b16 %v2691
  %v3349 = vunpack.c.l.b16 %v2692
  %v3350 = vunpack.c.h.b16 %v2692
  %v3351 = vunpack.c.l.b16 %v2693
  %v3352 = vunpack.c.h.b16 %v2693
  %v3353 = vunpack.c.l.b16 %v2694
  %v3354 = vunpack.c.h.b16 %v2694
  %v3355 = vunpack.c.l.b16 %v2695
  %v3356 = vunpack.c.h.b16 %v2695
  %v3357 = vunpack.c.l.b16 %v2696
  %v3358 = vunpack.c.h.b16 %v2696
  %v3359 = vunpack.c.l.b16 %v2697
  %v3360 = vunpack.c.h.b16 %v2697
  %v3361 = vunpack.c.l.b16 %v2698
  %v3362 = vunpack.c.h.b16 %v2698
  %v3363 = vunpack.c.l.b16 %v2699
  %v3364 = vunpack.c.h.b16 %v2699
  %v3365 = vunpack.c.l.b16 %v2700
  %v3366 = vunpack.c.h.b16 %v2700
  %v3367 = vunpack.c.l.b16 %v2701
  %v3368 = vunpack.c.h.b16 %v2701
  %v3369 = vunpack.c.l.b16 %v2702
  %v3370 = vunpack.c.h.b16 %v2702
  %v3371 = vunpack.c.l.b16 %v2703
  %v3372 = vunpack.c.h.b16 %v2703
  %v3373 = vunpack.c.l.b16 %v2704
  %v3374 = vunpack.c.h.b16 %v2704
  %v3375 = vunpack.c.l.b16 %v2705
  %v3376 = vunpack.c.h.b16 %v2705
  %v3377 = vunpack.c.l.b16 %v2706
  %v3378 = vunpack.c.h.b16 %v2706
  %v3379 = vunpack.c.l.b16 %v2707
  %v3380 = vunpack.c.h.b16 %v2707
  %v3381 = vunpack.c.l.b16 %v2708
  %v3382 = vunpack.c.h.b16 %v2708
  %v3383 = vunpack.c.l.b16 %v2709
  %v3384 = vunpack.c.h.b16 %v2709
  %v3385 = vunpack.c.l.b16 %v2710
  %v3386 = vunpack.c.h.b16 %v2710
  %v3387 = vunpack.c.l.b16 %v2711
  %v3388 = vunpack.c.h.b16 %v2711
  %v3389 = vunpack.c.l.b16 %v2712
  %v3390 = vunpack.c.h.b16 %v2712
  %v3391 = vunpack.c.l.b16 %v2713
  %v3392 = vunpack.c.h.b16 %v2713
  %v3393 = vunpack.c.l.b16 %v2714
  %v3394 = vunpack.c.h.b16 %v2714
  %v3395 = vunpack.c.l.b16 %v2715
  %v3396 = vunpack.c.h.b16 %v2715
  %v3397 = vunpack.c.l.b16 %v2716
  %v3398 = vunpack.c.h.b16 %v2716
  %v3399 = vunpack.c.l.b16 %v2717
  %v3400 = vunpack.c.h.b16 %v2717
  %v3401 = vunpack.c.l.b16 %v2718
  %v3402 = vunpack.c.h.b16 %v2718
  %v3403 = vunpack.c.l.b16 %v2719
  %v3404 = vunpack.c.h.b16 %v2719
  %v3405 = vunpack.c.l.b16 %v2720
  %v3406 = vunpack.c.h.b16 %v2720
  %v3407 = vunpack.c.l.b16 %v2721
  %v3408 = vunpack.c.h.b16 %v2721
  %v3409 = vunpack.c.l.b16 %v2722
  %v3410 = vunpack.c.h.b16 %v2722
  %v3411 = vunpack.c.l.b16 %v2723
  %v3412 = vunpack.c.h.b16 %v2723
  %v3413 = vunpack.c.l.b16 %v2724
  %v3414 = vunpack.c.h.b16 %v2724
  %v3415 = vunpack.c.l.b16 %v2725
  %v3416 = vunpack.c.h.b16 %v2725
  %v3417 = vunpack.c.l.b16 %v2726
  %v3418 = vunpack.c.h.b16 %v2726
  %v3419 = vunpack.c.l.b16 %v2727
  %v3420 = vunpack.c.h.b16 %v2727
  %v3421 = vunpack.c.l.b16 %v2728
  %v3422 = vunpack.c.h.b16 %v2728
  %v3423 = vunpack.c.l.b16 %v2729
  %v3424 = vunpack.c.h.b16 %v2729
  %v3425 = vunpack.c.l.b16 %v2730
  %v3426 = vunpack.c.h.b16 %v2730
  %v3427 = vunpack.c.l.b16 %v2731
  %v3428 = vunpack.c.h.b16 %v2731
  %v3429 = vunpack.c.l.b16 %v2732
  %v3430 = vunpack.c.h.b16 %v2732
  %v3431 = vunpack.c.l.b16 %v2733
  %v3432 = vunpack.c.h.b16 %v2733
  %v3433 = vunpack.c.l.b16 %v2734
  %v3434 = vunpack.c.h.b16 %v2734
  %v3435 = vunpack.c.l.b16 %v2735
  %v3436 = vunpack.c.h.b16 %v2735
  %v3437 = vunpack.c.l.b16 %v2736
  %v3438 = vunpack.c.h.b16 %v2736
  %v3439 = vunpack.c.l.b16 %v2737
  %v3440 = vunpack.c.h.b16 %v2737
  %v3441 = vunpack.c.l.b16 %v2738
  %v3442 = vunpack.c.h.b16 %v2738
  %v3443 = vunpack.c.l.b16 %v2739
  %v3444 = vunpack.c.h.b16 %v2739
  %v3445 = vunpack.c.l.b16 %v2740
  %v3446 = vunpack.c.h.b16 %v2740
  %v3447 = vunpack.c.l.b16 %v2741
  %v3448 = vunpack.c.h.b16 %v2741
  %v3449 = vunpack.c.l.b16 %v2742
  %v3450 = vunpack.c.h.b16 %v2742
  %v3451 = vpack.c.b16 %v3335, %v3331
  %v3452 = vpack.c.b16 %v3336, %v3332
  %v3453 = vpack.c.b16 %v3337, %v3333
  %v3454 = vpack.c.b16 %v3338, %v3334
  %v3455 = vpack.c.b16 %v3343, %v3339
  %v3456 = vpack.c.b16 %v3344, %v3340
  %v3457 = vpack.c.b16 %v3345, %v3341
  %v3458 = vpack.c.b16 %v3346, %v3342
  %v3459 = vpack.c.b16 %v3351, %v3347
  %v3460 = vpack.c.b16 %v3352, %v3348
  %v3461 = vpack.c.b16 %v3353, %v3349
  %v3462 = vpack.c.b16 %v3354, %v3350
  %v3463 = vpack.c.b16 %v3359, %v3355
  %v3464 = vpack.c.b16 %v3360, %v3356
  %v3465 = vpack.c.b16 %v3361, %v3357
  %v3466 = vpack.c.b16 %v3362, %v3358
  %v3467 = vpack.c.b16 %v3367, %v3363
  %v3468 = vpack.c.b16 %v3368, %v3364
  %v3469 = vpack.c.b16 %v3369, %v3365
  %v3470 = vpack.c.b16 %v3370, %v3366
  %v3471 = vpack.c.b16 %v3375, %v3371
  %v3472 = vpack.c.b16 %v3376, %v3372
  %v3473 = vpack.c.b16 %v3377, %v3373
  %v3474 = vpack.c.b16 %v3378, %v3374
  %v3475 = vpack.c.b16 %v3383, %v3379
  %v3476 = vpack.c.b16 %v3384, %v3380
  %v3477 = vpack.c.b16 %v3385, %v3381
  %v3478 = vpack.c.b16 %v3386, %v3382
  %v3479 = vpack.c.b16 %v3391, %v3387
  %v3480 = vpack.c.b16 %v3392, %v3388
  %v3481 = vpack.c.b16 %v3393, %v3389
  %v3482 = vpack.c.b16 %v3394, %v3390
  %v3483 = vpack.c.b16 %v3399, %v3395
  %v3484 = vpack.c.b16 %v3400, %v3396
  %v3485 = vpack.c.b16 %v3401, %v3397
  %v3486 = vpack.c.b16 %v3402, %v3398
  %v3487 = vpack.c.b16 %v3407, %v3403
  %v3488 = vpack.c.b16 %v3408, %v3404
  %v3489 = vpack.c.b16 %v3409, %v3405
  %v3490 = vpack.c.b16 %v3410, %v3406
  %v3491 = vpack.c.b16 %v3415, %v3411
  %v3492 = vpack.c.b16 %v3416, %v3412
  %v3493 = vpack.c.b16 %v3417, %v3413
  %v3494 = vpack.c.b16 %v3418, %v3414
  %v3495 = vpack.c.b16 %v3423, %v3419
  %v3496 = vpack.c.b16 %v3424, %v3420
  %v3497 = vpack.c.b16 %v3425, %v3421
  %v3498 = vpack.c.b16 %v3426, %v3422
  %v3499 = vpack.c.b16 %v3431, %v3427
  %v3500 = vpack.c.b16 %v3432, %v3428
  %v3501 = vpack.c.b16 %v3433, %v3429
  %v3502 = vpack.c.b16 %v3434, %v3430
  %v3503 = vpack.c.b16 %v3439, %v3435
  %v3504 = vpack.c.b16 %v3440, %v3436
  %v3505 = vpack.c.b16 %v3441, %v3437
  %v3506 = vpack.c.b16 %v3442, %v3438
  %v3507 = vpack.c.b16 %v3447, %v3443
  %v3508 = vpack.c.b16 %v3448, %v3444
  %v3509 = vpack.c.b16 %v3449, %v3445
  %v3510 = vpack.c.b16 %v3450, %v3446
  %v3572 = vsel %vm3112, %v2676, 0
  %v3575 = vsel %vm3112, %v2678, 0
  %v3578 = vsel %vm3112, %v2680, 0
  %v3581 = vsel %vm3112, %v2682, 0
  %3583 = vmatprep.subr.bf16.mxu0 %v3452
  %3584 = vmatpush1.bf16.msra.mxu0 %v3451
  %3585 = vmatprep.subr.bf16.mxu0 %v3456
  %3586 = vmatpush1.bf16.msra.mxu0 %v3455
  %3587 = vmatprep.subr.bf16.mxu0 %v3460
  %3588 = vmatpush1.bf16.msra.mxu0 %v3459
  %3589 = vmatprep.subr.bf16.mxu0 %v3464
  %3590 = vmatpush1.bf16.msra.mxu0 %v3463
  %3591 = vmatprep.subr.bf16.mxu0 %v3468
  %3592 = vmatpush1.bf16.msra.mxu0 %v3467
  %3593 = vmatprep.subr.bf16.mxu0 %v3472
  %3594 = vmatpush1.bf16.msra.mxu0 %v3471
  %3595 = vmatprep.subr.bf16.mxu0 %v3476
  %3596 = vmatpush1.bf16.msra.mxu0 %v3475
  %3597 = vmatprep.subr.bf16.mxu0 %v3480
  %3598 = vmatpush1.bf16.msra.mxu0 %v3479
  %3599 = vmatprep.subr.bf16.mxu0 %v3484
  %3600 = vmatpush1.bf16.msra.mxu0 %v3483
  %3601 = vmatprep.subr.bf16.mxu0 %v3488
  %3602 = vmatpush1.bf16.msra.mxu0 %v3487
  %3603 = vmatprep.subr.bf16.mxu0 %v3492
  %3604 = vmatpush1.bf16.msra.mxu0 %v3491
  %3605 = vmatprep.subr.bf16.mxu0 %v3496
  %3606 = vmatpush1.bf16.msra.mxu0 %v3495
  %3607 = vmatprep.subr.bf16.mxu0 %v3500
  %3608 = vmatpush1.bf16.msra.mxu0 %v3499
  %3609 = vmatprep.subr.bf16.mxu0 %v3504
  %3610 = vmatpush1.bf16.msra.mxu0 %v3503
  %3611 = vmatprep.subr.bf16.mxu0 %v3508
  %3612 = vmatpush1.bf16.msra.mxu0 %v3507
  %3613 = vmatprep.subr.bf16.mxu0 0
  %3614 = vmatpush1.bf16.msra.mxu0 0
  %3615 = vmatprep.mubr.bf16.mxu0 %v3572
  %3616 = vmatmul.mubr.bf16.gmra.mrb[0].mxu0 %v2675
  %v3617 = vpop.f32.mrb[0].mxu0
  %v3618 = vadd.f32 %v3160, %v3617
  %v3619 = vpop.f32.mrb[0].mxu0
  %v3620 = vadd.f32 %v3162, %v3619
  %v3621 = vpop.f32.mrb[0].mxu0
  %v3622 = vadd.f32 %v3164, %v3621
  %v3623 = vpop.f32.mrb[0].mxu0
  %v3624 = vadd.f32 %v3166, %v3623
  %3625 = vmatprep.mubr.bf16.mxu0 %v3575
  %3626 = vmatmul.mubr.bf16.gmra.mrb[0].mxu0 %v2677
  %v3627 = vpop.f32.mrb[0].mxu0
  %v3628 = vadd.f32 %v3170, %v3627
  %v3629 = vpop.f32.mrb[0].mxu0
  %v3630 = vadd.f32 %v3172, %v3629
  %v3631 = vpop.f32.mrb[0].mxu0
  %v3632 = vadd.f32 %v3174, %v3631
  %v3633 = vpop.f32.mrb[0].mxu0
  %v3634 = vadd.f32 %v3176, %v3633
  %3635 = vmatprep.mubr.bf16.mxu0 %v3578
  %3636 = vmatmul.mubr.bf16.gmra.mrb[0].mxu0 %v2679
  %v3637 = vpop.f32.mrb[0].mxu0
  %v3638 = vadd.f32 %v3180, %v3637
  %v3639 = vpop.f32.mrb[0].mxu0
  %v3640 = vadd.f32 %v3182, %v3639
  %v3641 = vpop.f32.mrb[0].mxu0
  %v3642 = vadd.f32 %v3184, %v3641
  %v3643 = vpop.f32.mrb[0].mxu0
  %v3644 = vadd.f32 %v3186, %v3643
  %3645 = vmatprep.mubr.bf16.mxu0 %v3581
  %3646 = vmatmul.mubr.bf16.gmra.mrb[0].mxu0 %v2681
  %v3647 = vpop.f32.mrb[0].mxu0
  %v3648 = vadd.f32 %v3190, %v3647
  %v3649 = vpop.f32.mrb[0].mxu0
  %v3650 = vadd.f32 %v3192, %v3649
  %v3651 = vpop.f32.mrb[0].mxu0
  %v3652 = vadd.f32 %v3194, %v3651
  %v3653 = vpop.f32.mrb[0].mxu0
  %v3654 = vadd.f32 %v3196, %v3653
  %3655 = vdwg.mxu0
  %3656 = vmatprep.subr.bf16.mxu0 %v3454
  %3657 = vmatpush1.bf16.msra.mxu0 %v3453
  %3658 = vmatprep.subr.bf16.mxu0 %v3458
  %3659 = vmatpush1.bf16.msra.mxu0 %v3457
  %3660 = vmatprep.subr.bf16.mxu0 %v3462
  %3661 = vmatpush1.bf16.msra.mxu0 %v3461
  %3662 = vmatprep.subr.bf16.mxu0 %v3466
  %3663 = vmatpush1.bf16.msra.mxu0 %v3465
  %3664 = vmatprep.subr.bf16.mxu0 %v3470
  %3665 = vmatpush1.bf16.msra.mxu0 %v3469
  %3666 = vmatprep.subr.bf16.mxu0 %v3474
  %3667 = vmatpush1.bf16.msra.mxu0 %v3473
  %3668 = vmatprep.subr.bf16.mxu0 %v3478
  %3669 = vmatpush1.bf16.msra.mxu0 %v3477
  %3670 = vmatprep.subr.bf16.mxu0 %v3482
  %3671 = vmatpush1.bf16.msra.mxu0 %v3481
  %3672 = vmatprep.subr.bf16.mxu0 %v3486
  %3673 = vmatpush1.bf16.msra.mxu0 %v3485
  %3674 = vmatprep.subr.bf16.mxu0 %v3490
  %3675 = vmatpush1.bf16.msra.mxu0 %v3489
  %3676 = vmatprep.subr.bf16.mxu0 %v3494
  %3677 = vmatpush1.bf16.msra.mxu0 %v3493
  %3678 = vmatprep.subr.bf16.mxu0 %v3498
  %3679 = vmatpush1.bf16.msra.mxu0 %v3497
  %3680 = vmatprep.subr.bf16.mxu0 %v3502
  %3681 = vmatpush1.bf16.msra.mxu0 %v3501
  %3682 = vmatprep.subr.bf16.mxu0 %v3506
  %3683 = vmatpush1.bf16.msra.mxu0 %v3505
  %3684 = vmatprep.subr.bf16.mxu0 %v3510
  %3685 = vmatpush1.bf16.msra.mxu0 %v3509
  %3686 = vmatprep.subr.bf16.mxu0 0
  %3687 = vmatpush1.bf16.msra.mxu0 0
  %3688 = vmatprep.mubr.bf16.mxu0 %v3572
  %3689 = vmatmul.mubr.bf16.gmra.mrb[0].mxu0 %v2675
  %v3690 = vpop.f32.mrb[0].mxu0
  %v3691 = vadd.f32 %v3233, %v3690
  %v3692 = vpop.f32.mrb[0].mxu0
  %v3693 = vadd.f32 %v3235, %v3692
  %v3694 = vpop.f32.mrb[0].mxu0
  %v3695 = vadd.f32 %v3237, %v3694
  %v3696 = vpop.f32.mrb[0].mxu0
  %v3697 = vadd.f32 %v3239, %v3696
  %3698 = vmatprep.mubr.bf16.mxu0 %v3575
  %3699 = vmatmul.mubr.bf16.gmra.mrb[0].mxu0 %v2677
  %v3700 = vpop.f32.mrb[0].mxu0
  %v3701 = vadd.f32 %v3243, %v3700
  %v3702 = vpop.f32.mrb[0].mxu0
  %v3703 = vadd.f32 %v3245, %v3702
  %v3704 = vpop.f32.mrb[0].mxu0
  %v3705 = vadd.f32 %v3247, %v3704
  %v3706 = vpop.f32.mrb[0].mxu0
  %v3707 = vadd.f32 %v3249, %v3706
  %3708 = vmatprep.mubr.bf16.mxu0 %v3578
  %3709 = vmatmul.mubr.bf16.gmra.mrb[0].mxu0 %v2679
  %v3710 = vpop.f32.mrb[0].mxu0
  %v3711 = vadd.f32 %v3253, %v3710
  %v3712 = vpop.f32.mrb[0].mxu0
  %v3713 = vadd.f32 %v3255, %v3712
  %v3714 = vpop.f32.mrb[0].mxu0
  %v3715 = vadd.f32 %v3257, %v3714
  %v3716 = vpop.f32.mrb[0].mxu0
  %v3717 = vadd.f32 %v3259, %v3716
  %3718 = vmatprep.mubr.bf16.mxu0 %v3581
  %3719 = vmatmul.mubr.bf16.gmra.mrb[0].mxu0 %v2681
  %v3720 = vpop.f32.mrb[0].mxu0
  %v3721 = vadd.f32 %v3263, %v3720
  %v3722 = vpop.f32.mrb[0].mxu0
  %v3723 = vadd.f32 %v3265, %v3722
  %v3724 = vpop.f32.mrb[0].mxu0
  %v3725 = vadd.f32 %v3267, %v3724
  %v3726 = vpop.f32.mrb[0].mxu0
  %v3727 = vadd.f32 %v3269, %v3726
  %3728 = vdwg.mxu0
  %v3729 = vpack.c.bf16 %v2669, %v2667
  %v3730 = vpack.c.bf16 %v2670, %v2668
  %s3731 = scalar_lea.vmem %s3, 960
  %v3732 = vld [vmem:[%s3731] sm:$0xff]
  %v3733 = vld [vmem:[%s3731 + $0x8] sm:$0xff]
  %v3734 = vld [vmem:[%s3731 + $0x10] sm:$0xff]
  %v3735 = vld [vmem:[%s3731 + $0x18] sm:$0xff]
  %v3736 = vld [vmem:[%s3731 + $0x20] sm:$0xff]
  %v3737 = vld [vmem:[%s3731 + $0x28] sm:$0xff]
  %v3738 = vld [vmem:[%s3731 + $0x30] sm:$0xff]
  %v3739 = vld [vmem:[%s3731 + $0x38] sm:$0xff]
  %v3740 = vld [vmem:[%s3731 + $0x40] sm:$0xff]
  %v3741 = vld [vmem:[%s3731 + $0x48] sm:$0xff]
  %v3742 = vld [vmem:[%s3731 + $0x50] sm:$0xff]
  %v3743 = vld [vmem:[%s3731 + $0x58] sm:$0xff]
  %v3744 = vld [vmem:[%s3731 + $0x60] sm:$0xff]
  %v3745 = vld [vmem:[%s3731 + $0x68] sm:$0xff]
  %v3746 = vld [vmem:[%s3731 + $0x70] sm:$0xff]
  %v3747 = vld [vmem:[%s3731 + $0x78] sm:$0xff]
  %v3748 = vld [vmem:[%s3731 + $0x80] sm:$0xff]
  %v3749 = vld [vmem:[%s3731 + $0x88] sm:$0xff]
  %v3750 = vld [vmem:[%s3731 + $0x90] sm:$0xff]
  %v3751 = vld [vmem:[%s3731 + $0x98] sm:$0xff]
  %v3752 = vld [vmem:[%s3731 + $0xa0] sm:$0xff]
  %v3753 = vld [vmem:[%s3731 + $0xa8] sm:$0xff]
  %v3754 = vld [vmem:[%s3731 + $0xb0] sm:$0xff]
  %v3755 = vld [vmem:[%s3731 + $0xb8] sm:$0xff]
  %v3756 = vld [vmem:[%s3731 + $0xc0] sm:$0xff]
  %v3757 = vld [vmem:[%s3731 + $0xc8] sm:$0xff]
  %v3758 = vld [vmem:[%s3731 + $0xd0] sm:$0xff]
  %v3759 = vld [vmem:[%s3731 + $0xd8] sm:$0xff]
  %v3760 = vld [vmem:[%s3731 + $0xe0] sm:$0xff]
  %v3761 = vld [vmem:[%s3731 + $0xe8] sm:$0xff]
  %v3762 = vld [vmem:[%s3731 + $0xf0] sm:$0xff]
  %v3763 = vld [vmem:[%s3731 + $0xf8] sm:$0xff]
  %v3764 = vld [vmem:[%s3731 + $0x100] sm:$0xff]
  %v3765 = vld [vmem:[%s3731 + $0x108] sm:$0xff]
  %v3766 = vld [vmem:[%s3731 + $0x110] sm:$0xff]
  %v3767 = vld [vmem:[%s3731 + $0x118] sm:$0xff]
  %v3768 = vld [vmem:[%s3731 + $0x120] sm:$0xff]
  %v3769 = vld [vmem:[%s3731 + $0x128] sm:$0xff]
  %v3770 = vld [vmem:[%s3731 + $0x130] sm:$0xff]
  %v3771 = vld [vmem:[%s3731 + $0x138] sm:$0xff]
  %v3772 = vld [vmem:[%s3731 + $0x140] sm:$0xff]
  %v3773 = vld [vmem:[%s3731 + $0x148] sm:$0xff]
  %v3774 = vld [vmem:[%s3731 + $0x150] sm:$0xff]
  %v3775 = vld [vmem:[%s3731 + $0x158] sm:$0xff]
  %v3776 = vld [vmem:[%s3731 + $0x160] sm:$0xff]
  %v3777 = vld [vmem:[%s3731 + $0x168] sm:$0xff]
  %v3778 = vld [vmem:[%s3731 + $0x170] sm:$0xff]
  %v3779 = vld [vmem:[%s3731 + $0x178] sm:$0xff]
  %v3780 = vld [vmem:[%s3731 + $0x180] sm:$0xff]
  %v3781 = vld [vmem:[%s3731 + $0x188] sm:$0xff]
  %v3782 = vld [vmem:[%s3731 + $0x190] sm:$0xff]
  %v3783 = vld [vmem:[%s3731 + $0x198] sm:$0xff]
  %v3784 = vld [vmem:[%s3731 + $0x1a0] sm:$0xff]
  %v3785 = vld [vmem:[%s3731 + $0x1a8] sm:$0xff]
  %v3786 = vld [vmem:[%s3731 + $0x1b0] sm:$0xff]
  %v3787 = vld [vmem:[%s3731 + $0x1b8] sm:$0xff]
  %v3788 = vld [vmem:[%s3731 + $0x1c0] sm:$0xff]
  %v3789 = vld [vmem:[%s3731 + $0x1c8] sm:$0xff]
  %v3790 = vld [vmem:[%s3731 + $0x1d0] sm:$0xff]
  %v3791 = vld [vmem:[%s3731 + $0x1d8] sm:$0xff]
  %v3852 = vunpack.c.l.b16 %v3732
  %v3853 = vunpack.c.h.b16 %v3732
  %v3854 = vunpack.c.l.b16 %v3733
  %v3855 = vunpack.c.h.b16 %v3733
  %v3856 = vunpack.c.l.b16 %v3734
  %v3857 = vunpack.c.h.b16 %v3734
  %v3858 = vunpack.c.l.b16 %v3735
  %v3859 = vunpack.c.h.b16 %v3735
  %v3860 = vunpack.c.l.b16 %v3736
  %v3861 = vunpack.c.h.b16 %v3736
  %v3862 = vunpack.c.l.b16 %v3737
  %v3863 = vunpack.c.h.b16 %v3737
  %v3864 = vunpack.c.l.b16 %v3738
  %v3865 = vunpack.c.h.b16 %v3738
  %v3866 = vunpack.c.l.b16 %v3739
  %v3867 = vunpack.c.h.b16 %v3739
  %v3868 = vunpack.c.l.b16 %v3740
  %v3869 = vunpack.c.h.b16 %v3740
  %v3870 = vunpack.c.l.b16 %v3741
  %v3871 = vunpack.c.h.b16 %v3741
  %v3872 = vunpack.c.l.b16 %v3742
  %v3873 = vunpack.c.h.b16 %v3742
  %v3874 = vunpack.c.l.b16 %v3743
  %v3875 = vunpack.c.h.b16 %v3743
  %v3876 = vunpack.c.l.b16 %v3744
  %v3877 = vunpack.c.h.b16 %v3744
  %v3878 = vunpack.c.l.b16 %v3745
  %v3879 = vunpack.c.h.b16 %v3745
  %v3880 = vunpack.c.l.b16 %v3746
  %v3881 = vunpack.c.h.b16 %v3746
  %v3882 = vunpack.c.l.b16 %v3747
  %v3883 = vunpack.c.h.b16 %v3747
  %v3884 = vunpack.c.l.b16 %v3748
  %v3885 = vunpack.c.h.b16 %v3748
  %v3886 = vunpack.c.l.b16 %v3749
  %v3887 = vunpack.c.h.b16 %v3749
  %v3888 = vunpack.c.l.b16 %v3750
  %v3889 = vunpack.c.h.b16 %v3750
  %v3890 = vunpack.c.l.b16 %v3751
  %v3891 = vunpack.c.h.b16 %v3751
  %v3892 = vunpack.c.l.b16 %v3752
  %v3893 = vunpack.c.h.b16 %v3752
  %v3894 = vunpack.c.l.b16 %v3753
  %v3895 = vunpack.c.h.b16 %v3753
  %v3896 = vunpack.c.l.b16 %v3754
  %v3897 = vunpack.c.h.b16 %v3754
  %v3898 = vunpack.c.l.b16 %v3755
  %v3899 = vunpack.c.h.b16 %v3755
  %v3900 = vunpack.c.l.b16 %v3756
  %v3901 = vunpack.c.h.b16 %v3756
  %v3902 = vunpack.c.l.b16 %v3757
  %v3903 = vunpack.c.h.b16 %v3757
  %v3904 = vunpack.c.l.b16 %v3758
  %v3905 = vunpack.c.h.b16 %v3758
  %v3906 = vunpack.c.l.b16 %v3759
  %v3907 = vunpack.c.h.b16 %v3759
  %v3908 = vunpack.c.l.b16 %v3760
  %v3909 = vunpack.c.h.b16 %v3760
  %v3910 = vunpack.c.l.b16 %v3761
  %v3911 = vunpack.c.h.b16 %v3761
  %v3912 = vunpack.c.l.b16 %v3762
  %v3913 = vunpack.c.h.b16 %v3762
  %v3914 = vunpack.c.l.b16 %v3763
  %v3915 = vunpack.c.h.b16 %v3763
  %v3916 = vunpack.c.l.b16 %v3764
  %v3917 = vunpack.c.h.b16 %v3764
  %v3918 = vunpack.c.l.b16 %v3765
  %v3919 = vunpack.c.h.b16 %v3765
  %v3920 = vunpack.c.l.b16 %v3766
  %v3921 = vunpack.c.h.b16 %v3766
  %v3922 = vunpack.c.l.b16 %v3767
  %v3923 = vunpack.c.h.b16 %v3767
  %v3924 = vunpack.c.l.b16 %v3768
  %v3925 = vunpack.c.h.b16 %v3768
  %v3926 = vunpack.c.l.b16 %v3769
  %v3927 = vunpack.c.h.b16 %v3769
  %v3928 = vunpack.c.l.b16 %v3770
  %v3929 = vunpack.c.h.b16 %v3770
  %v3930 = vunpack.c.l.b16 %v3771
  %v3931 = vunpack.c.h.b16 %v3771
  %v3932 = vunpack.c.l.b16 %v3772
  %v3933 = vunpack.c.h.b16 %v3772
  %v3934 = vunpack.c.l.b16 %v3773
  %v3935 = vunpack.c.h.b16 %v3773
  %v3936 = vunpack.c.l.b16 %v3774
  %v3937 = vunpack.c.h.b16 %v3774
  %v3938 = vunpack.c.l.b16 %v3775
  %v3939 = vunpack.c.h.b16 %v3775
  %v3940 = vunpack.c.l.b16 %v3776
  %v3941 = vunpack.c.h.b16 %v3776
  %v3942 = vunpack.c.l.b16 %v3777
  %v3943 = vunpack.c.h.b16 %v3777
  %v3944 = vunpack.c.l.b16 %v3778
  %v3945 = vunpack.c.h.b16 %v3778
  %v3946 = vunpack.c.l.b16 %v3779
  %v3947 = vunpack.c.h.b16 %v3779
  %v3948 = vunpack.c.l.b16 %v3780
  %v3949 = vunpack.c.h.b16 %v3780
  %v3950 = vunpack.c.l.b16 %v3781
  %v3951 = vunpack.c.h.b16 %v3781
  %v3952 = vunpack.c.l.b16 %v3782
  %v3953 = vunpack.c.h.b16 %v3782
  %v3954 = vunpack.c.l.b16 %v3783
  %v3955 = vunpack.c.h.b16 %v3783
  %v3956 = vunpack.c.l.b16 %v3784
  %v3957 = vunpack.c.h.b16 %v3784
  %v3958 = vunpack.c.l.b16 %v3785
  %v3959 = vunpack.c.h.b16 %v3785
  %v3960 = vunpack.c.l.b16 %v3786
  %v3961 = vunpack.c.h.b16 %v3786
  %v3962 = vunpack.c.l.b16 %v3787
  %v3963 = vunpack.c.h.b16 %v3787
  %v3964 = vunpack.c.l.b16 %v3788
  %v3965 = vunpack.c.h.b16 %v3788
  %v3966 = vunpack.c.l.b16 %v3789
  %v3967 = vunpack.c.h.b16 %v3789
  %v3968 = vunpack.c.l.b16 %v3790
  %v3969 = vunpack.c.h.b16 %v3790
  %v3970 = vunpack.c.l.b16 %v3791
  %v3971 = vunpack.c.h.b16 %v3791
  %v3972 = vpack.c.b16 %v3856, %v3852
  %v3973 = vpack.c.b16 %v3857, %v3853
  %v3974 = vpack.c.b16 %v3858, %v3854
  %v3975 = vpack.c.b16 %v3859, %v3855
  %v3976 = vpack.c.b16 %v3864, %v3860
  %v3977 = vpack.c.b16 %v3865, %v3861
  %v3978 = vpack.c.b16 %v3866, %v3862
  %v3979 = vpack.c.b16 %v3867, %v3863
  %v3980 = vpack.c.b16 %v3872, %v3868
  %v3981 = vpack.c.b16 %v3873, %v3869
  %v3982 = vpack.c.b16 %v3874, %v3870
  %v3983 = vpack.c.b16 %v3875, %v3871
  %v3984 = vpack.c.b16 %v3880, %v3876
  %v3985 = vpack.c.b16 %v3881, %v3877
  %v3986 = vpack.c.b16 %v3882, %v3878
  %v3987 = vpack.c.b16 %v3883, %v3879
  %v3988 = vpack.c.b16 %v3888, %v3884
  %v3989 = vpack.c.b16 %v3889, %v3885
  %v3990 = vpack.c.b16 %v3890, %v3886
  %v3991 = vpack.c.b16 %v3891, %v3887
  %v3992 = vpack.c.b16 %v3896, %v3892
  %v3993 = vpack.c.b16 %v3897, %v3893
  %v3994 = vpack.c.b16 %v3898, %v3894
  %v3995 = vpack.c.b16 %v3899, %v3895
  %v3996 = vpack.c.b16 %v3904, %v3900
  %v3997 = vpack.c.b16 %v3905, %v3901
  %v3998 = vpack.c.b16 %v3906, %v3902
  %v3999 = vpack.c.b16 %v3907, %v3903
  %v4000 = vpack.c.b16 %v3912, %v3908
  %v4001 = vpack.c.b16 %v3913, %v3909
  %v4002 = vpack.c.b16 %v3914, %v3910
  %v4003 = vpack.c.b16 %v3915, %v3911
  %v4004 = vpack.c.b16 %v3920, %v3916
  %v4005 = vpack.c.b16 %v3921, %v3917
  %v4006 = vpack.c.b16 %v3922, %v3918
  %v4007 = vpack.c.b16 %v3923, %v3919
  %v4008 = vpack.c.b16 %v3928, %v3924
  %v4009 = vpack.c.b16 %v3929, %v3925
  %v4010 = vpack.c.b16 %v3930, %v3926
  %v4011 = vpack.c.b16 %v3931, %v3927
  %v4012 = vpack.c.b16 %v3936, %v3932
  %v4013 = vpack.c.b16 %v3937, %v3933
  %v4014 = vpack.c.b16 %v3938, %v3934
  %v4015 = vpack.c.b16 %v3939, %v3935
  %v4016 = vpack.c.b16 %v3944, %v3940
  %v4017 = vpack.c.b16 %v3945, %v3941
  %v4018 = vpack.c.b16 %v3946, %v3942
  %v4019 = vpack.c.b16 %v3947, %v3943
  %v4020 = vpack.c.b16 %v3952, %v3948
  %v4021 = vpack.c.b16 %v3953, %v3949
  %v4022 = vpack.c.b16 %v3954, %v3950
  %v4023 = vpack.c.b16 %v3955, %v3951
  %v4024 = vpack.c.b16 %v3960, %v3956
  %v4025 = vpack.c.b16 %v3961, %v3957
  %v4026 = vpack.c.b16 %v3962, %v3958
  %v4027 = vpack.c.b16 %v3963, %v3959
  %v4028 = vpack.c.b16 %v3968, %v3964
  %v4029 = vpack.c.b16 %v3969, %v3965
  %v4030 = vpack.c.b16 %v3970, %v3966
  %v4031 = vpack.c.b16 %v3971, %v3967
  %v4093 = vsel %vm3112, %v3730, 0
  %4095 = vmatprep.subr.bf16.mxu0 %v3973
  %4096 = vmatpush1.bf16.msra.mxu0 %v3972
  %4097 = vmatprep.subr.bf16.mxu0 %v3977
  %4098 = vmatpush1.bf16.msra.mxu0 %v3976
  %4099 = vmatprep.subr.bf16.mxu0 %v3981
  %4100 = vmatpush1.bf16.msra.mxu0 %v3980
  %4101 = vmatprep.subr.bf16.mxu0 %v3985
  %4102 = vmatpush1.bf16.msra.mxu0 %v3984
  %4103 = vmatprep.subr.bf16.mxu0 %v3989
  %4104 = vmatpush1.bf16.msra.mxu0 %v3988
  %4105 = vmatprep.subr.bf16.mxu0 %v3993
  %4106 = vmatpush1.bf16.msra.mxu0 %v3992
  %4107 = vmatprep.subr.bf16.mxu0 %v3997
  %4108 = vmatpush1.bf16.msra.mxu0 %v3996
  %4109 = vmatprep.subr.bf16.mxu0 %v4001
  %4110 = vmatpush1.bf16.msra.mxu0 %v4000
  %4111 = vmatprep.subr.bf16.mxu0 %v4005
  %4112 = vmatpush1.bf16.msra.mxu0 %v4004
  %4113 = vmatprep.subr.bf16.mxu0 %v4009
  %4114 = vmatpush1.bf16.msra.mxu0 %v4008
  %4115 = vmatprep.subr.bf16.mxu0 %v4013
  %4116 = vmatpush1.bf16.msra.mxu0 %v4012
  %4117 = vmatprep.subr.bf16.mxu0 %v4017
  %4118 = vmatpush1.bf16.msra.mxu0 %v4016
  %4119 = vmatprep.subr.bf16.mxu0 %v4021
  %4120 = vmatpush1.bf16.msra.mxu0 %v4020
  %4121 = vmatprep.subr.bf16.mxu0 %v4025
  %4122 = vmatpush1.bf16.msra.mxu0 %v4024
  %4123 = vmatprep.subr.bf16.mxu0 %v4029
  %4124 = vmatpush1.bf16.msra.mxu0 %v4028
  %4125 = vmatprep.subr.bf16.mxu0 0
  %4126 = vmatpush1.bf16.msra.mxu0 0
  %4127 = vmatprep.mubr.bf16.mxu0 %v3575
  %4128 = vmatmul.mubr.bf16.gmra.mrb[0].mxu0 %v2677
  %v4129 = vpop.f32.mrb[0].mxu0
  %v4130 = vadd.f32 0.0, %v4129
  %v4131 = vpop.f32.mrb[0].mxu0
  %v4132 = vadd.f32 0.0, %v4131
  %v4133 = vpop.f32.mrb[0].mxu0
  %v4134 = vadd.f32 0.0, %v4133
  %v4135 = vpop.f32.mrb[0].mxu0
  %v4136 = vadd.f32 0.0, %v4135
  %4137 = vmatprep.mubr.bf16.mxu0 %v3578
  %4138 = vmatmul.mubr.bf16.gmra.mrb[0].mxu0 %v2679
  %v4139 = vpop.f32.mrb[0].mxu0
  %v4140 = vadd.f32 0.0, %v4139
  %v4141 = vpop.f32.mrb[0].mxu0
  %v4142 = vadd.f32 0.0, %v4141
  %v4143 = vpop.f32.mrb[0].mxu0
  %v4144 = vadd.f32 0.0, %v4143
  %v4145 = vpop.f32.mrb[0].mxu0
  %v4146 = vadd.f32 0.0, %v4145
  %4147 = vmatprep.mubr.bf16.mxu0 %v3581
  %4148 = vmatmul.mubr.bf16.gmra.mrb[0].mxu0 %v2681
  %v4149 = vpop.f32.mrb[0].mxu0
  %v4150 = vadd.f32 0.0, %v4149
  %v4151 = vpop.f32.mrb[0].mxu0
  %v4152 = vadd.f32 0.0, %v4151
  %v4153 = vpop.f32.mrb[0].mxu0
  %v4154 = vadd.f32 0.0, %v4153
  %v4155 = vpop.f32.mrb[0].mxu0
  %v4156 = vadd.f32 0.0, %v4155
  %4157 = vmatprep.mubr.bf16.mxu0 %v4093
  %4158 = vmatmul.mubr.bf16.gmra.mrb[0].mxu0 %v3729
  %v4159 = vpop.f32.mrb[0].mxu0
  %v4160 = vadd.f32 0.0, %v4159
  %v4161 = vpop.f32.mrb[0].mxu0
  %v4162 = vadd.f32 0.0, %v4161
  %v4163 = vpop.f32.mrb[0].mxu0
  %v4164 = vadd.f32 0.0, %v4163
  %v4165 = vpop.f32.mrb[0].mxu0
  %v4166 = vadd.f32 0.0, %v4165
  %4167 = vdwg.mxu0
  %4168 = vmatprep.subr.bf16.mxu0 %v3975
  %4169 = vmatpush1.bf16.msra.mxu0 %v3974
  %4170 = vmatprep.subr.bf16.mxu0 %v3979
  %4171 = vmatpush1.bf16.msra.mxu0 %v3978
  %4172 = vmatprep.subr.bf16.mxu0 %v3983
  %4173 = vmatpush1.bf16.msra.mxu0 %v3982
  %4174 = vmatprep.subr.bf16.mxu0 %v3987
  %4175 = vmatpush1.bf16.msra.mxu0 %v3986
  %4176 = vmatprep.subr.bf16.mxu0 %v3991
  %4177 = vmatpush1.bf16.msra.mxu0 %v3990
  %4178 = vmatprep.subr.bf16.mxu0 %v3995
  %4179 = vmatpush1.bf16.msra.mxu0 %v3994
  %4180 = vmatprep.subr.bf16.mxu0 %v3999
  %4181 = vmatpush1.bf16.msra.mxu0 %v3998
  %4182 = vmatprep.subr.bf16.mxu0 %v4003
  %4183 = vmatpush1.bf16.msra.mxu0 %v4002
  %4184 = vmatprep.subr.bf16.mxu0 %v4007
  %4185 = vmatpush1.bf16.msra.mxu0 %v4006
  %4186 = vmatprep.subr.bf16.mxu0 %v4011
  %4187 = vmatpush1.bf16.msra.mxu0 %v4010
  %4188 = vmatprep.subr.bf16.mxu0 %v4015
  %4189 = vmatpush1.bf16.msra.mxu0 %v4014
  %4190 = vmatprep.subr.bf16.mxu0 %v4019
  %4191 = vmatpush1.bf16.msra.mxu0 %v4018
  %4192 = vmatprep.subr.bf16.mxu0 %v4023
  %4193 = vmatpush1.bf16.msra.mxu0 %v4022
  %4194 = vmatprep.subr.bf16.mxu0 %v4027
  %4195 = vmatpush1.bf16.msra.mxu0 %v4026
  %4196 = vmatprep.subr.bf16.mxu0 %v4031
  %4197 = vmatpush1.bf16.msra.mxu0 %v4030
  %4198 = vmatprep.subr.bf16.mxu0 0
  %4199 = vmatpush1.bf16.msra.mxu0 0
  %4200 = vmatprep.mubr.bf16.mxu0 %v3575
  %4201 = vmatmul.mubr.bf16.gmra.mrb[0].mxu0 %v2677
  %v4202 = vpop.f32.mrb[0].mxu0
  %v4203 = vadd.f32 0.0, %v4202
  %v4204 = vpop.f32.mrb[0].mxu0
  %v4205 = vadd.f32 0.0, %v4204
  %v4206 = vpop.f32.mrb[0].mxu0
  %v4207 = vadd.f32 0.0, %v4206
  %v4208 = vpop.f32.mrb[0].mxu0
  %v4209 = vadd.f32 0.0, %v4208
  %4210 = vmatprep.mubr.bf16.mxu0 %v3578
  %4211 = vmatmul.mubr.bf16.gmra.mrb[0].mxu0 %v2679
  %v4212 = vpop.f32.mrb[0].mxu0
  %v4213 = vadd.f32 0.0, %v4212
  %v4214 = vpop.f32.mrb[0].mxu0
  %v4215 = vadd.f32 0.0, %v4214
  %v4216 = vpop.f32.mrb[0].mxu0
  %v4217 = vadd.f32 0.0, %v4216
  %v4218 = vpop.f32.mrb[0].mxu0
  %v4219 = vadd.f32 0.0, %v4218
  %4220 = vmatprep.mubr.bf16.mxu0 %v3581
  %4221 = vmatmul.mubr.bf16.gmra.mrb[0].mxu0 %v2681
  %v4222 = vpop.f32.mrb[0].mxu0
  %v4223 = vadd.f32 0.0, %v4222
  %v4224 = vpop.f32.mrb[0].mxu0
  %v4225 = vadd.f32 0.0, %v4224
  %v4226 = vpop.f32.mrb[0].mxu0
  %v4227 = vadd.f32 0.0, %v4226
  %v4228 = vpop.f32.mrb[0].mxu0
  %v4229 = vadd.f32 0.0, %v4228
  %4230 = vmatprep.mubr.bf16.mxu0 %v4093
  %4231 = vmatmul.mubr.bf16.gmra.mrb[0].mxu0 %v3729
  %v4232 = vpop.f32.mrb[0].mxu0
  %v4233 = vadd.f32 0.0, %v4232
  %v4234 = vpop.f32.mrb[0].mxu0
  %v4235 = vadd.f32 0.0, %v4234
  %v4236 = vpop.f32.mrb[0].mxu0
  %v4237 = vadd.f32 0.0, %v4236
  %v4238 = vpop.f32.mrb[0].mxu0
  %v4239 = vadd.f32 0.0, %v4238
  %4240 = vdwg.mxu0
  %v4241 = vadd.f32 %v3618, %v4130
  %v4242 = vadd.f32 %v3620, %v4132
  %v4243 = vadd.f32 %v3691, %v4203
  %v4244 = vadd.f32 %v3693, %v4205
  %v4245 = vadd.f32 %v3622, %v4134
  %v4246 = vadd.f32 %v3624, %v4136
  %v4247 = vadd.f32 %v3695, %v4207
  %v4248 = vadd.f32 %v3697, %v4209
  %v4249 = vadd.f32 %v3628, %v4140
  %v4250 = vadd.f32 %v3630, %v4142
  %v4251 = vadd.f32 %v3701, %v4213
  %v4252 = vadd.f32 %v3703, %v4215
  %v4253 = vadd.f32 %v3632, %v4144
  %v4254 = vadd.f32 %v3634, %v4146
  %v4255 = vadd.f32 %v3705, %v4217
  %v4256 = vadd.f32 %v3707, %v4219
  %v4257 = vadd.f32 %v3638, %v4150
  %v4258 = vadd.f32 %v3640, %v4152
  %v4259 = vadd.f32 %v3711, %v4223
  %v4260 = vadd.f32 %v3713, %v4225
  %v4261 = vadd.f32 %v3642, %v4154
  %v4262 = vadd.f32 %v3644, %v4156
  %v4263 = vadd.f32 %v3715, %v4227
  %v4264 = vadd.f32 %v3717, %v4229
  %v4265 = vadd.f32 %v3648, %v4160
  %v4266 = vadd.f32 %v3650, %v4162
  %v4267 = vadd.f32 %v3721, %v4233
  %v4268 = vadd.f32 %v3723, %v4235
  %v4269 = vadd.f32 %v3652, %v4164
  %v4270 = vadd.f32 %v3654, %v4166
  %v4271 = vadd.f32 %v3725, %v4237
  %v4272 = vadd.f32 %v3727, %v4239
  %v4273 = vpack.c.bf16 %v2671, %v2669
  %v4274 = vpack.c.bf16 %v2672, %v2670
  %s4275 = scalar_lea.vmem %s3, 1440
  %v4276 = vld [vmem:[%s4275] sm:$0xff]
  %v4277 = vld [vmem:[%s4275 + $0x8] sm:$0xff]
  %v4278 = vld [vmem:[%s4275 + $0x10] sm:$0xff]
  %v4279 = vld [vmem:[%s4275 + $0x18] sm:$0xff]
  %v4280 = vld [vmem:[%s4275 + $0x20] sm:$0xff]
  %v4281 = vld [vmem:[%s4275 + $0x28] sm:$0xff]
  %v4282 = vld [vmem:[%s4275 + $0x30] sm:$0xff]
  %v4283 = vld [vmem:[%s4275 + $0x38] sm:$0xff]
  %v4284 = vld [vmem:[%s4275 + $0x40] sm:$0xff]
  %v4285 = vld [vmem:[%s4275 + $0x48] sm:$0xff]
  %v4286 = vld [vmem:[%s4275 + $0x50] sm:$0xff]
  %v4287 = vld [vmem:[%s4275 + $0x58] sm:$0xff]
  %v4288 = vld [vmem:[%s4275 + $0x60] sm:$0xff]
  %v4289 = vld [vmem:[%s4275 + $0x68] sm:$0xff]
  %v4290 = vld [vmem:[%s4275 + $0x70] sm:$0xff]
  %v4291 = vld [vmem:[%s4275 + $0x78] sm:$0xff]
  %v4292 = vld [vmem:[%s4275 + $0x80] sm:$0xff]
  %v4293 = vld [vmem:[%s4275 + $0x88] sm:$0xff]
  %v4294 = vld [vmem:[%s4275 + $0x90] sm:$0xff]
  %v4295 = vld [vmem:[%s4275 + $0x98] sm:$0xff]
  %v4296 = vld [vmem:[%s4275 + $0xa0] sm:$0xff]
  %v4297 = vld [vmem:[%s4275 + $0xa8] sm:$0xff]
  %v4298 = vld [vmem:[%s4275 + $0xb0] sm:$0xff]
  %v4299 = vld [vmem:[%s4275 + $0xb8] sm:$0xff]
  %v4300 = vld [vmem:[%s4275 + $0xc0] sm:$0xff]
  %v4301 = vld [vmem:[%s4275 + $0xc8] sm:$0xff]
  %v4302 = vld [vmem:[%s4275 + $0xd0] sm:$0xff]
  %v4303 = vld [vmem:[%s4275 + $0xd8] sm:$0xff]
  %v4304 = vld [vmem:[%s4275 + $0xe0] sm:$0xff]
  %v4305 = vld [vmem:[%s4275 + $0xe8] sm:$0xff]
  %v4306 = vld [vmem:[%s4275 + $0xf0] sm:$0xff]
  %v4307 = vld [vmem:[%s4275 + $0xf8] sm:$0xff]
  %v4308 = vld [vmem:[%s4275 + $0x100] sm:$0xff]
  %v4309 = vld [vmem:[%s4275 + $0x108] sm:$0xff]
  %v4310 = vld [vmem:[%s4275 + $0x110] sm:$0xff]
  %v4311 = vld [vmem:[%s4275 + $0x118] sm:$0xff]
  %v4312 = vld [vmem:[%s4275 + $0x120] sm:$0xff]
  %v4313 = vld [vmem:[%s4275 + $0x128] sm:$0xff]
  %v4314 = vld [vmem:[%s4275 + $0x130] sm:$0xff]
  %v4315 = vld [vmem:[%s4275 + $0x138] sm:$0xff]
  %v4316 = vld [vmem:[%s4275 + $0x140] sm:$0xff]
  %v4317 = vld [vmem:[%s4275 + $0x148] sm:$0xff]
  %v4318 = vld [vmem:[%s4275 + $0x150] sm:$0xff]
  %v4319 = vld [vmem:[%s4275 + $0x158] sm:$0xff]
  %v4320 = vld [vmem:[%s4275 + $0x160] sm:$0xff]
  %v4321 = vld [vmem:[%s4275 + $0x168] sm:$0xff]
  %v4322 = vld [vmem:[%s4275 + $0x170] sm:$0xff]
  %v4323 = vld [vmem:[%s4275 + $0x178] sm:$0xff]
  %v4324 = vld [vmem:[%s4275 + $0x180] sm:$0xff]
  %v4325 = vld [vmem:[%s4275 + $0x188] sm:$0xff]
  %v4326 = vld [vmem:[%s4275 + $0x190] sm:$0xff]
  %v4327 = vld [vmem:[%s4275 + $0x198] sm:$0xff]
  %v4328 = vld [vmem:[%s4275 + $0x1a0] sm:$0xff]
  %v4329 = vld [vmem:[%s4275 + $0x1a8] sm:$0xff]
  %v4330 = vld [vmem:[%s4275 + $0x1b0] sm:$0xff]
  %v4331 = vld [vmem:[%s4275 + $0x1b8] sm:$0xff]
  %v4332 = vld [vmem:[%s4275 + $0x1c0] sm:$0xff]
  %v4333 = vld [vmem:[%s4275 + $0x1c8] sm:$0xff]
  %v4334 = vld [vmem:[%s4275 + $0x1d0] sm:$0xff]
  %v4335 = vld [vmem:[%s4275 + $0x1d8] sm:$0xff]
  %v4396 = vunpack.c.l.b16 %v4276
  %v4397 = vunpack.c.h.b16 %v4276
  %v4398 = vunpack.c.l.b16 %v4277
  %v4399 = vunpack.c.h.b16 %v4277
  %v4400 = vunpack.c.l.b16 %v4278
  %v4401 = vunpack.c.h.b16 %v4278
  %v4402 = vunpack.c.l.b16 %v4279
  %v4403 = vunpack.c.h.b16 %v4279
  %v4404 = vunpack.c.l.b16 %v4280
  %v4405 = vunpack.c.h.b16 %v4280
  %v4406 = vunpack.c.l.b16 %v4281
  %v4407 = vunpack.c.h.b16 %v4281
  %v4408 = vunpack.c.l.b16 %v4282
  %v4409 = vunpack.c.h.b16 %v4282
  %v4410 = vunpack.c.l.b16 %v4283
  %v4411 = vunpack.c.h.b16 %v4283
  %v4412 = vunpack.c.l.b16 %v4284
  %v4413 = vunpack.c.h.b16 %v4284
  %v4414 = vunpack.c.l.b16 %v4285
  %v4415 = vunpack.c.h.b16 %v4285
  %v4416 = vunpack.c.l.b16 %v4286
  %v4417 = vunpack.c.h.b16 %v4286
  %v4418 = vunpack.c.l.b16 %v4287
  %v4419 = vunpack.c.h.b16 %v4287
  %v4420 = vunpack.c.l.b16 %v4288
  %v4421 = vunpack.c.h.b16 %v4288
  %v4422 = vunpack.c.l.b16 %v4289
  %v4423 = vunpack.c.h.b16 %v4289
  %v4424 = vunpack.c.l.b16 %v4290
  %v4425 = vunpack.c.h.b16 %v4290
  %v4426 = vunpack.c.l.b16 %v4291
  %v4427 = vunpack.c.h.b16 %v4291
  %v4428 = vunpack.c.l.b16 %v4292
  %v4429 = vunpack.c.h.b16 %v4292
  %v4430 = vunpack.c.l.b16 %v4293
  %v4431 = vunpack.c.h.b16 %v4293
  %v4432 = vunpack.c.l.b16 %v4294
  %v4433 = vunpack.c.h.b16 %v4294
  %v4434 = vunpack.c.l.b16 %v4295
  %v4435 = vunpack.c.h.b16 %v4295
  %v4436 = vunpack.c.l.b16 %v4296
  %v4437 = vunpack.c.h.b16 %v4296
  %v4438 = vunpack.c.l.b16 %v4297
  %v4439 = vunpack.c.h.b16 %v4297
  %v4440 = vunpack.c.l.b16 %v4298
  %v4441 = vunpack.c.h.b16 %v4298
  %v4442 = vunpack.c.l.b16 %v4299
  %v4443 = vunpack.c.h.b16 %v4299
  %v4444 = vunpack.c.l.b16 %v4300
  %v4445 = vunpack.c.h.b16 %v4300
  %v4446 = vunpack.c.l.b16 %v4301
  %v4447 = vunpack.c.h.b16 %v4301
  %v4448 = vunpack.c.l.b16 %v4302
  %v4449 = vunpack.c.h.b16 %v4302
  %v4450 = vunpack.c.l.b16 %v4303
  %v4451 = vunpack.c.h.b16 %v4303
  %v4452 = vunpack.c.l.b16 %v4304
  %v4453 = vunpack.c.h.b16 %v4304
  %v4454 = vunpack.c.l.b16 %v4305
  %v4455 = vunpack.c.h.b16 %v4305
  %v4456 = vunpack.c.l.b16 %v4306
  %v4457 = vunpack.c.h.b16 %v4306
  %v4458 = vunpack.c.l.b16 %v4307
  %v4459 = vunpack.c.h.b16 %v4307
  %v4460 = vunpack.c.l.b16 %v4308
  %v4461 = vunpack.c.h.b16 %v4308
  %v4462 = vunpack.c.l.b16 %v4309
  %v4463 = vunpack.c.h.b16 %v4309
  %v4464 = vunpack.c.l.b16 %v4310
  %v4465 = vunpack.c.h.b16 %v4310
  %v4466 = vunpack.c.l.b16 %v4311
  %v4467 = vunpack.c.h.b16 %v4311
  %v4468 = vunpack.c.l.b16 %v4312
  %v4469 = vunpack.c.h.b16 %v4312
  %v4470 = vunpack.c.l.b16 %v4313
  %v4471 = vunpack.c.h.b16 %v4313
  %v4472 = vunpack.c.l.b16 %v4314
  %v4473 = vunpack.c.h.b16 %v4314
  %v4474 = vunpack.c.l.b16 %v4315
  %v4475 = vunpack.c.h.b16 %v4315
  %v4476 = vunpack.c.l.b16 %v4316
  %v4477 = vunpack.c.h.b16 %v4316
  %v4478 = vunpack.c.l.b16 %v4317
  %v4479 = vunpack.c.h.b16 %v4317
  %v4480 = vunpack.c.l.b16 %v4318
  %v4481 = vunpack.c.h.b16 %v4318
  %v4482 = vunpack.c.l.b16 %v4319
  %v4483 = vunpack.c.h.b16 %v4319
  %v4484 = vunpack.c.l.b16 %v4320
  %v4485 = vunpack.c.h.b16 %v4320
  %v4486 = vunpack.c.l.b16 %v4321
  %v4487 = vunpack.c.h.b16 %v4321
  %v4488 = vunpack.c.l.b16 %v4322
  %v4489 = vunpack.c.h.b16 %v4322
  %v4490 = vunpack.c.l.b16 %v4323
  %v4491 = vunpack.c.h.b16 %v4323
  %v4492 = vunpack.c.l.b16 %v4324
  %v4493 = vunpack.c.h.b16 %v4324
  %v4494 = vunpack.c.l.b16 %v4325
  %v4495 = vunpack.c.h.b16 %v4325
  %v4496 = vunpack.c.l.b16 %v4326
  %v4497 = vunpack.c.h.b16 %v4326
  %v4498 = vunpack.c.l.b16 %v4327
  %v4499 = vunpack.c.h.b16 %v4327
  %v4500 = vunpack.c.l.b16 %v4328
  %v4501 = vunpack.c.h.b16 %v4328
  %v4502 = vunpack.c.l.b16 %v4329
  %v4503 = vunpack.c.h.b16 %v4329
  %v4504 = vunpack.c.l.b16 %v4330
  %v4505 = vunpack.c.h.b16 %v4330
  %v4506 = vunpack.c.l.b16 %v4331
  %v4507 = vunpack.c.h.b16 %v4331
  %v4508 = vunpack.c.l.b16 %v4332
  %v4509 = vunpack.c.h.b16 %v4332
  %v4510 = vunpack.c.l.b16 %v4333
  %v4511 = vunpack.c.h.b16 %v4333
  %v4512 = vunpack.c.l.b16 %v4334
  %v4513 = vunpack.c.h.b16 %v4334
  %v4514 = vunpack.c.l.b16 %v4335
  %v4515 = vunpack.c.h.b16 %v4335
  %v4516 = vpack.c.b16 %v4400, %v4396
  %v4517 = vpack.c.b16 %v4401, %v4397
  %v4518 = vpack.c.b16 %v4402, %v4398
  %v4519 = vpack.c.b16 %v4403, %v4399
  %v4520 = vpack.c.b16 %v4408, %v4404
  %v4521 = vpack.c.b16 %v4409, %v4405
  %v4522 = vpack.c.b16 %v4410, %v4406
  %v4523 = vpack.c.b16 %v4411, %v4407
  %v4524 = vpack.c.b16 %v4416, %v4412
  %v4525 = vpack.c.b16 %v4417, %v4413
  %v4526 = vpack.c.b16 %v4418, %v4414
  %v4527 = vpack.c.b16 %v4419, %v4415
  %v4528 = vpack.c.b16 %v4424, %v4420
  %v4529 = vpack.c.b16 %v4425, %v4421
  %v4530 = vpack.c.b16 %v4426, %v4422
  %v4531 = vpack.c.b16 %v4427, %v4423
  %v4532 = vpack.c.b16 %v4432, %v4428
  %v4533 = vpack.c.b16 %v4433, %v4429
  %v4534 = vpack.c.b16 %v4434, %v4430
  %v4535 = vpack.c.b16 %v4435, %v4431
  %v4536 = vpack.c.b16 %v4440, %v4436
  %v4537 = vpack.c.b16 %v4441, %v4437
  %v4538 = vpack.c.b16 %v4442, %v4438
  %v4539 = vpack.c.b16 %v4443, %v4439
  %v4540 = vpack.c.b16 %v4448, %v4444
  %v4541 = vpack.c.b16 %v4449, %v4445
  %v4542 = vpack.c.b16 %v4450, %v4446
  %v4543 = vpack.c.b16 %v4451, %v4447
  %v4544 = vpack.c.b16 %v4456, %v4452
  %v4545 = vpack.c.b16 %v4457, %v4453
  %v4546 = vpack.c.b16 %v4458, %v4454
  %v4547 = vpack.c.b16 %v4459, %v4455
  %v4548 = vpack.c.b16 %v4464, %v4460
  %v4549 = vpack.c.b16 %v4465, %v4461
  %v4550 = vpack.c.b16 %v4466, %v4462
  %v4551 = vpack.c.b16 %v4467, %v4463
  %v4552 = vpack.c.b16 %v4472, %v4468
  %v4553 = vpack.c.b16 %v4473, %v4469
  %v4554 = vpack.c.b16 %v4474, %v4470
  %v4555 = vpack.c.b16 %v4475, %v4471
  %v4556 = vpack.c.b16 %v4480, %v4476
  %v4557 = vpack.c.b16 %v4481, %v4477
  %v4558 = vpack.c.b16 %v4482, %v4478
  %v4559 = vpack.c.b16 %v4483, %v4479
  %v4560 = vpack.c.b16 %v4488, %v4484
  %v4561 = vpack.c.b16 %v4489, %v4485
  %v4562 = vpack.c.b16 %v4490, %v4486
  %v4563 = vpack.c.b16 %v4491, %v4487
  %v4564 = vpack.c.b16 %v4496, %v4492
  %v4565 = vpack.c.b16 %v4497, %v4493
  %v4566 = vpack.c.b16 %v4498, %v4494
  %v4567 = vpack.c.b16 %v4499, %v4495
  %v4568 = vpack.c.b16 %v4504, %v4500
  %v4569 = vpack.c.b16 %v4505, %v4501
  %v4570 = vpack.c.b16 %v4506, %v4502
  %v4571 = vpack.c.b16 %v4507, %v4503
  %v4572 = vpack.c.b16 %v4512, %v4508
  %v4573 = vpack.c.b16 %v4513, %v4509
  %v4574 = vpack.c.b16 %v4514, %v4510
  %v4575 = vpack.c.b16 %v4515, %v4511
  %v4637 = vsel %vm3112, %v4274, 0
  %4639 = vmatprep.subr.bf16.mxu0 %v4517
  %4640 = vmatpush1.bf16.msra.mxu0 %v4516
  %4641 = vmatprep.subr.bf16.mxu0 %v4521
  %4642 = vmatpush1.bf16.msra.mxu0 %v4520
  %4643 = vmatprep.subr.bf16.mxu0 %v4525
  %4644 = vmatpush1.bf16.msra.mxu0 %v4524
  %4645 = vmatprep.subr.bf16.mxu0 %v4529
  %4646 = vmatpush1.bf16.msra.mxu0 %v4528
  %4647 = vmatprep.subr.bf16.mxu0 %v4533
  %4648 = vmatpush1.bf16.msra.mxu0 %v4532
  %4649 = vmatprep.subr.bf16.mxu0 %v4537
  %4650 = vmatpush1.bf16.msra.mxu0 %v4536
  %4651 = vmatprep.subr.bf16.mxu0 %v4541
  %4652 = vmatpush1.bf16.msra.mxu0 %v4540
  %4653 = vmatprep.subr.bf16.mxu0 %v4545
  %4654 = vmatpush1.bf16.msra.mxu0 %v4544
  %4655 = vmatprep.subr.bf16.mxu0 %v4549
  %4656 = vmatpush1.bf16.msra.mxu0 %v4548
  %4657 = vmatprep.subr.bf16.mxu0 %v4553
  %4658 = vmatpush1.bf16.msra.mxu0 %v4552
  %4659 = vmatprep.subr.bf16.mxu0 %v4557
  %4660 = vmatpush1.bf16.msra.mxu0 %v4556
  %4661 = vmatprep.subr.bf16.mxu0 %v4561
  %4662 = vmatpush1.bf16.msra.mxu0 %v4560
  %4663 = vmatprep.subr.bf16.mxu0 %v4565
  %4664 = vmatpush1.bf16.msra.mxu0 %v4564
  %4665 = vmatprep.subr.bf16.mxu0 %v4569
  %4666 = vmatpush1.bf16.msra.mxu0 %v4568
  %4667 = vmatprep.subr.bf16.mxu0 %v4573
  %4668 = vmatpush1.bf16.msra.mxu0 %v4572
  %4669 = vmatprep.subr.bf16.mxu0 0
  %4670 = vmatpush1.bf16.msra.mxu0 0
  %4671 = vmatprep.mubr.bf16.mxu0 %v3117
  %4672 = vmatmul.mubr.bf16.gmra.mrb[0].mxu0 %v2745
  %v4673 = vpop.f32.mrb[0].mxu0
  %v4674 = vadd.f32 0.0, %v4673
  %v4675 = vpop.f32.mrb[0].mxu0
  %v4676 = vadd.f32 0.0, %v4675
  %v4677 = vpop.f32.mrb[0].mxu0
  %v4678 = vadd.f32 0.0, %v4677
  %v4679 = vpop.f32.mrb[0].mxu0
  %v4680 = vadd.f32 0.0, %v4679
  %4681 = vmatprep.mubr.bf16.mxu0 %v3120
  %4682 = vmatmul.mubr.bf16.gmra.mrb[0].mxu0 %v2747
  %v4683 = vpop.f32.mrb[0].mxu0
  %v4684 = vadd.f32 0.0, %v4683
  %v4685 = vpop.f32.mrb[0].mxu0
  %v4686 = vadd.f32 0.0, %v4685
  %v4687 = vpop.f32.mrb[0].mxu0
  %v4688 = vadd.f32 0.0, %v4687
  %v4689 = vpop.f32.mrb[0].mxu0
  %v4690 = vadd.f32 0.0, %v4689
  %4691 = vmatprep.mubr.bf16.mxu0 %v3123
  %4692 = vmatmul.mubr.bf16.gmra.mrb[0].mxu0 %v2749
  %v4693 = vpop.f32.mrb[0].mxu0
  %v4694 = vadd.f32 0.0, %v4693
  %v4695 = vpop.f32.mrb[0].mxu0
  %v4696 = vadd.f32 0.0, %v4695
  %v4697 = vpop.f32.mrb[0].mxu0
  %v4698 = vadd.f32 0.0, %v4697
  %v4699 = vpop.f32.mrb[0].mxu0
  %v4700 = vadd.f32 0.0, %v4699
  %4701 = vmatprep.mubr.bf16.mxu0 %v4637
  %4702 = vmatmul.mubr.bf16.gmra.mrb[0].mxu0 %v4273
  %v4703 = vpop.f32.mrb[0].mxu0
  %v4704 = vadd.f32 0.0, %v4703
  %v4705 = vpop.f32.mrb[0].mxu0
  %v4706 = vadd.f32 0.0, %v4705
  %v4707 = vpop.f32.mrb[0].mxu0
  %v4708 = vadd.f32 0.0, %v4707
  %v4709 = vpop.f32.mrb[0].mxu0
  %v4710 = vadd.f32 0.0, %v4709
  %4711 = vdwg.mxu0
  %4712 = vmatprep.subr.bf16.mxu0 %v4519
  %4713 = vmatpush1.bf16.msra.mxu0 %v4518
  %4714 = vmatprep.subr.bf16.mxu0 %v4523
  %4715 = vmatpush1.bf16.msra.mxu0 %v4522
  %4716 = vmatprep.subr.bf16.mxu0 %v4527
  %4717 = vmatpush1.bf16.msra.mxu0 %v4526
  %4718 = vmatprep.subr.bf16.mxu0 %v4531
  %4719 = vmatpush1.bf16.msra.mxu0 %v4530
  %4720 = vmatprep.subr.bf16.mxu0 %v4535
  %4721 = vmatpush1.bf16.msra.mxu0 %v4534
  %4722 = vmatprep.subr.bf16.mxu0 %v4539
  %4723 = vmatpush1.bf16.msra.mxu0 %v4538
  %4724 = vmatprep.subr.bf16.mxu0 %v4543
  %4725 = vmatpush1.bf16.msra.mxu0 %v4542
  %4726 = vmatprep.subr.bf16.mxu0 %v4547
  %4727 = vmatpush1.bf16.msra.mxu0 %v4546
  %4728 = vmatprep.subr.bf16.mxu0 %v4551
  %4729 = vmatpush1.bf16.msra.mxu0 %v4550
  %4730 = vmatprep.subr.bf16.mxu0 %v4555
  %4731 = vmatpush1.bf16.msra.mxu0 %v4554
  %4732 = vmatprep.subr.bf16.mxu0 %v4559
  %4733 = vmatpush1.bf16.msra.mxu0 %v4558
  %4734 = vmatprep.subr.bf16.mxu0 %v4563
  %4735 = vmatpush1.bf16.msra.mxu0 %v4562
  %4736 = vmatprep.subr.bf16.mxu0 %v4567
  %4737 = vmatpush1.bf16.msra.mxu0 %v4566
  %4738 = vmatprep.subr.bf16.mxu0 %v4571
  %4739 = vmatpush1.bf16.msra.mxu0 %v4570
  %4740 = vmatprep.subr.bf16.mxu0 %v4575
  %4741 = vmatpush1.bf16.msra.mxu0 %v4574
  %4742 = vmatprep.subr.bf16.mxu0 0
  %4743 = vmatpush1.bf16.msra.mxu0 0
  %4744 = vmatprep.mubr.bf16.mxu0 %v3117
  %4745 = vmatmul.mubr.bf16.gmra.mrb[0].mxu0 %v2745
  %v4746 = vpop.f32.mrb[0].mxu0
  %v4747 = vadd.f32 0.0, %v4746
  %v4748 = vpop.f32.mrb[0].mxu0
  %v4749 = vadd.f32 0.0, %v4748
  %v4750 = vpop.f32.mrb[0].mxu0
  %v4751 = vadd.f32 0.0, %v4750
  %v4752 = vpop.f32.mrb[0].mxu0
  %v4753 = vadd.f32 0.0, %v4752
  %4754 = vmatprep.mubr.bf16.mxu0 %v3120
  %4755 = vmatmul.mubr.bf16.gmra.mrb[0].mxu0 %v2747
  %v4756 = vpop.f32.mrb[0].mxu0
  %v4757 = vadd.f32 0.0, %v4756
  %v4758 = vpop.f32.mrb[0].mxu0
  %v4759 = vadd.f32 0.0, %v4758
  %v4760 = vpop.f32.mrb[0].mxu0
  %v4761 = vadd.f32 0.0, %v4760
  %v4762 = vpop.f32.mrb[0].mxu0
  %v4763 = vadd.f32 0.0, %v4762
  %4764 = vmatprep.mubr.bf16.mxu0 %v3123
  %4765 = vmatmul.mubr.bf16.gmra.mrb[0].mxu0 %v2749
  %v4766 = vpop.f32.mrb[0].mxu0
  %v4767 = vadd.f32 0.0, %v4766
  %v4768 = vpop.f32.mrb[0].mxu0
  %v4769 = vadd.f32 0.0, %v4768
  %v4770 = vpop.f32.mrb[0].mxu0
  %v4771 = vadd.f32 0.0, %v4770
  %v4772 = vpop.f32.mrb[0].mxu0
  %v4773 = vadd.f32 0.0, %v4772
  %4774 = vmatprep.mubr.bf16.mxu0 %v4637
  %4775 = vmatmul.mubr.bf16.gmra.mrb[0].mxu0 %v4273
  %v4776 = vpop.f32.mrb[0].mxu0
  %v4777 = vadd.f32 0.0, %v4776
  %v4778 = vpop.f32.mrb[0].mxu0
  %v4779 = vadd.f32 0.0, %v4778
  %v4780 = vpop.f32.mrb[0].mxu0
  %v4781 = vadd.f32 0.0, %v4780
  %v4782 = vpop.f32.mrb[0].mxu0
  %v4783 = vadd.f32 0.0, %v4782
  %4784 = vdwg.mxu0
  %v4785 = vadd.f32 %v4241, %v4674
  %v4786 = vadd.f32 %v4242, %v4676
  %v4787 = vadd.f32 %v4243, %v4747
  %v4788 = vadd.f32 %v4244, %v4749
  %v4789 = vadd.f32 %v4245, %v4678
  %v4790 = vadd.f32 %v4246, %v4680
  %v4791 = vadd.f32 %v4247, %v4751
  %v4792 = vadd.f32 %v4248, %v4753
  %v4793 = vadd.f32 %v4249, %v4684
  %v4794 = vadd.f32 %v4250, %v4686
  %v4795 = vadd.f32 %v4251, %v4757
  %v4796 = vadd.f32 %v4252, %v4759
  %v4797 = vadd.f32 %v4253, %v4688
  %v4798 = vadd.f32 %v4254, %v4690
  %v4799 = vadd.f32 %v4255, %v4761
  %v4800 = vadd.f32 %v4256, %v4763
  %v4801 = vadd.f32 %v4257, %v4694
  %v4802 = vadd.f32 %v4258, %v4696
  %v4803 = vadd.f32 %v4259, %v4767
  %v4804 = vadd.f32 %v4260, %v4769
  %v4805 = vadd.f32 %v4261, %v4698
  %v4806 = vadd.f32 %v4262, %v4700
  %v4807 = vadd.f32 %v4263, %v4771
  %v4808 = vadd.f32 %v4264, %v4773
  %v4809 = vadd.f32 %v4265, %v4704
  %v4810 = vadd.f32 %v4266, %v4706
  %v4811 = vadd.f32 %v4267, %v4777
  %v4812 = vadd.f32 %v4268, %v4779
  %v4813 = vadd.f32 %v4269, %v4708
  %v4814 = vadd.f32 %v4270, %v4710
  %v4815 = vadd.f32 %v4271, %v4781
  %v4816 = vadd.f32 %v4272, %v4783
  %v4817 = vpack.c.bf16 %v2673, %v2671
  %v4818 = vpack.c.bf16 %v2674, %v2672
  %s4819 = scalar_lea.vmem %s3, 1920
  %v4820 = vld [vmem:[%s4819] sm:$0xff]
  %v4821 = vld [vmem:[%s4819 + $0x8] sm:$0xff]
  %v4822 = vld [vmem:[%s4819 + $0x10] sm:$0xff]
  %v4823 = vld [vmem:[%s4819 + $0x18] sm:$0xff]
  %v4824 = vld [vmem:[%s4819 + $0x20] sm:$0xff]
  %v4825 = vld [vmem:[%s4819 + $0x28] sm:$0xff]
  %v4826 = vld [vmem:[%s4819 + $0x30] sm:$0xff]
  %v4827 = vld [vmem:[%s4819 + $0x38] sm:$0xff]
  %v4828 = vld [vmem:[%s4819 + $0x40] sm:$0xff]
  %v4829 = vld [vmem:[%s4819 + $0x48] sm:$0xff]
  %v4830 = vld [vmem:[%s4819 + $0x50] sm:$0xff]
  %v4831 = vld [vmem:[%s4819 + $0x58] sm:$0xff]
  %v4832 = vld [vmem:[%s4819 + $0x60] sm:$0xff]
  %v4833 = vld [vmem:[%s4819 + $0x68] sm:$0xff]
  %v4834 = vld [vmem:[%s4819 + $0x70] sm:$0xff]
  %v4835 = vld [vmem:[%s4819 + $0x78] sm:$0xff]
  %v4836 = vld [vmem:[%s4819 + $0x80] sm:$0xff]
  %v4837 = vld [vmem:[%s4819 + $0x88] sm:$0xff]
  %v4838 = vld [vmem:[%s4819 + $0x90] sm:$0xff]
  %v4839 = vld [vmem:[%s4819 + $0x98] sm:$0xff]
  %v4840 = vld [vmem:[%s4819 + $0xa0] sm:$0xff]
  %v4841 = vld [vmem:[%s4819 + $0xa8] sm:$0xff]
  %v4842 = vld [vmem:[%s4819 + $0xb0] sm:$0xff]
  %v4843 = vld [vmem:[%s4819 + $0xb8] sm:$0xff]
  %v4844 = vld [vmem:[%s4819 + $0xc0] sm:$0xff]
  %v4845 = vld [vmem:[%s4819 + $0xc8] sm:$0xff]
  %v4846 = vld [vmem:[%s4819 + $0xd0] sm:$0xff]
  %v4847 = vld [vmem:[%s4819 + $0xd8] sm:$0xff]
  %v4848 = vld [vmem:[%s4819 + $0xe0] sm:$0xff]
  %v4849 = vld [vmem:[%s4819 + $0xe8] sm:$0xff]
  %v4850 = vld [vmem:[%s4819 + $0xf0] sm:$0xff]
  %v4851 = vld [vmem:[%s4819 + $0xf8] sm:$0xff]
  %v4852 = vld [vmem:[%s4819 + $0x100] sm:$0xff]
  %v4853 = vld [vmem:[%s4819 + $0x108] sm:$0xff]
  %v4854 = vld [vmem:[%s4819 + $0x110] sm:$0xff]
  %v4855 = vld [vmem:[%s4819 + $0x118] sm:$0xff]
  %v4856 = vld [vmem:[%s4819 + $0x120] sm:$0xff]
  %v4857 = vld [vmem:[%s4819 + $0x128] sm:$0xff]
  %v4858 = vld [vmem:[%s4819 + $0x130] sm:$0xff]
  %v4859 = vld [vmem:[%s4819 + $0x138] sm:$0xff]
  %v4860 = vld [vmem:[%s4819 + $0x140] sm:$0xff]
  %v4861 = vld [vmem:[%s4819 + $0x148] sm:$0xff]
  %v4862 = vld [vmem:[%s4819 + $0x150] sm:$0xff]
  %v4863 = vld [vmem:[%s4819 + $0x158] sm:$0xff]
  %v4864 = vld [vmem:[%s4819 + $0x160] sm:$0xff]
  %v4865 = vld [vmem:[%s4819 + $0x168] sm:$0xff]
  %v4866 = vld [vmem:[%s4819 + $0x170] sm:$0xff]
  %v4867 = vld [vmem:[%s4819 + $0x178] sm:$0xff]
  %v4868 = vld [vmem:[%s4819 + $0x180] sm:$0xff]
  %v4869 = vld [vmem:[%s4819 + $0x188] sm:$0xff]
  %v4870 = vld [vmem:[%s4819 + $0x190] sm:$0xff]
  %v4871 = vld [vmem:[%s4819 + $0x198] sm:$0xff]
  %v4872 = vld [vmem:[%s4819 + $0x1a0] sm:$0xff]
  %v4873 = vld [vmem:[%s4819 + $0x1a8] sm:$0xff]
  %v4874 = vld [vmem:[%s4819 + $0x1b0] sm:$0xff]
  %v4875 = vld [vmem:[%s4819 + $0x1b8] sm:$0xff]
  %v4876 = vld [vmem:[%s4819 + $0x1c0] sm:$0xff]
  %v4877 = vld [vmem:[%s4819 + $0x1c8] sm:$0xff]
  %v4878 = vld [vmem:[%s4819 + $0x1d0] sm:$0xff]
  %v4879 = vld [vmem:[%s4819 + $0x1d8] sm:$0xff]
  %v4940 = vunpack.c.l.b16 %v4820
  %v4941 = vunpack.c.h.b16 %v4820
  %v4942 = vunpack.c.l.b16 %v4821
  %v4943 = vunpack.c.h.b16 %v4821
  %v4944 = vunpack.c.l.b16 %v4822
  %v4945 = vunpack.c.h.b16 %v4822
  %v4946 = vunpack.c.l.b16 %v4823
  %v4947 = vunpack.c.h.b16 %v4823
  %v4948 = vunpack.c.l.b16 %v4824
  %v4949 = vunpack.c.h.b16 %v4824
  %v4950 = vunpack.c.l.b16 %v4825
  %v4951 = vunpack.c.h.b16 %v4825
  %v4952 = vunpack.c.l.b16 %v4826
  %v4953 = vunpack.c.h.b16 %v4826
  %v4954 = vunpack.c.l.b16 %v4827
  %v4955 = vunpack.c.h.b16 %v4827
  %v4956 = vunpack.c.l.b16 %v4828
  %v4957 = vunpack.c.h.b16 %v4828
  %v4958 = vunpack.c.l.b16 %v4829
  %v4959 = vunpack.c.h.b16 %v4829
  %v4960 = vunpack.c.l.b16 %v4830
  %v4961 = vunpack.c.h.b16 %v4830
  %v4962 = vunpack.c.l.b16 %v4831
  %v4963 = vunpack.c.h.b16 %v4831
  %v4964 = vunpack.c.l.b16 %v4832
  %v4965 = vunpack.c.h.b16 %v4832
  %v4966 = vunpack.c.l.b16 %v4833
  %v4967 = vunpack.c.h.b16 %v4833
  %v4968 = vunpack.c.l.b16 %v4834
  %v4969 = vunpack.c.h.b16 %v4834
  %v4970 = vunpack.c.l.b16 %v4835
  %v4971 = vunpack.c.h.b16 %v4835
  %v4972 = vunpack.c.l.b16 %v4836
  %v4973 = vunpack.c.h.b16 %v4836
  %v4974 = vunpack.c.l.b16 %v4837
  %v4975 = vunpack.c.h.b16 %v4837
  %v4976 = vunpack.c.l.b16 %v4838
  %v4977 = vunpack.c.h.b16 %v4838
  %v4978 = vunpack.c.l.b16 %v4839
  %v4979 = vunpack.c.h.b16 %v4839
  %v4980 = vunpack.c.l.b16 %v4840
  %v4981 = vunpack.c.h.b16 %v4840
  %v4982 = vunpack.c.l.b16 %v4841
  %v4983 = vunpack.c.h.b16 %v4841
  %v4984 = vunpack.c.l.b16 %v4842
  %v4985 = vunpack.c.h.b16 %v4842
  %v4986 = vunpack.c.l.b16 %v4843
  %v4987 = vunpack.c.h.b16 %v4843
  %v4988 = vunpack.c.l.b16 %v4844
  %v4989 = vunpack.c.h.b16 %v4844
  %v4990 = vunpack.c.l.b16 %v4845
  %v4991 = vunpack.c.h.b16 %v4845
  %v4992 = vunpack.c.l.b16 %v4846
  %v4993 = vunpack.c.h.b16 %v4846
  %v4994 = vunpack.c.l.b16 %v4847
  %v4995 = vunpack.c.h.b16 %v4847
  %v4996 = vunpack.c.l.b16 %v4848
  %v4997 = vunpack.c.h.b16 %v4848
  %v4998 = vunpack.c.l.b16 %v4849
  %v4999 = vunpack.c.h.b16 %v4849
  %v5000 = vunpack.c.l.b16 %v4850
  %v5001 = vunpack.c.h.b16 %v4850
  %v5002 = vunpack.c.l.b16 %v4851
  %v5003 = vunpack.c.h.b16 %v4851
  %v5004 = vunpack.c.l.b16 %v4852
  %v5005 = vunpack.c.h.b16 %v4852
  %v5006 = vunpack.c.l.b16 %v4853
  %v5007 = vunpack.c.h.b16 %v4853
  %v5008 = vunpack.c.l.b16 %v4854
  %v5009 = vunpack.c.h.b16 %v4854
  %v5010 = vunpack.c.l.b16 %v4855
  %v5011 = vunpack.c.h.b16 %v4855
  %v5012 = vunpack.c.l.b16 %v4856
  %v5013 = vunpack.c.h.b16 %v4856
  %v5014 = vunpack.c.l.b16 %v4857
  %v5015 = vunpack.c.h.b16 %v4857
  %v5016 = vunpack.c.l.b16 %v4858
  %v5017 = vunpack.c.h.b16 %v4858
  %v5018 = vunpack.c.l.b16 %v4859
  %v5019 = vunpack.c.h.b16 %v4859
  %v5020 = vunpack.c.l.b16 %v4860
  %v5021 = vunpack.c.h.b16 %v4860
  %v5022 = vunpack.c.l.b16 %v4861
  %v5023 = vunpack.c.h.b16 %v4861
  %v5024 = vunpack.c.l.b16 %v4862
  %v5025 = vunpack.c.h.b16 %v4862
  %v5026 = vunpack.c.l.b16 %v4863
  %v5027 = vunpack.c.h.b16 %v4863
  %v5028 = vunpack.c.l.b16 %v4864
  %v5029 = vunpack.c.h.b16 %v4864
  %v5030 = vunpack.c.l.b16 %v4865
  %v5031 = vunpack.c.h.b16 %v4865
  %v5032 = vunpack.c.l.b16 %v4866
  %v5033 = vunpack.c.h.b16 %v4866
  %v5034 = vunpack.c.l.b16 %v4867
  %v5035 = vunpack.c.h.b16 %v4867
  %v5036 = vunpack.c.l.b16 %v4868
  %v5037 = vunpack.c.h.b16 %v4868
  %v5038 = vunpack.c.l.b16 %v4869
  %v5039 = vunpack.c.h.b16 %v4869
  %v5040 = vunpack.c.l.b16 %v4870
  %v5041 = vunpack.c.h.b16 %v4870
  %v5042 = vunpack.c.l.b16 %v4871
  %v5043 = vunpack.c.h.b16 %v4871
  %v5044 = vunpack.c.l.b16 %v4872
  %v5045 = vunpack.c.h.b16 %v4872
  %v5046 = vunpack.c.l.b16 %v4873
  %v5047 = vunpack.c.h.b16 %v4873
  %v5048 = vunpack.c.l.b16 %v4874
  %v5049 = vunpack.c.h.b16 %v4874
  %v5050 = vunpack.c.l.b16 %v4875
  %v5051 = vunpack.c.h.b16 %v4875
  %v5052 = vunpack.c.l.b16 %v4876
  %v5053 = vunpack.c.h.b16 %v4876
  %v5054 = vunpack.c.l.b16 %v4877
  %v5055 = vunpack.c.h.b16 %v4877
  %v5056 = vunpack.c.l.b16 %v4878
  %v5057 = vunpack.c.h.b16 %v4878
  %v5058 = vunpack.c.l.b16 %v4879
  %v5059 = vunpack.c.h.b16 %v4879
  %v5060 = vpack.c.b16 %v4944, %v4940
  %v5061 = vpack.c.b16 %v4945, %v4941
  %v5062 = vpack.c.b16 %v4946, %v4942
  %v5063 = vpack.c.b16 %v4947, %v4943
  %v5064 = vpack.c.b16 %v4952, %v4948
  %v5065 = vpack.c.b16 %v4953, %v4949
  %v5066 = vpack.c.b16 %v4954, %v4950
  %v5067 = vpack.c.b16 %v4955, %v4951
  %v5068 = vpack.c.b16 %v4960, %v4956
  %v5069 = vpack.c.b16 %v4961, %v4957
  %v5070 = vpack.c.b16 %v4962, %v4958
  %v5071 = vpack.c.b16 %v4963, %v4959
  %v5072 = vpack.c.b16 %v4968, %v4964
  %v5073 = vpack.c.b16 %v4969, %v4965
  %v5074 = vpack.c.b16 %v4970, %v4966
  %v5075 = vpack.c.b16 %v4971, %v4967
  %v5076 = vpack.c.b16 %v4976, %v4972
  %v5077 = vpack.c.b16 %v4977, %v4973
  %v5078 = vpack.c.b16 %v4978, %v4974
  %v5079 = vpack.c.b16 %v4979, %v4975
  %v5080 = vpack.c.b16 %v4984, %v4980
  %v5081 = vpack.c.b16 %v4985, %v4981
  %v5082 = vpack.c.b16 %v4986, %v4982
  %v5083 = vpack.c.b16 %v4987, %v4983
  %v5084 = vpack.c.b16 %v4992, %v4988
  %v5085 = vpack.c.b16 %v4993, %v4989
  %v5086 = vpack.c.b16 %v4994, %v4990
  %v5087 = vpack.c.b16 %v4995, %v4991
  %v5088 = vpack.c.b16 %v5000, %v4996
  %v5089 = vpack.c.b16 %v5001, %v4997
  %v5090 = vpack.c.b16 %v5002, %v4998
  %v5091 = vpack.c.b16 %v5003, %v4999
  %v5092 = vpack.c.b16 %v5008, %v5004
  %v5093 = vpack.c.b16 %v5009, %v5005
  %v5094 = vpack.c.b16 %v5010, %v5006
  %v5095 = vpack.c.b16 %v5011, %v5007
  %v5096 = vpack.c.b16 %v5016, %v5012
  %v5097 = vpack.c.b16 %v5017, %v5013
  %v5098 = vpack.c.b16 %v5018, %v5014
  %v5099 = vpack.c.b16 %v5019, %v5015
  %v5100 = vpack.c.b16 %v5024, %v5020
  %v5101 = vpack.c.b16 %v5025, %v5021
  %v5102 = vpack.c.b16 %v5026, %v5022
  %v5103 = vpack.c.b16 %v5027, %v5023
  %v5104 = vpack.c.b16 %v5032, %v5028
  %v5105 = vpack.c.b16 %v5033, %v5029
  %v5106 = vpack.c.b16 %v5034, %v5030
  %v5107 = vpack.c.b16 %v5035, %v5031
  %v5108 = vpack.c.b16 %v5040, %v5036
  %v5109 = vpack.c.b16 %v5041, %v5037
  %v5110 = vpack.c.b16 %v5042, %v5038
  %v5111 = vpack.c.b16 %v5043, %v5039
  %v5112 = vpack.c.b16 %v5048, %v5044
  %v5113 = vpack.c.b16 %v5049, %v5045
  %v5114 = vpack.c.b16 %v5050, %v5046
  %v5115 = vpack.c.b16 %v5051, %v5047
  %v5116 = vpack.c.b16 %v5056, %v5052
  %v5117 = vpack.c.b16 %v5057, %v5053
  %v5118 = vpack.c.b16 %v5058, %v5054
  %v5119 = vpack.c.b16 %v5059, %v5055
  %v5181 = vsel %vm3112, %v4818, 0
  %5183 = vmatprep.subr.bf16.mxu0 %v5061
  %5184 = vmatpush1.bf16.msra.mxu0 %v5060
  %5185 = vmatprep.subr.bf16.mxu0 %v5065
  %5186 = vmatpush1.bf16.msra.mxu0 %v5064
  %5187 = vmatprep.subr.bf16.mxu0 %v5069
  %5188 = vmatpush1.bf16.msra.mxu0 %v5068
  %5189 = vmatprep.subr.bf16.mxu0 %v5073
  %5190 = vmatpush1.bf16.msra.mxu0 %v5072
  %5191 = vmatprep.subr.bf16.mxu0 %v5077
  %5192 = vmatpush1.bf16.msra.mxu0 %v5076
  %5193 = vmatprep.subr.bf16.mxu0 %v5081
  %5194 = vmatpush1.bf16.msra.mxu0 %v5080
  %5195 = vmatprep.subr.bf16.mxu0 %v5085
  %5196 = vmatpush1.bf16.msra.mxu0 %v5084
  %5197 = vmatprep.subr.bf16.mxu0 %v5089
  %5198 = vmatpush1.bf16.msra.mxu0 %v5088
  %5199 = vmatprep.subr.bf16.mxu0 %v5093
  %5200 = vmatpush1.bf16.msra.mxu0 %v5092
  %5201 = vmatprep.subr.bf16.mxu0 %v5097
  %5202 = vmatpush1.bf16.msra.mxu0 %v5096
  %5203 = vmatprep.subr.bf16.mxu0 %v5101
  %5204 = vmatpush1.bf16.msra.mxu0 %v5100
  %5205 = vmatprep.subr.bf16.mxu0 %v5105
  %5206 = vmatpush1.bf16.msra.mxu0 %v5104
  %5207 = vmatprep.subr.bf16.mxu0 %v5109
  %5208 = vmatpush1.bf16.msra.mxu0 %v5108
  %5209 = vmatprep.subr.bf16.mxu0 %v5113
  %5210 = vmatpush1.bf16.msra.mxu0 %v5112
  %5211 = vmatprep.subr.bf16.mxu0 %v5117
  %5212 = vmatpush1.bf16.msra.mxu0 %v5116
  %5213 = vmatprep.subr.bf16.mxu0 0
  %5214 = vmatpush1.bf16.msra.mxu0 0
  %5215 = vmatprep.mubr.bf16.mxu0 %v3578
  %5216 = vmatmul.mubr.bf16.gmra.mrb[0].mxu0 %v2679
  %v5217 = vpop.f32.mrb[0].mxu0
  %v5218 = vadd.f32 0.0, %v5217
  %v5219 = vpop.f32.mrb[0].mxu0
  %v5220 = vadd.f32 0.0, %v5219
  %v5221 = vpop.f32.mrb[0].mxu0
  %v5222 = vadd.f32 0.0, %v5221
  %v5223 = vpop.f32.mrb[0].mxu0
  %v5224 = vadd.f32 0.0, %v5223
  %5225 = vmatprep.mubr.bf16.mxu0 %v3581
  %5226 = vmatmul.mubr.bf16.gmra.mrb[0].mxu0 %v2681
  %v5227 = vpop.f32.mrb[0].mxu0
  %v5228 = vadd.f32 0.0, %v5227
  %v5229 = vpop.f32.mrb[0].mxu0
  %v5230 = vadd.f32 0.0, %v5229
  %v5231 = vpop.f32.mrb[0].mxu0
  %v5232 = vadd.f32 0.0, %v5231
  %v5233 = vpop.f32.mrb[0].mxu0
  %v5234 = vadd.f32 0.0, %v5233
  %5235 = vmatprep.mubr.bf16.mxu0 %v4093
  %5236 = vmatmul.mubr.bf16.gmra.mrb[0].mxu0 %v3729
  %v5237 = vpop.f32.mrb[0].mxu0
  %v5238 = vadd.f32 0.0, %v5237
  %v5239 = vpop.f32.mrb[0].mxu0
  %v5240 = vadd.f32 0.0, %v5239
  %v5241 = vpop.f32.mrb[0].mxu0
  %v5242 = vadd.f32 0.0, %v5241
  %v5243 = vpop.f32.mrb[0].mxu0
  %v5244 = vadd.f32 0.0, %v5243
  %5245 = vmatprep.mubr.bf16.mxu0 %v5181
  %5246 = vmatmul.mubr.bf16.gmra.mrb[0].mxu0 %v4817
  %v5247 = vpop.f32.mrb[0].mxu0
  %v5248 = vadd.f32 0.0, %v5247
  %v5249 = vpop.f32.mrb[0].mxu0
  %v5250 = vadd.f32 0.0, %v5249
  %v5251 = vpop.f32.mrb[0].mxu0
  %v5252 = vadd.f32 0.0, %v5251
  %v5253 = vpop.f32.mrb[0].mxu0
  %v5254 = vadd.f32 0.0, %v5253
  %5255 = vdwg.mxu0
  %5256 = vmatprep.subr.bf16.mxu0 %v5063
  %5257 = vmatpush1.bf16.msra.mxu0 %v5062
  %5258 = vmatprep.subr.bf16.mxu0 %v5067
  %5259 = vmatpush1.bf16.msra.mxu0 %v5066
  %5260 = vmatprep.subr.bf16.mxu0 %v5071
  %5261 = vmatpush1.bf16.msra.mxu0 %v5070
  %5262 = vmatprep.subr.bf16.mxu0 %v5075
  %5263 = vmatpush1.bf16.msra.mxu0 %v5074
  %5264 = vmatprep.subr.bf16.mxu0 %v5079
  %5265 = vmatpush1.bf16.msra.mxu0 %v5078
  %5266 = vmatprep.subr.bf16.mxu0 %v5083
  %5267 = vmatpush1.bf16.msra.mxu0 %v5082
  %5268 = vmatprep.subr.bf16.mxu0 %v5087
  %5269 = vmatpush1.bf16.msra.mxu0 %v5086
  %5270 = vmatprep.subr.bf16.mxu0 %v5091
  %5271 = vmatpush1.bf16.msra.mxu0 %v5090
  %5272 = vmatprep.subr.bf16.mxu0 %v5095
  %5273 = vmatpush1.bf16.msra.mxu0 %v5094
  %5274 = vmatprep.subr.bf16.mxu0 %v5099
  %5275 = vmatpush1.bf16.msra.mxu0 %v5098
  %5276 = vmatprep.subr.bf16.mxu0 %v5103
  %5277 = vmatpush1.bf16.msra.mxu0 %v5102
  %5278 = vmatprep.subr.bf16.mxu0 %v5107
  %5279 = vmatpush1.bf16.msra.mxu0 %v5106
  %5280 = vmatprep.subr.bf16.mxu0 %v5111
  %5281 = vmatpush1.bf16.msra.mxu0 %v5110
  %5282 = vmatprep.subr.bf16.mxu0 %v5115
  %5283 = vmatpush1.bf16.msra.mxu0 %v5114
  %5284 = vmatprep.subr.bf16.mxu0 %v5119
  %5285 = vmatpush1.bf16.msra.mxu0 %v5118
  %5286 = vmatprep.subr.bf16.mxu0 0
  %5287 = vmatpush1.bf16.msra.mxu0 0
  %5288 = vmatprep.mubr.bf16.mxu0 %v3578
  %5289 = vmatmul.mubr.bf16.gmra.mrb[0].mxu0 %v2679
  %v5290 = vpop.f32.mrb[0].mxu0
  %v5291 = vadd.f32 0.0, %v5290
  %v5292 = vpop.f32.mrb[0].mxu0
  %v5293 = vadd.f32 0.0, %v5292
  %v5294 = vpop.f32.mrb[0].mxu0
  %v5295 = vadd.f32 0.0, %v5294
  %v5296 = vpop.f32.mrb[0].mxu0
  %v5297 = vadd.f32 0.0, %v5296
  %5298 = vmatprep.mubr.bf16.mxu0 %v3581
  %5299 = vmatmul.mubr.bf16.gmra.mrb[0].mxu0 %v2681
  %v5300 = vpop.f32.mrb[0].mxu0
  %v5301 = vadd.f32 0.0, %v5300
  %v5302 = vpop.f32.mrb[0].mxu0
  %v5303 = vadd.f32 0.0, %v5302
  %v5304 = vpop.f32.mrb[0].mxu0
  %v5305 = vadd.f32 0.0, %v5304
  %v5306 = vpop.f32.mrb[0].mxu0
  %v5307 = vadd.f32 0.0, %v5306
  %5308 = vmatprep.mubr.bf16.mxu0 %v4093
  %5309 = vmatmul.mubr.bf16.gmra.mrb[0].mxu0 %v3729
  %v5310 = vpop.f32.mrb[0].mxu0
  %v5311 = vadd.f32 0.0, %v5310
  %v5312 = vpop.f32.mrb[0].mxu0
  %v5313 = vadd.f32 0.0, %v5312
  %v5314 = vpop.f32.mrb[0].mxu0
  %v5315 = vadd.f32 0.0, %v5314
  %v5316 = vpop.f32.mrb[0].mxu0
  %v5317 = vadd.f32 0.0, %v5316
  %5318 = vmatprep.mubr.bf16.mxu0 %v5181
  %5319 = vmatmul.mubr.bf16.gmra.mrb[0].mxu0 %v4817
  %v5320 = vpop.f32.mrb[0].mxu0
  %v5321 = vadd.f32 0.0, %v5320
  %v5322 = vpop.f32.mrb[0].mxu0
  %v5323 = vadd.f32 0.0, %v5322
  %v5324 = vpop.f32.mrb[0].mxu0
  %v5325 = vadd.f32 0.0, %v5324
  %v5326 = vpop.f32.mrb[0].mxu0
  %v5327 = vadd.f32 0.0, %v5326
  %5328 = vdwg.mxu0
  %v5329 = vadd.f32 %v4785, %v5218
  %v5330 = vadd.f32 %v4786, %v5220
  %v5331 = vadd.f32 %v4787, %v5291
  %v5332 = vadd.f32 %v4788, %v5293
  %v5333 = vadd.f32 %v4789, %v5222
  %v5334 = vadd.f32 %v4790, %v5224
  %v5335 = vadd.f32 %v4791, %v5295
  %v5336 = vadd.f32 %v4792, %v5297
  %v5337 = vadd.f32 %v4793, %v5228
  %v5338 = vadd.f32 %v4794, %v5230
  %v5339 = vadd.f32 %v4795, %v5301
  %v5340 = vadd.f32 %v4796, %v5303
  %v5341 = vadd.f32 %v4797, %v5232
  %v5342 = vadd.f32 %v4798, %v5234
  %v5343 = vadd.f32 %v4799, %v5305
  %v5344 = vadd.f32 %v4800, %v5307
  %v5345 = vadd.f32 %v4801, %v5238
  %v5346 = vadd.f32 %v4802, %v5240
  %v5347 = vadd.f32 %v4803, %v5311
  %v5348 = vadd.f32 %v4804, %v5313
  %v5349 = vadd.f32 %v4805, %v5242
  %v5350 = vadd.f32 %v4806, %v5244
  %v5351 = vadd.f32 %v4807, %v5315
  %v5352 = vadd.f32 %v4808, %v5317
  %v5353 = vadd.f32 %v4809, %v5248
  %v5354 = vadd.f32 %v4810, %v5250
  %v5355 = vadd.f32 %v4811, %v5321
  %v5356 = vadd.f32 %v4812, %v5323
  %v5357 = vadd.f32 %v4813, %v5252
  %v5358 = vadd.f32 %v4814, %v5254
  %v5359 = vadd.f32 %v4815, %v5325
  %v5360 = vadd.f32 %v4816, %v5327
  %v5361 = vld [vmem:[%s4] sm:$0xf]
  %v5363 = vlaneseq
  %v5364 = vshrl.u32 %v5363, 7
  %v5365 = vsub.s32 0, %v5364
  %v5366 = vrot.slane %v5361, %v5365
  %v5367 = vlaneseq
  %v5368 = vshrl.u32 %v5367, 7
  %v5369 = vsub.s32 1, %v5368
  %v5370 = vrot.slane %v5361, %v5369
  %v5371 = vlaneseq
  %v5372 = vshrl.u32 %v5371, 7
  %v5373 = vsub.s32 2, %v5372
  %v5374 = vrot.slane %v5361, %v5373
  %v5375 = vlaneseq
  %v5376 = vshrl.u32 %v5375, 7
  %v5377 = vsub.s32 3, %v5376
  %v5378 = vrot.slane %v5361, %v5377
  %v5383 = vadd.f32 %v5329, %v5366
  %v5384 = vadd.f32 %v5330, %v5370
  %v5385 = vadd.f32 %v5331, %v5374
  %v5386 = vadd.f32 %v5332, %v5378
  %v5387 = vadd.f32 %v5333, %v5366
  %v5388 = vadd.f32 %v5334, %v5370
  %v5389 = vadd.f32 %v5335, %v5374
  %v5390 = vadd.f32 %v5336, %v5378
  %v5391 = vadd.f32 %v5337, %v5366
  %v5392 = vadd.f32 %v5338, %v5370
  %v5393 = vadd.f32 %v5339, %v5374
  %v5394 = vadd.f32 %v5340, %v5378
  %v5395 = vadd.f32 %v5341, %v5366
  %v5396 = vadd.f32 %v5342, %v5370
  %v5397 = vadd.f32 %v5343, %v5374
  %v5398 = vadd.f32 %v5344, %v5378
  %v5399 = vadd.f32 %v5345, %v5366
  %v5400 = vadd.f32 %v5346, %v5370
  %v5401 = vadd.f32 %v5347, %v5374
  %v5402 = vadd.f32 %v5348, %v5378
  %v5403 = vadd.f32 %v5349, %v5366
  %v5404 = vadd.f32 %v5350, %v5370
  %v5405 = vadd.f32 %v5351, %v5374
  %v5406 = vadd.f32 %v5352, %v5378
  %v5407 = vadd.f32 %v5353, %v5366
  %v5408 = vadd.f32 %v5354, %v5370
  %v5409 = vadd.f32 %v5355, %v5374
  %v5410 = vadd.f32 %v5356, %v5378
  %v5411 = vadd.f32 %v5357, %v5366
  %v5412 = vadd.f32 %v5358, %v5370
  %v5413 = vadd.f32 %v5359, %v5374
  %v5414 = vadd.f32 %v5360, %v5378
  %v5415 = vmax.f32 %v5383, 0.0
  %v5416 = vmax.f32 %v5384, 0.0
  %v5417 = vmax.f32 %v5385, 0.0
  %v5418 = vmax.f32 %v5386, 0.0
  %v5419 = vmax.f32 %v5387, 0.0
  %v5420 = vmax.f32 %v5388, 0.0
  %v5421 = vmax.f32 %v5389, 0.0
  %v5422 = vmax.f32 %v5390, 0.0
  %v5423 = vmax.f32 %v5391, 0.0
  %v5424 = vmax.f32 %v5392, 0.0
  %v5425 = vmax.f32 %v5393, 0.0
  %v5426 = vmax.f32 %v5394, 0.0
  %v5427 = vmax.f32 %v5395, 0.0
  %v5428 = vmax.f32 %v5396, 0.0
  %v5429 = vmax.f32 %v5397, 0.0
  %v5430 = vmax.f32 %v5398, 0.0
  %v5431 = vmax.f32 %v5399, 0.0
  %v5432 = vmax.f32 %v5400, 0.0
  %v5433 = vmax.f32 %v5401, 0.0
  %v5434 = vmax.f32 %v5402, 0.0
  %v5435 = vmax.f32 %v5403, 0.0
  %v5436 = vmax.f32 %v5404, 0.0
  %v5437 = vmax.f32 %v5405, 0.0
  %v5438 = vmax.f32 %v5406, 0.0
  %v5439 = vmax.f32 %v5407, 0.0
  %v5440 = vmax.f32 %v5408, 0.0
  %v5441 = vmax.f32 %v5409, 0.0
  %v5442 = vmax.f32 %v5410, 0.0
  %v5443 = vmax.f32 %v5411, 0.0
  %v5444 = vmax.f32 %v5412, 0.0
  %v5445 = vmax.f32 %v5413, 0.0
  %v5446 = vmax.f32 %v5414, 0.0
  %v5447 = vmax.f32 %v5415, %v5419
  %v5448 = vmax.f32 %v5416, %v5420
  %v5449 = vmax.f32 %v5417, %v5421
  %v5450 = vmax.f32 %v5418, %v5422
  %v5451 = vmax.f32 %v5423, %v5427
  %v5452 = vmax.f32 %v5424, %v5428
  %v5453 = vmax.f32 %v5425, %v5429
  %v5454 = vmax.f32 %v5426, %v5430
  %v5455 = vmax.f32 %v5431, %v5435
  %v5456 = vmax.f32 %v5432, %v5436
  %v5457 = vmax.f32 %v5433, %v5437
  %v5458 = vmax.f32 %v5434, %v5438
  %v5459 = vmax.f32 %v5439, %v5443
  %v5460 = vmax.f32 %v5440, %v5444
  %v5461 = vmax.f32 %v5441, %v5445
  %v5462 = vmax.f32 %v5442, %v5446
  %5475 = vrot.lane.b32.xlu0 %v5448, 56
  %v5476 = vpop.permute.xlu0 %5475
  %5477 = vrot.lane.b32.xlu0 %v5449, 56
  %v5478 = vpop.permute.xlu0 %5477
  %5479 = vrot.lane.b32.xlu0 %v5450, 56
  %v5480 = vpop.permute.xlu0 %5479
  %5481 = vrot.lane.b32.xlu0 %v5452, 56
  %v5482 = vpop.permute.xlu0 %5481
  %5483 = vrot.lane.b32.xlu0 %v5453, 56
  %v5484 = vpop.permute.xlu0 %5483
  %5485 = vrot.lane.b32.xlu0 %v5454, 56
  %v5486 = vpop.permute.xlu0 %5485
  %5487 = vrot.lane.b32.xlu0 %v5456, 56
  %v5488 = vpop.permute.xlu0 %5487
  %5489 = vrot.lane.b32.xlu0 %v5457, 56
  %v5490 = vpop.permute.xlu0 %5489
  %5491 = vrot.lane.b32.xlu0 %v5458, 56
  %v5492 = vpop.permute.xlu0 %5491
  %5493 = vrot.lane.b32.xlu0 %v5460, 56
  %v5494 = vpop.permute.xlu0 %5493
  %5495 = vrot.lane.b32.xlu0 %v5461, 56
  %v5496 = vpop.permute.xlu0 %5495
  %5497 = vrot.lane.b32.xlu0 %v5462, 56
  %v5498 = vpop.permute.xlu0 %5497
  %vm5499 = vcmask 457728
  %v5500 = vsel %vm5499, %v5476, %v5478
  %v5501 = vsel %vm5499, %v5478, %v5480
  %v5502 = vsel %vm5499, %v5482, %v5484
  %v5503 = vsel %vm5499, %v5484, %v5486
  %v5504 = vsel %vm5499, %v5488, %v5490
  %v5505 = vsel %vm5499, %v5490, %v5492
  %v5506 = vsel %vm5499, %v5494, %v5496
  %v5507 = vsel %vm5499, %v5496, %v5498
  %v5516 = vmax.f32 %v5447, %v5500
  %v5517 = vmax.f32 %v5448, %v5501
  %v5518 = vmax.f32 %v5451, %v5502
  %v5519 = vmax.f32 %v5452, %v5503
  %v5520 = vmax.f32 %v5455, %v5504
  %v5521 = vmax.f32 %v5456, %v5505
  %v5522 = vmax.f32 %v5459, %v5506
  %v5523 = vmax.f32 %v5460, %v5507
  %v5524 = vpack.c.bf16 %v5516, %v5516
  %v5525 = vpack.c.bf16 %v5517, %v5517
  %v5526 = vld [vmem:[%s5] sm:$0xff]
  %v5527 = vld [vmem:[%s5 + $0x8] sm:$0xff]
  %v5528 = vld [vmem:[%s5 + $0x10] sm:$0xff]
  %v5529 = vld [vmem:[%s5 + $0x18] sm:$0xff]
  %v5530 = vld [vmem:[%s5 + $0x20] sm:$0xff]
  %v5531 = vld [vmem:[%s5 + $0x28] sm:$0xff]
  %v5532 = vld [vmem:[%s5 + $0x30] sm:$0xff]
  %v5533 = vld [vmem:[%s5 + $0x38] sm:$0xff]
  %v5534 = vld [vmem:[%s5 + $0x40] sm:$0xff]
  %v5535 = vld [vmem:[%s5 + $0x48] sm:$0xff]
  %v5536 = vld [vmem:[%s5 + $0x50] sm:$0xff]
  %v5537 = vld [vmem:[%s5 + $0x58] sm:$0xff]
  %v5538 = vld [vmem:[%s5 + $0x60] sm:$0xff]
  %v5539 = vld [vmem:[%s5 + $0x68] sm:$0xff]
  %v5540 = vld [vmem:[%s5 + $0x70] sm:$0xff]
  %v5541 = vld [vmem:[%s5 + $0x78] sm:$0xff]
  %v5542 = vld [vmem:[%s5 + $0x80] sm:$0xff]
  %v5543 = vld [vmem:[%s5 + $0x88] sm:$0xff]
  %v5544 = vld [vmem:[%s5 + $0x90] sm:$0xff]
  %v5545 = vld [vmem:[%s5 + $0x98] sm:$0xff]
  %v5546 = vld [vmem:[%s5 + $0xa0] sm:$0xff]
  %v5547 = vld [vmem:[%s5 + $0xa8] sm:$0xff]
  %v5548 = vld [vmem:[%s5 + $0xb0] sm:$0xff]
  %v5549 = vld [vmem:[%s5 + $0xb8] sm:$0xff]
  %v5550 = vld [vmem:[%s5 + $0xc0] sm:$0xff]
  %v5551 = vld [vmem:[%s5 + $0xc8] sm:$0xff]
  %v5552 = vld [vmem:[%s5 + $0xd0] sm:$0xff]
  %v5553 = vld [vmem:[%s5 + $0xd8] sm:$0xff]
  %v5554 = vld [vmem:[%s5 + $0xe0] sm:$0xff]
  %v5555 = vld [vmem:[%s5 + $0xe8] sm:$0xff]
  %v5556 = vld [vmem:[%s5 + $0xf0] sm:$0xff]
  %v5557 = vld [vmem:[%s5 + $0xf8] sm:$0xff]
  %v5558 = vld [vmem:[%s5 + $0x100] sm:$0xff]
  %v5559 = vld [vmem:[%s5 + $0x108] sm:$0xff]
  %v5560 = vld [vmem:[%s5 + $0x110] sm:$0xff]
  %v5561 = vld [vmem:[%s5 + $0x118] sm:$0xff]
  %v5562 = vld [vmem:[%s5 + $0x120] sm:$0xff]
  %v5563 = vld [vmem:[%s5 + $0x128] sm:$0xff]
  %v5564 = vld [vmem:[%s5 + $0x130] sm:$0xff]
  %v5565 = vld [vmem:[%s5 + $0x138] sm:$0xff]
  %v5566 = vld [vmem:[%s5 + $0x140] sm:$0xff]
  %v5567 = vld [vmem:[%s5 + $0x148] sm:$0xff]
  %v5568 = vld [vmem:[%s5 + $0x150] sm:$0xff]
  %v5569 = vld [vmem:[%s5 + $0x158] sm:$0xff]
  %v5570 = vld [vmem:[%s5 + $0x160] sm:$0xff]
  %v5571 = vld [vmem:[%s5 + $0x168] sm:$0xff]
  %v5572 = vld [vmem:[%s5 + $0x170] sm:$0xff]
  %v5573 = vld [vmem:[%s5 + $0x178] sm:$0xff]
  %v5574 = vld [vmem:[%s5 + $0x180] sm:$0xff]
  %v5575 = vld [vmem:[%s5 + $0x188] sm:$0xff]
  %v5576 = vpack.c.bf16 %v5518, %v5518
  %v5577 = vpack.c.bf16 %v5519, %v5519
  %s5578 = scalar_lea.vmem %s5, 400
  %v5579 = vld [vmem:[%s5578] sm:$0xff]
  %v5580 = vld [vmem:[%s5578 + $0x8] sm:$0xff]
  %v5581 = vld [vmem:[%s5578 + $0x10] sm:$0xff]
  %v5582 = vld [vmem:[%s5578 + $0x18] sm:$0xff]
  %v5583 = vld [vmem:[%s5578 + $0x20] sm:$0xff]
  %v5584 = vld [vmem:[%s5578 + $0x28] sm:$0xff]
  %v5585 = vld [vmem:[%s5578 + $0x30] sm:$0xff]
  %v5586 = vld [vmem:[%s5578 + $0x38] sm:$0xff]
  %v5587 = vld [vmem:[%s5578 + $0x40] sm:$0xff]
  %v5588 = vld [vmem:[%s5578 + $0x48] sm:$0xff]
  %v5589 = vld [vmem:[%s5578 + $0x50] sm:$0xff]
  %v5590 = vld [vmem:[%s5578 + $0x58] sm:$0xff]
  %v5591 = vld [vmem:[%s5578 + $0x60] sm:$0xff]
  %v5592 = vld [vmem:[%s5578 + $0x68] sm:$0xff]
  %v5593 = vld [vmem:[%s5578 + $0x70] sm:$0xff]
  %v5594 = vld [vmem:[%s5578 + $0x78] sm:$0xff]
  %v5595 = vld [vmem:[%s5578 + $0x80] sm:$0xff]
  %v5596 = vld [vmem:[%s5578 + $0x88] sm:$0xff]
  %v5597 = vld [vmem:[%s5578 + $0x90] sm:$0xff]
  %v5598 = vld [vmem:[%s5578 + $0x98] sm:$0xff]
  %v5599 = vld [vmem:[%s5578 + $0xa0] sm:$0xff]
  %v5600 = vld [vmem:[%s5578 + $0xa8] sm:$0xff]
  %v5601 = vld [vmem:[%s5578 + $0xb0] sm:$0xff]
  %v5602 = vld [vmem:[%s5578 + $0xb8] sm:$0xff]
  %v5603 = vld [vmem:[%s5578 + $0xc0] sm:$0xff]
  %v5604 = vld [vmem:[%s5578 + $0xc8] sm:$0xff]
  %v5605 = vld [vmem:[%s5578 + $0xd0] sm:$0xff]
  %v5606 = vld [vmem:[%s5578 + $0xd8] sm:$0xff]
  %v5607 = vld [vmem:[%s5578 + $0xe0] sm:$0xff]
  %v5608 = vld [vmem:[%s5578 + $0xe8] sm:$0xff]
  %v5609 = vld [vmem:[%s5578 + $0xf0] sm:$0xff]
  %v5610 = vld [vmem:[%s5578 + $0xf8] sm:$0xff]
  %v5611 = vld [vmem:[%s5578 + $0x100] sm:$0xff]
  %v5612 = vld [vmem:[%s5578 + $0x108] sm:$0xff]
  %v5613 = vld [vmem:[%s5578 + $0x110] sm:$0xff]
  %v5614 = vld [vmem:[%s5578 + $0x118] sm:$0xff]
  %v5615 = vld [vmem:[%s5578 + $0x120] sm:$0xff]
  %v5616 = vld [vmem:[%s5578 + $0x128] sm:$0xff]
  %v5617 = vld [vmem:[%s5578 + $0x130] sm:$0xff]
  %v5618 = vld [vmem:[%s5578 + $0x138] sm:$0xff]
  %v5619 = vld [vmem:[%s5578 + $0x140] sm:$0xff]
  %v5620 = vld [vmem:[%s5578 + $0x148] sm:$0xff]
  %v5621 = vld [vmem:[%s5578 + $0x150] sm:$0xff]
  %v5622 = vld [vmem:[%s5578 + $0x158] sm:$0xff]
  %v5623 = vld [vmem:[%s5578 + $0x160] sm:$0xff]
  %v5624 = vld [vmem:[%s5578 + $0x168] sm:$0xff]
  %v5625 = vld [vmem:[%s5578 + $0x170] sm:$0xff]
  %v5626 = vld [vmem:[%s5578 + $0x178] sm:$0xff]
  %v5627 = vld [vmem:[%s5578 + $0x180] sm:$0xff]
  %v5628 = vld [vmem:[%s5578 + $0x188] sm:$0xff]
  %v5679 = vunpack.c.l.b16 %v5579
  %v5680 = vunpack.c.h.b16 %v5579
  %v5681 = vunpack.c.l.b16 %v5580
  %v5682 = vunpack.c.h.b16 %v5580
  %v5683 = vunpack.c.l.b16 %v5581
  %v5684 = vunpack.c.h.b16 %v5581
  %v5685 = vunpack.c.l.b16 %v5582
  %v5686 = vunpack.c.h.b16 %v5582
  %v5687 = vunpack.c.l.b16 %v5583
  %v5688 = vunpack.c.h.b16 %v5583
  %v5689 = vunpack.c.l.b16 %v5584
  %v5690 = vunpack.c.h.b16 %v5584
  %v5691 = vunpack.c.l.b16 %v5585
  %v5692 = vunpack.c.h.b16 %v5585
  %v5693 = vunpack.c.l.b16 %v5586
  %v5694 = vunpack.c.h.b16 %v5586
  %v5695 = vunpack.c.l.b16 %v5587
  %v5696 = vunpack.c.h.b16 %v5587
  %v5697 = vunpack.c.l.b16 %v5588
  %v5698 = vunpack.c.h.b16 %v5588
  %v5699 = vunpack.c.l.b16 %v5589
  %v5700 = vunpack.c.h.b16 %v5589
  %v5701 = vunpack.c.l.b16 %v5590
  %v5702 = vunpack.c.h.b16 %v5590
  %v5703 = vunpack.c.l.b16 %v5591
  %v5704 = vunpack.c.h.b16 %v5591
  %v5705 = vunpack.c.l.b16 %v5592
  %v5706 = vunpack.c.h.b16 %v5592
  %v5707 = vunpack.c.l.b16 %v5593
  %v5708 = vunpack.c.h.b16 %v5593
  %v5709 = vunpack.c.l.b16 %v5594
  %v5710 = vunpack.c.h.b16 %v5594
  %v5711 = vunpack.c.l.b16 %v5595
  %v5712 = vunpack.c.h.b16 %v5595
  %v5713 = vunpack.c.l.b16 %v5596
  %v5714 = vunpack.c.h.b16 %v5596
  %v5715 = vunpack.c.l.b16 %v5597
  %v5716 = vunpack.c.h.b16 %v5597
  %v5717 = vunpack.c.l.b16 %v5598
  %v5718 = vunpack.c.h.b16 %v5598
  %v5719 = vunpack.c.l.b16 %v5599
  %v5720 = vunpack.c.h.b16 %v5599
  %v5721 = vunpack.c.l.b16 %v5600
  %v5722 = vunpack.c.h.b16 %v5600
  %v5723 = vunpack.c.l.b16 %v5601
  %v5724 = vunpack.c.h.b16 %v5601
  %v5725 = vunpack.c.l.b16 %v5602
  %v5726 = vunpack.c.h.b16 %v5602
  %v5727 = vunpack.c.l.b16 %v5603
  %v5728 = vunpack.c.h.b16 %v5603
  %v5729 = vunpack.c.l.b16 %v5604
  %v5730 = vunpack.c.h.b16 %v5604
  %v5731 = vunpack.c.l.b16 %v5605
  %v5732 = vunpack.c.h.b16 %v5605
  %v5733 = vunpack.c.l.b16 %v5606
  %v5734 = vunpack.c.h.b16 %v5606
  %v5735 = vunpack.c.l.b16 %v5607
  %v5736 = vunpack.c.h.b16 %v5607
  %v5737 = vunpack.c.l.b16 %v5608
  %v5738 = vunpack.c.h.b16 %v5608
  %v5739 = vunpack.c.l.b16 %v5609
  %v5740 = vunpack.c.h.b16 %v5609
  %v5741 = vunpack.c.l.b16 %v5610
  %v5742 = vunpack.c.h.b16 %v5610
  %v5743 = vunpack.c.l.b16 %v5611
  %v5744 = vunpack.c.h.b16 %v5611
  %v5745 = vunpack.c.l.b16 %v5612
  %v5746 = vunpack.c.h.b16 %v5612
  %v5747 = vunpack.c.l.b16 %v5613
  %v5748 = vunpack.c.h.b16 %v5613
  %v5749 = vunpack.c.l.b16 %v5614
  %v5750 = vunpack.c.h.b16 %v5614
  %v5751 = vunpack.c.l.b16 %v5615
  %v5752 = vunpack.c.h.b16 %v5615
  %v5753 = vunpack.c.l.b16 %v5616
  %v5754 = vunpack.c.h.b16 %v5616
  %v5755 = vunpack.c.l.b16 %v5617
  %v5756 = vunpack.c.h.b16 %v5617
  %v5757 = vunpack.c.l.b16 %v5618
  %v5758 = vunpack.c.h.b16 %v5618
  %v5759 = vunpack.c.l.b16 %v5619
  %v5760 = vunpack.c.h.b16 %v5619
  %v5761 = vunpack.c.l.b16 %v5620
  %v5762 = vunpack.c.h.b16 %v5620
  %v5763 = vunpack.c.l.b16 %v5621
  %v5764 = vunpack.c.h.b16 %v5621
  %v5765 = vunpack.c.l.b16 %v5622
  %v5766 = vunpack.c.h.b16 %v5622
  %v5767 = vunpack.c.l.b16 %v5623
  %v5768 = vunpack.c.h.b16 %v5623
  %v5769 = vunpack.c.l.b16 %v5624
  %v5770 = vunpack.c.h.b16 %v5624
  %v5771 = vunpack.c.l.b16 %v5625
  %v5772 = vunpack.c.h.b16 %v5625
  %v5773 = vunpack.c.l.b16 %v5626
  %v5774 = vunpack.c.h.b16 %v5626
  %v5775 = vunpack.c.l.b16 %v5627
  %v5776 = vunpack.c.h.b16 %v5627
  %v5777 = vunpack.c.l.b16 %v5628
  %v5778 = vunpack.c.h.b16 %v5628
  %v5779 = vpack.c.b16 %v5683, %v5679
  %v5780 = vpack.c.b16 %v5684, %v5680
  %v5781 = vpack.c.b16 %v5685, %v5681
  %v5782 = vpack.c.b16 %v5686, %v5682
  %v5783 = vpack.c.b16 %v5691, %v5687
  %v5784 = vpack.c.b16 %v5692, %v5688
  %v5785 = vpack.c.b16 %v5693, %v5689
  %v5786 = vpack.c.b16 %v5694, %v5690
  %v5787 = vpack.c.b16 %v5699, %v5695
  %v5788 = vpack.c.b16 %v5700, %v5696
  %v5789 = vpack.c.b16 %v5701, %v5697
  %v5790 = vpack.c.b16 %v5702, %v5698
  %v5791 = vpack.c.b16 %v5707, %v5703
  %v5792 = vpack.c.b16 %v5708, %v5704
  %v5793 = vpack.c.b16 %v5709, %v5705
  %v5794 = vpack.c.b16 %v5710, %v5706
  %v5795 = vpack.c.b16 %v5715, %v5711
  %v5796 = vpack.c.b16 %v5716, %v5712
  %v5797 = vpack.c.b16 %v5717, %v5713
  %v5798 = vpack.c.b16 %v5718, %v5714
  %v5799 = vpack.c.b16 %v5723, %v5719
  %v5800 = vpack.c.b16 %v5724, %v5720
  %v5801 = vpack.c.b16 %v5725, %v5721
  %v5802 = vpack.c.b16 %v5726, %v5722
  %v5803 = vpack.c.b16 %v5731, %v5727
  %v5804 = vpack.c.b16 %v5732, %v5728
  %v5805 = vpack.c.b16 %v5733, %v5729
  %v5806 = vpack.c.b16 %v5734, %v5730
  %v5807 = vpack.c.b16 %v5739, %v5735
  %v5808 = vpack.c.b16 %v5740, %v5736
  %v5809 = vpack.c.b16 %v5741, %v5737
  %v5810 = vpack.c.b16 %v5742, %v5738
  %v5811 = vpack.c.b16 %v5747, %v5743
  %v5812 = vpack.c.b16 %v5748, %v5744
  %v5813 = vpack.c.b16 %v5749, %v5745
  %v5814 = vpack.c.b16 %v5750, %v5746
  %v5815 = vpack.c.b16 %v5755, %v5751
  %v5816 = vpack.c.b16 %v5756, %v5752
  %v5817 = vpack.c.b16 %v5757, %v5753
  %v5818 = vpack.c.b16 %v5758, %v5754
  %v5819 = vpack.c.b16 %v5763, %v5759
  %v5820 = vpack.c.b16 %v5764, %v5760
  %v5821 = vpack.c.b16 %v5765, %v5761
  %v5822 = vpack.c.b16 %v5766, %v5762
  %v5823 = vpack.c.b16 %v5771, %v5767
  %v5824 = vpack.c.b16 %v5772, %v5768
  %v5825 = vpack.c.b16 %v5773, %v5769
  %v5826 = vpack.c.b16 %v5774, %v5770
  %v5827 = vpack.c.b16 %v5775, %v5775
  %v5828 = vpack.c.b16 %v5776, %v5776
  %v5829 = vpack.c.b16 %v5777, %v5777
  %v5830 = vpack.c.b16 %v5778, %v5778
  %vm5879 = vcmask 588800
  %v5881 = vsel %vm5879, %v5577, 0
  %vm5883 = vcmask 1043456
  %v5885 = vsel %vm5883, %v5827, 0
  %v5888 = vsel %vm5883, %v5828, 0
  %v5891 = vsel %vm5883, %v5829, 0
  %v5894 = vsel %vm5883, %v5830, 0
  %5896 = vmatprep.subr.bf16.mxu0 %v5780
  %5897 = vmatpush1.bf16.msra.mxu0 %v5779
  %5898 = vmatprep.subr.bf16.mxu0 %v5784
  %5899 = vmatpush1.bf16.msra.mxu0 %v5783
  %5900 = vmatprep.subr.bf16.mxu0 %v5788
  %5901 = vmatpush1.bf16.msra.mxu0 %v5787
  %5902 = vmatprep.subr.bf16.mxu0 %v5792
  %5903 = vmatpush1.bf16.msra.mxu0 %v5791
  %5904 = vmatprep.subr.bf16.mxu0 %v5796
  %5905 = vmatpush1.bf16.msra.mxu0 %v5795
  %5906 = vmatprep.subr.bf16.mxu0 %v5800
  %5907 = vmatpush1.bf16.msra.mxu0 %v5799
  %5908 = vmatprep.subr.bf16.mxu0 %v5804
  %5909 = vmatpush1.bf16.msra.mxu0 %v5803
  %5910 = vmatprep.subr.bf16.mxu0 %v5808
  %5911 = vmatpush1.bf16.msra.mxu0 %v5807
  %5912 = vmatprep.subr.bf16.mxu0 %v5812
  %5913 = vmatpush1.bf16.msra.mxu0 %v5811
  %5914 = vmatprep.subr.bf16.mxu0 %v5816
  %5915 = vmatpush1.bf16.msra.mxu0 %v5815
  %5916 = vmatprep.subr.bf16.mxu0 %v5820
  %5917 = vmatpush1.bf16.msra.mxu0 %v5819
  %5918 = vmatprep.subr.bf16.mxu0 %v5824
  %5919 = vmatpush1.bf16.msra.mxu0 %v5823
  %5920 = vmatprep.subr.bf16.mxu0 %v5888
  %5921 = vmatpush1.bf16.msra.mxu0 %v5885
  %5922 = vmatprep.subr.bf16.mxu0 0
  %5923 = vmatpush1.bf16.msra.mxu0 0
  %5924 = vmatprep.subr.bf16.mxu0 0
  %5925 = vmatpush1.bf16.msra.mxu0 0
  %5926 = vmatprep.subr.bf16.mxu0 0
  %5927 = vmatpush1.bf16.msra.mxu0 0
  %5928 = vmatprep.mubr.bf16.mxu0 %v5881
  %5929 = vmatmul.mubr.bf16.gmra.mrb[0].mxu0 %v5576
  %v5930 = vpop.f32.mrb[0].mxu0
  %v5931 = vadd.f32 0.0, %v5930
  %v5932 = vpop.f32.mrb[0].mxu0
  %v5933 = vadd.f32 0.0, %v5932
  %v5934 = vpop.f32.mrb[0].mxu0
  %v5935 = vpop.f32.mrb[0].mxu0
  %5936 = vdwg.mxu0
  %5937 = vmatprep.subr.bf16.mxu0 %v5782
  %5938 = vmatpush1.bf16.msra.mxu0 %v5781
  %5939 = vmatprep.subr.bf16.mxu0 %v5786
  %5940 = vmatpush1.bf16.msra.mxu0 %v5785
  %5941 = vmatprep.subr.bf16.mxu0 %v5790
  %5942 = vmatpush1.bf16.msra.mxu0 %v5789
  %5943 = vmatprep.subr.bf16.mxu0 %v5794
  %5944 = vmatpush1.bf16.msra.mxu0 %v5793
  %5945 = vmatprep.subr.bf16.mxu0 %v5798
  %5946 = vmatpush1.bf16.msra.mxu0 %v5797
  %5947 = vmatprep.subr.bf16.mxu0 %v5802
  %5948 = vmatpush1.bf16.msra.mxu0 %v5801
  %5949 = vmatprep.subr.bf16.mxu0 %v5806
  %5950 = vmatpush1.bf16.msra.mxu0 %v5805
  %5951 = vmatprep.subr.bf16.mxu0 %v5810
  %5952 = vmatpush1.bf16.msra.mxu0 %v5809
  %5953 = vmatprep.subr.bf16.mxu0 %v5814
  %5954 = vmatpush1.bf16.msra.mxu0 %v5813
  %5955 = vmatprep.subr.bf16.mxu0 %v5818
  %5956 = vmatpush1.bf16.msra.mxu0 %v5817
  %5957 = vmatprep.subr.bf16.mxu0 %v5822
  %5958 = vmatpush1.bf16.msra.mxu0 %v5821
  %5959 = vmatprep.subr.bf16.mxu0 %v5826
  %5960 = vmatpush1.bf16.msra.mxu0 %v5825
  %5961 = vmatprep.subr.bf16.mxu0 %v5894
  %5962 = vmatpush1.bf16.msra.mxu0 %v5891
  %5963 = vmatprep.subr.bf16.mxu0 0
  %5964 = vmatpush1.bf16.msra.mxu0 0
  %5965 = vmatprep.subr.bf16.mxu0 0
  %5966 = vmatpush1.bf16.msra.mxu0 0
  %5967 = vmatprep.subr.bf16.mxu0 0
  %5968 = vmatpush1.bf16.msra.mxu0 0
  %5969 = vmatprep.mubr.bf16.mxu0 %v5881
  %5970 = vmatmul.mubr.bf16.gmra.mrb[0].mxu0 %v5576
  %v5971 = vpop.f32.mrb[0].mxu0
  %v5972 = vadd.f32 0.0, %v5971
  %v5973 = vpop.f32.mrb[0].mxu0
  %v5974 = vadd.f32 0.0, %v5973
  %v5975 = vpop.f32.mrb[0].mxu0
  %v5976 = vpop.f32.mrb[0].mxu0
  %5977 = vdwg.mxu0
  %v6028 = vunpack.c.l.b16 %v5526
  %v6029 = vunpack.c.h.b16 %v5526
  %v6030 = vunpack.c.l.b16 %v5527
  %v6031 = vunpack.c.h.b16 %v5527
  %v6032 = vunpack.c.l.b16 %v5528
  %v6033 = vunpack.c.h.b16 %v5528
  %v6034 = vunpack.c.l.b16 %v5529
  %v6035 = vunpack.c.h.b16 %v5529
  %v6036 = vunpack.c.l.b16 %v5530
  %v6037 = vunpack.c.h.b16 %v5530
  %v6038 = vunpack.c.l.b16 %v5531
  %v6039 = vunpack.c.h.b16 %v5531
  %v6040 = vunpack.c.l.b16 %v5532
  %v6041 = vunpack.c.h.b16 %v5532
  %v6042 = vunpack.c.l.b16 %v5533
  %v6043 = vunpack.c.h.b16 %v5533
  %v6044 = vunpack.c.l.b16 %v5534
  %v6045 = vunpack.c.h.b16 %v5534
  %v6046 = vunpack.c.l.b16 %v5535
  %v6047 = vunpack.c.h.b16 %v5535
  %v6048 = vunpack.c.l.b16 %v5536
  %v6049 = vunpack.c.h.b16 %v5536
  %v6050 = vunpack.c.l.b16 %v5537
  %v6051 = vunpack.c.h.b16 %v5537
  %v6052 = vunpack.c.l.b16 %v5538
  %v6053 = vunpack.c.h.b16 %v5538
  %v6054 = vunpack.c.l.b16 %v5539
  %v6055 = vunpack.c.h.b16 %v5539
  %v6056 = vunpack.c.l.b16 %v5540
  %v6057 = vunpack.c.h.b16 %v5540
  %v6058 = vunpack.c.l.b16 %v5541
  %v6059 = vunpack.c.h.b16 %v5541
  %v6060 = vunpack.c.l.b16 %v5542
  %v6061 = vunpack.c.h.b16 %v5542
  %v6062 = vunpack.c.l.b16 %v5543
  %v6063 = vunpack.c.h.b16 %v5543
  %v6064 = vunpack.c.l.b16 %v5544
  %v6065 = vunpack.c.h.b16 %v5544
  %v6066 = vunpack.c.l.b16 %v5545
  %v6067 = vunpack.c.h.b16 %v5545
  %v6068 = vunpack.c.l.b16 %v5546
  %v6069 = vunpack.c.h.b16 %v5546
  %v6070 = vunpack.c.l.b16 %v5547
  %v6071 = vunpack.c.h.b16 %v5547
  %v6072 = vunpack.c.l.b16 %v5548
  %v6073 = vunpack.c.h.b16 %v5548
  %v6074 = vunpack.c.l.b16 %v5549
  %v6075 = vunpack.c.h.b16 %v5549
  %v6076 = vunpack.c.l.b16 %v5550
  %v6077 = vunpack.c.h.b16 %v5550
  %v6078 = vunpack.c.l.b16 %v5551
  %v6079 = vunpack.c.h.b16 %v5551
  %v6080 = vunpack.c.l.b16 %v5552
  %v6081 = vunpack.c.h.b16 %v5552
  %v6082 = vunpack.c.l.b16 %v5553
  %v6083 = vunpack.c.h.b16 %v5553
  %v6084 = vunpack.c.l.b16 %v5554
  %v6085 = vunpack.c.h.b16 %v5554
  %v6086 = vunpack.c.l.b16 %v5555
  %v6087 = vunpack.c.h.b16 %v5555
  %v6088 = vunpack.c.l.b16 %v5556
  %v6089 = vunpack.c.h.b16 %v5556
  %v6090 = vunpack.c.l.b16 %v5557
  %v6091 = vunpack.c.h.b16 %v5557
  %v6092 = vunpack.c.l.b16 %v5558
  %v6093 = vunpack.c.h.b16 %v5558
  %v6094 = vunpack.c.l.b16 %v5559
  %v6095 = vunpack.c.h.b16 %v5559
  %v6096 = vunpack.c.l.b16 %v5560
  %v6097 = vunpack.c.h.b16 %v5560
  %v6098 = vunpack.c.l.b16 %v5561
  %v6099 = vunpack.c.h.b16 %v5561
  %v6100 = vunpack.c.l.b16 %v5562
  %v6101 = vunpack.c.h.b16 %v5562
  %v6102 = vunpack.c.l.b16 %v5563
  %v6103 = vunpack.c.h.b16 %v5563
  %v6104 = vunpack.c.l.b16 %v5564
  %v6105 = vunpack.c.h.b16 %v5564
  %v6106 = vunpack.c.l.b16 %v5565
  %v6107 = vunpack.c.h.b16 %v5565
  %v6108 = vunpack.c.l.b16 %v5566
  %v6109 = vunpack.c.h.b16 %v5566
  %v6110 = vunpack.c.l.b16 %v5567
  %v6111 = vunpack.c.h.b16 %v5567
  %v6112 = vunpack.c.l.b16 %v5568
  %v6113 = vunpack.c.h.b16 %v5568
  %v6114 = vunpack.c.l.b16 %v5569
  %v6115 = vunpack.c.h.b16 %v5569
  %v6116 = vunpack.c.l.b16 %v5570
  %v6117 = vunpack.c.h.b16 %v5570
  %v6118 = vunpack.c.l.b16 %v5571
  %v6119 = vunpack.c.h.b16 %v5571
  %v6120 = vunpack.c.l.b16 %v5572
  %v6121 = vunpack.c.h.b16 %v5572
  %v6122 = vunpack.c.l.b16 %v5573
  %v6123 = vunpack.c.h.b16 %v5573
  %v6124 = vunpack.c.l.b16 %v5574
  %v6125 = vunpack.c.h.b16 %v5574
  %v6126 = vunpack.c.l.b16 %v5575
  %v6127 = vunpack.c.h.b16 %v5575
  %v6128 = vpack.c.b16 %v6032, %v6028
  %v6129 = vpack.c.b16 %v6033, %v6029
  %v6130 = vpack.c.b16 %v6034, %v6030
  %v6131 = vpack.c.b16 %v6035, %v6031
  %v6132 = vpack.c.b16 %v6040, %v6036
  %v6133 = vpack.c.b16 %v6041, %v6037
  %v6134 = vpack.c.b16 %v6042, %v6038
  %v6135 = vpack.c.b16 %v6043, %v6039
  %v6136 = vpack.c.b16 %v6048, %v6044
  %v6137 = vpack.c.b16 %v6049, %v6045
  %v6138 = vpack.c.b16 %v6050, %v6046
  %v6139 = vpack.c.b16 %v6051, %v6047
  %v6140 = vpack.c.b16 %v6056, %v6052
  %v6141 = vpack.c.b16 %v6057, %v6053
  %v6142 = vpack.c.b16 %v6058, %v6054
  %v6143 = vpack.c.b16 %v6059, %v6055
  %v6144 = vpack.c.b16 %v6064, %v6060
  %v6145 = vpack.c.b16 %v6065, %v6061
  %v6146 = vpack.c.b16 %v6066, %v6062
  %v6147 = vpack.c.b16 %v6067, %v6063
  %v6148 = vpack.c.b16 %v6072, %v6068
  %v6149 = vpack.c.b16 %v6073, %v6069
  %v6150 = vpack.c.b16 %v6074, %v6070
  %v6151 = vpack.c.b16 %v6075, %v6071
  %v6152 = vpack.c.b16 %v6080, %v6076
  %v6153 = vpack.c.b16 %v6081, %v6077
  %v6154 = vpack.c.b16 %v6082, %v6078
  %v6155 = vpack.c.b16 %v6083, %v6079
  %v6156 = vpack.c.b16 %v6088, %v6084
  %v6157 = vpack.c.b16 %v6089, %v6085
  %v6158 = vpack.c.b16 %v6090, %v6086
  %v6159 = vpack.c.b16 %v6091, %v6087
  %v6160 = vpack.c.b16 %v6096, %v6092
  %v6161 = vpack.c.b16 %v6097, %v6093
  %v6162 = vpack.c.b16 %v6098, %v6094
  %v6163 = vpack.c.b16 %v6099, %v6095
  %v6164 = vpack.c.b16 %v6104, %v6100
  %v6165 = vpack.c.b16 %v6105, %v6101
  %v6166 = vpack.c.b16 %v6106, %v6102
  %v6167 = vpack.c.b16 %v6107, %v6103
  %v6168 = vpack.c.b16 %v6112, %v6108
  %v6169 = vpack.c.b16 %v6113, %v6109
  %v6170 = vpack.c.b16 %v6114, %v6110
  %v6171 = vpack.c.b16 %v6115, %v6111
  %v6172 = vpack.c.b16 %v6120, %v6116
  %v6173 = vpack.c.b16 %v6121, %v6117
  %v6174 = vpack.c.b16 %v6122, %v6118
  %v6175 = vpack.c.b16 %v6123, %v6119
  %v6176 = vpack.c.b16 %v6124, %v6124
  %v6177 = vpack.c.b16 %v6125, %v6125
  %v6178 = vpack.c.b16 %v6126, %v6126
  %v6179 = vpack.c.b16 %v6127, %v6127
  %v6229 = vsel %vm5879, %v5525, 0
  %v6232 = vsel %vm5883, %v6176, 0
  %v6235 = vsel %vm5883, %v6177, 0
  %v6238 = vsel %vm5883, %v6178, 0
  %v6241 = vsel %vm5883, %v6179, 0
  %6243 = vmatprep.subr.bf16.mxu0 %v6129
  %6244 = vmatpush1.bf16.msra.mxu0 %v6128
  %6245 = vmatprep.subr.bf16.mxu0 %v6133
  %6246 = vmatpush1.bf16.msra.mxu0 %v6132
  %6247 = vmatprep.subr.bf16.mxu0 %v6137
  %6248 = vmatpush1.bf16.msra.mxu0 %v6136
  %6249 = vmatprep.subr.bf16.mxu0 %v6141
  %6250 = vmatpush1.bf16.msra.mxu0 %v6140
  %6251 = vmatprep.subr.bf16.mxu0 %v6145
  %6252 = vmatpush1.bf16.msra.mxu0 %v6144
  %6253 = vmatprep.subr.bf16.mxu0 %v6149
  %6254 = vmatpush1.bf16.msra.mxu0 %v6148
  %6255 = vmatprep.subr.bf16.mxu0 %v6153
  %6256 = vmatpush1.bf16.msra.mxu0 %v6152
  %6257 = vmatprep.subr.bf16.mxu0 %v6157
  %6258 = vmatpush1.bf16.msra.mxu0 %v6156
  %6259 = vmatprep.subr.bf16.mxu0 %v6161
  %6260 = vmatpush1.bf16.msra.mxu0 %v6160
  %6261 = vmatprep.subr.bf16.mxu0 %v6165
  %6262 = vmatpush1.bf16.msra.mxu0 %v6164
  %6263 = vmatprep.subr.bf16.mxu0 %v6169
  %6264 = vmatpush1.bf16.msra.mxu0 %v6168
  %6265 = vmatprep.subr.bf16.mxu0 %v6173
  %6266 = vmatpush1.bf16.msra.mxu0 %v6172
  %6267 = vmatprep.subr.bf16.mxu0 %v6235
  %6268 = vmatpush1.bf16.msra.mxu0 %v6232
  %6269 = vmatprep.subr.bf16.mxu0 0
  %6270 = vmatpush1.bf16.msra.mxu0 0
  %6271 = vmatprep.subr.bf16.mxu0 0
  %6272 = vmatpush1.bf16.msra.mxu0 0
  %6273 = vmatprep.subr.bf16.mxu0 0
  %6274 = vmatpush1.bf16.msra.mxu0 0
  %6275 = vmatprep.mubr.bf16.mxu0 %v6229
  %6276 = vmatmul.mubr.bf16.gmra.mrb[0].mxu0 %v5524
  %v6277 = vpop.f32.mrb[0].mxu0
  %v6278 = vadd.f32 %v5931, %v6277
  %v6279 = vpop.f32.mrb[0].mxu0
  %v6280 = vadd.f32 %v5933, %v6279
  %v6281 = vpop.f32.mrb[0].mxu0
  %v6282 = vpop.f32.mrb[0].mxu0
  %6283 = vdwg.mxu0
  %6284 = vmatprep.subr.bf16.mxu0 %v6131
  %6285 = vmatpush1.bf16.msra.mxu0 %v6130
  %6286 = vmatprep.subr.bf16.mxu0 %v6135
  %6287 = vmatpush1.bf16.msra.mxu0 %v6134
  %6288 = vmatprep.subr.bf16.mxu0 %v6139
  %6289 = vmatpush1.bf16.msra.mxu0 %v6138
  %6290 = vmatprep.subr.bf16.mxu0 %v6143
  %6291 = vmatpush1.bf16.msra.mxu0 %v6142
  %6292 = vmatprep.subr.bf16.mxu0 %v6147
  %6293 = vmatpush1.bf16.msra.mxu0 %v6146
  %6294 = vmatprep.subr.bf16.mxu0 %v6151
  %6295 = vmatpush1.bf16.msra.mxu0 %v6150
  %6296 = vmatprep.subr.bf16.mxu0 %v6155
  %6297 = vmatpush1.bf16.msra.mxu0 %v6154
  %6298 = vmatprep.subr.bf16.mxu0 %v6159
  %6299 = vmatpush1.bf16.msra.mxu0 %v6158
  %6300 = vmatprep.subr.bf16.mxu0 %v6163
  %6301 = vmatpush1.bf16.msra.mxu0 %v6162
  %6302 = vmatprep.subr.bf16.mxu0 %v6167
  %6303 = vmatpush1.bf16.msra.mxu0 %v6166
  %6304 = vmatprep.subr.bf16.mxu0 %v6171
  %6305 = vmatpush1.bf16.msra.mxu0 %v6170
  %6306 = vmatprep.subr.bf16.mxu0 %v6175
  %6307 = vmatpush1.bf16.msra.mxu0 %v6174
  %6308 = vmatprep.subr.bf16.mxu0 %v6241
  %6309 = vmatpush1.bf16.msra.mxu0 %v6238
  %6310 = vmatprep.subr.bf16.mxu0 0
  %6311 = vmatpush1.bf16.msra.mxu0 0
  %6312 = vmatprep.subr.bf16.mxu0 0
  %6313 = vmatpush1.bf16.msra.mxu0 0
  %6314 = vmatprep.subr.bf16.mxu0 0
  %6315 = vmatpush1.bf16.msra.mxu0 0
  %6316 = vmatprep.mubr.bf16.mxu0 %v6229
  %6317 = vmatmul.mubr.bf16.gmra.mrb[0].mxu0 %v5524
  %v6318 = vpop.f32.mrb[0].mxu0
  %v6319 = vadd.f32 %v5972, %v6318
  %v6320 = vpop.f32.mrb[0].mxu0
  %v6321 = vadd.f32 %v5974, %v6320
  %v6322 = vpop.f32.mrb[0].mxu0
  %v6323 = vpop.f32.mrb[0].mxu0
  %6324 = vdwg.mxu0
  %v6325 = vpack.c.bf16 %v5520, %v5520
  %v6326 = vpack.c.bf16 %v5521, %v5521
  %s6327 = scalar_lea.vmem %s5, 800
  %v6328 = vld [vmem:[%s6327] sm:$0xff]
  %v6329 = vld [vmem:[%s6327 + $0x8] sm:$0xff]
  %v6330 = vld [vmem:[%s6327 + $0x10] sm:$0xff]
  %v6331 = vld [vmem:[%s6327 + $0x18] sm:$0xff]
  %v6332 = vld [vmem:[%s6327 + $0x20] sm:$0xff]
  %v6333 = vld [vmem:[%s6327 + $0x28] sm:$0xff]
  %v6334 = vld [vmem:[%s6327 + $0x30] sm:$0xff]
  %v6335 = vld [vmem:[%s6327 + $0x38] sm:$0xff]
  %v6336 = vld [vmem:[%s6327 + $0x40] sm:$0xff]
  %v6337 = vld [vmem:[%s6327 + $0x48] sm:$0xff]
  %v6338 = vld [vmem:[%s6327 + $0x50] sm:$0xff]
  %v6339 = vld [vmem:[%s6327 + $0x58] sm:$0xff]
  %v6340 = vld [vmem:[%s6327 + $0x60] sm:$0xff]
  %v6341 = vld [vmem:[%s6327 + $0x68] sm:$0xff]
  %v6342 = vld [vmem:[%s6327 + $0x70] sm:$0xff]
  %v6343 = vld [vmem:[%s6327 + $0x78] sm:$0xff]
  %v6344 = vld [vmem:[%s6327 + $0x80] sm:$0xff]
  %v6345 = vld [vmem:[%s6327 + $0x88] sm:$0xff]
  %v6346 = vld [vmem:[%s6327 + $0x90] sm:$0xff]
  %v6347 = vld [vmem:[%s6327 + $0x98] sm:$0xff]
  %v6348 = vld [vmem:[%s6327 + $0xa0] sm:$0xff]
  %v6349 = vld [vmem:[%s6327 + $0xa8] sm:$0xff]
  %v6350 = vld [vmem:[%s6327 + $0xb0] sm:$0xff]
  %v6351 = vld [vmem:[%s6327 + $0xb8] sm:$0xff]
  %v6352 = vld [vmem:[%s6327 + $0xc0] sm:$0xff]
  %v6353 = vld [vmem:[%s6327 + $0xc8] sm:$0xff]
  %v6354 = vld [vmem:[%s6327 + $0xd0] sm:$0xff]
  %v6355 = vld [vmem:[%s6327 + $0xd8] sm:$0xff]
  %v6356 = vld [vmem:[%s6327 + $0xe0] sm:$0xff]
  %v6357 = vld [vmem:[%s6327 + $0xe8] sm:$0xff]
  %v6358 = vld [vmem:[%s6327 + $0xf0] sm:$0xff]
  %v6359 = vld [vmem:[%s6327 + $0xf8] sm:$0xff]
  %v6360 = vld [vmem:[%s6327 + $0x100] sm:$0xff]
  %v6361 = vld [vmem:[%s6327 + $0x108] sm:$0xff]
  %v6362 = vld [vmem:[%s6327 + $0x110] sm:$0xff]
  %v6363 = vld [vmem:[%s6327 + $0x118] sm:$0xff]
  %v6364 = vld [vmem:[%s6327 + $0x120] sm:$0xff]
  %v6365 = vld [vmem:[%s6327 + $0x128] sm:$0xff]
  %v6366 = vld [vmem:[%s6327 + $0x130] sm:$0xff]
  %v6367 = vld [vmem:[%s6327 + $0x138] sm:$0xff]
  %v6368 = vld [vmem:[%s6327 + $0x140] sm:$0xff]
  %v6369 = vld [vmem:[%s6327 + $0x148] sm:$0xff]
  %v6370 = vld [vmem:[%s6327 + $0x150] sm:$0xff]
  %v6371 = vld [vmem:[%s6327 + $0x158] sm:$0xff]
  %v6372 = vld [vmem:[%s6327 + $0x160] sm:$0xff]
  %v6373 = vld [vmem:[%s6327 + $0x168] sm:$0xff]
  %v6374 = vld [vmem:[%s6327 + $0x170] sm:$0xff]
  %v6375 = vld [vmem:[%s6327 + $0x178] sm:$0xff]
  %v6376 = vld [vmem:[%s6327 + $0x180] sm:$0xff]
  %v6377 = vld [vmem:[%s6327 + $0x188] sm:$0xff]
  %v6428 = vunpack.c.l.b16 %v6328
  %v6429 = vunpack.c.h.b16 %v6328
  %v6430 = vunpack.c.l.b16 %v6329
  %v6431 = vunpack.c.h.b16 %v6329
  %v6432 = vunpack.c.l.b16 %v6330
  %v6433 = vunpack.c.h.b16 %v6330
  %v6434 = vunpack.c.l.b16 %v6331
  %v6435 = vunpack.c.h.b16 %v6331
  %v6436 = vunpack.c.l.b16 %v6332
  %v6437 = vunpack.c.h.b16 %v6332
  %v6438 = vunpack.c.l.b16 %v6333
  %v6439 = vunpack.c.h.b16 %v6333
  %v6440 = vunpack.c.l.b16 %v6334
  %v6441 = vunpack.c.h.b16 %v6334
  %v6442 = vunpack.c.l.b16 %v6335
  %v6443 = vunpack.c.h.b16 %v6335
  %v6444 = vunpack.c.l.b16 %v6336
  %v6445 = vunpack.c.h.b16 %v6336
  %v6446 = vunpack.c.l.b16 %v6337
  %v6447 = vunpack.c.h.b16 %v6337
  %v6448 = vunpack.c.l.b16 %v6338
  %v6449 = vunpack.c.h.b16 %v6338
  %v6450 = vunpack.c.l.b16 %v6339
  %v6451 = vunpack.c.h.b16 %v6339
  %v6452 = vunpack.c.l.b16 %v6340
  %v6453 = vunpack.c.h.b16 %v6340
  %v6454 = vunpack.c.l.b16 %v6341
  %v6455 = vunpack.c.h.b16 %v6341
  %v6456 = vunpack.c.l.b16 %v6342
  %v6457 = vunpack.c.h.b16 %v6342
  %v6458 = vunpack.c.l.b16 %v6343
  %v6459 = vunpack.c.h.b16 %v6343
  %v6460 = vunpack.c.l.b16 %v6344
  %v6461 = vunpack.c.h.b16 %v6344
  %v6462 = vunpack.c.l.b16 %v6345
  %v6463 = vunpack.c.h.b16 %v6345
  %v6464 = vunpack.c.l.b16 %v6346
  %v6465 = vunpack.c.h.b16 %v6346
  %v6466 = vunpack.c.l.b16 %v6347
  %v6467 = vunpack.c.h.b16 %v6347
  %v6468 = vunpack.c.l.b16 %v6348
  %v6469 = vunpack.c.h.b16 %v6348
  %v6470 = vunpack.c.l.b16 %v6349
  %v6471 = vunpack.c.h.b16 %v6349
  %v6472 = vunpack.c.l.b16 %v6350
  %v6473 = vunpack.c.h.b16 %v6350
  %v6474 = vunpack.c.l.b16 %v6351
  %v6475 = vunpack.c.h.b16 %v6351
  %v6476 = vunpack.c.l.b16 %v6352
  %v6477 = vunpack.c.h.b16 %v6352
  %v6478 = vunpack.c.l.b16 %v6353
  %v6479 = vunpack.c.h.b16 %v6353
  %v6480 = vunpack.c.l.b16 %v6354
  %v6481 = vunpack.c.h.b16 %v6354
  %v6482 = vunpack.c.l.b16 %v6355
  %v6483 = vunpack.c.h.b16 %v6355
  %v6484 = vunpack.c.l.b16 %v6356
  %v6485 = vunpack.c.h.b16 %v6356
  %v6486 = vunpack.c.l.b16 %v6357
  %v6487 = vunpack.c.h.b16 %v6357
  %v6488 = vunpack.c.l.b16 %v6358
  %v6489 = vunpack.c.h.b16 %v6358
  %v6490 = vunpack.c.l.b16 %v6359
  %v6491 = vunpack.c.h.b16 %v6359
  %v6492 = vunpack.c.l.b16 %v6360
  %v6493 = vunpack.c.h.b16 %v6360
  %v6494 = vunpack.c.l.b16 %v6361
  %v6495 = vunpack.c.h.b16 %v6361
  %v6496 = vunpack.c.l.b16 %v6362
  %v6497 = vunpack.c.h.b16 %v6362
  %v6498 = vunpack.c.l.b16 %v6363
  %v6499 = vunpack.c.h.b16 %v6363
  %v6500 = vunpack.c.l.b16 %v6364
  %v6501 = vunpack.c.h.b16 %v6364
  %v6502 = vunpack.c.l.b16 %v6365
  %v6503 = vunpack.c.h.b16 %v6365
  %v6504 = vunpack.c.l.b16 %v6366
  %v6505 = vunpack.c.h.b16 %v6366
  %v6506 = vunpack.c.l.b16 %v6367
  %v6507 = vunpack.c.h.b16 %v6367
  %v6508 = vunpack.c.l.b16 %v6368
  %v6509 = vunpack.c.h.b16 %v6368
  %v6510 = vunpack.c.l.b16 %v6369
  %v6511 = vunpack.c.h.b16 %v6369
  %v6512 = vunpack.c.l.b16 %v6370
  %v6513 = vunpack.c.h.b16 %v6370
  %v6514 = vunpack.c.l.b16 %v6371
  %v6515 = vunpack.c.h.b16 %v6371
  %v6516 = vunpack.c.l.b16 %v6372
  %v6517 = vunpack.c.h.b16 %v6372
  %v6518 = vunpack.c.l.b16 %v6373
  %v6519 = vunpack.c.h.b16 %v6373
  %v6520 = vunpack.c.l.b16 %v6374
  %v6521 = vunpack.c.h.b16 %v6374
  %v6522 = vunpack.c.l.b16 %v6375
  %v6523 = vunpack.c.h.b16 %v6375
  %v6524 = vunpack.c.l.b16 %v6376
  %v6525 = vunpack.c.h.b16 %v6376
  %v6526 = vunpack.c.l.b16 %v6377
  %v6527 = vunpack.c.h.b16 %v6377
  %v6528 = vpack.c.b16 %v6432, %v6428
  %v6529 = vpack.c.b16 %v6433, %v6429
  %v6530 = vpack.c.b16 %v6434, %v6430
  %v6531 = vpack.c.b16 %v6435, %v6431
  %v6532 = vpack.c.b16 %v6440, %v6436
  %v6533 = vpack.c.b16 %v6441, %v6437
  %v6534 = vpack.c.b16 %v6442, %v6438
  %v6535 = vpack.c.b16 %v6443, %v6439
  %v6536 = vpack.c.b16 %v6448, %v6444
  %v6537 = vpack.c.b16 %v6449, %v6445
  %v6538 = vpack.c.b16 %v6450, %v6446
  %v6539 = vpack.c.b16 %v6451, %v6447
  %v6540 = vpack.c.b16 %v6456, %v6452
  %v6541 = vpack.c.b16 %v6457, %v6453
  %v6542 = vpack.c.b16 %v6458, %v6454
  %v6543 = vpack.c.b16 %v6459, %v6455
  %v6544 = vpack.c.b16 %v6464, %v6460
  %v6545 = vpack.c.b16 %v6465, %v6461
  %v6546 = vpack.c.b16 %v6466, %v6462
  %v6547 = vpack.c.b16 %v6467, %v6463
  %v6548 = vpack.c.b16 %v6472, %v6468
  %v6549 = vpack.c.b16 %v6473, %v6469
  %v6550 = vpack.c.b16 %v6474, %v6470
  %v6551 = vpack.c.b16 %v6475, %v6471
  %v6552 = vpack.c.b16 %v6480, %v6476
  %v6553 = vpack.c.b16 %v6481, %v6477
  %v6554 = vpack.c.b16 %v6482, %v6478
  %v6555 = vpack.c.b16 %v6483, %v6479
  %v6556 = vpack.c.b16 %v6488, %v6484
  %v6557 = vpack.c.b16 %v6489, %v6485
  %v6558 = vpack.c.b16 %v6490, %v6486
  %v6559 = vpack.c.b16 %v6491, %v6487
  %v6560 = vpack.c.b16 %v6496, %v6492
  %v6561 = vpack.c.b16 %v6497, %v6493
  %v6562 = vpack.c.b16 %v6498, %v6494
  %v6563 = vpack.c.b16 %v6499, %v6495
  %v6564 = vpack.c.b16 %v6504, %v6500
  %v6565 = vpack.c.b16 %v6505, %v6501
  %v6566 = vpack.c.b16 %v6506, %v6502
  %v6567 = vpack.c.b16 %v6507, %v6503
  %v6568 = vpack.c.b16 %v6512, %v6508
  %v6569 = vpack.c.b16 %v6513, %v6509
  %v6570 = vpack.c.b16 %v6514, %v6510
  %v6571 = vpack.c.b16 %v6515, %v6511
  %v6572 = vpack.c.b16 %v6520, %v6516
  %v6573 = vpack.c.b16 %v6521, %v6517
  %v6574 = vpack.c.b16 %v6522, %v6518
  %v6575 = vpack.c.b16 %v6523, %v6519
  %v6576 = vpack.c.b16 %v6524, %v6524
  %v6577 = vpack.c.b16 %v6525, %v6525
  %v6578 = vpack.c.b16 %v6526, %v6526
  %v6579 = vpack.c.b16 %v6527, %v6527
  %v6629 = vsel %vm5879, %v6326, 0
  %v6632 = vsel %vm5883, %v6576, 0
  %v6635 = vsel %vm5883, %v6577, 0
  %v6638 = vsel %vm5883, %v6578, 0
  %v6641 = vsel %vm5883, %v6579, 0
  %6643 = vmatprep.subr.bf16.mxu0 %v6529
  %6644 = vmatpush1.bf16.msra.mxu0 %v6528
  %6645 = vmatprep.subr.bf16.mxu0 %v6533
  %6646 = vmatpush1.bf16.msra.mxu0 %v6532
  %6647 = vmatprep.subr.bf16.mxu0 %v6537
  %6648 = vmatpush1.bf16.msra.mxu0 %v6536
  %6649 = vmatprep.subr.bf16.mxu0 %v6541
  %6650 = vmatpush1.bf16.msra.mxu0 %v6540
  %6651 = vmatprep.subr.bf16.mxu0 %v6545
  %6652 = vmatpush1.bf16.msra.mxu0 %v6544
  %6653 = vmatprep.subr.bf16.mxu0 %v6549
  %6654 = vmatpush1.bf16.msra.mxu0 %v6548
  %6655 = vmatprep.subr.bf16.mxu0 %v6553
  %6656 = vmatpush1.bf16.msra.mxu0 %v6552
  %6657 = vmatprep.subr.bf16.mxu0 %v6557
  %6658 = vmatpush1.bf16.msra.mxu0 %v6556
  %6659 = vmatprep.subr.bf16.mxu0 %v6561
  %6660 = vmatpush1.bf16.msra.mxu0 %v6560
  %6661 = vmatprep.subr.bf16.mxu0 %v6565
  %6662 = vmatpush1.bf16.msra.mxu0 %v6564
  %6663 = vmatprep.subr.bf16.mxu0 %v6569
  %6664 = vmatpush1.bf16.msra.mxu0 %v6568
  %6665 = vmatprep.subr.bf16.mxu0 %v6573
  %6666 = vmatpush1.bf16.msra.mxu0 %v6572
  %6667 = vmatprep.subr.bf16.mxu0 %v6635
  %6668 = vmatpush1.bf16.msra.mxu0 %v6632
  %6669 = vmatprep.subr.bf16.mxu0 0
  %6670 = vmatpush1.bf16.msra.mxu0 0
  %6671 = vmatprep.subr.bf16.mxu0 0
  %6672 = vmatpush1.bf16.msra.mxu0 0
  %6673 = vmatprep.subr.bf16.mxu0 0
  %6674 = vmatpush1.bf16.msra.mxu0 0
  %6675 = vmatprep.mubr.bf16.mxu0 %v6629
  %6676 = vmatmul.mubr.bf16.gmra.mrb[0].mxu0 %v6325
  %v6677 = vpop.f32.mrb[0].mxu0
  %v6678 = vadd.f32 0.0, %v6677
  %v6679 = vpop.f32.mrb[0].mxu0
  %v6680 = vadd.f32 0.0, %v6679
  %v6681 = vpop.f32.mrb[0].mxu0
  %v6682 = vpop.f32.mrb[0].mxu0
  %6683 = vdwg.mxu0
  %6684 = vmatprep.subr.bf16.mxu0 %v6531
  %6685 = vmatpush1.bf16.msra.mxu0 %v6530
  %6686 = vmatprep.subr.bf16.mxu0 %v6535
  %6687 = vmatpush1.bf16.msra.mxu0 %v6534
  %6688 = vmatprep.subr.bf16.mxu0 %v6539
  %6689 = vmatpush1.bf16.msra.mxu0 %v6538
  %6690 = vmatprep.subr.bf16.mxu0 %v6543
  %6691 = vmatpush1.bf16.msra.mxu0 %v6542
  %6692 = vmatprep.subr.bf16.mxu0 %v6547
  %6693 = vmatpush1.bf16.msra.mxu0 %v6546
  %6694 = vmatprep.subr.bf16.mxu0 %v6551
  %6695 = vmatpush1.bf16.msra.mxu0 %v6550
  %6696 = vmatprep.subr.bf16.mxu0 %v6555
  %6697 = vmatpush1.bf16.msra.mxu0 %v6554
  %6698 = vmatprep.subr.bf16.mxu0 %v6559
  %6699 = vmatpush1.bf16.msra.mxu0 %v6558
  %6700 = vmatprep.subr.bf16.mxu0 %v6563
  %6701 = vmatpush1.bf16.msra.mxu0 %v6562
  %6702 = vmatprep.subr.bf16.mxu0 %v6567
  %6703 = vmatpush1.bf16.msra.mxu0 %v6566
  %6704 = vmatprep.subr.bf16.mxu0 %v6571
  %6705 = vmatpush1.bf16.msra.mxu0 %v6570
  %6706 = vmatprep.subr.bf16.mxu0 %v6575
  %6707 = vmatpush1.bf16.msra.mxu0 %v6574
  %6708 = vmatprep.subr.bf16.mxu0 %v6641
  %6709 = vmatpush1.bf16.msra.mxu0 %v6638
  %6710 = vmatprep.subr.bf16.mxu0 0
  %6711 = vmatpush1.bf16.msra.mxu0 0
  %6712 = vmatprep.subr.bf16.mxu0 0
  %6713 = vmatpush1.bf16.msra.mxu0 0
  %6714 = vmatprep.subr.bf16.mxu0 0
  %6715 = vmatpush1.bf16.msra.mxu0 0
  %6716 = vmatprep.mubr.bf16.mxu0 %v6629
  %6717 = vmatmul.mubr.bf16.gmra.mrb[0].mxu0 %v6325
  %v6718 = vpop.f32.mrb[0].mxu0
  %v6719 = vadd.f32 0.0, %v6718
  %v6720 = vpop.f32.mrb[0].mxu0
  %v6721 = vadd.f32 0.0, %v6720
  %v6722 = vpop.f32.mrb[0].mxu0
  %v6723 = vpop.f32.mrb[0].mxu0
  %6724 = vdwg.mxu0
  %v6725 = vadd.f32 %v6278, %v6678
  %v6726 = vadd.f32 %v6280, %v6680
  %v6727 = vadd.f32 %v6319, %v6719
  %v6728 = vadd.f32 %v6321, %v6721
  %v6729 = vpack.c.bf16 %v5522, %v5522
  %v6730 = vpack.c.bf16 %v5523, %v5523
  %s6731 = scalar_lea.vmem %s5, 1200
  %v6732 = vld [vmem:[%s6731] sm:$0xff]
  %v6733 = vld [vmem:[%s6731 + $0x8] sm:$0xff]
  %v6734 = vld [vmem:[%s6731 + $0x10] sm:$0xff]
  %v6735 = vld [vmem:[%s6731 + $0x18] sm:$0xff]
  %v6736 = vld [vmem:[%s6731 + $0x20] sm:$0xff]
  %v6737 = vld [vmem:[%s6731 + $0x28] sm:$0xff]
  %v6738 = vld [vmem:[%s6731 + $0x30] sm:$0xff]
  %v6739 = vld [vmem:[%s6731 + $0x38] sm:$0xff]
  %v6740 = vld [vmem:[%s6731 + $0x40] sm:$0xff]
  %v6741 = vld [vmem:[%s6731 + $0x48] sm:$0xff]
  %v6742 = vld [vmem:[%s6731 + $0x50] sm:$0xff]
  %v6743 = vld [vmem:[%s6731 + $0x58] sm:$0xff]
  %v6744 = vld [vmem:[%s6731 + $0x60] sm:$0xff]
  %v6745 = vld [vmem:[%s6731 + $0x68] sm:$0xff]
  %v6746 = vld [vmem:[%s6731 + $0x70] sm:$0xff]
  %v6747 = vld [vmem:[%s6731 + $0x78] sm:$0xff]
  %v6748 = vld [vmem:[%s6731 + $0x80] sm:$0xff]
  %v6749 = vld [vmem:[%s6731 + $0x88] sm:$0xff]
  %v6750 = vld [vmem:[%s6731 + $0x90] sm:$0xff]
  %v6751 = vld [vmem:[%s6731 + $0x98] sm:$0xff]
  %v6752 = vld [vmem:[%s6731 + $0xa0] sm:$0xff]
  %v6753 = vld [vmem:[%s6731 + $0xa8] sm:$0xff]
  %v6754 = vld [vmem:[%s6731 + $0xb0] sm:$0xff]
  %v6755 = vld [vmem:[%s6731 + $0xb8] sm:$0xff]
  %v6756 = vld [vmem:[%s6731 + $0xc0] sm:$0xff]
  %v6757 = vld [vmem:[%s6731 + $0xc8] sm:$0xff]
  %v6758 = vld [vmem:[%s6731 + $0xd0] sm:$0xff]
  %v6759 = vld [vmem:[%s6731 + $0xd8] sm:$0xff]
  %v6760 = vld [vmem:[%s6731 + $0xe0] sm:$0xff]
  %v6761 = vld [vmem:[%s6731 + $0xe8] sm:$0xff]
  %v6762 = vld [vmem:[%s6731 + $0xf0] sm:$0xff]
  %v6763 = vld [vmem:[%s6731 + $0xf8] sm:$0xff]
  %v6764 = vld [vmem:[%s6731 + $0x100] sm:$0xff]
  %v6765 = vld [vmem:[%s6731 + $0x108] sm:$0xff]
  %v6766 = vld [vmem:[%s6731 + $0x110] sm:$0xff]
  %v6767 = vld [vmem:[%s6731 + $0x118] sm:$0xff]
  %v6768 = vld [vmem:[%s6731 + $0x120] sm:$0xff]
  %v6769 = vld [vmem:[%s6731 + $0x128] sm:$0xff]
  %v6770 = vld [vmem:[%s6731 + $0x130] sm:$0xff]
  %v6771 = vld [vmem:[%s6731 + $0x138] sm:$0xff]
  %v6772 = vld [vmem:[%s6731 + $0x140] sm:$0xff]
  %v6773 = vld [vmem:[%s6731 + $0x148] sm:$0xff]
  %v6774 = vld [vmem:[%s6731 + $0x150] sm:$0xff]
  %v6775 = vld [vmem:[%s6731 + $0x158] sm:$0xff]
  %v6776 = vld [vmem:[%s6731 + $0x160] sm:$0xff]
  %v6777 = vld [vmem:[%s6731 + $0x168] sm:$0xff]
  %v6778 = vld [vmem:[%s6731 + $0x170] sm:$0xff]
  %v6779 = vld [vmem:[%s6731 + $0x178] sm:$0xff]
  %v6780 = vld [vmem:[%s6731 + $0x180] sm:$0xff]
  %v6781 = vld [vmem:[%s6731 + $0x188] sm:$0xff]
  %v6832 = vunpack.c.l.b16 %v6732
  %v6833 = vunpack.c.h.b16 %v6732
  %v6834 = vunpack.c.l.b16 %v6733
  %v6835 = vunpack.c.h.b16 %v6733
  %v6836 = vunpack.c.l.b16 %v6734
  %v6837 = vunpack.c.h.b16 %v6734
  %v6838 = vunpack.c.l.b16 %v6735
  %v6839 = vunpack.c.h.b16 %v6735
  %v6840 = vunpack.c.l.b16 %v6736
  %v6841 = vunpack.c.h.b16 %v6736
  %v6842 = vunpack.c.l.b16 %v6737
  %v6843 = vunpack.c.h.b16 %v6737
  %v6844 = vunpack.c.l.b16 %v6738
  %v6845 = vunpack.c.h.b16 %v6738
  %v6846 = vunpack.c.l.b16 %v6739
  %v6847 = vunpack.c.h.b16 %v6739
  %v6848 = vunpack.c.l.b16 %v6740
  %v6849 = vunpack.c.h.b16 %v6740
  %v6850 = vunpack.c.l.b16 %v6741
  %v6851 = vunpack.c.h.b16 %v6741
  %v6852 = vunpack.c.l.b16 %v6742
  %v6853 = vunpack.c.h.b16 %v6742
  %v6854 = vunpack.c.l.b16 %v6743
  %v6855 = vunpack.c.h.b16 %v6743
  %v6856 = vunpack.c.l.b16 %v6744
  %v6857 = vunpack.c.h.b16 %v6744
  %v6858 = vunpack.c.l.b16 %v6745
  %v6859 = vunpack.c.h.b16 %v6745
  %v6860 = vunpack.c.l.b16 %v6746
  %v6861 = vunpack.c.h.b16 %v6746
  %v6862 = vunpack.c.l.b16 %v6747
  %v6863 = vunpack.c.h.b16 %v6747
  %v6864 = vunpack.c.l.b16 %v6748
  %v6865 = vunpack.c.h.b16 %v6748
  %v6866 = vunpack.c.l.b16 %v6749
  %v6867 = vunpack.c.h.b16 %v6749
  %v6868 = vunpack.c.l.b16 %v6750
  %v6869 = vunpack.c.h.b16 %v6750
  %v6870 = vunpack.c.l.b16 %v6751
  %v6871 = vunpack.c.h.b16 %v6751
  %v6872 = vunpack.c.l.b16 %v6752
  %v6873 = vunpack.c.h.b16 %v6752
  %v6874 = vunpack.c.l.b16 %v6753
  %v6875 = vunpack.c.h.b16 %v6753
  %v6876 = vunpack.c.l.b16 %v6754
  %v6877 = vunpack.c.h.b16 %v6754
  %v6878 = vunpack.c.l.b16 %v6755
  %v6879 = vunpack.c.h.b16 %v6755
  %v6880 = vunpack.c.l.b16 %v6756
  %v6881 = vunpack.c.h.b16 %v6756
  %v6882 = vunpack.c.l.b16 %v6757
  %v6883 = vunpack.c.h.b16 %v6757
  %v6884 = vunpack.c.l.b16 %v6758
  %v6885 = vunpack.c.h.b16 %v6758
  %v6886 = vunpack.c.l.b16 %v6759
  %v6887 = vunpack.c.h.b16 %v6759
  %v6888 = vunpack.c.l.b16 %v6760
  %v6889 = vunpack.c.h.b16 %v6760
  %v6890 = vunpack.c.l.b16 %v6761
  %v6891 = vunpack.c.h.b16 %v6761
  %v6892 = vunpack.c.l.b16 %v6762
  %v6893 = vunpack.c.h.b16 %v6762
  %v6894 = vunpack.c.l.b16 %v6763
  %v6895 = vunpack.c.h.b16 %v6763
  %v6896 = vunpack.c.l.b16 %v6764
  %v6897 = vunpack.c.h.b16 %v6764
  %v6898 = vunpack.c.l.b16 %v6765
  %v6899 = vunpack.c.h.b16 %v6765
  %v6900 = vunpack.c.l.b16 %v6766
  %v6901 = vunpack.c.h.b16 %v6766
  %v6902 = vunpack.c.l.b16 %v6767
  %v6903 = vunpack.c.h.b16 %v6767
  %v6904 = vunpack.c.l.b16 %v6768
  %v6905 = vunpack.c.h.b16 %v6768
  %v6906 = vunpack.c.l.b16 %v6769
  %v6907 = vunpack.c.h.b16 %v6769
  %v6908 = vunpack.c.l.b16 %v6770
  %v6909 = vunpack.c.h.b16 %v6770
  %v6910 = vunpack.c.l.b16 %v6771
  %v6911 = vunpack.c.h.b16 %v6771
  %v6912 = vunpack.c.l.b16 %v6772
  %v6913 = vunpack.c.h.b16 %v6772
  %v6914 = vunpack.c.l.b16 %v6773
  %v6915 = vunpack.c.h.b16 %v6773
  %v6916 = vunpack.c.l.b16 %v6774
  %v6917 = vunpack.c.h.b16 %v6774
  %v6918 = vunpack.c.l.b16 %v6775
  %v6919 = vunpack.c.h.b16 %v6775
  %v6920 = vunpack.c.l.b16 %v6776
  %v6921 = vunpack.c.h.b16 %v6776
  %v6922 = vunpack.c.l.b16 %v6777
  %v6923 = vunpack.c.h.b16 %v6777
  %v6924 = vunpack.c.l.b16 %v6778
  %v6925 = vunpack.c.h.b16 %v6778
  %v6926 = vunpack.c.l.b16 %v6779
  %v6927 = vunpack.c.h.b16 %v6779
  %v6928 = vunpack.c.l.b16 %v6780
  %v6929 = vunpack.c.h.b16 %v6780
  %v6930 = vunpack.c.l.b16 %v6781
  %v6931 = vunpack.c.h.b16 %v6781
  %v6932 = vpack.c.b16 %v6836, %v6832
  %v6933 = vpack.c.b16 %v6837, %v6833
  %v6934 = vpack.c.b16 %v6838, %v6834
  %v6935 = vpack.c.b16 %v6839, %v6835
  %v6936 = vpack.c.b16 %v6844, %v6840
  %v6937 = vpack.c.b16 %v6845, %v6841
  %v6938 = vpack.c.b16 %v6846, %v6842
  %v6939 = vpack.c.b16 %v6847, %v6843
  %v6940 = vpack.c.b16 %v6852, %v6848
  %v6941 = vpack.c.b16 %v6853, %v6849
  %v6942 = vpack.c.b16 %v6854, %v6850
  %v6943 = vpack.c.b16 %v6855, %v6851
  %v6944 = vpack.c.b16 %v6860, %v6856
  %v6945 = vpack.c.b16 %v6861, %v6857
  %v6946 = vpack.c.b16 %v6862, %v6858
  %v6947 = vpack.c.b16 %v6863, %v6859
  %v6948 = vpack.c.b16 %v6868, %v6864
  %v6949 = vpack.c.b16 %v6869, %v6865
  %v6950 = vpack.c.b16 %v6870, %v6866
  %v6951 = vpack.c.b16 %v6871, %v6867
  %v6952 = vpack.c.b16 %v6876, %v6872
  %v6953 = vpack.c.b16 %v6877, %v6873
  %v6954 = vpack.c.b16 %v6878, %v6874
  %v6955 = vpack.c.b16 %v6879, %v6875
  %v6956 = vpack.c.b16 %v6884, %v6880
  %v6957 = vpack.c.b16 %v6885, %v6881
  %v6958 = vpack.c.b16 %v6886, %v6882
  %v6959 = vpack.c.b16 %v6887, %v6883
  %v6960 = vpack.c.b16 %v6892, %v6888
  %v6961 = vpack.c.b16 %v6893, %v6889
  %v6962 = vpack.c.b16 %v6894, %v6890
  %v6963 = vpack.c.b16 %v6895, %v6891
  %v6964 = vpack.c.b16 %v6900, %v6896
  %v6965 = vpack.c.b16 %v6901, %v6897
  %v6966 = vpack.c.b16 %v6902, %v6898
  %v6967 = vpack.c.b16 %v6903, %v6899
  %v6968 = vpack.c.b16 %v6908, %v6904
  %v6969 = vpack.c.b16 %v6909, %v6905
  %v6970 = vpack.c.b16 %v6910, %v6906
  %v6971 = vpack.c.b16 %v6911, %v6907
  %v6972 = vpack.c.b16 %v6916, %v6912
  %v6973 = vpack.c.b16 %v6917, %v6913
  %v6974 = vpack.c.b16 %v6918, %v6914
  %v6975 = vpack.c.b16 %v6919, %v6915
  %v6976 = vpack.c.b16 %v6924, %v6920
  %v6977 = vpack.c.b16 %v6925, %v6921
  %v6978 = vpack.c.b16 %v6926, %v6922
  %v6979 = vpack.c.b16 %v6927, %v6923
  %v6980 = vpack.c.b16 %v6928, %v6928
  %v6981 = vpack.c.b16 %v6929, %v6929
  %v6982 = vpack.c.b16 %v6930, %v6930
  %v6983 = vpack.c.b16 %v6931, %v6931
  %v7033 = vsel %vm5879, %v6730, 0
  %v7036 = vsel %vm5883, %v6980, 0
  %v7039 = vsel %vm5883, %v6981, 0
  %v7042 = vsel %vm5883, %v6982, 0
  %v7045 = vsel %vm5883, %v6983, 0
  %7047 = vmatprep.subr.bf16.mxu0 %v6933
  %7048 = vmatpush1.bf16.msra.mxu0 %v6932
  %7049 = vmatprep.subr.bf16.mxu0 %v6937
  %7050 = vmatpush1.bf16.msra.mxu0 %v6936
  %7051 = vmatprep.subr.bf16.mxu0 %v6941
  %7052 = vmatpush1.bf16.msra.mxu0 %v6940
  %7053 = vmatprep.subr.bf16.mxu0 %v6945
  %7054 = vmatpush1.bf16.msra.mxu0 %v6944
  %7055 = vmatprep.subr.bf16.mxu0 %v6949
  %7056 = vmatpush1.bf16.msra.mxu0 %v6948
  %7057 = vmatprep.subr.bf16.mxu0 %v6953
  %7058 = vmatpush1.bf16.msra.mxu0 %v6952
  %7059 = vmatprep.subr.bf16.mxu0 %v6957
  %7060 = vmatpush1.bf16.msra.mxu0 %v6956
  %7061 = vmatprep.subr.bf16.mxu0 %v6961
  %7062 = vmatpush1.bf16.msra.mxu0 %v6960
  %7063 = vmatprep.subr.bf16.mxu0 %v6965
  %7064 = vmatpush1.bf16.msra.mxu0 %v6964
  %7065 = vmatprep.subr.bf16.mxu0 %v6969
  %7066 = vmatpush1.bf16.msra.mxu0 %v6968
  %7067 = vmatprep.subr.bf16.mxu0 %v6973
  %7068 = vmatpush1.bf16.msra.mxu0 %v6972
  %7069 = vmatprep.subr.bf16.mxu0 %v6977
  %7070 = vmatpush1.bf16.msra.mxu0 %v6976
  %7071 = vmatprep.subr.bf16.mxu0 %v7039
  %7072 = vmatpush1.bf16.msra.mxu0 %v7036
  %7073 = vmatprep.subr.bf16.mxu0 0
  %7074 = vmatpush1.bf16.msra.mxu0 0
  %7075 = vmatprep.subr.bf16.mxu0 0
  %7076 = vmatpush1.bf16.msra.mxu0 0
  %7077 = vmatprep.subr.bf16.mxu0 0
  %7078 = vmatpush1.bf16.msra.mxu0 0
  %7079 = vmatprep.mubr.bf16.mxu0 %v7033
  %7080 = vmatmul.mubr.bf16.gmra.mrb[0].mxu0 %v6729
  %v7081 = vpop.f32.mrb[0].mxu0
  %v7082 = vadd.f32 0.0, %v7081
  %v7083 = vpop.f32.mrb[0].mxu0
  %v7084 = vadd.f32 0.0, %v7083
  %v7085 = vpop.f32.mrb[0].mxu0
  %v7086 = vpop.f32.mrb[0].mxu0
  %7087 = vdwg.mxu0
  %7088 = vmatprep.subr.bf16.mxu0 %v6935
  %7089 = vmatpush1.bf16.msra.mxu0 %v6934
  %7090 = vmatprep.subr.bf16.mxu0 %v6939
  %7091 = vmatpush1.bf16.msra.mxu0 %v6938
  %7092 = vmatprep.subr.bf16.mxu0 %v6943
  %7093 = vmatpush1.bf16.msra.mxu0 %v6942
  %7094 = vmatprep.subr.bf16.mxu0 %v6947
  %7095 = vmatpush1.bf16.msra.mxu0 %v6946
  %7096 = vmatprep.subr.bf16.mxu0 %v6951
  %7097 = vmatpush1.bf16.msra.mxu0 %v6950
  %7098 = vmatprep.subr.bf16.mxu0 %v6955
  %7099 = vmatpush1.bf16.msra.mxu0 %v6954
  %7100 = vmatprep.subr.bf16.mxu0 %v6959
  %7101 = vmatpush1.bf16.msra.mxu0 %v6958
  %7102 = vmatprep.subr.bf16.mxu0 %v6963
  %7103 = vmatpush1.bf16.msra.mxu0 %v6962
  %7104 = vmatprep.subr.bf16.mxu0 %v6967
  %7105 = vmatpush1.bf16.msra.mxu0 %v6966
  %7106 = vmatprep.subr.bf16.mxu0 %v6971
  %7107 = vmatpush1.bf16.msra.mxu0 %v6970
  %7108 = vmatprep.subr.bf16.mxu0 %v6975
  %7109 = vmatpush1.bf16.msra.mxu0 %v6974
  %7110 = vmatprep.subr.bf16.mxu0 %v6979
  %7111 = vmatpush1.bf16.msra.mxu0 %v6978
  %7112 = vmatprep.subr.bf16.mxu0 %v7045
  %7113 = vmatpush1.bf16.msra.mxu0 %v7042
  %7114 = vmatprep.subr.bf16.mxu0 0
  %7115 = vmatpush1.bf16.msra.mxu0 0
  %7116 = vmatprep.subr.bf16.mxu0 0
  %7117 = vmatpush1.bf16.msra.mxu0 0
  %7118 = vmatprep.subr.bf16.mxu0 0
  %7119 = vmatpush1.bf16.msra.mxu0 0
  %7120 = vmatprep.mubr.bf16.mxu0 %v7033
  %7121 = vmatmul.mubr.bf16.gmra.mrb[0].mxu0 %v6729
  %v7122 = vpop.f32.mrb[0].mxu0
  %v7123 = vadd.f32 0.0, %v7122
  %v7124 = vpop.f32.mrb[0].mxu0
  %v7125 = vadd.f32 0.0, %v7124
  %v7126 = vpop.f32.mrb[0].mxu0
  %v7127 = vpop.f32.mrb[0].mxu0
  %7128 = vdwg.mxu0
  %v7129 = vadd.f32 %v6725, %v7082
  %v7130 = vadd.f32 %v6726, %v7084
  %v7131 = vadd.f32 %v6727, %v7123
  %v7132 = vadd.f32 %v6728, %v7125
  %v7133 = vld [vmem:[%s6] sm:$0xf]
  %v7135 = vlaneseq
  %v7136 = vshrl.u32 %v7135, 7
  %v7137 = vsub.s32 0, %v7136
  %v7138 = vrot.slane %v7133, %v7137
  %v7139 = vlaneseq
  %v7140 = vshrl.u32 %v7139, 7
  %v7141 = vsub.s32 1, %v7140
  %v7142 = vrot.slane %v7133, %v7141
  %v7143 = vlaneseq
  %v7144 = vshrl.u32 %v7143, 7
  %v7145 = vsub.s32 2, %v7144
  %v7146 = vrot.slane %v7133, %v7145
  %v7147 = vlaneseq
  %v7148 = vshrl.u32 %v7147, 7
  %v7149 = vsub.s32 3, %v7148
  %v7150 = vrot.slane %v7133, %v7149
  %v7155 = vadd.f32 %v7129, %v7138
  %v7156 = vadd.f32 %v7130, %v7142
  %v7157 = vadd.f32 %v7131, %v7146
  %v7158 = vadd.f32 %v7132, %v7150
  %v7159 = vmax.f32 %v7155, 0.0
  %v7160 = vmax.f32 %v7156, 0.0
  %v7161 = vmax.f32 %v7157, 0.0
  %v7162 = vmax.f32 %v7158, 0.0
  %v7163 = vpack.c.bf16 %v7159, %v7159
  %v7164 = vpack.c.bf16 %v7160, %v7160
  %v7165 = vpack.c.bf16 %v7161, %v7161
  %v7166 = vpack.c.bf16 %v7162, %v7162
  %v7167 = vld [vmem:[%s7] sm:$0xf]
  %v7168 = vld [vmem:[%s7 + $0x4] sm:$0xf]
  %v7169 = vld [vmem:[%s7 + $0x8] sm:$0xf]
  %v7170 = vld [vmem:[%s7 + $0xc] sm:$0xf]
  %v7171 = vld [vmem:[%s7 + $0x10] sm:$0xf]
  %v7172 = vld [vmem:[%s7 + $0x14] sm:$0xf]
  %v7173 = vld [vmem:[%s7 + $0x18] sm:$0xf]
  %v7174 = vld [vmem:[%s7 + $0x1c] sm:$0xf]
  %v7175 = vld [vmem:[%s7 + $0x20] sm:$0xf]
  %v7176 = vld [vmem:[%s7 + $0x24] sm:$0xf]
  %v7177 = vld [vmem:[%s7 + $0x28] sm:$0xf]
  %v7178 = vld [vmem:[%s7 + $0x2c] sm:$0xf]
  %v7179 = vld [vmem:[%s7 + $0x30] sm:$0xf]
  %v7180 = vld [vmem:[%s7 + $0x34] sm:$0xf]
  %v7181 = vld [vmem:[%s7 + $0x38] sm:$0xf]
  %v7182 = vld [vmem:[%s7 + $0x3c] sm:$0xf]
  %v7183 = vld [vmem:[%s7 + $0x40] sm:$0xf]
  %v7184 = vld [vmem:[%s7 + $0x44] sm:$0xf]
  %v7185 = vld [vmem:[%s7 + $0x48] sm:$0xf]
  %v7186 = vld [vmem:[%s7 + $0x4c] sm:$0xf]
  %v7187 = vld [vmem:[%s7 + $0x50] sm:$0xf]
  %v7188 = vld [vmem:[%s7 + $0x54] sm:$0xf]
  %v7189 = vld [vmem:[%s7 + $0x58] sm:$0xf]
  %v7190 = vld [vmem:[%s7 + $0x5c] sm:$0xf]
  %v7191 = vld [vmem:[%s7 + $0x60] sm:$0xf]
  %v7192 = vld [vmem:[%s7 + $0x64] sm:$0xf]
  %v7193 = vld [vmem:[%s7 + $0x68] sm:$0xf]
  %v7194 = vld [vmem:[%s7 + $0x6c] sm:$0xf]
  %v7195 = vld [vmem:[%s7 + $0x70] sm:$0xf]
  %v7196 = vld [vmem:[%s7 + $0x74] sm:$0xf]
  %v7197 = vld [vmem:[%s7 + $0x78] sm:$0xf]
  %v7198 = vld [vmem:[%s7 + $0x7c] sm:$0xf]
  %v7199 = vld [vmem:[%s7 + $0x80] sm:$0xf]
  %v7200 = vld [vmem:[%s7 + $0x84] sm:$0xf]
  %v7201 = vld [vmem:[%s7 + $0x88] sm:$0xf]
  %v7202 = vld [vmem:[%s7 + $0x8c] sm:$0xf]
  %v7203 = vld [vmem:[%s7 + $0x90] sm:$0xf]
  %v7204 = vld [vmem:[%s7 + $0x94] sm:$0xf]
  %v7205 = vld [vmem:[%s7 + $0x98] sm:$0xf]
  %v7206 = vld [vmem:[%s7 + $0x9c] sm:$0xf]
  %v7207 = vld [vmem:[%s7 + $0xa0] sm:$0xf]
  %v7208 = vld [vmem:[%s7 + $0xa4] sm:$0xf]
  %v7209 = vld [vmem:[%s7 + $0xa8] sm:$0xf]
  %v7210 = vld [vmem:[%s7 + $0xac] sm:$0xf]
  %v7211 = vld [vmem:[%s7 + $0xb0] sm:$0xf]
  %v7212 = vld [vmem:[%s7 + $0xb4] sm:$0xf]
  %v7213 = vld [vmem:[%s7 + $0xb8] sm:$0xf]
  %v7214 = vld [vmem:[%s7 + $0xbc] sm:$0xf]
  %v7215 = vld [vmem:[%s7 + $0xc0] sm:$0xf]
  %v7216 = vld [vmem:[%s7 + $0xc4] sm:$0xf]
  %v7217 = vld [vmem:[%s7 + $0xc8] sm:$0xf]
  %v7218 = vld [vmem:[%s7 + $0xcc] sm:$0xf]
  %v7219 = vld [vmem:[%s7 + $0xd0] sm:$0xf]
  %v7220 = vld [vmem:[%s7 + $0xd4] sm:$0xf]
  %v7221 = vld [vmem:[%s7 + $0xd8] sm:$0xf]
  %v7222 = vld [vmem:[%s7 + $0xdc] sm:$0xf]
  %v7223 = vld [vmem:[%s7 + $0xe0] sm:$0xf]
  %v7224 = vld [vmem:[%s7 + $0xe4] sm:$0xf]
  %v7225 = vld [vmem:[%s7 + $0xe8] sm:$0xf]
  %v7226 = vld [vmem:[%s7 + $0xec] sm:$0xf]
  %v7227 = vld [vmem:[%s7 + $0xf0] sm:$0xf]
  %v7228 = vld [vmem:[%s7 + $0xf4] sm:$0xf]
  %v7229 = vld [vmem:[%s7 + $0xf8] sm:$0xf]
  %v7230 = vld [vmem:[%s7 + $0xfc] sm:$0xf]
  %v7231 = vld [vmem:[%s8] sm:$0x1]
  %v7233 = vlaneseq
  %v7234 = vshrl.u32 %v7233, 7
  %v7235 = vsub.s32 0, %v7234
  %v7236 = vrot.slane %v7231, %v7235
  %v7302 = vunpack.c.l.b16 %v7167
  %v7303 = vunpack.c.l.b16 %v7168
  %v7304 = vunpack.c.l.b16 %v7169
  %v7305 = vunpack.c.l.b16 %v7170
  %v7306 = vunpack.c.l.b16 %v7171
  %v7307 = vunpack.c.l.b16 %v7172
  %v7308 = vunpack.c.l.b16 %v7173
  %v7309 = vunpack.c.l.b16 %v7174
  %v7310 = vunpack.c.l.b16 %v7175
  %v7311 = vunpack.c.l.b16 %v7176
  %v7312 = vunpack.c.l.b16 %v7177
  %v7313 = vunpack.c.l.b16 %v7178
  %v7314 = vunpack.c.l.b16 %v7179
  %v7315 = vunpack.c.l.b16 %v7180
  %v7316 = vunpack.c.l.b16 %v7181
  %v7317 = vunpack.c.l.b16 %v7182
  %v7318 = vunpack.c.l.b16 %v7183
  %v7319 = vunpack.c.l.b16 %v7184
  %v7320 = vunpack.c.l.b16 %v7185
  %v7321 = vunpack.c.l.b16 %v7186
  %v7322 = vunpack.c.l.b16 %v7187
  %v7323 = vunpack.c.l.b16 %v7188
  %v7324 = vunpack.c.l.b16 %v7189
  %v7325 = vunpack.c.l.b16 %v7190
  %v7326 = vunpack.c.l.b16 %v7191
  %v7327 = vunpack.c.l.b16 %v7192
  %v7328 = vunpack.c.l.b16 %v7193
  %v7329 = vunpack.c.l.b16 %v7194
  %v7330 = vunpack.c.l.b16 %v7195
  %v7331 = vunpack.c.l.b16 %v7196
  %v7332 = vunpack.c.l.b16 %v7197
  %v7333 = vunpack.c.l.b16 %v7198
  %v7334 = vunpack.c.l.b16 %v7199
  %v7335 = vunpack.c.l.b16 %v7200
  %v7336 = vunpack.c.l.b16 %v7201
  %v7337 = vunpack.c.l.b16 %v7202
  %v7338 = vunpack.c.l.b16 %v7203
  %v7339 = vunpack.c.l.b16 %v7204
  %v7340 = vunpack.c.l.b16 %v7205
  %v7341 = vunpack.c.l.b16 %v7206
  %v7342 = vunpack.c.l.b16 %v7207
  %v7343 = vunpack.c.l.b16 %v7208
  %v7344 = vunpack.c.l.b16 %v7209
  %v7345 = vunpack.c.l.b16 %v7210
  %v7346 = vunpack.c.l.b16 %v7211
  %v7347 = vunpack.c.l.b16 %v7212
  %v7348 = vunpack.c.l.b16 %v7213
  %v7349 = vunpack.c.l.b16 %v7214
  %v7350 = vunpack.c.l.b16 %v7215
  %v7351 = vunpack.c.l.b16 %v7216
  %v7352 = vunpack.c.l.b16 %v7217
  %v7353 = vunpack.c.l.b16 %v7218
  %v7354 = vunpack.c.l.b16 %v7219
  %v7355 = vunpack.c.l.b16 %v7220
  %v7356 = vunpack.c.l.b16 %v7221
  %v7357 = vunpack.c.l.b16 %v7222
  %v7358 = vunpack.c.l.b16 %v7223
  %v7359 = vunpack.c.l.b16 %v7224
  %v7360 = vunpack.c.l.b16 %v7225
  %v7361 = vunpack.c.l.b16 %v7226
  %v7362 = vunpack.c.l.b16 %v7227
  %v7363 = vunpack.c.l.b16 %v7228
  %v7364 = vunpack.c.l.b16 %v7229
  %v7365 = vunpack.c.l.b16 %v7230
  %v7366 = vpack.c.b16 %v7303, %v7302
  %v7367 = vpack.c.b16 %v7305, %v7304
  %v7368 = vpack.c.b16 %v7307, %v7306
  %v7369 = vpack.c.b16 %v7309, %v7308
  %v7370 = vpack.c.b16 %v7311, %v7310
  %v7371 = vpack.c.b16 %v7313, %v7312
  %v7372 = vpack.c.b16 %v7315, %v7314
  %v7373 = vpack.c.b16 %v7317, %v7316
  %v7374 = vpack.c.b16 %v7319, %v7318
  %v7375 = vpack.c.b16 %v7321, %v7320
  %v7376 = vpack.c.b16 %v7323, %v7322
  %v7377 = vpack.c.b16 %v7325, %v7324
  %v7378 = vpack.c.b16 %v7327, %v7326
  %v7379 = vpack.c.b16 %v7329, %v7328
  %v7380 = vpack.c.b16 %v7331, %v7330
  %v7381 = vpack.c.b16 %v7333, %v7332
  %v7382 = vpack.c.b16 %v7335, %v7334
  %v7383 = vpack.c.b16 %v7337, %v7336
  %v7384 = vpack.c.b16 %v7339, %v7338
  %v7385 = vpack.c.b16 %v7341, %v7340
  %v7386 = vpack.c.b16 %v7343, %v7342
  %v7387 = vpack.c.b16 %v7345, %v7344
  %v7388 = vpack.c.b16 %v7347, %v7346
  %v7389 = vpack.c.b16 %v7349, %v7348
  %v7390 = vpack.c.b16 %v7351, %v7350
  %v7391 = vpack.c.b16 %v7353, %v7352
  %v7392 = vpack.c.b16 %v7355, %v7354
  %v7393 = vpack.c.b16 %v7357, %v7356
  %v7394 = vpack.c.b16 %v7359, %v7358
  %v7395 = vpack.c.b16 %v7361, %v7360
  %v7396 = vpack.c.b16 %v7363, %v7362
  %v7397 = vpack.c.b16 %v7365, %v7364
  %7430 = vmatprep.subr.bf16.mxu0 0
  %7431 = vmatpush1.bf16.msra.mxu0 %v7366
  %7432 = vmatprep.subr.bf16.mxu0 0
  %7433 = vmatpush1.bf16.msra.mxu0 %v7367
  %7434 = vmatprep.subr.bf16.mxu0 0
  %7435 = vmatpush1.bf16.msra.mxu0 %v7368
  %7436 = vmatprep.subr.bf16.mxu0 0
  %7437 = vmatpush1.bf16.msra.mxu0 %v7369
  %7438 = vmatprep.subr.bf16.mxu0 0
  %7439 = vmatpush1.bf16.msra.mxu0 %v7370
  %7440 = vmatprep.subr.bf16.mxu0 0
  %7441 = vmatpush1.bf16.msra.mxu0 %v7371
  %7442 = vmatprep.subr.bf16.mxu0 0
  %7443 = vmatpush1.bf16.msra.mxu0 %v7372
  %7444 = vmatprep.subr.bf16.mxu0 0
  %7445 = vmatpush1.bf16.msra.mxu0 %v7373
  %7446 = vmatprep.subr.bf16.mxu0 0
  %7447 = vmatpush1.bf16.msra.mxu0 %v7374
  %7448 = vmatprep.subr.bf16.mxu0 0
  %7449 = vmatpush1.bf16.msra.mxu0 %v7375
  %7450 = vmatprep.subr.bf16.mxu0 0
  %7451 = vmatpush1.bf16.msra.mxu0 %v7376
  %7452 = vmatprep.subr.bf16.mxu0 0
  %7453 = vmatpush1.bf16.msra.mxu0 %v7377
  %7454 = vmatprep.subr.bf16.mxu0 0
  %7455 = vmatpush1.bf16.msra.mxu0 %v7378
  %7456 = vmatprep.subr.bf16.mxu0 0
  %7457 = vmatpush1.bf16.msra.mxu0 %v7379
  %7458 = vmatprep.subr.bf16.mxu0 0
  %7459 = vmatpush1.bf16.msra.mxu0 %v7380
  %7460 = vmatprep.subr.bf16.mxu0 0
  %7461 = vmatpush1.bf16.msra.mxu0 %v7381
  %7462 = vmatprep.mubr.bf16.mxu0 %v7164
  %7463 = vmatmul.mubr.bf16.gmra.mrb[0].mxu0 %v7163
  %v7464 = vpop.f32.mrb[0].mxu0
  %v7465 = vadd.f32 %v7236, %v7464
  %v7466 = vpop.f32.mrb[0].mxu0
  %v7467 = vpop.f32.mrb[0].mxu0
  %v7468 = vpop.f32.mrb[0].mxu0
  %7469 = vdwg.mxu0
  %7470 = vmatprep.subr.bf16.mxu0 0
  %7471 = vmatpush1.bf16.msra.mxu0 %v7382
  %7472 = vmatprep.subr.bf16.mxu0 0
  %7473 = vmatpush1.bf16.msra.mxu0 %v7383
  %7474 = vmatprep.subr.bf16.mxu0 0
  %7475 = vmatpush1.bf16.msra.mxu0 %v7384
  %7476 = vmatprep.subr.bf16.mxu0 0
  %7477 = vmatpush1.bf16.msra.mxu0 %v7385
  %7478 = vmatprep.subr.bf16.mxu0 0
  %7479 = vmatpush1.bf16.msra.mxu0 %v7386
  %7480 = vmatprep.subr.bf16.mxu0 0
  %7481 = vmatpush1.bf16.msra.mxu0 %v7387
  %7482 = vmatprep.subr.bf16.mxu0 0
  %7483 = vmatpush1.bf16.msra.mxu0 %v7388
  %7484 = vmatprep.subr.bf16.mxu0 0
  %7485 = vmatpush1.bf16.msra.mxu0 %v7389
  %7486 = vmatprep.subr.bf16.mxu0 0
  %7487 = vmatpush1.bf16.msra.mxu0 %v7390
  %7488 = vmatprep.subr.bf16.mxu0 0
  %7489 = vmatpush1.bf16.msra.mxu0 %v7391
  %7490 = vmatprep.subr.bf16.mxu0 0
  %7491 = vmatpush1.bf16.msra.mxu0 %v7392
  %7492 = vmatprep.subr.bf16.mxu0 0
  %7493 = vmatpush1.bf16.msra.mxu0 %v7393
  %7494 = vmatprep.subr.bf16.mxu0 0
  %7495 = vmatpush1.bf16.msra.mxu0 %v7394
  %7496 = vmatprep.subr.bf16.mxu0 0
  %7497 = vmatpush1.bf16.msra.mxu0 %v7395
  %7498 = vmatprep.subr.bf16.mxu0 0
  %7499 = vmatpush1.bf16.msra.mxu0 %v7396
  %7500 = vmatprep.subr.bf16.mxu0 0
  %7501 = vmatpush1.bf16.msra.mxu0 %v7397
  %7502 = vmatprep.mubr.bf16.mxu0 %v7166
  %7503 = vmatmul.mubr.bf16.gmra.mrb[0].mxu0 %v7165
  %v7504 = vpop.f32.mrb[0].mxu0
  %v7505 = vadd.f32 %v7465, %v7504
  %v7506 = vpop.f32.mrb[0].mxu0
  %v7507 = vpop.f32.mrb[0].mxu0
  %v7508 = vpop.f32.mrb[0].mxu0
  %7509 = vdwg.mxu0
  %7510 = vmax.xlane.f32.xlu0 %v7505
  %v7511 = vpop.xlane.xlu0 %7510
  %v7512 = vsub.f32 %v7505, %v7511
  %v7513 = vmul.f32 %v7512, 1.442695
  %v7514 = vpow.pop %v7513
  %7515 = vadd.xlane.f32.xlu0 %v7514
  %v7516 = vpop.xlane.xlu0 %7515
  %v7517 = vlog2.pop %v7516
  %v7518 = vmul.f32 %v7517, 0.6931472
  %v7519 = vsub.f32 %v7512, %v7518
  %7520 = vst [vmem:[%s9] sm:$0xff] %v7519
  // Predicated region
  $region38: #{cnn_mnist_forward.1} parent=0 // pred_check
    _
  $region39: #{cnn_mnist_forward.1} parent=0 // pred_check_branch
    %7522 = sbr.rel (0) target = $region41
  $region40: #{cnn_mnist_forward.1} parent=0 // pred_region
    _
  $region41: #{cnn_mnist_forward.1} parent=0 // pred_fallthru
    _
  // Predicated region
  $region42: #{cnn_mnist_forward.1} parent=0 // pred_check
    _
  $region43: #{cnn_mnist_forward.1} parent=0 // pred_check_branch
    %7524 = sbr.rel (0) target = $region45
  $region44: #{cnn_mnist_forward.1} parent=0 // pred_region
    _
  $region45: #{cnn_mnist_forward.1} parent=0 // pred_fallthru
    _

</llo_original>
